<compile_context>
chip_gen: v5e
topology: v5e:2x2
jax: 0.10.0
libtpu: 0.0.40
codegen_flags: <defaults>
</compile_context>

<pallas_src>
import functools
import math

import jax
import jax.numpy as jnp
from jax.experimental import pallas as pl
from jax.experimental.pallas import tpu as pltpu

SUBLANE = 8
TILE_M_TARGET = 2048                 # rows per grid step
_TILE_VMEM_BUDGET = 12 * 1024 * 1024 # cap on a single patch tile (bytes)
BN_EPS = 1e-5
ACT_DTYPE = jnp.bfloat16             # inter-layer activation storage dtype


def _round_up(x, m):
    return (x + m - 1) // m * m


@functools.lru_cache(maxsize=None)
def _vmem_limit_bytes():
    # ~3/4 of physical VMEM: ~96 MiB on v5e/v6e (128 MiB), 48 MiB on v7x (64 MiB).
    try:
        cap = int(pltpu.get_tpu_info().vmem_capacity_bytes)
    except Exception:
        cap = 64 * 1024 * 1024
    return max(32 * 1024 * 1024, min(cap * 3 // 4, 100 * 1024 * 1024))


# ----------------------------------------------------------------------------
# Pallas kernels
# ----------------------------------------------------------------------------
def _matmul_stats_kernel(p_ref, w_ref, y_ref, sum_ref, sq_ref):
    """Pass 1: conv-as-matmul (bf16 MXU, f32 acc) + per-tile partial BN stats."""
    y = jnp.dot(p_ref[...], w_ref[...], preferred_element_type=jnp.float32)
    y_ref[...] = y.astype(y_ref.dtype)                       # bf16 store
    sum_ref[...] = jnp.sum(y, axis=0, keepdims=True)[None]   # (1,1,Cout) f32
    sq_ref[...] = jnp.sum(y * y, axis=0, keepdims=True)[None]


def _bn_relu_kernel(y_ref, scale_ref, shift_ref, o_ref):
    """Pass 2: apply precomputed global BN affine (scale/shift) + ReLU."""
    y = y_ref[...].astype(jnp.float32)
    o_ref[...] = jnp.maximum(y * scale_ref[...] + shift_ref[...],
                             0.0).astype(o_ref.dtype)


# ----------------------------------------------------------------------------
# JAX glue: im2col for 3-D conv (k=3, pad=1, stride in {1,2}), NDHWC layout.
# Takes a LIST of tensors that are virtually channel-concatenated (the concat
# happens per-tap inside this gather, never as a standalone tensor).
# ----------------------------------------------------------------------------
def _im2col_patches(xs, k, stride, pad):
    n, d, h, w, _ = xs[0].shape
    do = (d + 2 * pad - k) // stride + 1
    ho = (h + 2 * pad - k) // stride + 1
    wo = (w + 2 * pad - k) // stride + 1
    xps = [jnp.pad(x.astype(jnp.bfloat16),
                   ((0, 0), (pad, pad), (pad, pad), (pad, pad), (0, 0)))
           for x in xs]
    taps = []
    for kd in range(k):
        for kh in range(k):
            for kw in range(k):
                for xp in xps:                       # channel order = concat order
                    taps.append(xp[:,
                                   kd:kd + do * stride:stride,
                                   kh:kh + ho * stride:stride,
                                   kw:kw + wo * stride:stride,
                                   :])
    p = jnp.concatenate(taps, axis=-1)               # (N, Do, Ho, Wo, 27*Cin)
    cin_total = sum(x.shape[-1] for x in xs)
    return p.reshape(n * do * ho * wo, k * k * k * cin_total), (n, do, ho, wo)


def _conv_bn_relu(xs, w, gamma, beta, stride, out_dtype):
    """xs: list of NDHWC tensors (channel-concatenated input).
    w: (Cout, Cin_total, 3, 3, 3) PyTorch layout."""
    k, pad = 3, 1
    cout, cin = int(w.shape[0]), int(w.shape[1])
    assert cin == sum(x.shape[-1] for x in xs)

    p, (n, do, ho, wo) = _im2col_patches(xs, k, stride, pad)
    m, kk = p.shape

    rows_by_vmem = max(SUBLANE,
                       (_TILE_VMEM_BUDGET // (kk * 2)) // SUBLANE * SUBLANE)
    tile_m = min(TILE_M_TARGET, _round_up(m, SUBLANE), rows_by_vmem)
    m_pad = _round_up(m, tile_m)
    num_tiles = m_pad // tile_m
    if m_pad != m:
        # Zero rows contribute exactly 0 to the matmul and to the BN sums,
        # which are divided by the TRUE m below.
        p = jnp.pad(p, ((0, m_pad - m), (0, 0)))

    # Weight as (27*Cin, Cout), matching the patch ((kd,kh,kw) outer, cin inner).
    w_mat = jnp.transpose(w, (2, 3, 4, 1, 0)).reshape(kk, cout).astype(jnp.bfloat16)

    vmem_limit = _vmem_limit_bytes()

    # -------------------- pass 1: matmul + partial BN stats ------------------
    cost1 = pl.CostEstimate(
        flops=2 * m_pad * kk * cout + 4 * m_pad * cout,
        transcendentals=0,
        bytes_accessed=(m_pad * kk * 2 + kk * cout * 2 + m_pad * cout * 2
                        + 2 * num_tiles * cout * 4))
    y, psum, psq = pl.pallas_call(
        _matmul_stats_kernel,
        out_shape=(jax.ShapeDtypeStruct((m_pad, cout), jnp.bfloat16),
                   jax.ShapeDtypeStruct((num_tiles, 1, cout), jnp.float32),
                   jax.ShapeDtypeStruct((num_tiles, 1, cout), jnp.float32)),
        grid=(num_tiles,),
        in_specs=[pl.BlockSpec((tile_m, kk), lambda i: (i, 0)),
                  pl.BlockSpec((kk, cout), lambda i: (0, 0))],
        out_specs=(pl.BlockSpec((tile_m, cout), lambda i: (i, 0)),
                   pl.BlockSpec((1, 1, cout), lambda i: (i, 0, 0)),
                   pl.BlockSpec((1, 1, cout), lambda i: (i, 0, 0))),
        compiler_params=pltpu.CompilerParams(
            dimension_semantics=("parallel",),        # megacore-shardable
            vmem_limit_bytes=vmem_limit),
        cost_estimate=cost1,
    )(p, w_mat)

    # ------------- global training-mode BN affine (tiny, XLA, f32) ----------
    inv_m = 1.0 / float(m)
    ch_sum = jnp.sum(psum, axis=0).reshape(cout)
    ch_sq = jnp.sum(psq, axis=0).reshape(cout)
    mean = ch_sum * inv_m
    var = jnp.maximum(ch_sq * inv_m - mean * mean, 0.0)      # clamp >= 0
    scale_v = gamma * jax.lax.rsqrt(var + BN_EPS)
    shift_v = beta - mean * scale_v
    scale = scale_v.reshape(1, cout).astype(jnp.float32)
    shift = shift_v.reshape(1, cout).astype(jnp.float32)

    # -------------------- pass 2: BN affine + ReLU ---------------------------
    out_bytes = jnp.dtype(out_dtype).itemsize
    cost2 = pl.CostEstimate(
        flops=3 * m_pad * cout,
        transcendentals=0,
        bytes_accessed=m_pad * cout * 2 + 2 * cout * 4 + m_pad * cout * out_bytes)
    out = pl.pallas_call(
        _bn_relu_kernel,
        out_shape=jax.ShapeDtypeStruct((m_pad, cout), out_dtype),
        grid=(num_tiles,),
        in_specs=[pl.BlockSpec((tile_m, cout), lambda i: (i, 0)),
                  pl.BlockSpec((1, cout), lambda i: (0, 0)),
                  pl.BlockSpec((1, cout), lambda i: (0, 0))],
        out_specs=pl.BlockSpec((tile_m, cout), lambda i: (i, 0)),
        compiler_params=pltpu.CompilerParams(
            dimension_semantics=("parallel",),
            vmem_limit_bytes=vmem_limit),
        cost_estimate=cost2,
    )(y, scale, shift)

    return out[:m].reshape(n, do, ho, wo, cout)


def _upsample_nearest_2x(x):
    # NDHWC nearest upsample x2 on D,H,W via a single broadcast+reshape
    # (matches nn.Upsample(scale_factor=2, mode='nearest')).
    n, d, h, w, c = x.shape
    x = jnp.broadcast_to(x[:, :, None, :, None, :, None, :],
                         (n, d, 2, h, 2, w, 2, c))
    return x.reshape(n, 2 * d, 2 * h, 2 * w, c)


# ----------------------------------------------------------------------------
# Parameter construction (deterministic, mirrors the module's __init__)
# ----------------------------------------------------------------------------
_LAYER_DEFS = lambda c: {
    "conv1":   (c,             2 * c, 2),
    "conv2":   (2 * c,         2 * c, 1),
    "conv3":   (2 * c,         4 * c, 2),
    "conv4":   (4 * c,         4 * c, 1),
    "conv5":   (4 * c + 2 * c, 2 * c, 1),
    "conv5_r": (2 * c,         2 * c, 1),
    "conv6":   (2 * c + c,     c,     1),
    "conv6_r": (c,             c,     1),
    "conv7":   (c,             1,     1),
}


def init_params(key, in_channels):
    # NOTE: the Conv3d bias is intentionally omitted — a per-channel constant
    # added right before a training-mode BatchNorm3d is cancelled exactly by
    # the mean subtraction and leaves the variance unchanged (no-op).
    params = {}
    for name, (cin, cout, _stride) in _LAYER_DEFS(in_channels).items():
        key, kw = jax.random.split(key)
        std = math.sqrt(2.0 / (3 * 3 * 3 * cout))        # module's weight init
        w = std * jax.random.normal(kw, (cout, cin, 3, 3, 3), jnp.float32)
        gamma = jnp.ones((cout,), jnp.float32)           # BatchNorm3d weight=1
        beta = jnp.zeros((cout,), jnp.float32)           # BatchNorm3d bias=0
        params[name] = (w, gamma, beta)
    return params


# ----------------------------------------------------------------------------
# Forward pass (semantics of RefineNet_UNet.forward)
# ----------------------------------------------------------------------------
def refine_net_unet_forward(params, vol, img_vol, in_channels):
    """vol, img_vol: N C D H W (PyTorch layout).  Returns N 1 D H W."""
    defs = _LAYER_DEFS(in_channels)

    def block(name, *xs, out_dtype=ACT_DTYPE):
        w, g, b = params[name]
        return _conv_bn_relu(list(xs), w, g, b, stride=defs[name][2],
                             out_dtype=out_dtype)

    vol_in = jnp.concatenate([vol, img_vol], axis=1)
    assert vol_in.shape[1] == in_channels
    x = jnp.transpose(vol_in, (0, 2, 3, 4, 1)).astype(ACT_DTYPE)  # -> NDHWC

    dw1 = block("conv1", x)
    dw1_r = block("conv2", dw1)
    dw2 = block("conv3", dw1_r)
    dw2_r = block("conv4", dw2)

    # Upsampled tensor and skip connection are fed as two separate inputs; the
    # channel concat happens per-tap inside the im2col gather.
    up1 = block("conv5", _upsample_nearest_2x(dw2_r), dw1_r)
    up1_r = block("conv5_r", up1)

    up2 = block("conv6", _upsample_nearest_2x(up1_r), x)
    up2_r = block("conv6_r", up2)

    out = block("conv7", up2_r, out_dtype=jnp.float32)    # (N, D, H, W, 1)
    return jnp.transpose(out, (0, 4, 1, 2, 3))            # back to N 1 D H W


# ----------------------------------------------------------------------------
if __name__ == "__main__":
    in_channels = 4          # total channels after concat(vol, img_vol)
    N, D, H, W = 2, 8, 8, 8
    c_vol, c_img = in_channels // 2, in_channels - in_channels // 2

    key = jax.random.PRNGKey(0)
    k_p, k_v, k_i = jax.random.split(key, 3)
    params = init_params(k_p, in_channels)

    vol = jax.random.normal(k_v, (N, c_vol, D, H, W), jnp.float32)
    img_vol = jax.random.normal(k_i, (N, c_img, D, H, W), jnp.float32)

    fwd = jax.jit(functools.partial(refine_net_unet_forward,
                                    in_channels=in_channels))
    out = fwd(params, vol, img_vol)
    jax.block_until_ready(out)
    assert out.shape == (N, 1, D, H, W), out.shape
    print("KERNEL_OK")
</pallas_src>

<mosaic_0001>
module attributes {stable_mosaic.version = 11 : i64} {
  func.func @_bn_relu_kernel(%arg0: i32, %arg1: memref<128x8xbf16, #tpu.memory_space<vmem>>, %arg2: memref<1x8xf32, #tpu.memory_space<vmem>>, %arg3: memref<1x8xf32, #tpu.memory_space<vmem>>, %arg4: memref<128x8xbf16, #tpu.memory_space<vmem>>) attributes {dimension_semantics = [#tpu.dimension_semantics<parallel>], iteration_bounds = array<i64: 1>, scalar_prefetch = 0 : i64, scratch_operands = 0 : i64, tpu.core_type = #tpu.core_type<tc>, window_params = [{transform_indices = @transform_0, window_bounds = array<i64: 128, 8>}, {pipeline_mode = #tpu.pipeline_mode<synchronous>, transform_indices = @transform_1, window_bounds = array<i64: 1, 8>}, {pipeline_mode = #tpu.pipeline_mode<synchronous>, transform_indices = @transform_2, window_bounds = array<i64: 1, 8>}, {transform_indices = @transform_3, window_bounds = array<i64: 128, 8>}]} {
    %c0 = arith.constant 0 : index
    %c0_0 = arith.constant 0 : index
    %0 = vector.load %arg1[%c0, %c0_0] : memref<128x8xbf16, #tpu.memory_space<vmem>>, vector<128x8xbf16>
    %1 = arith.extf %0 : vector<128x8xbf16> to vector<128x8xf32>
    %c0_1 = arith.constant 0 : index
    %c0_2 = arith.constant 0 : index
    %2 = vector.load %arg2[%c0_1, %c0_2] : memref<1x8xf32, #tpu.memory_space<vmem>>, vector<1x8xf32>
    %3 = vector.broadcast %2 : vector<1x8xf32> to vector<128x8xf32>
    %4 = arith.mulf %1, %3 : vector<128x8xf32>
    %c0_3 = arith.constant 0 : index
    %c0_4 = arith.constant 0 : index
    %5 = vector.load %arg3[%c0_3, %c0_4] : memref<1x8xf32, #tpu.memory_space<vmem>>, vector<1x8xf32>
    %6 = vector.broadcast %5 : vector<1x8xf32> to vector<128x8xf32>
    %7 = arith.addf %4, %6 : vector<128x8xf32>
    %cst = arith.constant 0.000000e+00 : f32
    %8 = vector.broadcast %cst : f32 to vector<128x8xf32>
    %9 = arith.maximumf %7, %8 : vector<128x8xf32>
    %10 = arith.truncf %9 : vector<128x8xf32> to vector<128x8xbf16>
    %c0_5 = arith.constant 0 : index
    %c0_6 = arith.constant 0 : index
    %11 = vector.load %arg4[%c0_5, %c0_6] : memref<128x8xbf16, #tpu.memory_space<vmem>>, vector<128x8xbf16>
    tpu.vector_store %arg4[%c0_5, %c0_6], %10 {strides = array<i32>} : memref<128x8xbf16, #tpu.memory_space<vmem>>, vector<128x8xbf16>,
    return
  }
  func.func @transform_0(%arg0: i32) -> (i32, i32) {
    %c0_i32 = arith.constant 0 : i32
    %c0_i32_0 = arith.constant 0 : i32
    return %arg0, %c0_i32 : i32, i32
  }
  func.func @transform_1(%arg0: i32) -> (i32, i32) {
    %c0_i32 = arith.constant 0 : i32
    %c0_i32_0 = arith.constant 0 : i32
    %c0_i32_1 = arith.constant 0 : i32
    return %c0_i32, %c0_i32_0 : i32, i32
  }
  func.func @transform_2(%arg0: i32) -> (i32, i32) {
    %c0_i32 = arith.constant 0 : i32
    %c0_i32_0 = arith.constant 0 : i32
    %c0_i32_1 = arith.constant 0 : i32
    return %c0_i32, %c0_i32_0 : i32, i32
  }
  func.func @transform_3(%arg0: i32) -> (i32, i32) {
    %c0_i32 = arith.constant 0 : i32
    %c0_i32_0 = arith.constant 0 : i32
    return %arg0, %c0_i32 : i32, i32
  }
}

module attributes {stable_mosaic.version = 11 : i64} {
  func.func @_matmul_stats_kernel(%arg0: i32, %arg1: memref<128x108xbf16, #tpu.memory_space<vmem>>, %arg2: memref<108x8xbf16, #tpu.memory_space<vmem>>, %arg3: memref<128x8xbf16, #tpu.memory_space<vmem>>, %arg4: memref<1x1x8xf32, #tpu.memory_space<vmem>>, %arg5: memref<1x1x8xf32, #tpu.memory_space<vmem>>) attributes {dimension_semantics = [#tpu.dimension_semantics<parallel>], iteration_bounds = array<i64: 1>, scalar_prefetch = 0 : i64, scratch_operands = 0 : i64, tpu.core_type = #tpu.core_type<tc>, window_params = [{transform_indices = @transform_0, window_bounds = array<i64: 128, 108>}, {pipeline_mode = #tpu.pipeline_mode<synchronous>, transform_indices = @transform_1, window_bounds = array<i64: 108, 8>}, {transform_indices = @transform_2, window_bounds = array<i64: 128, 8>}, {transform_indices = @transform_3, window_bounds = array<i64: 1, 1, 8>}, {transform_indices = @transform_4, window_bounds = array<i64: 1, 1, 8>}]} {
    %c0 = arith.constant 0 : index
    %c0_0 = arith.constant 0 : index
    %0 = vector.load %arg1[%c0, %c0_0] : memref<128x108xbf16, #tpu.memory_space<vmem>>, vector<128x108xbf16>
    %c0_1 = arith.constant 0 : index
    %c0_2 = arith.constant 0 : index
    %1 = vector.load %arg2[%c0_1, %c0_2] : memref<108x8xbf16, #tpu.memory_space<vmem>>, vector<108x8xbf16>
    %cst = arith.constant dense<0.000000e+00> : vector<128x8xf32>
    %2 = tpu.matmul %0, %1, %cst {dimension_numbers = #tpu.dot_dimension_numbers<[1], [0], [0], [1], [0, 0, 1, 1], [], []>} : vector<128x108xbf16>, vector<108x8xbf16>, vector<128x8xf32> -> vector<128x8xf32>
    %3 = arith.truncf %2 : vector<128x8xf32> to vector<128x8xbf16>
    %c0_3 = arith.constant 0 : index
    %c0_4 = arith.constant 0 : index
    %4 = vector.load %arg3[%c0_3, %c0_4] : memref<128x8xbf16, #tpu.memory_space<vmem>>, vector<128x8xbf16>
    tpu.vector_store %arg3[%c0_3, %c0_4], %3 {strides = array<i32>} : memref<128x8xbf16, #tpu.memory_space<vmem>>, vector<128x8xbf16>,
    %cst_5 = arith.constant dense<0.000000e+00> : vector<8xf32>
    %5 = vector.multi_reduction <add>, %2, %cst_5 [0] : vector<128x8xf32> to vector<8xf32>
    %6 = vector.shape_cast %5 : vector<8xf32> to vector<1x8xf32>
    %7 = vector.shape_cast %6 : vector<1x8xf32> to vector<1x1x8xf32>
    %c0_6 = arith.constant 0 : index
    %c0_7 = arith.constant 0 : index
    %c0_8 = arith.constant 0 : index
    %8 = vector.load %arg4[%c0_6, %c0_7, %c0_8] : memref<1x1x8xf32, #tpu.memory_space<vmem>>, vector<1x1x8xf32>
    tpu.vector_store %arg4[%c0_6, %c0_7, %c0_8], %7 {strides = array<i32>} : memref<1x1x8xf32, #tpu.memory_space<vmem>>, vector<1x1x8xf32>,
    %9 = arith.mulf %2, %2 : vector<128x8xf32>
    %cst_9 = arith.constant dense<0.000000e+00> : vector<8xf32>
    %10 = vector.multi_reduction <add>, %9, %cst_9 [0] : vector<128x8xf32> to vector<8xf32>
    %11 = vector.shape_cast %10 : vector<8xf32> to vector<1x8xf32>
    %12 = vector.shape_cast %11 : vector<1x8xf32> to vector<1x1x8xf32>
    %c0_10 = arith.constant 0 : index
    %c0_11 = arith.constant 0 : index
    %c0_12 = arith.constant 0 : index
    %13 = vector.load %arg5[%c0_10, %c0_11, %c0_12] : memref<1x1x8xf32, #tpu.memory_space<vmem>>, vector<1x1x8xf32>
    tpu.vector_store %arg5[%c0_10, %c0_11, %c0_12], %12 {strides = array<i32>} : memref<1x1x8xf32, #tpu.memory_space<vmem>>, vector<1x1x8xf32>,
    return
  }
  func.func @transform_0(%arg0: i32) -> (i32, i32) {
    %c0_i32 = arith.constant 0 : i32
    %c0_i32_0 = arith.constant 0 : i32
    return %arg0, %c0_i32 : i32, i32
  }
  func.func @transform_1(%arg0: i32) -> (i32, i32) {
    %c0_i32 = arith.constant 0 : i32
    %c0_i32_0 = arith.constant 0 : i32
    %c0_i32_1 = arith.constant 0 : i32
    return %c0_i32, %c0_i32_0 : i32, i32
  }
  func.func @transform_2(%arg0: i32) -> (i32, i32) {
    %c0_i32 = arith.constant 0 : i32
    %c0_i32_0 = arith.constant 0 : i32
    return %arg0, %c0_i32 : i32, i32
  }
  func.func @transform_3(%arg0: i32) -> (i32, i32, i32) {
    %c0_i32 = arith.constant 0 : i32
    %c0_i32_0 = arith.constant 0 : i32
    %c0_i32_1 = arith.constant 0 : i32
    return %arg0, %c0_i32, %c0_i32_0 : i32, i32, i32
  }
  func.func @transform_4(%arg0: i32) -> (i32, i32, i32) {
    %c0_i32 = arith.constant 0 : i32
    %c0_i32_0 = arith.constant 0 : i32
    %c0_i32_1 = arith.constant 0 : i32
    return %arg0, %c0_i32, %c0_i32_0 : i32, i32, i32
  }
}

module attributes {stable_mosaic.version = 11 : i64} {
  func.func @_matmul_stats_kernel(%arg0: i32, %arg1: memref<128x216xbf16, #tpu.memory_space<vmem>>, %arg2: memref<216x8xbf16, #tpu.memory_space<vmem>>, %arg3: memref<128x8xbf16, #tpu.memory_space<vmem>>, %arg4: memref<1x1x8xf32, #tpu.memory_space<vmem>>, %arg5: memref<1x1x8xf32, #tpu.memory_space<vmem>>) attributes {dimension_semantics = [#tpu.dimension_semantics<parallel>], iteration_bounds = array<i64: 1>, scalar_prefetch = 0 : i64, scratch_operands = 0 : i64, tpu.core_type = #tpu.core_type<tc>, window_params = [{transform_indices = @transform_0, window_bounds = array<i64: 128, 216>}, {pipeline_mode = #tpu.pipeline_mode<synchronous>, transform_indices = @transform_1, window_bounds = array<i64: 216, 8>}, {transform_indices = @transform_2, window_bounds = array<i64: 128, 8>}, {transform_indices = @transform_3, window_bounds = array<i64: 1, 1, 8>}, {transform_indices = @transform_4, window_bounds = array<i64: 1, 1, 8>}]} {
    %c0 = arith.constant 0 : index
    %c0_0 = arith.constant 0 : index
    %0 = vector.load %arg1[%c0, %c0_0] : memref<128x216xbf16, #tpu.memory_space<vmem>>, vector<128x216xbf16>
    %c0_1 = arith.constant 0 : index
    %c0_2 = arith.constant 0 : index
    %1 = vector.load %arg2[%c0_1, %c0_2] : memref<216x8xbf16, #tpu.memory_space<vmem>>, vector<216x8xbf16>
    %cst = arith.constant dense<0.000000e+00> : vector<128x8xf32>
    %2 = tpu.matmul %0, %1, %cst {dimension_numbers = #tpu.dot_dimension_numbers<[1], [0], [0], [1], [0, 0, 1, 1], [], []>} : vector<128x216xbf16>, vector<216x8xbf16>, vector<128x8xf32> -> vector<128x8xf32>
    %3 = arith.truncf %2 : vector<128x8xf32> to vector<128x8xbf16>
    %c0_3 = arith.constant 0 : index
    %c0_4 = arith.constant 0 : index
    %4 = vector.load %arg3[%c0_3, %c0_4] : memref<128x8xbf16, #tpu.memory_space<vmem>>, vector<128x8xbf16>
    tpu.vector_store %arg3[%c0_3, %c0_4], %3 {strides = array<i32>} : memref<128x8xbf16, #tpu.memory_space<vmem>>, vector<128x8xbf16>,
    %cst_5 = arith.constant dense<0.000000e+00> : vector<8xf32>
    %5 = vector.multi_reduction <add>, %2, %cst_5 [0] : vector<128x8xf32> to vector<8xf32>
    %6 = vector.shape_cast %5 : vector<8xf32> to vector<1x8xf32>
    %7 = vector.shape_cast %6 : vector<1x8xf32> to vector<1x1x8xf32>
    %c0_6 = arith.constant 0 : index
    %c0_7 = arith.constant 0 : index
    %c0_8 = arith.constant 0 : index
    %8 = vector.load %arg4[%c0_6, %c0_7, %c0_8] : memref<1x1x8xf32, #tpu.memory_space<vmem>>, vector<1x1x8xf32>
    tpu.vector_store %arg4[%c0_6, %c0_7, %c0_8], %7 {strides = array<i32>} : memref<1x1x8xf32, #tpu.memory_space<vmem>>, vector<1x1x8xf32>,
    %9 = arith.mulf %2, %2 : vector<128x8xf32>
    %cst_9 = arith.constant dense<0.000000e+00> : vector<8xf32>
    %10 = vector.multi_reduction <add>, %9, %cst_9 [0] : vector<128x8xf32> to vector<8xf32>
    %11 = vector.shape_cast %10 : vector<8xf32> to vector<1x8xf32>
    %12 = vector.shape_cast %11 : vector<1x8xf32> to vector<1x1x8xf32>
    %c0_10 = arith.constant 0 : index
    %c0_11 = arith.constant 0 : index
    %c0_12 = arith.constant 0 : index
    %13 = vector.load %arg5[%c0_10, %c0_11, %c0_12] : memref<1x1x8xf32, #tpu.memory_space<vmem>>, vector<1x1x8xf32>
    tpu.vector_store %arg5[%c0_10, %c0_11, %c0_12], %12 {strides = array<i32>} : memref<1x1x8xf32, #tpu.memory_space<vmem>>, vector<1x1x8xf32>,
    return
  }
  func.func @transform_0(%arg0: i32) -> (i32, i32) {
    %c0_i32 = arith.constant 0 : i32
    %c0_i32_0 = arith.constant 0 : i32
    return %arg0, %c0_i32 : i32, i32
  }
  func.func @transform_1(%arg0: i32) -> (i32, i32) {
    %c0_i32 = arith.constant 0 : i32
    %c0_i32_0 = arith.constant 0 : i32
    %c0_i32_1 = arith.constant 0 : i32
    return %c0_i32, %c0_i32_0 : i32, i32
  }
  func.func @transform_2(%arg0: i32) -> (i32, i32) {
    %c0_i32 = arith.constant 0 : i32
    %c0_i32_0 = arith.constant 0 : i32
    return %arg0, %c0_i32 : i32, i32
  }
  func.func @transform_3(%arg0: i32) -> (i32, i32, i32) {
    %c0_i32 = arith.constant 0 : i32
    %c0_i32_0 = arith.constant 0 : i32
    %c0_i32_1 = arith.constant 0 : i32
    return %arg0, %c0_i32, %c0_i32_0 : i32, i32, i32
  }
  func.func @transform_4(%arg0: i32) -> (i32, i32, i32) {
    %c0_i32 = arith.constant 0 : i32
    %c0_i32_0 = arith.constant 0 : i32
    %c0_i32_1 = arith.constant 0 : i32
    return %arg0, %c0_i32, %c0_i32_0 : i32, i32, i32
  }
}

module attributes {stable_mosaic.version = 11 : i64} {
  func.func @_matmul_stats_kernel(%arg0: i32, %arg1: memref<16x216xbf16, #tpu.memory_space<vmem>>, %arg2: memref<216x16xbf16, #tpu.memory_space<vmem>>, %arg3: memref<16x16xbf16, #tpu.memory_space<vmem>>, %arg4: memref<1x1x16xf32, #tpu.memory_space<vmem>>, %arg5: memref<1x1x16xf32, #tpu.memory_space<vmem>>) attributes {dimension_semantics = [#tpu.dimension_semantics<parallel>], iteration_bounds = array<i64: 1>, scalar_prefetch = 0 : i64, scratch_operands = 0 : i64, tpu.core_type = #tpu.core_type<tc>, window_params = [{transform_indices = @transform_0, window_bounds = array<i64: 16, 216>}, {pipeline_mode = #tpu.pipeline_mode<synchronous>, transform_indices = @transform_1, window_bounds = array<i64: 216, 16>}, {transform_indices = @transform_2, window_bounds = array<i64: 16, 16>}, {transform_indices = @transform_3, window_bounds = array<i64: 1, 1, 16>}, {transform_indices = @transform_4, window_bounds = array<i64: 1, 1, 16>}]} {
    %c0 = arith.constant 0 : index
    %c0_0 = arith.constant 0 : index
    %0 = vector.load %arg1[%c0, %c0_0] : memref<16x216xbf16, #tpu.memory_space<vmem>>, vector<16x216xbf16>
    %c0_1 = arith.constant 0 : index
    %c0_2 = arith.constant 0 : index
    %1 = vector.load %arg2[%c0_1, %c0_2] : memref<216x16xbf16, #tpu.memory_space<vmem>>, vector<216x16xbf16>
    %cst = arith.constant dense<0.000000e+00> : vector<16x16xf32>
    %2 = tpu.matmul %0, %1, %cst {dimension_numbers = #tpu.dot_dimension_numbers<[1], [0], [0], [1], [0, 0, 1, 1], [], []>} : vector<16x216xbf16>, vector<216x16xbf16>, vector<16x16xf32> -> vector<16x16xf32>
    %3 = arith.truncf %2 : vector<16x16xf32> to vector<16x16xbf16>
    %c0_3 = arith.constant 0 : index
    %c0_4 = arith.constant 0 : index
    %4 = vector.load %arg3[%c0_3, %c0_4] : memref<16x16xbf16, #tpu.memory_space<vmem>>, vector<16x16xbf16>
    tpu.vector_store %arg3[%c0_3, %c0_4], %3 {strides = array<i32>} : memref<16x16xbf16, #tpu.memory_space<vmem>>, vector<16x16xbf16>,
    %cst_5 = arith.constant dense<0.000000e+00> : vector<16xf32>
    %5 = vector.multi_reduction <add>, %2, %cst_5 [0] : vector<16x16xf32> to vector<16xf32>
    %6 = vector.shape_cast %5 : vector<16xf32> to vector<1x16xf32>
    %7 = vector.shape_cast %6 : vector<1x16xf32> to vector<1x1x16xf32>
    %c0_6 = arith.constant 0 : index
    %c0_7 = arith.constant 0 : index
    %c0_8 = arith.constant 0 : index
    %8 = vector.load %arg4[%c0_6, %c0_7, %c0_8] : memref<1x1x16xf32, #tpu.memory_space<vmem>>, vector<1x1x16xf32>
    tpu.vector_store %arg4[%c0_6, %c0_7, %c0_8], %7 {strides = array<i32>} : memref<1x1x16xf32, #tpu.memory_space<vmem>>, vector<1x1x16xf32>,
    %9 = arith.mulf %2, %2 : vector<16x16xf32>
    %cst_9 = arith.constant dense<0.000000e+00> : vector<16xf32>
    %10 = vector.multi_reduction <add>, %9, %cst_9 [0] : vector<16x16xf32> to vector<16xf32>
    %11 = vector.shape_cast %10 : vector<16xf32> to vector<1x16xf32>
    %12 = vector.shape_cast %11 : vector<1x16xf32> to vector<1x1x16xf32>
    %c0_10 = arith.constant 0 : index
    %c0_11 = arith.constant 0 : index
    %c0_12 = arith.constant 0 : index
    %13 = vector.load %arg5[%c0_10, %c0_11, %c0_12] : memref<1x1x16xf32, #tpu.memory_space<vmem>>, vector<1x1x16xf32>
    tpu.vector_store %arg5[%c0_10, %c0_11, %c0_12], %12 {strides = array<i32>} : memref<1x1x16xf32, #tpu.memory_space<vmem>>, vector<1x1x16xf32>,
    return
  }
  func.func @transform_0(%arg0: i32) -> (i32, i32) {
    %c0_i32 = arith.constant 0 : i32
    %c0_i32_0 = arith.constant 0 : i32
    return %arg0, %c0_i32 : i32, i32
  }
  func.func @transform_1(%arg0: i32) -> (i32, i32) {
    %c0_i32 = arith.constant 0 : i32
    %c0_i32_0 = arith.constant 0 : i32
    %c0_i32_1 = arith.constant 0 : i32
    return %c0_i32, %c0_i32_0 : i32, i32
  }
  func.func @transform_2(%arg0: i32) -> (i32, i32) {
    %c0_i32 = arith.constant 0 : i32
    %c0_i32_0 = arith.constant 0 : i32
    return %arg0, %c0_i32 : i32, i32
  }
  func.func @transform_3(%arg0: i32) -> (i32, i32, i32) {
    %c0_i32 = arith.constant 0 : i32
    %c0_i32_0 = arith.constant 0 : i32
    %c0_i32_1 = arith.constant 0 : i32
    return %arg0, %c0_i32, %c0_i32_0 : i32, i32, i32
  }
  func.func @transform_4(%arg0: i32) -> (i32, i32, i32) {
    %c0_i32 = arith.constant 0 : i32
    %c0_i32_0 = arith.constant 0 : i32
    %c0_i32_1 = arith.constant 0 : i32
    return %arg0, %c0_i32, %c0_i32_0 : i32, i32, i32
  }
}

module attributes {stable_mosaic.version = 11 : i64} {
  func.func @_bn_relu_kernel(%arg0: i32, %arg1: memref<16x16xbf16, #tpu.memory_space<vmem>>, %arg2: memref<1x16xf32, #tpu.memory_space<vmem>>, %arg3: memref<1x16xf32, #tpu.memory_space<vmem>>, %arg4: memref<16x16xbf16, #tpu.memory_space<vmem>>) attributes {dimension_semantics = [#tpu.dimension_semantics<parallel>], iteration_bounds = array<i64: 1>, scalar_prefetch = 0 : i64, scratch_operands = 0 : i64, tpu.core_type = #tpu.core_type<tc>, window_params = [{transform_indices = @transform_0, window_bounds = array<i64: 16, 16>}, {pipeline_mode = #tpu.pipeline_mode<synchronous>, transform_indices = @transform_1, window_bounds = array<i64: 1, 16>}, {pipeline_mode = #tpu.pipeline_mode<synchronous>, transform_indices = @transform_2, window_bounds = array<i64: 1, 16>}, {transform_indices = @transform_3, window_bounds = array<i64: 16, 16>}]} {
    %c0 = arith.constant 0 : index
    %c0_0 = arith.constant 0 : index
    %0 = vector.load %arg1[%c0, %c0_0] : memref<16x16xbf16, #tpu.memory_space<vmem>>, vector<16x16xbf16>
    %1 = arith.extf %0 : vector<16x16xbf16> to vector<16x16xf32>
    %c0_1 = arith.constant 0 : index
    %c0_2 = arith.constant 0 : index
    %2 = vector.load %arg2[%c0_1, %c0_2] : memref<1x16xf32, #tpu.memory_space<vmem>>, vector<1x16xf32>
    %3 = vector.broadcast %2 : vector<1x16xf32> to vector<16x16xf32>
    %4 = arith.mulf %1, %3 : vector<16x16xf32>
    %c0_3 = arith.constant 0 : index
    %c0_4 = arith.constant 0 : index
    %5 = vector.load %arg3[%c0_3, %c0_4] : memref<1x16xf32, #tpu.memory_space<vmem>>, vector<1x16xf32>
    %6 = vector.broadcast %5 : vector<1x16xf32> to vector<16x16xf32>
    %7 = arith.addf %4, %6 : vector<16x16xf32>
    %cst = arith.constant 0.000000e+00 : f32
    %8 = vector.broadcast %cst : f32 to vector<16x16xf32>
    %9 = arith.maximumf %7, %8 : vector<16x16xf32>
    %10 = arith.truncf %9 : vector<16x16xf32> to vector<16x16xbf16>
    %c0_5 = arith.constant 0 : index
    %c0_6 = arith.constant 0 : index
    %11 = vector.load %arg4[%c0_5, %c0_6] : memref<16x16xbf16, #tpu.memory_space<vmem>>, vector<16x16xbf16>
    tpu.vector_store %arg4[%c0_5, %c0_6], %10 {strides = array<i32>} : memref<16x16xbf16, #tpu.memory_space<vmem>>, vector<16x16xbf16>,
    return
  }
  func.func @transform_0(%arg0: i32) -> (i32, i32) {
    %c0_i32 = arith.constant 0 : i32
    %c0_i32_0 = arith.constant 0 : i32
    return %arg0, %c0_i32 : i32, i32
  }
  func.func @transform_1(%arg0: i32) -> (i32, i32) {
    %c0_i32 = arith.constant 0 : i32
    %c0_i32_0 = arith.constant 0 : i32
    %c0_i32_1 = arith.constant 0 : i32
    return %c0_i32, %c0_i32_0 : i32, i32
  }
  func.func @transform_2(%arg0: i32) -> (i32, i32) {
    %c0_i32 = arith.constant 0 : i32
    %c0_i32_0 = arith.constant 0 : i32
    %c0_i32_1 = arith.constant 0 : i32
    return %c0_i32, %c0_i32_0 : i32, i32
  }
  func.func @transform_3(%arg0: i32) -> (i32, i32) {
    %c0_i32 = arith.constant 0 : i32
    %c0_i32_0 = arith.constant 0 : i32
    return %arg0, %c0_i32 : i32, i32
  }
}

module attributes {stable_mosaic.version = 11 : i64} {
  func.func @_matmul_stats_kernel(%arg0: i32, %arg1: memref<16x432xbf16, #tpu.memory_space<vmem>>, %arg2: memref<432x16xbf16, #tpu.memory_space<vmem>>, %arg3: memref<16x16xbf16, #tpu.memory_space<vmem>>, %arg4: memref<1x1x16xf32, #tpu.memory_space<vmem>>, %arg5: memref<1x1x16xf32, #tpu.memory_space<vmem>>) attributes {dimension_semantics = [#tpu.dimension_semantics<parallel>], iteration_bounds = array<i64: 1>, scalar_prefetch = 0 : i64, scratch_operands = 0 : i64, tpu.core_type = #tpu.core_type<tc>, window_params = [{transform_indices = @transform_0, window_bounds = array<i64: 16, 432>}, {pipeline_mode = #tpu.pipeline_mode<synchronous>, transform_indices = @transform_1, window_bounds = array<i64: 432, 16>}, {transform_indices = @transform_2, window_bounds = array<i64: 16, 16>}, {transform_indices = @transform_3, window_bounds = array<i64: 1, 1, 16>}, {transform_indices = @transform_4, window_bounds = array<i64: 1, 1, 16>}]} {
    %c0 = arith.constant 0 : index
    %c0_0 = arith.constant 0 : index
    %0 = vector.load %arg1[%c0, %c0_0] : memref<16x432xbf16, #tpu.memory_space<vmem>>, vector<16x432xbf16>
    %c0_1 = arith.constant 0 : index
    %c0_2 = arith.constant 0 : index
    %1 = vector.load %arg2[%c0_1, %c0_2] : memref<432x16xbf16, #tpu.memory_space<vmem>>, vector<432x16xbf16>
    %cst = arith.constant dense<0.000000e+00> : vector<16x16xf32>
    %2 = tpu.matmul %0, %1, %cst {dimension_numbers = #tpu.dot_dimension_numbers<[1], [0], [0], [1], [0, 0, 1, 1], [], []>} : vector<16x432xbf16>, vector<432x16xbf16>, vector<16x16xf32> -> vector<16x16xf32>
    %3 = arith.truncf %2 : vector<16x16xf32> to vector<16x16xbf16>
    %c0_3 = arith.constant 0 : index
    %c0_4 = arith.constant 0 : index
    %4 = vector.load %arg3[%c0_3, %c0_4] : memref<16x16xbf16, #tpu.memory_space<vmem>>, vector<16x16xbf16>
    tpu.vector_store %arg3[%c0_3, %c0_4], %3 {strides = array<i32>} : memref<16x16xbf16, #tpu.memory_space<vmem>>, vector<16x16xbf16>,
    %cst_5 = arith.constant dense<0.000000e+00> : vector<16xf32>
    %5 = vector.multi_reduction <add>, %2, %cst_5 [0] : vector<16x16xf32> to vector<16xf32>
    %6 = vector.shape_cast %5 : vector<16xf32> to vector<1x16xf32>
    %7 = vector.shape_cast %6 : vector<1x16xf32> to vector<1x1x16xf32>
    %c0_6 = arith.constant 0 : index
    %c0_7 = arith.constant 0 : index
    %c0_8 = arith.constant 0 : index
    %8 = vector.load %arg4[%c0_6, %c0_7, %c0_8] : memref<1x1x16xf32, #tpu.memory_space<vmem>>, vector<1x1x16xf32>
    tpu.vector_store %arg4[%c0_6, %c0_7, %c0_8], %7 {strides = array<i32>} : memref<1x1x16xf32, #tpu.memory_space<vmem>>, vector<1x1x16xf32>,
    %9 = arith.mulf %2, %2 : vector<16x16xf32>
    %cst_9 = arith.constant dense<0.000000e+00> : vector<16xf32>
    %10 = vector.multi_reduction <add>, %9, %cst_9 [0] : vector<16x16xf32> to vector<16xf32>
    %11 = vector.shape_cast %10 : vector<16xf32> to vector<1x16xf32>
    %12 = vector.shape_cast %11 : vector<1x16xf32> to vector<1x1x16xf32>
    %c0_10 = arith.constant 0 : index
    %c0_11 = arith.constant 0 : index
    %c0_12 = arith.constant 0 : index
    %13 = vector.load %arg5[%c0_10, %c0_11, %c0_12] : memref<1x1x16xf32, #tpu.memory_space<vmem>>, vector<1x1x16xf32>
    tpu.vector_store %arg5[%c0_10, %c0_11, %c0_12], %12 {strides = array<i32>} : memref<1x1x16xf32, #tpu.memory_space<vmem>>, vector<1x1x16xf32>,
    return
  }
  func.func @transform_0(%arg0: i32) -> (i32, i32) {
    %c0_i32 = arith.constant 0 : i32
    %c0_i32_0 = arith.constant 0 : i32
    return %arg0, %c0_i32 : i32, i32
  }
  func.func @transform_1(%arg0: i32) -> (i32, i32) {
    %c0_i32 = arith.constant 0 : i32
    %c0_i32_0 = arith.constant 0 : i32
    %c0_i32_1 = arith.constant 0 : i32
    return %c0_i32, %c0_i32_0 : i32, i32
  }
  func.func @transform_2(%arg0: i32) -> (i32, i32) {
    %c0_i32 = arith.constant 0 : i32
    %c0_i32_0 = arith.constant 0 : i32
    return %arg0, %c0_i32 : i32, i32
  }
  func.func @transform_3(%arg0: i32) -> (i32, i32, i32) {
    %c0_i32 = arith.constant 0 : i32
    %c0_i32_0 = arith.constant 0 : i32
    %c0_i32_1 = arith.constant 0 : i32
    return %arg0, %c0_i32, %c0_i32_0 : i32, i32, i32
  }
  func.func @transform_4(%arg0: i32) -> (i32, i32, i32) {
    %c0_i32 = arith.constant 0 : i32
    %c0_i32_0 = arith.constant 0 : i32
    %c0_i32_1 = arith.constant 0 : i32
    return %arg0, %c0_i32, %c0_i32_0 : i32, i32, i32
  }
}

module attributes {stable_mosaic.version = 11 : i64} {
  func.func @_matmul_stats_kernel(%arg0: i32, %arg1: memref<128x648xbf16, #tpu.memory_space<vmem>>, %arg2: memref<648x8xbf16, #tpu.memory_space<vmem>>, %arg3: memref<128x8xbf16, #tpu.memory_space<vmem>>, %arg4: memref<1x1x8xf32, #tpu.memory_space<vmem>>, %arg5: memref<1x1x8xf32, #tpu.memory_space<vmem>>) attributes {dimension_semantics = [#tpu.dimension_semantics<parallel>], iteration_bounds = array<i64: 1>, scalar_prefetch = 0 : i64, scratch_operands = 0 : i64, tpu.core_type = #tpu.core_type<tc>, window_params = [{transform_indices = @transform_0, window_bounds = array<i64: 128, 648>}, {pipeline_mode = #tpu.pipeline_mode<synchronous>, transform_indices = @transform_1, window_bounds = array<i64: 648, 8>}, {transform_indices = @transform_2, window_bounds = array<i64: 128, 8>}, {transform_indices = @transform_3, window_bounds = array<i64: 1, 1, 8>}, {transform_indices = @transform_4, window_bounds = array<i64: 1, 1, 8>}]} {
    %c0 = arith.constant 0 : index
    %c0_0 = arith.constant 0 : index
    %0 = vector.load %arg1[%c0, %c0_0] : memref<128x648xbf16, #tpu.memory_space<vmem>>, vector<128x648xbf16>
    %c0_1 = arith.constant 0 : index
    %c0_2 = arith.constant 0 : index
    %1 = vector.load %arg2[%c0_1, %c0_2] : memref<648x8xbf16, #tpu.memory_space<vmem>>, vector<648x8xbf16>
    %cst = arith.constant dense<0.000000e+00> : vector<128x8xf32>
    %2 = tpu.matmul %0, %1, %cst {dimension_numbers = #tpu.dot_dimension_numbers<[1], [0], [0], [1], [0, 0, 1, 1], [], []>} : vector<128x648xbf16>, vector<648x8xbf16>, vector<128x8xf32> -> vector<128x8xf32>
    %3 = arith.truncf %2 : vector<128x8xf32> to vector<128x8xbf16>
    %c0_3 = arith.constant 0 : index
    %c0_4 = arith.constant 0 : index
    %4 = vector.load %arg3[%c0_3, %c0_4] : memref<128x8xbf16, #tpu.memory_space<vmem>>, vector<128x8xbf16>
    tpu.vector_store %arg3[%c0_3, %c0_4], %3 {strides = array<i32>} : memref<128x8xbf16, #tpu.memory_space<vmem>>, vector<128x8xbf16>,
    %cst_5 = arith.constant dense<0.000000e+00> : vector<8xf32>
    %5 = vector.multi_reduction <add>, %2, %cst_5 [0] : vector<128x8xf32> to vector<8xf32>
    %6 = vector.shape_cast %5 : vector<8xf32> to vector<1x8xf32>
    %7 = vector.shape_cast %6 : vector<1x8xf32> to vector<1x1x8xf32>
    %c0_6 = arith.constant 0 : index
    %c0_7 = arith.constant 0 : index
    %c0_8 = arith.constant 0 : index
    %8 = vector.load %arg4[%c0_6, %c0_7, %c0_8] : memref<1x1x8xf32, #tpu.memory_space<vmem>>, vector<1x1x8xf32>
    tpu.vector_store %arg4[%c0_6, %c0_7, %c0_8], %7 {strides = array<i32>} : memref<1x1x8xf32, #tpu.memory_space<vmem>>, vector<1x1x8xf32>,
    %9 = arith.mulf %2, %2 : vector<128x8xf32>
    %cst_9 = arith.constant dense<0.000000e+00> : vector<8xf32>
    %10 = vector.multi_reduction <add>, %9, %cst_9 [0] : vector<128x8xf32> to vector<8xf32>
    %11 = vector.shape_cast %10 : vector<8xf32> to vector<1x8xf32>
    %12 = vector.shape_cast %11 : vector<1x8xf32> to vector<1x1x8xf32>
    %c0_10 = arith.constant 0 : index
    %c0_11 = arith.constant 0 : index
    %c0_12 = arith.constant 0 : index
    %13 = vector.load %arg5[%c0_10, %c0_11, %c0_12] : memref<1x1x8xf32, #tpu.memory_space<vmem>>, vector<1x1x8xf32>
    tpu.vector_store %arg5[%c0_10, %c0_11, %c0_12], %12 {strides = array<i32>} : memref<1x1x8xf32, #tpu.memory_space<vmem>>, vector<1x1x8xf32>,
    return
  }
  func.func @transform_0(%arg0: i32) -> (i32, i32) {
    %c0_i32 = arith.constant 0 : i32
    %c0_i32_0 = arith.constant 0 : i32
    return %arg0, %c0_i32 : i32, i32
  }
  func.func @transform_1(%arg0: i32) -> (i32, i32) {
    %c0_i32 = arith.constant 0 : i32
    %c0_i32_0 = arith.constant 0 : i32
    %c0_i32_1 = arith.constant 0 : i32
    return %c0_i32, %c0_i32_0 : i32, i32
  }
  func.func @transform_2(%arg0: i32) -> (i32, i32) {
    %c0_i32 = arith.constant 0 : i32
    %c0_i32_0 = arith.constant 0 : i32
    return %arg0, %c0_i32 : i32, i32
  }
  func.func @transform_3(%arg0: i32) -> (i32, i32, i32) {
    %c0_i32 = arith.constant 0 : i32
    %c0_i32_0 = arith.constant 0 : i32
    %c0_i32_1 = arith.constant 0 : i32
    return %arg0, %c0_i32, %c0_i32_0 : i32, i32, i32
  }
  func.func @transform_4(%arg0: i32) -> (i32, i32, i32) {
    %c0_i32 = arith.constant 0 : i32
    %c0_i32_0 = arith.constant 0 : i32
    %c0_i32_1 = arith.constant 0 : i32
    return %arg0, %c0_i32, %c0_i32_0 : i32, i32, i32
  }
}

module attributes {stable_mosaic.version = 11 : i64} {
  func.func @_matmul_stats_kernel(%arg0: i32, %arg1: memref<1024x324xbf16, #tpu.memory_space<vmem>>, %arg2: memref<324x4xbf16, #tpu.memory_space<vmem>>, %arg3: memref<1024x4xbf16, #tpu.memory_space<vmem>>, %arg4: memref<1x1x4xf32, #tpu.memory_space<vmem>>, %arg5: memref<1x1x4xf32, #tpu.memory_space<vmem>>) attributes {dimension_semantics = [#tpu.dimension_semantics<parallel>], iteration_bounds = array<i64: 1>, scalar_prefetch = 0 : i64, scratch_operands = 0 : i64, tpu.core_type = #tpu.core_type<tc>, window_params = [{transform_indices = @transform_0, window_bounds = array<i64: 1024, 324>}, {pipeline_mode = #tpu.pipeline_mode<synchronous>, transform_indices = @transform_1, window_bounds = array<i64: 324, 4>}, {transform_indices = @transform_2, window_bounds = array<i64: 1024, 4>}, {transform_indices = @transform_3, window_bounds = array<i64: 1, 1, 4>}, {transform_indices = @transform_4, window_bounds = array<i64: 1, 1, 4>}]} {
    %c0 = arith.constant 0 : index
    %c0_0 = arith.constant 0 : index
    %0 = vector.load %arg1[%c0, %c0_0] : memref<1024x324xbf16, #tpu.memory_space<vmem>>, vector<1024x324xbf16>
    %c0_1 = arith.constant 0 : index
    %c0_2 = arith.constant 0 : index
    %1 = vector.load %arg2[%c0_1, %c0_2] : memref<324x4xbf16, #tpu.memory_space<vmem>>, vector<324x4xbf16>
    %cst = arith.constant dense<0.000000e+00> : vector<1024x4xf32>
    %2 = tpu.matmul %0, %1, %cst {dimension_numbers = #tpu.dot_dimension_numbers<[1], [0], [0], [1], [0, 0, 1, 1], [], []>} : vector<1024x324xbf16>, vector<324x4xbf16>, vector<1024x4xf32> -> vector<1024x4xf32>
    %3 = arith.truncf %2 : vector<1024x4xf32> to vector<1024x4xbf16>
    %c0_3 = arith.constant 0 : index
    %c0_4 = arith.constant 0 : index
    %4 = vector.load %arg3[%c0_3, %c0_4] : memref<1024x4xbf16, #tpu.memory_space<vmem>>, vector<1024x4xbf16>
    tpu.vector_store %arg3[%c0_3, %c0_4], %3 {strides = array<i32>} : memref<1024x4xbf16, #tpu.memory_space<vmem>>, vector<1024x4xbf16>,
    %cst_5 = arith.constant dense<0.000000e+00> : vector<4xf32>
    %5 = vector.multi_reduction <add>, %2, %cst_5 [0] : vector<1024x4xf32> to vector<4xf32>
    %6 = vector.shape_cast %5 : vector<4xf32> to vector<1x4xf32>
    %7 = vector.shape_cast %6 : vector<1x4xf32> to vector<1x1x4xf32>
    %c0_6 = arith.constant 0 : index
    %c0_7 = arith.constant 0 : index
    %c0_8 = arith.constant 0 : index
    %8 = vector.load %arg4[%c0_6, %c0_7, %c0_8] : memref<1x1x4xf32, #tpu.memory_space<vmem>>, vector<1x1x4xf32>
    tpu.vector_store %arg4[%c0_6, %c0_7, %c0_8], %7 {strides = array<i32>} : memref<1x1x4xf32, #tpu.memory_space<vmem>>, vector<1x1x4xf32>,
    %9 = arith.mulf %2, %2 : vector<1024x4xf32>
    %cst_9 = arith.constant dense<0.000000e+00> : vector<4xf32>
    %10 = vector.multi_reduction <add>, %9, %cst_9 [0] : vector<1024x4xf32> to vector<4xf32>
    %11 = vector.shape_cast %10 : vector<4xf32> to vector<1x4xf32>
    %12 = vector.shape_cast %11 : vector<1x4xf32> to vector<1x1x4xf32>
    %c0_10 = arith.constant 0 : index
    %c0_11 = arith.constant 0 : index
    %c0_12 = arith.constant 0 : index
    %13 = vector.load %arg5[%c0_10, %c0_11, %c0_12] : memref<1x1x4xf32, #tpu.memory_space<vmem>>, vector<1x1x4xf32>
    tpu.vector_store %arg5[%c0_10, %c0_11, %c0_12], %12 {strides = array<i32>} : memref<1x1x4xf32, #tpu.memory_space<vmem>>, vector<1x1x4xf32>,
    return
  }
  func.func @transform_0(%arg0: i32) -> (i32, i32) {
    %c0_i32 = arith.constant 0 : i32
    %c0_i32_0 = arith.constant 0 : i32
    return %arg0, %c0_i32 : i32, i32
  }
  func.func @transform_1(%arg0: i32) -> (i32, i32) {
    %c0_i32 = arith.constant 0 : i32
    %c0_i32_0 = arith.constant 0 : i32
    %c0_i32_1 = arith.constant 0 : i32
    return %c0_i32, %c0_i32_0 : i32, i32
  }
  func.func @transform_2(%arg0: i32) -> (i32, i32) {
    %c0_i32 = arith.constant 0 : i32
    %c0_i32_0 = arith.constant 0 : i32
    return %arg0, %c0_i32 : i32, i32
  }
  func.func @transform_3(%arg0: i32) -> (i32, i32, i32) {
    %c0_i32 = arith.constant 0 : i32
    %c0_i32_0 = arith.constant 0 : i32
    %c0_i32_1 = arith.constant 0 : i32
    return %arg0, %c0_i32, %c0_i32_0 : i32, i32, i32
  }
  func.func @transform_4(%arg0: i32) -> (i32, i32, i32) {
    %c0_i32 = arith.constant 0 : i32
    %c0_i32_0 = arith.constant 0 : i32
    %c0_i32_1 = arith.constant 0 : i32
    return %arg0, %c0_i32, %c0_i32_0 : i32, i32, i32
  }
}

module attributes {stable_mosaic.version = 11 : i64} {
  func.func @_bn_relu_kernel(%arg0: i32, %arg1: memref<1024x4xbf16, #tpu.memory_space<vmem>>, %arg2: memref<1x4xf32, #tpu.memory_space<vmem>>, %arg3: memref<1x4xf32, #tpu.memory_space<vmem>>, %arg4: memref<1024x4xbf16, #tpu.memory_space<vmem>>) attributes {dimension_semantics = [#tpu.dimension_semantics<parallel>], iteration_bounds = array<i64: 1>, scalar_prefetch = 0 : i64, scratch_operands = 0 : i64, tpu.core_type = #tpu.core_type<tc>, window_params = [{transform_indices = @transform_0, window_bounds = array<i64: 1024, 4>}, {pipeline_mode = #tpu.pipeline_mode<synchronous>, transform_indices = @transform_1, window_bounds = array<i64: 1, 4>}, {pipeline_mode = #tpu.pipeline_mode<synchronous>, transform_indices = @transform_2, window_bounds = array<i64: 1, 4>}, {transform_indices = @transform_3, window_bounds = array<i64: 1024, 4>}]} {
    %c0 = arith.constant 0 : index
    %c0_0 = arith.constant 0 : index
    %0 = vector.load %arg1[%c0, %c0_0] : memref<1024x4xbf16, #tpu.memory_space<vmem>>, vector<1024x4xbf16>
    %1 = arith.extf %0 : vector<1024x4xbf16> to vector<1024x4xf32>
    %c0_1 = arith.constant 0 : index
    %c0_2 = arith.constant 0 : index
    %2 = vector.load %arg2[%c0_1, %c0_2] : memref<1x4xf32, #tpu.memory_space<vmem>>, vector<1x4xf32>
    %3 = vector.broadcast %2 : vector<1x4xf32> to vector<1024x4xf32>
    %4 = arith.mulf %1, %3 : vector<1024x4xf32>
    %c0_3 = arith.constant 0 : index
    %c0_4 = arith.constant 0 : index
    %5 = vector.load %arg3[%c0_3, %c0_4] : memref<1x4xf32, #tpu.memory_space<vmem>>, vector<1x4xf32>
    %6 = vector.broadcast %5 : vector<1x4xf32> to vector<1024x4xf32>
    %7 = arith.addf %4, %6 : vector<1024x4xf32>
    %cst = arith.constant 0.000000e+00 : f32
    %8 = vector.broadcast %cst : f32 to vector<1024x4xf32>
    %9 = arith.maximumf %7, %8 : vector<1024x4xf32>
    %10 = arith.truncf %9 : vector<1024x4xf32> to vector<1024x4xbf16>
    %c0_5 = arith.constant 0 : index
    %c0_6 = arith.constant 0 : index
    %11 = vector.load %arg4[%c0_5, %c0_6] : memref<1024x4xbf16, #tpu.memory_space<vmem>>, vector<1024x4xbf16>
    tpu.vector_store %arg4[%c0_5, %c0_6], %10 {strides = array<i32>} : memref<1024x4xbf16, #tpu.memory_space<vmem>>, vector<1024x4xbf16>,
    return
  }
  func.func @transform_0(%arg0: i32) -> (i32, i32) {
    %c0_i32 = arith.constant 0 : i32
    %c0_i32_0 = arith.constant 0 : i32
    return %arg0, %c0_i32 : i32, i32
  }
  func.func @transform_1(%arg0: i32) -> (i32, i32) {
    %c0_i32 = arith.constant 0 : i32
    %c0_i32_0 = arith.constant 0 : i32
    %c0_i32_1 = arith.constant 0 : i32
    return %c0_i32, %c0_i32_0 : i32, i32
  }
  func.func @transform_2(%arg0: i32) -> (i32, i32) {
    %c0_i32 = arith.constant 0 : i32
    %c0_i32_0 = arith.constant 0 : i32
    %c0_i32_1 = arith.constant 0 : i32
    return %c0_i32, %c0_i32_0 : i32, i32
  }
  func.func @transform_3(%arg0: i32) -> (i32, i32) {
    %c0_i32 = arith.constant 0 : i32
    %c0_i32_0 = arith.constant 0 : i32
    return %arg0, %c0_i32 : i32, i32
  }
}

module attributes {stable_mosaic.version = 11 : i64} {
  func.func @_matmul_stats_kernel(%arg0: i32, %arg1: memref<1024x108xbf16, #tpu.memory_space<vmem>>, %arg2: memref<108x4xbf16, #tpu.memory_space<vmem>>, %arg3: memref<1024x4xbf16, #tpu.memory_space<vmem>>, %arg4: memref<1x1x4xf32, #tpu.memory_space<vmem>>, %arg5: memref<1x1x4xf32, #tpu.memory_space<vmem>>) attributes {dimension_semantics = [#tpu.dimension_semantics<parallel>], iteration_bounds = array<i64: 1>, scalar_prefetch = 0 : i64, scratch_operands = 0 : i64, tpu.core_type = #tpu.core_type<tc>, window_params = [{transform_indices = @transform_0, window_bounds = array<i64: 1024, 108>}, {pipeline_mode = #tpu.pipeline_mode<synchronous>, transform_indices = @transform_1, window_bounds = array<i64: 108, 4>}, {transform_indices = @transform_2, window_bounds = array<i64: 1024, 4>}, {transform_indices = @transform_3, window_bounds = array<i64: 1, 1, 4>}, {transform_indices = @transform_4, window_bounds = array<i64: 1, 1, 4>}]} {
    %c0 = arith.constant 0 : index
    %c0_0 = arith.constant 0 : index
    %0 = vector.load %arg1[%c0, %c0_0] : memref<1024x108xbf16, #tpu.memory_space<vmem>>, vector<1024x108xbf16>
    %c0_1 = arith.constant 0 : index
    %c0_2 = arith.constant 0 : index
    %1 = vector.load %arg2[%c0_1, %c0_2] : memref<108x4xbf16, #tpu.memory_space<vmem>>, vector<108x4xbf16>
    %cst = arith.constant dense<0.000000e+00> : vector<1024x4xf32>
    %2 = tpu.matmul %0, %1, %cst {dimension_numbers = #tpu.dot_dimension_numbers<[1], [0], [0], [1], [0, 0, 1, 1], [], []>} : vector<1024x108xbf16>, vector<108x4xbf16>, vector<1024x4xf32> -> vector<1024x4xf32>
    %3 = arith.truncf %2 : vector<1024x4xf32> to vector<1024x4xbf16>
    %c0_3 = arith.constant 0 : index
    %c0_4 = arith.constant 0 : index
    %4 = vector.load %arg3[%c0_3, %c0_4] : memref<1024x4xbf16, #tpu.memory_space<vmem>>, vector<1024x4xbf16>
    tpu.vector_store %arg3[%c0_3, %c0_4], %3 {strides = array<i32>} : memref<1024x4xbf16, #tpu.memory_space<vmem>>, vector<1024x4xbf16>,
    %cst_5 = arith.constant dense<0.000000e+00> : vector<4xf32>
    %5 = vector.multi_reduction <add>, %2, %cst_5 [0] : vector<1024x4xf32> to vector<4xf32>
    %6 = vector.shape_cast %5 : vector<4xf32> to vector<1x4xf32>
    %7 = vector.shape_cast %6 : vector<1x4xf32> to vector<1x1x4xf32>
    %c0_6 = arith.constant 0 : index
    %c0_7 = arith.constant 0 : index
    %c0_8 = arith.constant 0 : index
    %8 = vector.load %arg4[%c0_6, %c0_7, %c0_8] : memref<1x1x4xf32, #tpu.memory_space<vmem>>, vector<1x1x4xf32>
    tpu.vector_store %arg4[%c0_6, %c0_7, %c0_8], %7 {strides = array<i32>} : memref<1x1x4xf32, #tpu.memory_space<vmem>>, vector<1x1x4xf32>,
    %9 = arith.mulf %2, %2 : vector<1024x4xf32>
    %cst_9 = arith.constant dense<0.000000e+00> : vector<4xf32>
    %10 = vector.multi_reduction <add>, %9, %cst_9 [0] : vector<1024x4xf32> to vector<4xf32>
    %11 = vector.shape_cast %10 : vector<4xf32> to vector<1x4xf32>
    %12 = vector.shape_cast %11 : vector<1x4xf32> to vector<1x1x4xf32>
    %c0_10 = arith.constant 0 : index
    %c0_11 = arith.constant 0 : index
    %c0_12 = arith.constant 0 : index
    %13 = vector.load %arg5[%c0_10, %c0_11, %c0_12] : memref<1x1x4xf32, #tpu.memory_space<vmem>>, vector<1x1x4xf32>
    tpu.vector_store %arg5[%c0_10, %c0_11, %c0_12], %12 {strides = array<i32>} : memref<1x1x4xf32, #tpu.memory_space<vmem>>, vector<1x1x4xf32>,
    return
  }
  func.func @transform_0(%arg0: i32) -> (i32, i32) {
    %c0_i32 = arith.constant 0 : i32
    %c0_i32_0 = arith.constant 0 : i32
    return %arg0, %c0_i32 : i32, i32
  }
  func.func @transform_1(%arg0: i32) -> (i32, i32) {
    %c0_i32 = arith.constant 0 : i32
    %c0_i32_0 = arith.constant 0 : i32
    %c0_i32_1 = arith.constant 0 : i32
    return %c0_i32, %c0_i32_0 : i32, i32
  }
  func.func @transform_2(%arg0: i32) -> (i32, i32) {
    %c0_i32 = arith.constant 0 : i32
    %c0_i32_0 = arith.constant 0 : i32
    return %arg0, %c0_i32 : i32, i32
  }
  func.func @transform_3(%arg0: i32) -> (i32, i32, i32) {
    %c0_i32 = arith.constant 0 : i32
    %c0_i32_0 = arith.constant 0 : i32
    %c0_i32_1 = arith.constant 0 : i32
    return %arg0, %c0_i32, %c0_i32_0 : i32, i32, i32
  }
  func.func @transform_4(%arg0: i32) -> (i32, i32, i32) {
    %c0_i32 = arith.constant 0 : i32
    %c0_i32_0 = arith.constant 0 : i32
    %c0_i32_1 = arith.constant 0 : i32
    return %arg0, %c0_i32, %c0_i32_0 : i32, i32, i32
  }
}

module attributes {stable_mosaic.version = 11 : i64} {
  func.func @_matmul_stats_kernel(%arg0: i32, %arg1: memref<1024x108xbf16, #tpu.memory_space<vmem>>, %arg2: memref<108x1xbf16, #tpu.memory_space<vmem>>, %arg3: memref<1024x1xbf16, #tpu.memory_space<vmem>>, %arg4: memref<1x1x1xf32, #tpu.memory_space<vmem>>, %arg5: memref<1x1x1xf32, #tpu.memory_space<vmem>>) attributes {dimension_semantics = [#tpu.dimension_semantics<parallel>], iteration_bounds = array<i64: 1>, scalar_prefetch = 0 : i64, scratch_operands = 0 : i64, tpu.core_type = #tpu.core_type<tc>, window_params = [{transform_indices = @transform_0, window_bounds = array<i64: 1024, 108>}, {pipeline_mode = #tpu.pipeline_mode<synchronous>, transform_indices = @transform_1, window_bounds = array<i64: 108, 1>}, {transform_indices = @transform_2, window_bounds = array<i64: 1024, 1>}, {transform_indices = @transform_3, window_bounds = array<i64: 1, 1, 1>}, {transform_indices = @transform_4, window_bounds = array<i64: 1, 1, 1>}]} {
    %c0 = arith.constant 0 : index
    %c0_0 = arith.constant 0 : index
    %0 = vector.load %arg1[%c0, %c0_0] : memref<1024x108xbf16, #tpu.memory_space<vmem>>, vector<1024x108xbf16>
    %c0_1 = arith.constant 0 : index
    %c0_2 = arith.constant 0 : index
    %1 = vector.load %arg2[%c0_1, %c0_2] : memref<108x1xbf16, #tpu.memory_space<vmem>>, vector<108x1xbf16>
    %cst = arith.constant dense<0.000000e+00> : vector<1024x1xf32>
    %2 = tpu.matmul %0, %1, %cst {dimension_numbers = #tpu.dot_dimension_numbers<[1], [0], [0], [1], [0, 0, 1, 1], [], []>} : vector<1024x108xbf16>, vector<108x1xbf16>, vector<1024x1xf32> -> vector<1024x1xf32>
    %3 = arith.truncf %2 : vector<1024x1xf32> to vector<1024x1xbf16>
    %c0_3 = arith.constant 0 : index
    %c0_4 = arith.constant 0 : index
    %4 = vector.load %arg3[%c0_3, %c0_4] : memref<1024x1xbf16, #tpu.memory_space<vmem>>, vector<1024x1xbf16>
    tpu.vector_store %arg3[%c0_3, %c0_4], %3 {strides = array<i32>} : memref<1024x1xbf16, #tpu.memory_space<vmem>>, vector<1024x1xbf16>,
    %cst_5 = arith.constant dense<0.000000e+00> : vector<1xf32>
    %5 = vector.multi_reduction <add>, %2, %cst_5 [0] : vector<1024x1xf32> to vector<1xf32>
    %6 = vector.shape_cast %5 : vector<1xf32> to vector<1x1xf32>
    %7 = vector.shape_cast %6 : vector<1x1xf32> to vector<1x1x1xf32>
    %c0_6 = arith.constant 0 : index
    %c0_7 = arith.constant 0 : index
    %c0_8 = arith.constant 0 : index
    %8 = vector.load %arg4[%c0_6, %c0_7, %c0_8] : memref<1x1x1xf32, #tpu.memory_space<vmem>>, vector<1x1x1xf32>
    tpu.vector_store %arg4[%c0_6, %c0_7, %c0_8], %7 {strides = array<i32>} : memref<1x1x1xf32, #tpu.memory_space<vmem>>, vector<1x1x1xf32>,
    %9 = arith.mulf %2, %2 : vector<1024x1xf32>
    %cst_9 = arith.constant dense<0.000000e+00> : vector<1xf32>
    %10 = vector.multi_reduction <add>, %9, %cst_9 [0] : vector<1024x1xf32> to vector<1xf32>
    %11 = vector.shape_cast %10 : vector<1xf32> to vector<1x1xf32>
    %12 = vector.shape_cast %11 : vector<1x1xf32> to vector<1x1x1xf32>
    %c0_10 = arith.constant 0 : index
    %c0_11 = arith.constant 0 : index
    %c0_12 = arith.constant 0 : index
    %13 = vector.load %arg5[%c0_10, %c0_11, %c0_12] : memref<1x1x1xf32, #tpu.memory_space<vmem>>, vector<1x1x1xf32>
    tpu.vector_store %arg5[%c0_10, %c0_11, %c0_12], %12 {strides = array<i32>} : memref<1x1x1xf32, #tpu.memory_space<vmem>>, vector<1x1x1xf32>,
    return
  }
  func.func @transform_0(%arg0: i32) -> (i32, i32) {
    %c0_i32 = arith.constant 0 : i32
    %c0_i32_0 = arith.constant 0 : i32
    return %arg0, %c0_i32 : i32, i32
  }
  func.func @transform_1(%arg0: i32) -> (i32, i32) {
    %c0_i32 = arith.constant 0 : i32
    %c0_i32_0 = arith.constant 0 : i32
    %c0_i32_1 = arith.constant 0 : i32
    return %c0_i32, %c0_i32_0 : i32, i32
  }
  func.func @transform_2(%arg0: i32) -> (i32, i32) {
    %c0_i32 = arith.constant 0 : i32
    %c0_i32_0 = arith.constant 0 : i32
    return %arg0, %c0_i32 : i32, i32
  }
  func.func @transform_3(%arg0: i32) -> (i32, i32, i32) {
    %c0_i32 = arith.constant 0 : i32
    %c0_i32_0 = arith.constant 0 : i32
    %c0_i32_1 = arith.constant 0 : i32
    return %arg0, %c0_i32, %c0_i32_0 : i32, i32, i32
  }
  func.func @transform_4(%arg0: i32) -> (i32, i32, i32) {
    %c0_i32 = arith.constant 0 : i32
    %c0_i32_0 = arith.constant 0 : i32
    %c0_i32_1 = arith.constant 0 : i32
    return %arg0, %c0_i32, %c0_i32_0 : i32, i32, i32
  }
}

module attributes {stable_mosaic.version = 11 : i64} {
  func.func @_bn_relu_kernel(%arg0: i32, %arg1: memref<1024x1xbf16, #tpu.memory_space<vmem>>, %arg2: memref<1x1xf32, #tpu.memory_space<vmem>>, %arg3: memref<1x1xf32, #tpu.memory_space<vmem>>, %arg4: memref<1024x1xf32, #tpu.memory_space<vmem>>) attributes {dimension_semantics = [#tpu.dimension_semantics<parallel>], iteration_bounds = array<i64: 1>, scalar_prefetch = 0 : i64, scratch_operands = 0 : i64, tpu.core_type = #tpu.core_type<tc>, window_params = [{transform_indices = @transform_0, window_bounds = array<i64: 1024, 1>}, {pipeline_mode = #tpu.pipeline_mode<synchronous>, transform_indices = @transform_1, window_bounds = array<i64: 1, 1>}, {pipeline_mode = #tpu.pipeline_mode<synchronous>, transform_indices = @transform_2, window_bounds = array<i64: 1, 1>}, {transform_indices = @transform_3, window_bounds = array<i64: 1024, 1>}]} {
    %c0 = arith.constant 0 : index
    %c0_0 = arith.constant 0 : index
    %0 = vector.load %arg1[%c0, %c0_0] : memref<1024x1xbf16, #tpu.memory_space<vmem>>, vector<1024x1xbf16>
    %1 = arith.extf %0 : vector<1024x1xbf16> to vector<1024x1xf32>
    %c0_1 = arith.constant 0 : index
    %c0_2 = arith.constant 0 : index
    %2 = vector.load %arg2[%c0_1, %c0_2] : memref<1x1xf32, #tpu.memory_space<vmem>>, vector<1x1xf32>
    %3 = vector.broadcast %2 : vector<1x1xf32> to vector<1024x1xf32>
    %4 = arith.mulf %1, %3 : vector<1024x1xf32>
    %c0_3 = arith.constant 0 : index
    %c0_4 = arith.constant 0 : index
    %5 = vector.load %arg3[%c0_3, %c0_4] : memref<1x1xf32, #tpu.memory_space<vmem>>, vector<1x1xf32>
    %6 = vector.broadcast %5 : vector<1x1xf32> to vector<1024x1xf32>
    %7 = arith.addf %4, %6 : vector<1024x1xf32>
    %cst = arith.constant 0.000000e+00 : f32
    %8 = vector.broadcast %cst : f32 to vector<1024x1xf32>
    %9 = arith.maximumf %7, %8 : vector<1024x1xf32>
    %c0_5 = arith.constant 0 : index
    %c0_6 = arith.constant 0 : index
    %10 = vector.load %arg4[%c0_5, %c0_6] : memref<1024x1xf32, #tpu.memory_space<vmem>>, vector<1024x1xf32>
    tpu.vector_store %arg4[%c0_5, %c0_6], %9 {strides = array<i32>} : memref<1024x1xf32, #tpu.memory_space<vmem>>, vector<1024x1xf32>,
    return
  }
  func.func @transform_0(%arg0: i32) -> (i32, i32) {
    %c0_i32 = arith.constant 0 : i32
    %c0_i32_0 = arith.constant 0 : i32
    return %arg0, %c0_i32 : i32, i32
  }
  func.func @transform_1(%arg0: i32) -> (i32, i32) {
    %c0_i32 = arith.constant 0 : i32
    %c0_i32_0 = arith.constant 0 : i32
    %c0_i32_1 = arith.constant 0 : i32
    return %c0_i32, %c0_i32_0 : i32, i32
  }
  func.func @transform_2(%arg0: i32) -> (i32, i32) {
    %c0_i32 = arith.constant 0 : i32
    %c0_i32_0 = arith.constant 0 : i32
    %c0_i32_1 = arith.constant 0 : i32
    return %c0_i32, %c0_i32_0 : i32, i32
  }
  func.func @transform_3(%arg0: i32) -> (i32, i32) {
    %c0_i32 = arith.constant 0 : i32
    %c0_i32_0 = arith.constant 0 : i32
    return %arg0, %c0_i32 : i32, i32
  }
}

</mosaic_0001>

<llo_original>
// kernel: refine_net_unet_forward.19
$region0: #{refine_net_unet_forward.19}
  #allocation0 [shape = 'u32[]', space=smem, size = 0x4, offset = 0x4, fixed_abs, tag = 'smem constant byte address 0x4 - core index']
  #allocation1 [shape = 'u32[72,128]{1,0:T(1,128)}', space=vmem, size = 0x9000, scoped, tag = 'internal scratch']
  %s0 = inlined_call_operand.vmem [shape: bf16[128,8], index: 0, kind: input, shape index: {}]
  %s1 = inlined_call_operand.vmem [shape: f32[1,8], index: 1, kind: input, shape index: {}]
  %s2 = inlined_call_operand.vmem [shape: f32[1,8], index: 2, kind: input, shape index: {}]
  %s3 = inlined_call_operand.vmem [shape: bf16[128,8], index: 3, kind: output, shape index: {}]
  %s4 = sld [smem:[#allocation0]]
  $region22: #{refine_net_unet_forward.19} parent=0
    _
  %s6 = ssub.s32 1, %s4
  %s7 = scalar_select 0, %s6, %s4
  // Predicated region
  $region2: #{refine_net_unet_forward.19} parent=0 // pred_check
    _
  $region3: #{refine_net_unet_forward.19} parent=0 // pred_check_branch
    %9 = sbr.rel (0) target = $region5
  $region4: #{refine_net_unet_forward.19} parent=0 // pred_region
    _
  $region5: #{refine_net_unet_forward.19} parent=0 // pred_fallthru
    _
  // Predicated region
  $region6: #{refine_net_unet_forward.19} parent=0 // pred_check
    _
  $region7: #{refine_net_unet_forward.19} parent=0 // pred_check_branch
    %11 = sbr.rel (0) target = $region9
  $region8: #{refine_net_unet_forward.19} parent=0 // pred_region
    _
  $region9: #{refine_net_unet_forward.19} parent=0 // pred_fallthru
    _
  // Predicated region
  $region10: #{refine_net_unet_forward.19} parent=0 // pred_check
    _
  $region11: #{refine_net_unet_forward.19} parent=0 // pred_check_branch
    %13 = sbr.rel (0) target = $region13
  $region12: #{refine_net_unet_forward.19} parent=0 // pred_region
    _
  $region13: #{refine_net_unet_forward.19} parent=0 // pred_fallthru
    _
  %v14 = vld [vmem:[%s0] sm:$0xf]
  %v15 = vld [vmem:[%s0 + $0x4] sm:$0xf]
  %v16 = vld [vmem:[%s0 + $0x8] sm:$0xf]
  %v17 = vld [vmem:[%s0 + $0xc] sm:$0xf]
  %v18 = vld [vmem:[%s0 + $0x10] sm:$0xf]
  %v19 = vld [vmem:[%s0 + $0x14] sm:$0xf]
  %v20 = vld [vmem:[%s0 + $0x18] sm:$0xf]
  %v21 = vld [vmem:[%s0 + $0x1c] sm:$0xf]
  %v22 = vld [vmem:[%s0 + $0x20] sm:$0xf]
  %v23 = vld [vmem:[%s0 + $0x24] sm:$0xf]
  %v24 = vld [vmem:[%s0 + $0x28] sm:$0xf]
  %v25 = vld [vmem:[%s0 + $0x2c] sm:$0xf]
  %v26 = vld [vmem:[%s0 + $0x30] sm:$0xf]
  %v27 = vld [vmem:[%s0 + $0x34] sm:$0xf]
  %v28 = vld [vmem:[%s0 + $0x38] sm:$0xf]
  %v29 = vld [vmem:[%s0 + $0x3c] sm:$0xf]
  %v30 = vunpack.c.l.bf16 %v14
  %v31 = vunpack.c.l.bf16 %v15
  %v32 = vunpack.c.l.bf16 %v16
  %v33 = vunpack.c.l.bf16 %v17
  %v34 = vunpack.c.l.bf16 %v18
  %v35 = vunpack.c.l.bf16 %v19
  %v36 = vunpack.c.l.bf16 %v20
  %v37 = vunpack.c.l.bf16 %v21
  %v38 = vunpack.c.l.bf16 %v22
  %v39 = vunpack.c.l.bf16 %v23
  %v40 = vunpack.c.l.bf16 %v24
  %v41 = vunpack.c.l.bf16 %v25
  %v42 = vunpack.c.l.bf16 %v26
  %v43 = vunpack.c.l.bf16 %v27
  %v44 = vunpack.c.l.bf16 %v28
  %v45 = vunpack.c.l.bf16 %v29
  %v46 = vld [vmem:[%s1] sm:$0x1]
  %v48 = vperm.slane %v46, 0
  %v50 = vmul.f32 %v30, %v48
  %v51 = vmul.f32 %v31, %v48
  %v52 = vmul.f32 %v32, %v48
  %v53 = vmul.f32 %v33, %v48
  %v54 = vmul.f32 %v34, %v48
  %v55 = vmul.f32 %v35, %v48
  %v56 = vmul.f32 %v36, %v48
  %v57 = vmul.f32 %v37, %v48
  %v58 = vmul.f32 %v38, %v48
  %v59 = vmul.f32 %v39, %v48
  %v60 = vmul.f32 %v40, %v48
  %v61 = vmul.f32 %v41, %v48
  %v62 = vmul.f32 %v42, %v48
  %v63 = vmul.f32 %v43, %v48
  %v64 = vmul.f32 %v44, %v48
  %v65 = vmul.f32 %v45, %v48
  %v66 = vld [vmem:[%s2] sm:$0x1]
  %v68 = vperm.slane %v66, 0
  %v70 = vadd.f32 %v50, %v68
  %v71 = vadd.f32 %v51, %v68
  %v72 = vadd.f32 %v52, %v68
  %v73 = vadd.f32 %v53, %v68
  %v74 = vadd.f32 %v54, %v68
  %v75 = vadd.f32 %v55, %v68
  %v76 = vadd.f32 %v56, %v68
  %v77 = vadd.f32 %v57, %v68
  %v78 = vadd.f32 %v58, %v68
  %v79 = vadd.f32 %v59, %v68
  %v80 = vadd.f32 %v60, %v68
  %v81 = vadd.f32 %v61, %v68
  %v82 = vadd.f32 %v62, %v68
  %v83 = vadd.f32 %v63, %v68
  %v84 = vadd.f32 %v64, %v68
  %v85 = vadd.f32 %v65, %v68
  %v86 = vmax.f32 %v70, 0.0
  %v87 = vmax.f32 %v71, 0.0
  %v88 = vmax.f32 %v72, 0.0
  %v89 = vmax.f32 %v73, 0.0
  %v90 = vmax.f32 %v74, 0.0
  %v91 = vmax.f32 %v75, 0.0
  %v92 = vmax.f32 %v76, 0.0
  %v93 = vmax.f32 %v77, 0.0
  %v94 = vmax.f32 %v78, 0.0
  %v95 = vmax.f32 %v79, 0.0
  %v96 = vmax.f32 %v80, 0.0
  %v97 = vmax.f32 %v81, 0.0
  %v98 = vmax.f32 %v82, 0.0
  %v99 = vmax.f32 %v83, 0.0
  %v100 = vmax.f32 %v84, 0.0
  %v101 = vmax.f32 %v85, 0.0
  %v102 = vpack.c.bf16 %v86, %v86
  %v103 = vpack.c.bf16 %v87, %v87
  %v104 = vpack.c.bf16 %v88, %v88
  %v105 = vpack.c.bf16 %v89, %v89
  %v106 = vpack.c.bf16 %v90, %v90
  %v107 = vpack.c.bf16 %v91, %v91
  %v108 = vpack.c.bf16 %v92, %v92
  %v109 = vpack.c.bf16 %v93, %v93
  %v110 = vpack.c.bf16 %v94, %v94
  %v111 = vpack.c.bf16 %v95, %v95
  %v112 = vpack.c.bf16 %v96, %v96
  %v113 = vpack.c.bf16 %v97, %v97
  %v114 = vpack.c.bf16 %v98, %v98
  %v115 = vpack.c.bf16 %v99, %v99
  %v116 = vpack.c.bf16 %v100, %v100
  %v117 = vpack.c.bf16 %v101, %v101
  %vm118 = vcmask 60416
  %119 = vst.msk [vmem:[%s3] sm:$0xf] %vm118, %v102
  %120 = vst.msk [vmem:[%s3 + $0x4] sm:$0xf] %vm118, %v103
  %121 = vst.msk [vmem:[%s3 + $0x8] sm:$0xf] %vm118, %v104
  %122 = vst.msk [vmem:[%s3 + $0xc] sm:$0xf] %vm118, %v105
  %123 = vst.msk [vmem:[%s3 + $0x10] sm:$0xf] %vm118, %v106
  %124 = vst.msk [vmem:[%s3 + $0x14] sm:$0xf] %vm118, %v107
  %125 = vst.msk [vmem:[%s3 + $0x18] sm:$0xf] %vm118, %v108
  %126 = vst.msk [vmem:[%s3 + $0x1c] sm:$0xf] %vm118, %v109
  %127 = vst.msk [vmem:[%s3 + $0x20] sm:$0xf] %vm118, %v110
  %128 = vst.msk [vmem:[%s3 + $0x24] sm:$0xf] %vm118, %v111
  %129 = vst.msk [vmem:[%s3 + $0x28] sm:$0xf] %vm118, %v112
  %130 = vst.msk [vmem:[%s3 + $0x2c] sm:$0xf] %vm118, %v113
  %131 = vst.msk [vmem:[%s3 + $0x30] sm:$0xf] %vm118, %v114
  %132 = vst.msk [vmem:[%s3 + $0x34] sm:$0xf] %vm118, %v115
  %133 = vst.msk [vmem:[%s3 + $0x38] sm:$0xf] %vm118, %v116
  %134 = vst.msk [vmem:[%s3 + $0x3c] sm:$0xf] %vm118, %v117
  // Predicated region
  $region14: #{refine_net_unet_forward.19} parent=0 // pred_check
    _
  $region15: #{refine_net_unet_forward.19} parent=0 // pred_check_branch
    %136 = sbr.rel (0) target = $region17
  $region16: #{refine_net_unet_forward.19} parent=0 // pred_region
    _
  $region17: #{refine_net_unet_forward.19} parent=0 // pred_fallthru
    _
  // Predicated region
  $region18: #{refine_net_unet_forward.19} parent=0 // pred_check
    _
  $region19: #{refine_net_unet_forward.19} parent=0 // pred_check_branch
    %138 = sbr.rel (0) target = $region21
  $region20: #{refine_net_unet_forward.19} parent=0 // pred_region
    _
  $region21: #{refine_net_unet_forward.19} parent=0 // pred_fallthru
    _

// kernel: refine_net_unet_forward.18
$region0: #{refine_net_unet_forward.18}
  #allocation0 [shape = 'u32[]', space=smem, size = 0x4, offset = 0x4, fixed_abs, tag = 'smem constant byte address 0x4 - core index']
  #allocation1 [shape = 'u32[72,128]{1,0:T(1,128)}', space=vmem, size = 0x9000, scoped, tag = 'internal scratch']
  %s0 = inlined_call_operand.vmem [shape: bf16[128,108], index: 0, kind: input, shape index: {}]
  %s1 = inlined_call_operand.vmem [shape: bf16[108,8], index: 1, kind: input, shape index: {}]
  %s2 = inlined_call_operand.vmem [shape: bf16[128,8], index: 2, kind: output, shape index: {0}]
  %s3 = inlined_call_operand.vmem [shape: f32[1,1,8], index: 3, kind: output, shape index: {1}]
  %s4 = inlined_call_operand.vmem [shape: f32[1,1,8], index: 4, kind: output, shape index: {2}]
  %5 = xla_tuple %s2, %s3, %s4
  %s6 = sld [smem:[#allocation0]]
  $region34: #{refine_net_unet_forward.18} parent=0
    _
  %s8 = ssub.s32 1, %s6
  %s9 = scalar_select 0, %s8, %s6
  // Predicated region
  $region2: #{refine_net_unet_forward.18} parent=0 // pred_check
    _
  $region3: #{refine_net_unet_forward.18} parent=0 // pred_check_branch
    %11 = sbr.rel (0) target = $region5
  $region4: #{refine_net_unet_forward.18} parent=0 // pred_region
    _
  $region5: #{refine_net_unet_forward.18} parent=0 // pred_fallthru
    _
  // Predicated region
  $region6: #{refine_net_unet_forward.18} parent=0 // pred_check
    _
  $region7: #{refine_net_unet_forward.18} parent=0 // pred_check_branch
    %13 = sbr.rel (0) target = $region9
  $region8: #{refine_net_unet_forward.18} parent=0 // pred_region
    _
  $region9: #{refine_net_unet_forward.18} parent=0 // pred_fallthru
    _
  %v15 = vld [vmem:[%s0] sm:$0xf]
  %v16 = vld [vmem:[%s0 + $0x4] sm:$0xf]
  %v17 = vld [vmem:[%s0 + $0x8] sm:$0xf]
  %v18 = vld [vmem:[%s0 + $0xc] sm:$0xf]
  %v19 = vld [vmem:[%s0 + $0x10] sm:$0xf]
  %v20 = vld [vmem:[%s0 + $0x14] sm:$0xf]
  %v21 = vld [vmem:[%s0 + $0x18] sm:$0xf]
  %v22 = vld [vmem:[%s0 + $0x1c] sm:$0xf]
  %v23 = vld [vmem:[%s0 + $0x20] sm:$0xf]
  %v24 = vld [vmem:[%s0 + $0x24] sm:$0xf]
  %v25 = vld [vmem:[%s0 + $0x28] sm:$0xf]
  %v26 = vld [vmem:[%s0 + $0x2c] sm:$0xf]
  %v27 = vld [vmem:[%s0 + $0x30] sm:$0xf]
  %v28 = vld [vmem:[%s0 + $0x34] sm:$0xf]
  %v29 = vld [vmem:[%s0 + $0x38] sm:$0xf]
  %v30 = vld [vmem:[%s0 + $0x3c] sm:$0xf]
  %v31 = vld [vmem:[%s1] sm:$0xf]
  %v32 = vld [vmem:[%s1 + $0x4] sm:$0xf]
  %v33 = vld [vmem:[%s1 + $0x8] sm:$0xf]
  %v34 = vld [vmem:[%s1 + $0xc] sm:$0xf]
  %v35 = vld [vmem:[%s1 + $0x10] sm:$0xf]
  %v36 = vld [vmem:[%s1 + $0x14] sm:$0xf]
  %v37 = vld [vmem:[%s1 + $0x18] sm:$0xf]
  %v38 = vld [vmem:[%s1 + $0x1c] sm:$0xf]
  %v39 = vld [vmem:[%s1 + $0x20] sm:$0xf]
  %v40 = vld [vmem:[%s1 + $0x24] sm:$0xf]
  %v41 = vld [vmem:[%s1 + $0x28] sm:$0xf]
  %v42 = vld [vmem:[%s1 + $0x2c] sm:$0xf]
  %v43 = vld [vmem:[%s1 + $0x30] sm:$0xf]
  %v44 = vld [vmem:[%s1 + $0x34] sm:$0x3]
  %v61 = vunpack.c.l.b16 %v15
  %v62 = vunpack.c.l.b16 %v16
  %v63 = vunpack.c.l.b16 %v17
  %v64 = vunpack.c.l.b16 %v18
  %v65 = vunpack.c.l.b16 %v19
  %v66 = vunpack.c.l.b16 %v20
  %v67 = vunpack.c.l.b16 %v21
  %v68 = vunpack.c.l.b16 %v22
  %v69 = vunpack.c.l.b16 %v23
  %v70 = vunpack.c.l.b16 %v24
  %v71 = vunpack.c.l.b16 %v25
  %v72 = vunpack.c.l.b16 %v26
  %v73 = vunpack.c.l.b16 %v27
  %v74 = vunpack.c.l.b16 %v28
  %v75 = vunpack.c.l.b16 %v29
  %v76 = vunpack.c.l.b16 %v30
  %v77 = vpack.c.b16 %v62, %v61
  %v78 = vpack.c.b16 %v64, %v63
  %v79 = vpack.c.b16 %v66, %v65
  %v80 = vpack.c.b16 %v68, %v67
  %v81 = vpack.c.b16 %v70, %v69
  %v82 = vpack.c.b16 %v72, %v71
  %v83 = vpack.c.b16 %v74, %v73
  %v84 = vpack.c.b16 %v76, %v75
  %v99 = vunpack.c.l.b16 %v31
  %v100 = vunpack.c.l.b16 %v32
  %v101 = vunpack.c.l.b16 %v33
  %v102 = vunpack.c.l.b16 %v34
  %v103 = vunpack.c.l.b16 %v35
  %v104 = vunpack.c.l.b16 %v36
  %v105 = vunpack.c.l.b16 %v37
  %v106 = vunpack.c.l.b16 %v38
  %v107 = vunpack.c.l.b16 %v39
  %v108 = vunpack.c.l.b16 %v40
  %v109 = vunpack.c.l.b16 %v41
  %v110 = vunpack.c.l.b16 %v42
  %v111 = vunpack.c.l.b16 %v43
  %v112 = vunpack.c.l.b16 %v44
  %v113 = vpack.c.b16 %v100, %v99
  %v114 = vpack.c.b16 %v102, %v101
  %v115 = vpack.c.b16 %v104, %v103
  %v116 = vpack.c.b16 %v106, %v105
  %v117 = vpack.c.b16 %v108, %v107
  %v118 = vpack.c.b16 %v110, %v109
  %v119 = vpack.c.b16 %v112, %v111
  %vm126 = vcmask 883712
  %v128 = vsel %vm126, %v77, 0
  %v131 = vsel %vm126, %v78, 0
  %v134 = vsel %vm126, %v79, 0
  %v137 = vsel %vm126, %v80, 0
  %v140 = vsel %vm126, %v81, 0
  %v143 = vsel %vm126, %v82, 0
  %v146 = vsel %vm126, %v83, 0
  %v149 = vsel %vm126, %v84, 0
  %vm151 = vcmask 1045504
  %v153 = vsel %vm151, %v119, 0
  %155 = vmatpush.bf16.msra.mxu0 0
  %156 = vmatpush.bf16.msra.mxu0 %v153
  %157 = vmatpush.bf16.msra.mxu0 %v118
  %158 = vmatpush.bf16.msra.mxu0 %v117
  %159 = vmatpush.bf16.msra.mxu0 %v116
  %160 = vmatpush.bf16.msra.mxu0 %v115
  %161 = vmatpush.bf16.msra.mxu0 %v114
  %162 = vmatpush.bf16.msra.mxu0 %v113
  %163 = vmatmul.bf16.gmra.mxu0 %v128
  %v164 = vpop.f32.mrf.mxu0
  %v165 = vadd.f32 0.0, %v164
  %v166 = vpop.f32.mrf.mxu0
  %v167 = vadd.f32 0.0, %v166
  %168 = vmatmul.bf16.gmra.mxu0 %v131
  %v169 = vpop.f32.mrf.mxu0
  %v170 = vadd.f32 0.0, %v169
  %v171 = vpop.f32.mrf.mxu0
  %v172 = vadd.f32 0.0, %v171
  %173 = vmatmul.bf16.gmra.mxu0 %v134
  %v174 = vpop.f32.mrf.mxu0
  %v175 = vadd.f32 0.0, %v174
  %v176 = vpop.f32.mrf.mxu0
  %v177 = vadd.f32 0.0, %v176
  %178 = vmatmul.bf16.gmra.mxu0 %v137
  %v179 = vpop.f32.mrf.mxu0
  %v180 = vadd.f32 0.0, %v179
  %v181 = vpop.f32.mrf.mxu0
  %v182 = vadd.f32 0.0, %v181
  %183 = vmatmul.bf16.gmra.mxu0 %v140
  %v184 = vpop.f32.mrf.mxu0
  %v185 = vadd.f32 0.0, %v184
  %v186 = vpop.f32.mrf.mxu0
  %v187 = vadd.f32 0.0, %v186
  %188 = vmatmul.bf16.gmra.mxu0 %v143
  %v189 = vpop.f32.mrf.mxu0
  %v190 = vadd.f32 0.0, %v189
  %v191 = vpop.f32.mrf.mxu0
  %v192 = vadd.f32 0.0, %v191
  %193 = vmatmul.bf16.gmra.mxu0 %v146
  %v194 = vpop.f32.mrf.mxu0
  %v195 = vadd.f32 0.0, %v194
  %v196 = vpop.f32.mrf.mxu0
  %v197 = vadd.f32 0.0, %v196
  %198 = vmatmul.bf16.gmra.mxu0 %v149
  %v199 = vpop.f32.mrf.mxu0
  %v200 = vadd.f32 0.0, %v199
  %v201 = vpop.f32.mrf.mxu0
  %v202 = vadd.f32 0.0, %v201
  %203 = vdwg.mxu0
  %v204 = vpack.c.bf16 %v165, %v165
  %v205 = vpack.c.bf16 %v167, %v167
  %v206 = vpack.c.bf16 %v170, %v170
  %v207 = vpack.c.bf16 %v172, %v172
  %v208 = vpack.c.bf16 %v175, %v175
  %v209 = vpack.c.bf16 %v177, %v177
  %v210 = vpack.c.bf16 %v180, %v180
  %v211 = vpack.c.bf16 %v182, %v182
  %v212 = vpack.c.bf16 %v185, %v185
  %v213 = vpack.c.bf16 %v187, %v187
  %v214 = vpack.c.bf16 %v190, %v190
  %v215 = vpack.c.bf16 %v192, %v192
  %v216 = vpack.c.bf16 %v195, %v195
  %v217 = vpack.c.bf16 %v197, %v197
  %v218 = vpack.c.bf16 %v200, %v200
  %v219 = vpack.c.bf16 %v202, %v202
  %vm220 = vcmask 60416
  %221 = vst.msk [vmem:[%s2] sm:$0xf] %vm220, %v204
  %222 = vst.msk [vmem:[%s2 + $0x4] sm:$0xf] %vm220, %v205
  %223 = vst.msk [vmem:[%s2 + $0x8] sm:$0xf] %vm220, %v206
  %224 = vst.msk [vmem:[%s2 + $0xc] sm:$0xf] %vm220, %v207
  %225 = vst.msk [vmem:[%s2 + $0x10] sm:$0xf] %vm220, %v208
  %226 = vst.msk [vmem:[%s2 + $0x14] sm:$0xf] %vm220, %v209
  %227 = vst.msk [vmem:[%s2 + $0x18] sm:$0xf] %vm220, %v210
  %228 = vst.msk [vmem:[%s2 + $0x1c] sm:$0xf] %vm220, %v211
  %229 = vst.msk [vmem:[%s2 + $0x20] sm:$0xf] %vm220, %v212
  %230 = vst.msk [vmem:[%s2 + $0x24] sm:$0xf] %vm220, %v213
  %231 = vst.msk [vmem:[%s2 + $0x28] sm:$0xf] %vm220, %v214
  %232 = vst.msk [vmem:[%s2 + $0x2c] sm:$0xf] %vm220, %v215
  %233 = vst.msk [vmem:[%s2 + $0x30] sm:$0xf] %vm220, %v216
  %234 = vst.msk [vmem:[%s2 + $0x34] sm:$0xf] %vm220, %v217
  %235 = vst.msk [vmem:[%s2 + $0x38] sm:$0xf] %vm220, %v218
  %236 = vst.msk [vmem:[%s2 + $0x3c] sm:$0xf] %vm220, %v219
  %vm237 = vcmask 64512
  %v238 = vsel %vm237, %v165, 0.0
  %v239 = vsel %vm237, %v167, 0.0
  %v240 = vadd.f32 %v238, %v239
  %v241 = vsel %vm237, %v170, 0.0
  %v242 = vadd.f32 %v240, %v241
  %v243 = vsel %vm237, %v172, 0.0
  %v244 = vadd.f32 %v242, %v243
  %v245 = vsel %vm237, %v175, 0.0
  %v246 = vadd.f32 %v244, %v245
  %v247 = vsel %vm237, %v177, 0.0
  %v248 = vadd.f32 %v246, %v247
  %v249 = vsel %vm237, %v180, 0.0
  %v250 = vadd.f32 %v248, %v249
  %v251 = vsel %vm237, %v182, 0.0
  %v252 = vadd.f32 %v250, %v251
  %v253 = vsel %vm237, %v185, 0.0
  %v254 = vadd.f32 %v252, %v253
  %v255 = vsel %vm237, %v187, 0.0
  %v256 = vadd.f32 %v254, %v255
  %v257 = vsel %vm237, %v190, 0.0
  %v258 = vadd.f32 %v256, %v257
  %v259 = vsel %vm237, %v192, 0.0
  %v260 = vadd.f32 %v258, %v259
  %v261 = vsel %vm237, %v195, 0.0
  %v262 = vadd.f32 %v260, %v261
  %v263 = vsel %vm237, %v197, 0.0
  %v264 = vadd.f32 %v262, %v263
  %v265 = vsel %vm237, %v200, 0.0
  %v266 = vadd.f32 %v264, %v265
  %v267 = vsel %vm237, %v202, 0.0
  %v268 = vadd.f32 %v266, %v267
  %v269 = vrot.slane %v268, 4
  %v270 = vadd.f32 %v268, %v269
  %v271 = vrot.slane %v270, 2
  %v272 = vadd.f32 %v270, %v271
  %v273 = vrot.slane %v272, 1
  %v274 = vadd.f32 %v272, %v273
  %vm275 = vcmask 57344
  %276 = vst.msk [vmem:[%s3] sm:$0x1] %vm275, %v274
  %v277 = vmul.f32 %v165, %v165
  %v278 = vmul.f32 %v167, %v167
  %v279 = vmul.f32 %v170, %v170
  %v280 = vmul.f32 %v172, %v172
  %v281 = vmul.f32 %v175, %v175
  %v282 = vmul.f32 %v177, %v177
  %v283 = vmul.f32 %v180, %v180
  %v284 = vmul.f32 %v182, %v182
  %v285 = vmul.f32 %v185, %v185
  %v286 = vmul.f32 %v187, %v187
  %v287 = vmul.f32 %v190, %v190
  %v288 = vmul.f32 %v192, %v192
  %v289 = vmul.f32 %v195, %v195
  %v290 = vmul.f32 %v197, %v197
  %v291 = vmul.f32 %v200, %v200
  %v292 = vmul.f32 %v202, %v202
  %v293 = vsel %vm237, %v277, 0.0
  %v294 = vsel %vm237, %v278, 0.0
  %v295 = vadd.f32 %v293, %v294
  %v296 = vsel %vm237, %v279, 0.0
  %v297 = vadd.f32 %v295, %v296
  %v298 = vsel %vm237, %v280, 0.0
  %v299 = vadd.f32 %v297, %v298
  %v300 = vsel %vm237, %v281, 0.0
  %v301 = vadd.f32 %v299, %v300
  %v302 = vsel %vm237, %v282, 0.0
  %v303 = vadd.f32 %v301, %v302
  %v304 = vsel %vm237, %v283, 0.0
  %v305 = vadd.f32 %v303, %v304
  %v306 = vsel %vm237, %v284, 0.0
  %v307 = vadd.f32 %v305, %v306
  %v308 = vsel %vm237, %v285, 0.0
  %v309 = vadd.f32 %v307, %v308
  %v310 = vsel %vm237, %v286, 0.0
  %v311 = vadd.f32 %v309, %v310
  %v312 = vsel %vm237, %v287, 0.0
  %v313 = vadd.f32 %v311, %v312
  %v314 = vsel %vm237, %v288, 0.0
  %v315 = vadd.f32 %v313, %v314
  %v316 = vsel %vm237, %v289, 0.0
  %v317 = vadd.f32 %v315, %v316
  %v318 = vsel %vm237, %v290, 0.0
  %v319 = vadd.f32 %v317, %v318
  %v320 = vsel %vm237, %v291, 0.0
  %v321 = vadd.f32 %v319, %v320
  %v322 = vsel %vm237, %v292, 0.0
  %v323 = vadd.f32 %v321, %v322
  %v324 = vrot.slane %v323, 4
  %v325 = vadd.f32 %v323, %v324
  %v326 = vrot.slane %v325, 2
  %v327 = vadd.f32 %v325, %v326
  %v328 = vrot.slane %v327, 1
  %v329 = vadd.f32 %v327, %v328
  %330 = vst.msk [vmem:[%s4] sm:$0x1] %vm275, %v329
  // Predicated region
  $region10: #{refine_net_unet_forward.18} parent=0 // pred_check
    _
  $region11: #{refine_net_unet_forward.18} parent=0 // pred_check_branch
    %332 = sbr.rel (0) target = $region13
  $region12: #{refine_net_unet_forward.18} parent=0 // pred_region
    _
  $region13: #{refine_net_unet_forward.18} parent=0 // pred_fallthru
    _
  // Predicated region
  $region14: #{refine_net_unet_forward.18} parent=0 // pred_check
    _
  $region15: #{refine_net_unet_forward.18} parent=0 // pred_check_branch
    %334 = sbr.rel (0) target = $region17
  $region16: #{refine_net_unet_forward.18} parent=0 // pred_region
    _
  $region17: #{refine_net_unet_forward.18} parent=0 // pred_fallthru
    _
  // Predicated region
  $region18: #{refine_net_unet_forward.18} parent=0 // pred_check
    _
  $region19: #{refine_net_unet_forward.18} parent=0 // pred_check_branch
    %336 = sbr.rel (0) target = $region21
  $region20: #{refine_net_unet_forward.18} parent=0 // pred_region
    _
  $region21: #{refine_net_unet_forward.18} parent=0 // pred_fallthru
    _
  // Predicated region
  $region22: #{refine_net_unet_forward.18} parent=0 // pred_check
    _
  $region23: #{refine_net_unet_forward.18} parent=0 // pred_check_branch
    %338 = sbr.rel (0) target = $region25
  $region24: #{refine_net_unet_forward.18} parent=0 // pred_region
    _
  $region25: #{refine_net_unet_forward.18} parent=0 // pred_fallthru
    _
  // Predicated region
  $region26: #{refine_net_unet_forward.18} parent=0 // pred_check
    _
  $region27: #{refine_net_unet_forward.18} parent=0 // pred_check_branch
    %340 = sbr.rel (0) target = $region29
  $region28: #{refine_net_unet_forward.18} parent=0 // pred_region
    _
  $region29: #{refine_net_unet_forward.18} parent=0 // pred_fallthru
    _
  // Predicated region
  $region30: #{refine_net_unet_forward.18} parent=0 // pred_check
    _
  $region31: #{refine_net_unet_forward.18} parent=0 // pred_check_branch
    %342 = sbr.rel (0) target = $region33
  $region32: #{refine_net_unet_forward.18} parent=0 // pred_region
    _
  $region33: #{refine_net_unet_forward.18} parent=0 // pred_fallthru
    _

// kernel: refine_net_unet_forward.20
$region0: #{refine_net_unet_forward.20}
  #allocation0 [shape = 'u32[]', space=smem, size = 0x4, offset = 0x4, fixed_abs, tag = 'smem constant byte address 0x4 - core index']
  #allocation1 [shape = 'u32[72,128]{1,0:T(1,128)}', space=vmem, size = 0x9000, scoped, tag = 'internal scratch']
  %s0 = inlined_call_operand.vmem [shape: bf16[128,216], index: 0, kind: input, shape index: {}]
  %s1 = inlined_call_operand.vmem [shape: bf16[216,8], index: 1, kind: input, shape index: {}]
  %s2 = inlined_call_operand.vmem [shape: bf16[128,8], index: 2, kind: output, shape index: {0}]
  %s3 = inlined_call_operand.vmem [shape: f32[1,1,8], index: 3, kind: output, shape index: {1}]
  %s4 = inlined_call_operand.vmem [shape: f32[1,1,8], index: 4, kind: output, shape index: {2}]
  %5 = xla_tuple %s2, %s3, %s4
  %s6 = sld [smem:[#allocation0]]
  $region34: #{refine_net_unet_forward.20} parent=0
    _
  %s8 = ssub.s32 1, %s6
  %s9 = scalar_select 0, %s8, %s6
  // Predicated region
  $region2: #{refine_net_unet_forward.20} parent=0 // pred_check
    _
  $region3: #{refine_net_unet_forward.20} parent=0 // pred_check_branch
    %11 = sbr.rel (0) target = $region5
  $region4: #{refine_net_unet_forward.20} parent=0 // pred_region
    _
  $region5: #{refine_net_unet_forward.20} parent=0 // pred_fallthru
    _
  // Predicated region
  $region6: #{refine_net_unet_forward.20} parent=0 // pred_check
    _
  $region7: #{refine_net_unet_forward.20} parent=0 // pred_check_branch
    %13 = sbr.rel (0) target = $region9
  $region8: #{refine_net_unet_forward.20} parent=0 // pred_region
    _
  $region9: #{refine_net_unet_forward.20} parent=0 // pred_fallthru
    _
  %v15 = vld [vmem:[%s0] sm:$0xff]
  %v16 = vld [vmem:[%s0 + $0x8] sm:$0xff]
  %v17 = vld [vmem:[%s0 + $0x10] sm:$0xff]
  %v18 = vld [vmem:[%s0 + $0x18] sm:$0xff]
  %v19 = vld [vmem:[%s0 + $0x20] sm:$0xff]
  %v20 = vld [vmem:[%s0 + $0x28] sm:$0xff]
  %v21 = vld [vmem:[%s0 + $0x30] sm:$0xff]
  %v22 = vld [vmem:[%s0 + $0x38] sm:$0xff]
  %v23 = vld [vmem:[%s0 + $0x40] sm:$0xff]
  %v24 = vld [vmem:[%s0 + $0x48] sm:$0xff]
  %v25 = vld [vmem:[%s0 + $0x50] sm:$0xff]
  %v26 = vld [vmem:[%s0 + $0x58] sm:$0xff]
  %v27 = vld [vmem:[%s0 + $0x60] sm:$0xff]
  %v28 = vld [vmem:[%s0 + $0x68] sm:$0xff]
  %v29 = vld [vmem:[%s0 + $0x70] sm:$0xff]
  %v30 = vld [vmem:[%s0 + $0x78] sm:$0xff]
  %v31 = vld [vmem:[%s1] sm:$0xf]
  %v32 = vld [vmem:[%s1 + $0x4] sm:$0xf]
  %v33 = vld [vmem:[%s1 + $0x8] sm:$0xf]
  %v34 = vld [vmem:[%s1 + $0xc] sm:$0xf]
  %v35 = vld [vmem:[%s1 + $0x10] sm:$0xf]
  %v36 = vld [vmem:[%s1 + $0x14] sm:$0xf]
  %v37 = vld [vmem:[%s1 + $0x18] sm:$0xf]
  %v38 = vld [vmem:[%s1 + $0x1c] sm:$0xf]
  %v39 = vld [vmem:[%s1 + $0x20] sm:$0xf]
  %v40 = vld [vmem:[%s1 + $0x24] sm:$0xf]
  %v41 = vld [vmem:[%s1 + $0x28] sm:$0xf]
  %v42 = vld [vmem:[%s1 + $0x2c] sm:$0xf]
  %v43 = vld [vmem:[%s1 + $0x30] sm:$0xf]
  %v44 = vld [vmem:[%s1 + $0x34] sm:$0xf]
  %v45 = vld [vmem:[%s1 + $0x38] sm:$0xf]
  %v46 = vld [vmem:[%s1 + $0x3c] sm:$0xf]
  %v47 = vld [vmem:[%s1 + $0x40] sm:$0xf]
  %v48 = vld [vmem:[%s1 + $0x44] sm:$0xf]
  %v49 = vld [vmem:[%s1 + $0x48] sm:$0xf]
  %v50 = vld [vmem:[%s1 + $0x4c] sm:$0xf]
  %v51 = vld [vmem:[%s1 + $0x50] sm:$0xf]
  %v52 = vld [vmem:[%s1 + $0x54] sm:$0xf]
  %v53 = vld [vmem:[%s1 + $0x58] sm:$0xf]
  %v54 = vld [vmem:[%s1 + $0x5c] sm:$0xf]
  %v55 = vld [vmem:[%s1 + $0x60] sm:$0xf]
  %v56 = vld [vmem:[%s1 + $0x64] sm:$0xf]
  %v57 = vld [vmem:[%s1 + $0x68] sm:$0xf]
  %v74 = vunpack.c.l.b16 %v15
  %v75 = vunpack.c.h.b16 %v15
  %v76 = vunpack.c.l.b16 %v16
  %v77 = vunpack.c.h.b16 %v16
  %v78 = vunpack.c.l.b16 %v17
  %v79 = vunpack.c.h.b16 %v17
  %v80 = vunpack.c.l.b16 %v18
  %v81 = vunpack.c.h.b16 %v18
  %v82 = vunpack.c.l.b16 %v19
  %v83 = vunpack.c.h.b16 %v19
  %v84 = vunpack.c.l.b16 %v20
  %v85 = vunpack.c.h.b16 %v20
  %v86 = vunpack.c.l.b16 %v21
  %v87 = vunpack.c.h.b16 %v21
  %v88 = vunpack.c.l.b16 %v22
  %v89 = vunpack.c.h.b16 %v22
  %v90 = vunpack.c.l.b16 %v23
  %v91 = vunpack.c.h.b16 %v23
  %v92 = vunpack.c.l.b16 %v24
  %v93 = vunpack.c.h.b16 %v24
  %v94 = vunpack.c.l.b16 %v25
  %v95 = vunpack.c.h.b16 %v25
  %v96 = vunpack.c.l.b16 %v26
  %v97 = vunpack.c.h.b16 %v26
  %v98 = vunpack.c.l.b16 %v27
  %v99 = vunpack.c.h.b16 %v27
  %v100 = vunpack.c.l.b16 %v28
  %v101 = vunpack.c.h.b16 %v28
  %v102 = vunpack.c.l.b16 %v29
  %v103 = vunpack.c.h.b16 %v29
  %v104 = vunpack.c.l.b16 %v30
  %v105 = vunpack.c.h.b16 %v30
  %v106 = vpack.c.b16 %v76, %v74
  %v107 = vpack.c.b16 %v77, %v75
  %v108 = vpack.c.b16 %v80, %v78
  %v109 = vpack.c.b16 %v81, %v79
  %v110 = vpack.c.b16 %v84, %v82
  %v111 = vpack.c.b16 %v85, %v83
  %v112 = vpack.c.b16 %v88, %v86
  %v113 = vpack.c.b16 %v89, %v87
  %v114 = vpack.c.b16 %v92, %v90
  %v115 = vpack.c.b16 %v93, %v91
  %v116 = vpack.c.b16 %v96, %v94
  %v117 = vpack.c.b16 %v97, %v95
  %v118 = vpack.c.b16 %v100, %v98
  %v119 = vpack.c.b16 %v101, %v99
  %v120 = vpack.c.b16 %v104, %v102
  %v121 = vpack.c.b16 %v105, %v103
  %v157 = vunpack.c.l.b16 %v31
  %v158 = vunpack.c.l.b16 %v32
  %v159 = vunpack.c.l.b16 %v33
  %v160 = vunpack.c.l.b16 %v34
  %v161 = vunpack.c.l.b16 %v35
  %v162 = vunpack.c.l.b16 %v36
  %v163 = vunpack.c.l.b16 %v37
  %v164 = vunpack.c.l.b16 %v38
  %v165 = vunpack.c.l.b16 %v39
  %v166 = vunpack.c.l.b16 %v40
  %v167 = vunpack.c.l.b16 %v41
  %v168 = vunpack.c.l.b16 %v42
  %v169 = vunpack.c.l.b16 %v43
  %v170 = vunpack.c.l.b16 %v44
  %v171 = vunpack.c.l.b16 %v45
  %v172 = vunpack.c.l.b16 %v46
  %v173 = vunpack.c.l.b16 %v47
  %v174 = vunpack.c.l.b16 %v48
  %v175 = vunpack.c.l.b16 %v49
  %v176 = vunpack.c.l.b16 %v50
  %v177 = vunpack.c.l.b16 %v51
  %v178 = vunpack.c.l.b16 %v52
  %v179 = vunpack.c.l.b16 %v53
  %v180 = vunpack.c.l.b16 %v54
  %v181 = vunpack.c.l.b16 %v55
  %v182 = vunpack.c.l.b16 %v56
  %v183 = vunpack.c.l.b16 %v57
  %v184 = vpack.c.b16 %v158, %v157
  %v185 = vpack.c.b16 %v160, %v159
  %v186 = vpack.c.b16 %v162, %v161
  %v187 = vpack.c.b16 %v164, %v163
  %v188 = vpack.c.b16 %v166, %v165
  %v189 = vpack.c.b16 %v168, %v167
  %v190 = vpack.c.b16 %v170, %v169
  %v191 = vpack.c.b16 %v172, %v171
  %v192 = vpack.c.b16 %v174, %v173
  %v193 = vpack.c.b16 %v176, %v175
  %v194 = vpack.c.b16 %v178, %v177
  %v195 = vpack.c.b16 %v180, %v179
  %v196 = vpack.c.b16 %v182, %v181
  %v197 = vpack.c.b16 %v183, %v183
  %vm211 = vcmask 719872
  %v213 = vsel %vm211, %v107, 0
  %v216 = vsel %vm211, %v109, 0
  %v219 = vsel %vm211, %v111, 0
  %v222 = vsel %vm211, %v113, 0
  %v225 = vsel %vm211, %v115, 0
  %v228 = vsel %vm211, %v117, 0
  %v231 = vsel %vm211, %v119, 0
  %v234 = vsel %vm211, %v121, 0
  %vm236 = vcmask 1043456
  %v238 = vsel %vm236, %v197, 0
  %240 = vmatpush.bf16.msra.mxu0 %v191
  %241 = vmatpush.bf16.msra.mxu0 %v190
  %242 = vmatpush.bf16.msra.mxu0 %v189
  %243 = vmatpush.bf16.msra.mxu0 %v188
  %244 = vmatpush.bf16.msra.mxu0 %v187
  %245 = vmatpush.bf16.msra.mxu0 %v186
  %246 = vmatpush.bf16.msra.mxu0 %v185
  %247 = vmatpush.bf16.msra.mxu0 %v184
  %248 = vmatmul.bf16.gmra.mxu0 %v106
  %v249 = vpop.f32.mrf.mxu0
  %v250 = vadd.f32 0.0, %v249
  %v251 = vpop.f32.mrf.mxu0
  %v252 = vadd.f32 0.0, %v251
  %253 = vmatmul.bf16.gmra.mxu0 %v108
  %v254 = vpop.f32.mrf.mxu0
  %v255 = vadd.f32 0.0, %v254
  %v256 = vpop.f32.mrf.mxu0
  %v257 = vadd.f32 0.0, %v256
  %258 = vmatmul.bf16.gmra.mxu0 %v110
  %v259 = vpop.f32.mrf.mxu0
  %v260 = vadd.f32 0.0, %v259
  %v261 = vpop.f32.mrf.mxu0
  %v262 = vadd.f32 0.0, %v261
  %263 = vmatmul.bf16.gmra.mxu0 %v112
  %v264 = vpop.f32.mrf.mxu0
  %v265 = vadd.f32 0.0, %v264
  %v266 = vpop.f32.mrf.mxu0
  %v267 = vadd.f32 0.0, %v266
  %268 = vmatmul.bf16.gmra.mxu0 %v114
  %v269 = vpop.f32.mrf.mxu0
  %v270 = vadd.f32 0.0, %v269
  %v271 = vpop.f32.mrf.mxu0
  %v272 = vadd.f32 0.0, %v271
  %273 = vmatmul.bf16.gmra.mxu0 %v116
  %v274 = vpop.f32.mrf.mxu0
  %v275 = vadd.f32 0.0, %v274
  %v276 = vpop.f32.mrf.mxu0
  %v277 = vadd.f32 0.0, %v276
  %278 = vmatmul.bf16.gmra.mxu0 %v118
  %v279 = vpop.f32.mrf.mxu0
  %v280 = vadd.f32 0.0, %v279
  %v281 = vpop.f32.mrf.mxu0
  %v282 = vadd.f32 0.0, %v281
  %283 = vmatmul.bf16.gmra.mxu0 %v120
  %v284 = vpop.f32.mrf.mxu0
  %v285 = vadd.f32 0.0, %v284
  %v286 = vpop.f32.mrf.mxu0
  %v287 = vadd.f32 0.0, %v286
  %288 = vdwg.mxu0
  %289 = vmatpush.bf16.msra.mxu0 0
  %290 = vmatpush.bf16.msra.mxu0 0
  %291 = vmatpush.bf16.msra.mxu0 %v238
  %292 = vmatpush.bf16.msra.mxu0 %v196
  %293 = vmatpush.bf16.msra.mxu0 %v195
  %294 = vmatpush.bf16.msra.mxu0 %v194
  %295 = vmatpush.bf16.msra.mxu0 %v193
  %296 = vmatpush.bf16.msra.mxu0 %v192
  %297 = vmatmul.bf16.gmra.mxu0 %v213
  %v298 = vpop.f32.mrf.mxu0
  %v299 = vadd.f32 %v250, %v298
  %v300 = vpop.f32.mrf.mxu0
  %v301 = vadd.f32 %v252, %v300
  %302 = vmatmul.bf16.gmra.mxu0 %v216
  %v303 = vpop.f32.mrf.mxu0
  %v304 = vadd.f32 %v255, %v303
  %v305 = vpop.f32.mrf.mxu0
  %v306 = vadd.f32 %v257, %v305
  %307 = vmatmul.bf16.gmra.mxu0 %v219
  %v308 = vpop.f32.mrf.mxu0
  %v309 = vadd.f32 %v260, %v308
  %v310 = vpop.f32.mrf.mxu0
  %v311 = vadd.f32 %v262, %v310
  %312 = vmatmul.bf16.gmra.mxu0 %v222
  %v313 = vpop.f32.mrf.mxu0
  %v314 = vadd.f32 %v265, %v313
  %v315 = vpop.f32.mrf.mxu0
  %v316 = vadd.f32 %v267, %v315
  %317 = vmatmul.bf16.gmra.mxu0 %v225
  %v318 = vpop.f32.mrf.mxu0
  %v319 = vadd.f32 %v270, %v318
  %v320 = vpop.f32.mrf.mxu0
  %v321 = vadd.f32 %v272, %v320
  %322 = vmatmul.bf16.gmra.mxu0 %v228
  %v323 = vpop.f32.mrf.mxu0
  %v324 = vadd.f32 %v275, %v323
  %v325 = vpop.f32.mrf.mxu0
  %v326 = vadd.f32 %v277, %v325
  %327 = vmatmul.bf16.gmra.mxu0 %v231
  %v328 = vpop.f32.mrf.mxu0
  %v329 = vadd.f32 %v280, %v328
  %v330 = vpop.f32.mrf.mxu0
  %v331 = vadd.f32 %v282, %v330
  %332 = vmatmul.bf16.gmra.mxu0 %v234
  %v333 = vpop.f32.mrf.mxu0
  %v334 = vadd.f32 %v285, %v333
  %v335 = vpop.f32.mrf.mxu0
  %v336 = vadd.f32 %v287, %v335
  %337 = vdwg.mxu0
  %v338 = vpack.c.bf16 %v299, %v299
  %v339 = vpack.c.bf16 %v301, %v301
  %v340 = vpack.c.bf16 %v304, %v304
  %v341 = vpack.c.bf16 %v306, %v306
  %v342 = vpack.c.bf16 %v309, %v309
  %v343 = vpack.c.bf16 %v311, %v311
  %v344 = vpack.c.bf16 %v314, %v314
  %v345 = vpack.c.bf16 %v316, %v316
  %v346 = vpack.c.bf16 %v319, %v319
  %v347 = vpack.c.bf16 %v321, %v321
  %v348 = vpack.c.bf16 %v324, %v324
  %v349 = vpack.c.bf16 %v326, %v326
  %v350 = vpack.c.bf16 %v329, %v329
  %v351 = vpack.c.bf16 %v331, %v331
  %v352 = vpack.c.bf16 %v334, %v334
  %v353 = vpack.c.bf16 %v336, %v336
  %vm354 = vcmask 60416
  %355 = vst.msk [vmem:[%s2] sm:$0xf] %vm354, %v338
  %356 = vst.msk [vmem:[%s2 + $0x4] sm:$0xf] %vm354, %v339
  %357 = vst.msk [vmem:[%s2 + $0x8] sm:$0xf] %vm354, %v340
  %358 = vst.msk [vmem:[%s2 + $0xc] sm:$0xf] %vm354, %v341
  %359 = vst.msk [vmem:[%s2 + $0x10] sm:$0xf] %vm354, %v342
  %360 = vst.msk [vmem:[%s2 + $0x14] sm:$0xf] %vm354, %v343
  %361 = vst.msk [vmem:[%s2 + $0x18] sm:$0xf] %vm354, %v344
  %362 = vst.msk [vmem:[%s2 + $0x1c] sm:$0xf] %vm354, %v345
  %363 = vst.msk [vmem:[%s2 + $0x20] sm:$0xf] %vm354, %v346
  %364 = vst.msk [vmem:[%s2 + $0x24] sm:$0xf] %vm354, %v347
  %365 = vst.msk [vmem:[%s2 + $0x28] sm:$0xf] %vm354, %v348
  %366 = vst.msk [vmem:[%s2 + $0x2c] sm:$0xf] %vm354, %v349
  %367 = vst.msk [vmem:[%s2 + $0x30] sm:$0xf] %vm354, %v350
  %368 = vst.msk [vmem:[%s2 + $0x34] sm:$0xf] %vm354, %v351
  %369 = vst.msk [vmem:[%s2 + $0x38] sm:$0xf] %vm354, %v352
  %370 = vst.msk [vmem:[%s2 + $0x3c] sm:$0xf] %vm354, %v353
  %vm371 = vcmask 64512
  %v372 = vsel %vm371, %v299, 0.0
  %v373 = vsel %vm371, %v301, 0.0
  %v374 = vadd.f32 %v372, %v373
  %v375 = vsel %vm371, %v304, 0.0
  %v376 = vadd.f32 %v374, %v375
  %v377 = vsel %vm371, %v306, 0.0
  %v378 = vadd.f32 %v376, %v377
  %v379 = vsel %vm371, %v309, 0.0
  %v380 = vadd.f32 %v378, %v379
  %v381 = vsel %vm371, %v311, 0.0
  %v382 = vadd.f32 %v380, %v381
  %v383 = vsel %vm371, %v314, 0.0
  %v384 = vadd.f32 %v382, %v383
  %v385 = vsel %vm371, %v316, 0.0
  %v386 = vadd.f32 %v384, %v385
  %v387 = vsel %vm371, %v319, 0.0
  %v388 = vadd.f32 %v386, %v387
  %v389 = vsel %vm371, %v321, 0.0
  %v390 = vadd.f32 %v388, %v389
  %v391 = vsel %vm371, %v324, 0.0
  %v392 = vadd.f32 %v390, %v391
  %v393 = vsel %vm371, %v326, 0.0
  %v394 = vadd.f32 %v392, %v393
  %v395 = vsel %vm371, %v329, 0.0
  %v396 = vadd.f32 %v394, %v395
  %v397 = vsel %vm371, %v331, 0.0
  %v398 = vadd.f32 %v396, %v397
  %v399 = vsel %vm371, %v334, 0.0
  %v400 = vadd.f32 %v398, %v399
  %v401 = vsel %vm371, %v336, 0.0
  %v402 = vadd.f32 %v400, %v401
  %v403 = vrot.slane %v402, 4
  %v404 = vadd.f32 %v402, %v403
  %v405 = vrot.slane %v404, 2
  %v406 = vadd.f32 %v404, %v405
  %v407 = vrot.slane %v406, 1
  %v408 = vadd.f32 %v406, %v407
  %vm409 = vcmask 57344
  %410 = vst.msk [vmem:[%s3] sm:$0x1] %vm409, %v408
  %v411 = vmul.f32 %v299, %v299
  %v412 = vmul.f32 %v301, %v301
  %v413 = vmul.f32 %v304, %v304
  %v414 = vmul.f32 %v306, %v306
  %v415 = vmul.f32 %v309, %v309
  %v416 = vmul.f32 %v311, %v311
  %v417 = vmul.f32 %v314, %v314
  %v418 = vmul.f32 %v316, %v316
  %v419 = vmul.f32 %v319, %v319
  %v420 = vmul.f32 %v321, %v321
  %v421 = vmul.f32 %v324, %v324
  %v422 = vmul.f32 %v326, %v326
  %v423 = vmul.f32 %v329, %v329
  %v424 = vmul.f32 %v331, %v331
  %v425 = vmul.f32 %v334, %v334
  %v426 = vmul.f32 %v336, %v336
  %v427 = vsel %vm371, %v411, 0.0
  %v428 = vsel %vm371, %v412, 0.0
  %v429 = vadd.f32 %v427, %v428
  %v430 = vsel %vm371, %v413, 0.0
  %v431 = vadd.f32 %v429, %v430
  %v432 = vsel %vm371, %v414, 0.0
  %v433 = vadd.f32 %v431, %v432
  %v434 = vsel %vm371, %v415, 0.0
  %v435 = vadd.f32 %v433, %v434
  %v436 = vsel %vm371, %v416, 0.0
  %v437 = vadd.f32 %v435, %v436
  %v438 = vsel %vm371, %v417, 0.0
  %v439 = vadd.f32 %v437, %v438
  %v440 = vsel %vm371, %v418, 0.0
  %v441 = vadd.f32 %v439, %v440
  %v442 = vsel %vm371, %v419, 0.0
  %v443 = vadd.f32 %v441, %v442
  %v444 = vsel %vm371, %v420, 0.0
  %v445 = vadd.f32 %v443, %v444
  %v446 = vsel %vm371, %v421, 0.0
  %v447 = vadd.f32 %v445, %v446
  %v448 = vsel %vm371, %v422, 0.0
  %v449 = vadd.f32 %v447, %v448
  %v450 = vsel %vm371, %v423, 0.0
  %v451 = vadd.f32 %v449, %v450
  %v452 = vsel %vm371, %v424, 0.0
  %v453 = vadd.f32 %v451, %v452
  %v454 = vsel %vm371, %v425, 0.0
  %v455 = vadd.f32 %v453, %v454
  %v456 = vsel %vm371, %v426, 0.0
  %v457 = vadd.f32 %v455, %v456
  %v458 = vrot.slane %v457, 4
  %v459 = vadd.f32 %v457, %v458
  %v460 = vrot.slane %v459, 2
  %v461 = vadd.f32 %v459, %v460
  %v462 = vrot.slane %v461, 1
  %v463 = vadd.f32 %v461, %v462
  %464 = vst.msk [vmem:[%s4] sm:$0x1] %vm409, %v463
  // Predicated region
  $region10: #{refine_net_unet_forward.20} parent=0 // pred_check
    _
  $region11: #{refine_net_unet_forward.20} parent=0 // pred_check_branch
    %466 = sbr.rel (0) target = $region13
  $region12: #{refine_net_unet_forward.20} parent=0 // pred_region
    _
  $region13: #{refine_net_unet_forward.20} parent=0 // pred_fallthru
    _
  // Predicated region
  $region14: #{refine_net_unet_forward.20} parent=0 // pred_check
    _
  $region15: #{refine_net_unet_forward.20} parent=0 // pred_check_branch
    %468 = sbr.rel (0) target = $region17
  $region16: #{refine_net_unet_forward.20} parent=0 // pred_region
    _
  $region17: #{refine_net_unet_forward.20} parent=0 // pred_fallthru
    _
  // Predicated region
  $region18: #{refine_net_unet_forward.20} parent=0 // pred_check
    _
  $region19: #{refine_net_unet_forward.20} parent=0 // pred_check_branch
    %470 = sbr.rel (0) target = $region21
  $region20: #{refine_net_unet_forward.20} parent=0 // pred_region
    _
  $region21: #{refine_net_unet_forward.20} parent=0 // pred_fallthru
    _
  // Predicated region
  $region22: #{refine_net_unet_forward.20} parent=0 // pred_check
    _
  $region23: #{refine_net_unet_forward.20} parent=0 // pred_check_branch
    %472 = sbr.rel (0) target = $region25
  $region24: #{refine_net_unet_forward.20} parent=0 // pred_region
    _
  $region25: #{refine_net_unet_forward.20} parent=0 // pred_fallthru
    _
  // Predicated region
  $region26: #{refine_net_unet_forward.20} parent=0 // pred_check
    _
  $region27: #{refine_net_unet_forward.20} parent=0 // pred_check_branch
    %474 = sbr.rel (0) target = $region29
  $region28: #{refine_net_unet_forward.20} parent=0 // pred_region
    _
  $region29: #{refine_net_unet_forward.20} parent=0 // pred_fallthru
    _
  // Predicated region
  $region30: #{refine_net_unet_forward.20} parent=0 // pred_check
    _
  $region31: #{refine_net_unet_forward.20} parent=0 // pred_check_branch
    %476 = sbr.rel (0) target = $region33
  $region32: #{refine_net_unet_forward.20} parent=0 // pred_region
    _
  $region33: #{refine_net_unet_forward.20} parent=0 // pred_fallthru
    _

// kernel: refine_net_unet_forward.23
$region0: #{refine_net_unet_forward.23}
  #allocation0 [shape = 'u32[]', space=smem, size = 0x4, offset = 0x4, fixed_abs, tag = 'smem constant byte address 0x4 - core index']
  #allocation1 [shape = 'u32[72,128]{1,0:T(1,128)}', space=vmem, size = 0x9000, scoped, tag = 'internal scratch']
  %s0 = inlined_call_operand.vmem [shape: bf16[16,16], index: 0, kind: input, shape index: {}]
  %s1 = inlined_call_operand.vmem [shape: f32[1,16], index: 1, kind: input, shape index: {}]
  %s2 = inlined_call_operand.vmem [shape: f32[1,16], index: 2, kind: input, shape index: {}]
  %s3 = inlined_call_operand.vmem [shape: bf16[16,16], index: 3, kind: output, shape index: {}]
  %s4 = sld [smem:[#allocation0]]
  $region22: #{refine_net_unet_forward.23} parent=0
    _
  %s6 = ssub.s32 1, %s4
  %s7 = scalar_select 0, %s6, %s4
  // Predicated region
  $region2: #{refine_net_unet_forward.23} parent=0 // pred_check
    _
  $region3: #{refine_net_unet_forward.23} parent=0 // pred_check_branch
    %9 = sbr.rel (0) target = $region5
  $region4: #{refine_net_unet_forward.23} parent=0 // pred_region
    _
  $region5: #{refine_net_unet_forward.23} parent=0 // pred_fallthru
    _
  // Predicated region
  $region6: #{refine_net_unet_forward.23} parent=0 // pred_check
    _
  $region7: #{refine_net_unet_forward.23} parent=0 // pred_check_branch
    %11 = sbr.rel (0) target = $region9
  $region8: #{refine_net_unet_forward.23} parent=0 // pred_region
    _
  $region9: #{refine_net_unet_forward.23} parent=0 // pred_fallthru
    _
  // Predicated region
  $region10: #{refine_net_unet_forward.23} parent=0 // pred_check
    _
  $region11: #{refine_net_unet_forward.23} parent=0 // pred_check_branch
    %13 = sbr.rel (0) target = $region13
  $region12: #{refine_net_unet_forward.23} parent=0 // pred_region
    _
  $region13: #{refine_net_unet_forward.23} parent=0 // pred_fallthru
    _
  %v14 = vld [vmem:[%s0] sm:$0xf]
  %v15 = vld [vmem:[%s0 + $0x4] sm:$0xf]
  %v16 = vunpack.c.l.bf16 %v14
  %v17 = vunpack.c.l.bf16 %v15
  %v18 = vld [vmem:[%s1] sm:$0x1]
  %v20 = vperm.slane %v18, 0
  %v22 = vmul.f32 %v16, %v20
  %v23 = vmul.f32 %v17, %v20
  %v24 = vld [vmem:[%s2] sm:$0x1]
  %v26 = vperm.slane %v24, 0
  %v28 = vadd.f32 %v22, %v26
  %v29 = vadd.f32 %v23, %v26
  %v30 = vmax.f32 %v28, 0.0
  %v31 = vmax.f32 %v29, 0.0
  %v32 = vpack.c.bf16 %v30, %v30
  %v33 = vpack.c.bf16 %v31, %v31
  %vm34 = vcmask 125952
  %35 = vst.msk [vmem:[%s3] sm:$0xf] %vm34, %v32
  %36 = vst.msk [vmem:[%s3 + $0x4] sm:$0xf] %vm34, %v33
  // Predicated region
  $region14: #{refine_net_unet_forward.23} parent=0 // pred_check
    _
  $region15: #{refine_net_unet_forward.23} parent=0 // pred_check_branch
    %38 = sbr.rel (0) target = $region17
  $region16: #{refine_net_unet_forward.23} parent=0 // pred_region
    _
  $region17: #{refine_net_unet_forward.23} parent=0 // pred_fallthru
    _
  // Predicated region
  $region18: #{refine_net_unet_forward.23} parent=0 // pred_check
    _
  $region19: #{refine_net_unet_forward.23} parent=0 // pred_check_branch
    %40 = sbr.rel (0) target = $region21
  $region20: #{refine_net_unet_forward.23} parent=0 // pred_region
    _
  $region21: #{refine_net_unet_forward.23} parent=0 // pred_fallthru
    _

// kernel: refine_net_unet_forward.22
$region0: #{refine_net_unet_forward.22}
  #allocation0 [shape = 'u32[]', space=smem, size = 0x4, offset = 0x4, fixed_abs, tag = 'smem constant byte address 0x4 - core index']
  #allocation1 [shape = 'u32[72,128]{1,0:T(1,128)}', space=vmem, size = 0x9000, scoped, tag = 'internal scratch']
  %s0 = inlined_call_operand.vmem [shape: bf16[16,216], index: 0, kind: input, shape index: {}]
  %s1 = inlined_call_operand.vmem [shape: bf16[216,16], index: 1, kind: input, shape index: {}]
  %s2 = inlined_call_operand.vmem [shape: bf16[16,16], index: 2, kind: output, shape index: {0}]
  %s3 = inlined_call_operand.vmem [shape: f32[1,1,16], index: 3, kind: output, shape index: {1}]
  %s4 = inlined_call_operand.vmem [shape: f32[1,1,16], index: 4, kind: output, shape index: {2}]
  %5 = xla_tuple %s2, %s3, %s4
  %s6 = sld [smem:[#allocation0]]
  $region34: #{refine_net_unet_forward.22} parent=0
    _
  %s8 = ssub.s32 1, %s6
  %s9 = scalar_select 0, %s8, %s6
  // Predicated region
  $region2: #{refine_net_unet_forward.22} parent=0 // pred_check
    _
  $region3: #{refine_net_unet_forward.22} parent=0 // pred_check_branch
    %11 = sbr.rel (0) target = $region5
  $region4: #{refine_net_unet_forward.22} parent=0 // pred_region
    _
  $region5: #{refine_net_unet_forward.22} parent=0 // pred_fallthru
    _
  // Predicated region
  $region6: #{refine_net_unet_forward.22} parent=0 // pred_check
    _
  $region7: #{refine_net_unet_forward.22} parent=0 // pred_check_branch
    %13 = sbr.rel (0) target = $region9
  $region8: #{refine_net_unet_forward.22} parent=0 // pred_region
    _
  $region9: #{refine_net_unet_forward.22} parent=0 // pred_fallthru
    _
  %v15 = vld [vmem:[%s0] sm:$0xff]
  %v16 = vld [vmem:[%s0 + $0x8] sm:$0xff]
  %v17 = vld [vmem:[%s1] sm:$0xf]
  %v18 = vld [vmem:[%s1 + $0x4] sm:$0xf]
  %v19 = vld [vmem:[%s1 + $0x8] sm:$0xf]
  %v20 = vld [vmem:[%s1 + $0xc] sm:$0xf]
  %v21 = vld [vmem:[%s1 + $0x10] sm:$0xf]
  %v22 = vld [vmem:[%s1 + $0x14] sm:$0xf]
  %v23 = vld [vmem:[%s1 + $0x18] sm:$0xf]
  %v24 = vld [vmem:[%s1 + $0x1c] sm:$0xf]
  %v25 = vld [vmem:[%s1 + $0x20] sm:$0xf]
  %v26 = vld [vmem:[%s1 + $0x24] sm:$0xf]
  %v27 = vld [vmem:[%s1 + $0x28] sm:$0xf]
  %v28 = vld [vmem:[%s1 + $0x2c] sm:$0xf]
  %v29 = vld [vmem:[%s1 + $0x30] sm:$0xf]
  %v30 = vld [vmem:[%s1 + $0x34] sm:$0xf]
  %v31 = vld [vmem:[%s1 + $0x38] sm:$0xf]
  %v32 = vld [vmem:[%s1 + $0x3c] sm:$0xf]
  %v33 = vld [vmem:[%s1 + $0x40] sm:$0xf]
  %v34 = vld [vmem:[%s1 + $0x44] sm:$0xf]
  %v35 = vld [vmem:[%s1 + $0x48] sm:$0xf]
  %v36 = vld [vmem:[%s1 + $0x4c] sm:$0xf]
  %v37 = vld [vmem:[%s1 + $0x50] sm:$0xf]
  %v38 = vld [vmem:[%s1 + $0x54] sm:$0xf]
  %v39 = vld [vmem:[%s1 + $0x58] sm:$0xf]
  %v40 = vld [vmem:[%s1 + $0x5c] sm:$0xf]
  %v41 = vld [vmem:[%s1 + $0x60] sm:$0xf]
  %v42 = vld [vmem:[%s1 + $0x64] sm:$0xf]
  %v43 = vld [vmem:[%s1 + $0x68] sm:$0xf]
  %v46 = vunpack.c.l.b16 %v15
  %v47 = vunpack.c.h.b16 %v15
  %v48 = vunpack.c.l.b16 %v16
  %v49 = vunpack.c.h.b16 %v16
  %v50 = vpack.c.b16 %v48, %v46
  %v51 = vpack.c.b16 %v49, %v47
  %v80 = vunpack.c.l.b16 %v17
  %v81 = vunpack.c.l.b16 %v18
  %v82 = vunpack.c.l.b16 %v19
  %v83 = vunpack.c.l.b16 %v20
  %v84 = vunpack.c.l.b16 %v21
  %v85 = vunpack.c.l.b16 %v22
  %v86 = vunpack.c.l.b16 %v23
  %v87 = vunpack.c.l.b16 %v24
  %v88 = vunpack.c.l.b16 %v25
  %v89 = vunpack.c.l.b16 %v26
  %v90 = vunpack.c.l.b16 %v27
  %v91 = vunpack.c.l.b16 %v28
  %v92 = vunpack.c.l.b16 %v29
  %v93 = vunpack.c.l.b16 %v30
  %v94 = vunpack.c.l.b16 %v31
  %v95 = vunpack.c.l.b16 %v32
  %v96 = vunpack.c.l.b16 %v33
  %v97 = vunpack.c.l.b16 %v34
  %v98 = vunpack.c.l.b16 %v35
  %v99 = vunpack.c.l.b16 %v36
  %v100 = vunpack.c.l.b16 %v37
  %v101 = vunpack.c.l.b16 %v38
  %v102 = vunpack.c.l.b16 %v39
  %v103 = vunpack.c.l.b16 %v40
  %v104 = vunpack.c.l.b16 %v41
  %v105 = vunpack.c.l.b16 %v42
  %v106 = vunpack.c.l.b16 %v43
  %v107 = vpack.c.b16 %v81, %v80
  %v108 = vpack.c.b16 %v83, %v82
  %v109 = vpack.c.b16 %v85, %v84
  %v110 = vpack.c.b16 %v87, %v86
  %v111 = vpack.c.b16 %v89, %v88
  %v112 = vpack.c.b16 %v91, %v90
  %v113 = vpack.c.b16 %v93, %v92
  %v114 = vpack.c.b16 %v95, %v94
  %v115 = vpack.c.b16 %v97, %v96
  %v116 = vpack.c.b16 %v99, %v98
  %v117 = vpack.c.b16 %v101, %v100
  %v118 = vpack.c.b16 %v103, %v102
  %v119 = vpack.c.b16 %v105, %v104
  %v120 = vpack.c.b16 %v106, %v106
  %vm134 = vcmask 719872
  %v136 = vsel %vm134, %v51, 0
  %vm138 = vcmask 1043456
  %v140 = vsel %vm138, %v120, 0
  %142 = vmatpush.bf16.msra.mxu0 %v114
  %143 = vmatpush.bf16.msra.mxu0 %v113
  %144 = vmatpush.bf16.msra.mxu0 %v112
  %145 = vmatpush.bf16.msra.mxu0 %v111
  %146 = vmatpush.bf16.msra.mxu0 %v110
  %147 = vmatpush.bf16.msra.mxu0 %v109
  %148 = vmatpush.bf16.msra.mxu0 %v108
  %149 = vmatpush.bf16.msra.mxu0 %v107
  %150 = vmatmul.bf16.gmra.mxu0 %v50
  %v151 = vpop.f32.mrf.mxu0
  %v152 = vadd.f32 0.0, %v151
  %v153 = vpop.f32.mrf.mxu0
  %v154 = vadd.f32 0.0, %v153
  %155 = vdwg.mxu0
  %156 = vmatpush.bf16.msra.mxu0 0
  %157 = vmatpush.bf16.msra.mxu0 0
  %158 = vmatpush.bf16.msra.mxu0 %v140
  %159 = vmatpush.bf16.msra.mxu0 %v119
  %160 = vmatpush.bf16.msra.mxu0 %v118
  %161 = vmatpush.bf16.msra.mxu0 %v117
  %162 = vmatpush.bf16.msra.mxu0 %v116
  %163 = vmatpush.bf16.msra.mxu0 %v115
  %164 = vmatmul.bf16.gmra.mxu0 %v136
  %v165 = vpop.f32.mrf.mxu0
  %v166 = vadd.f32 %v152, %v165
  %v167 = vpop.f32.mrf.mxu0
  %v168 = vadd.f32 %v154, %v167
  %169 = vdwg.mxu0
  %v170 = vpack.c.bf16 %v166, %v166
  %v171 = vpack.c.bf16 %v168, %v168
  %vm172 = vcmask 125952
  %173 = vst.msk [vmem:[%s2] sm:$0xf] %vm172, %v170
  %174 = vst.msk [vmem:[%s2 + $0x4] sm:$0xf] %vm172, %v171
  %vm175 = vcmask 130048
  %v176 = vsel %vm175, %v166, 0.0
  %v177 = vsel %vm175, %v168, 0.0
  %v178 = vadd.f32 %v176, %v177
  %v179 = vrot.slane %v178, 4
  %v180 = vadd.f32 %v178, %v179
  %v181 = vrot.slane %v180, 2
  %v182 = vadd.f32 %v180, %v181
  %v183 = vrot.slane %v182, 1
  %v184 = vadd.f32 %v182, %v183
  %vm185 = vcmask 122880
  %186 = vst.msk [vmem:[%s3] sm:$0x1] %vm185, %v184
  %v187 = vmul.f32 %v166, %v166
  %v188 = vmul.f32 %v168, %v168
  %v189 = vsel %vm175, %v187, 0.0
  %v190 = vsel %vm175, %v188, 0.0
  %v191 = vadd.f32 %v189, %v190
  %v192 = vrot.slane %v191, 4
  %v193 = vadd.f32 %v191, %v192
  %v194 = vrot.slane %v193, 2
  %v195 = vadd.f32 %v193, %v194
  %v196 = vrot.slane %v195, 1
  %v197 = vadd.f32 %v195, %v196
  %198 = vst.msk [vmem:[%s4] sm:$0x1] %vm185, %v197
  // Predicated region
  $region10: #{refine_net_unet_forward.22} parent=0 // pred_check
    _
  $region11: #{refine_net_unet_forward.22} parent=0 // pred_check_branch
    %200 = sbr.rel (0) target = $region13
  $region12: #{refine_net_unet_forward.22} parent=0 // pred_region
    _
  $region13: #{refine_net_unet_forward.22} parent=0 // pred_fallthru
    _
  // Predicated region
  $region14: #{refine_net_unet_forward.22} parent=0 // pred_check
    _
  $region15: #{refine_net_unet_forward.22} parent=0 // pred_check_branch
    %202 = sbr.rel (0) target = $region17
  $region16: #{refine_net_unet_forward.22} parent=0 // pred_region
    _
  $region17: #{refine_net_unet_forward.22} parent=0 // pred_fallthru
    _
  // Predicated region
  $region18: #{refine_net_unet_forward.22} parent=0 // pred_check
    _
  $region19: #{refine_net_unet_forward.22} parent=0 // pred_check_branch
    %204 = sbr.rel (0) target = $region21
  $region20: #{refine_net_unet_forward.22} parent=0 // pred_region
    _
  $region21: #{refine_net_unet_forward.22} parent=0 // pred_fallthru
    _
  // Predicated region
  $region22: #{refine_net_unet_forward.22} parent=0 // pred_check
    _
  $region23: #{refine_net_unet_forward.22} parent=0 // pred_check_branch
    %206 = sbr.rel (0) target = $region25
  $region24: #{refine_net_unet_forward.22} parent=0 // pred_region
    _
  $region25: #{refine_net_unet_forward.22} parent=0 // pred_fallthru
    _
  // Predicated region
  $region26: #{refine_net_unet_forward.22} parent=0 // pred_check
    _
  $region27: #{refine_net_unet_forward.22} parent=0 // pred_check_branch
    %208 = sbr.rel (0) target = $region29
  $region28: #{refine_net_unet_forward.22} parent=0 // pred_region
    _
  $region29: #{refine_net_unet_forward.22} parent=0 // pred_fallthru
    _
  // Predicated region
  $region30: #{refine_net_unet_forward.22} parent=0 // pred_check
    _
  $region31: #{refine_net_unet_forward.22} parent=0 // pred_check_branch
    %210 = sbr.rel (0) target = $region33
  $region32: #{refine_net_unet_forward.22} parent=0 // pred_region
    _
  $region33: #{refine_net_unet_forward.22} parent=0 // pred_fallthru
    _

// kernel: refine_net_unet_forward.24
$region0: #{refine_net_unet_forward.24}
  #allocation0 [shape = 'u32[]', space=smem, size = 0x4, offset = 0x4, fixed_abs, tag = 'smem constant byte address 0x4 - core index']
  #allocation1 [shape = 'u32[72,128]{1,0:T(1,128)}', space=vmem, size = 0x9000, scoped, tag = 'internal scratch']
  %s0 = inlined_call_operand.vmem [shape: bf16[16,432], index: 0, kind: input, shape index: {}]
  %s1 = inlined_call_operand.vmem [shape: bf16[432,16], index: 1, kind: input, shape index: {}]
  %s2 = inlined_call_operand.vmem [shape: bf16[16,16], index: 2, kind: output, shape index: {0}]
  %s3 = inlined_call_operand.vmem [shape: f32[1,1,16], index: 3, kind: output, shape index: {1}]
  %s4 = inlined_call_operand.vmem [shape: f32[1,1,16], index: 4, kind: output, shape index: {2}]
  %5 = xla_tuple %s2, %s3, %s4
  %s6 = sld [smem:[#allocation0]]
  $region34: #{refine_net_unet_forward.24} parent=0
    _
  %s8 = ssub.s32 1, %s6
  %s9 = scalar_select 0, %s8, %s6
  // Predicated region
  $region2: #{refine_net_unet_forward.24} parent=0 // pred_check
    _
  $region3: #{refine_net_unet_forward.24} parent=0 // pred_check_branch
    %11 = sbr.rel (0) target = $region5
  $region4: #{refine_net_unet_forward.24} parent=0 // pred_region
    _
  $region5: #{refine_net_unet_forward.24} parent=0 // pred_fallthru
    _
  // Predicated region
  $region6: #{refine_net_unet_forward.24} parent=0 // pred_check
    _
  $region7: #{refine_net_unet_forward.24} parent=0 // pred_check_branch
    %13 = sbr.rel (0) target = $region9
  $region8: #{refine_net_unet_forward.24} parent=0 // pred_region
    _
  $region9: #{refine_net_unet_forward.24} parent=0 // pred_fallthru
    _
  %v15 = vld [vmem:[%s0] sm:$0xff]
  %v16 = vld [vmem:[%s0 + $0x8] sm:$0xff]
  %v17 = vld [vmem:[%s0 + $0x10] sm:$0xff]
  %v18 = vld [vmem:[%s0 + $0x18] sm:$0xff]
  %v19 = vld [vmem:[%s1] sm:$0xf]
  %v20 = vld [vmem:[%s1 + $0x4] sm:$0xf]
  %v21 = vld [vmem:[%s1 + $0x8] sm:$0xf]
  %v22 = vld [vmem:[%s1 + $0xc] sm:$0xf]
  %v23 = vld [vmem:[%s1 + $0x10] sm:$0xf]
  %v24 = vld [vmem:[%s1 + $0x14] sm:$0xf]
  %v25 = vld [vmem:[%s1 + $0x18] sm:$0xf]
  %v26 = vld [vmem:[%s1 + $0x1c] sm:$0xf]
  %v27 = vld [vmem:[%s1 + $0x20] sm:$0xf]
  %v28 = vld [vmem:[%s1 + $0x24] sm:$0xf]
  %v29 = vld [vmem:[%s1 + $0x28] sm:$0xf]
  %v30 = vld [vmem:[%s1 + $0x2c] sm:$0xf]
  %v31 = vld [vmem:[%s1 + $0x30] sm:$0xf]
  %v32 = vld [vmem:[%s1 + $0x34] sm:$0xf]
  %v33 = vld [vmem:[%s1 + $0x38] sm:$0xf]
  %v34 = vld [vmem:[%s1 + $0x3c] sm:$0xf]
  %v35 = vld [vmem:[%s1 + $0x40] sm:$0xf]
  %v36 = vld [vmem:[%s1 + $0x44] sm:$0xf]
  %v37 = vld [vmem:[%s1 + $0x48] sm:$0xf]
  %v38 = vld [vmem:[%s1 + $0x4c] sm:$0xf]
  %v39 = vld [vmem:[%s1 + $0x50] sm:$0xf]
  %v40 = vld [vmem:[%s1 + $0x54] sm:$0xf]
  %v41 = vld [vmem:[%s1 + $0x58] sm:$0xf]
  %v42 = vld [vmem:[%s1 + $0x5c] sm:$0xf]
  %v43 = vld [vmem:[%s1 + $0x60] sm:$0xf]
  %v44 = vld [vmem:[%s1 + $0x64] sm:$0xf]
  %v45 = vld [vmem:[%s1 + $0x68] sm:$0xf]
  %v46 = vld [vmem:[%s1 + $0x6c] sm:$0xf]
  %v47 = vld [vmem:[%s1 + $0x70] sm:$0xf]
  %v48 = vld [vmem:[%s1 + $0x74] sm:$0xf]
  %v49 = vld [vmem:[%s1 + $0x78] sm:$0xf]
  %v50 = vld [vmem:[%s1 + $0x7c] sm:$0xf]
  %v51 = vld [vmem:[%s1 + $0x80] sm:$0xf]
  %v52 = vld [vmem:[%s1 + $0x84] sm:$0xf]
  %v53 = vld [vmem:[%s1 + $0x88] sm:$0xf]
  %v54 = vld [vmem:[%s1 + $0x8c] sm:$0xf]
  %v55 = vld [vmem:[%s1 + $0x90] sm:$0xf]
  %v56 = vld [vmem:[%s1 + $0x94] sm:$0xf]
  %v57 = vld [vmem:[%s1 + $0x98] sm:$0xf]
  %v58 = vld [vmem:[%s1 + $0x9c] sm:$0xf]
  %v59 = vld [vmem:[%s1 + $0xa0] sm:$0xf]
  %v60 = vld [vmem:[%s1 + $0xa4] sm:$0xf]
  %v61 = vld [vmem:[%s1 + $0xa8] sm:$0xf]
  %v62 = vld [vmem:[%s1 + $0xac] sm:$0xf]
  %v63 = vld [vmem:[%s1 + $0xb0] sm:$0xf]
  %v64 = vld [vmem:[%s1 + $0xb4] sm:$0xf]
  %v65 = vld [vmem:[%s1 + $0xb8] sm:$0xf]
  %v66 = vld [vmem:[%s1 + $0xbc] sm:$0xf]
  %v67 = vld [vmem:[%s1 + $0xc0] sm:$0xf]
  %v68 = vld [vmem:[%s1 + $0xc4] sm:$0xf]
  %v69 = vld [vmem:[%s1 + $0xc8] sm:$0xf]
  %v70 = vld [vmem:[%s1 + $0xcc] sm:$0xf]
  %v71 = vld [vmem:[%s1 + $0xd0] sm:$0xf]
  %v72 = vld [vmem:[%s1 + $0xd4] sm:$0xf]
  %v77 = vunpack.c.l.b16 %v15
  %v78 = vunpack.c.h.b16 %v15
  %v79 = vunpack.c.l.b16 %v16
  %v80 = vunpack.c.h.b16 %v16
  %v81 = vunpack.c.l.b16 %v17
  %v82 = vunpack.c.h.b16 %v17
  %v83 = vunpack.c.l.b16 %v18
  %v84 = vunpack.c.h.b16 %v18
  %v85 = vpack.c.b16 %v81, %v77
  %v86 = vpack.c.b16 %v82, %v78
  %v87 = vpack.c.b16 %v83, %v79
  %v88 = vpack.c.b16 %v84, %v80
  %v146 = vunpack.c.l.b16 %v19
  %v147 = vunpack.c.l.b16 %v20
  %v148 = vunpack.c.l.b16 %v21
  %v149 = vunpack.c.l.b16 %v22
  %v150 = vunpack.c.l.b16 %v23
  %v151 = vunpack.c.l.b16 %v24
  %v152 = vunpack.c.l.b16 %v25
  %v153 = vunpack.c.l.b16 %v26
  %v154 = vunpack.c.l.b16 %v27
  %v155 = vunpack.c.l.b16 %v28
  %v156 = vunpack.c.l.b16 %v29
  %v157 = vunpack.c.l.b16 %v30
  %v158 = vunpack.c.l.b16 %v31
  %v159 = vunpack.c.l.b16 %v32
  %v160 = vunpack.c.l.b16 %v33
  %v161 = vunpack.c.l.b16 %v34
  %v162 = vunpack.c.l.b16 %v35
  %v163 = vunpack.c.l.b16 %v36
  %v164 = vunpack.c.l.b16 %v37
  %v165 = vunpack.c.l.b16 %v38
  %v166 = vunpack.c.l.b16 %v39
  %v167 = vunpack.c.l.b16 %v40
  %v168 = vunpack.c.l.b16 %v41
  %v169 = vunpack.c.l.b16 %v42
  %v170 = vunpack.c.l.b16 %v43
  %v171 = vunpack.c.l.b16 %v44
  %v172 = vunpack.c.l.b16 %v45
  %v173 = vunpack.c.l.b16 %v46
  %v174 = vunpack.c.l.b16 %v47
  %v175 = vunpack.c.l.b16 %v48
  %v176 = vunpack.c.l.b16 %v49
  %v177 = vunpack.c.l.b16 %v50
  %v178 = vunpack.c.l.b16 %v51
  %v179 = vunpack.c.l.b16 %v52
  %v180 = vunpack.c.l.b16 %v53
  %v181 = vunpack.c.l.b16 %v54
  %v182 = vunpack.c.l.b16 %v55
  %v183 = vunpack.c.l.b16 %v56
  %v184 = vunpack.c.l.b16 %v57
  %v185 = vunpack.c.l.b16 %v58
  %v186 = vunpack.c.l.b16 %v59
  %v187 = vunpack.c.l.b16 %v60
  %v188 = vunpack.c.l.b16 %v61
  %v189 = vunpack.c.l.b16 %v62
  %v190 = vunpack.c.l.b16 %v63
  %v191 = vunpack.c.l.b16 %v64
  %v192 = vunpack.c.l.b16 %v65
  %v193 = vunpack.c.l.b16 %v66
  %v194 = vunpack.c.l.b16 %v67
  %v195 = vunpack.c.l.b16 %v68
  %v196 = vunpack.c.l.b16 %v69
  %v197 = vunpack.c.l.b16 %v70
  %v198 = vunpack.c.l.b16 %v71
  %v199 = vunpack.c.l.b16 %v72
  %v200 = vpack.c.b16 %v147, %v146
  %v201 = vpack.c.b16 %v149, %v148
  %v202 = vpack.c.b16 %v151, %v150
  %v203 = vpack.c.b16 %v153, %v152
  %v204 = vpack.c.b16 %v155, %v154
  %v205 = vpack.c.b16 %v157, %v156
  %v206 = vpack.c.b16 %v159, %v158
  %v207 = vpack.c.b16 %v161, %v160
  %v208 = vpack.c.b16 %v163, %v162
  %v209 = vpack.c.b16 %v165, %v164
  %v210 = vpack.c.b16 %v167, %v166
  %v211 = vpack.c.b16 %v169, %v168
  %v212 = vpack.c.b16 %v171, %v170
  %v213 = vpack.c.b16 %v173, %v172
  %v214 = vpack.c.b16 %v175, %v174
  %v215 = vpack.c.b16 %v177, %v176
  %v216 = vpack.c.b16 %v179, %v178
  %v217 = vpack.c.b16 %v181, %v180
  %v218 = vpack.c.b16 %v183, %v182
  %v219 = vpack.c.b16 %v185, %v184
  %v220 = vpack.c.b16 %v187, %v186
  %v221 = vpack.c.b16 %v189, %v188
  %v222 = vpack.c.b16 %v191, %v190
  %v223 = vpack.c.b16 %v193, %v192
  %v224 = vpack.c.b16 %v195, %v194
  %v225 = vpack.c.b16 %v197, %v196
  %v226 = vpack.c.b16 %v199, %v198
  %vm254 = vcmask 392192
  %v256 = vsel %vm254, %v88, 0
  %258 = vmatpush.bf16.msra.mxu0 %v207
  %259 = vmatpush.bf16.msra.mxu0 %v206
  %260 = vmatpush.bf16.msra.mxu0 %v205
  %261 = vmatpush.bf16.msra.mxu0 %v204
  %262 = vmatpush.bf16.msra.mxu0 %v203
  %263 = vmatpush.bf16.msra.mxu0 %v202
  %264 = vmatpush.bf16.msra.mxu0 %v201
  %265 = vmatpush.bf16.msra.mxu0 %v200
  %266 = vmatmul.bf16.gmra.mxu0 %v85
  %v267 = vpop.f32.mrf.mxu0
  %v268 = vadd.f32 0.0, %v267
  %v269 = vpop.f32.mrf.mxu0
  %v270 = vadd.f32 0.0, %v269
  %271 = vdwg.mxu0
  %272 = vmatpush.bf16.msra.mxu0 %v215
  %273 = vmatpush.bf16.msra.mxu0 %v214
  %274 = vmatpush.bf16.msra.mxu0 %v213
  %275 = vmatpush.bf16.msra.mxu0 %v212
  %276 = vmatpush.bf16.msra.mxu0 %v211
  %277 = vmatpush.bf16.msra.mxu0 %v210
  %278 = vmatpush.bf16.msra.mxu0 %v209
  %279 = vmatpush.bf16.msra.mxu0 %v208
  %280 = vmatmul.bf16.gmra.mxu0 %v86
  %v281 = vpop.f32.mrf.mxu0
  %v282 = vadd.f32 %v268, %v281
  %v283 = vpop.f32.mrf.mxu0
  %v284 = vadd.f32 %v270, %v283
  %285 = vdwg.mxu0
  %286 = vmatpush.bf16.msra.mxu0 %v223
  %287 = vmatpush.bf16.msra.mxu0 %v222
  %288 = vmatpush.bf16.msra.mxu0 %v221
  %289 = vmatpush.bf16.msra.mxu0 %v220
  %290 = vmatpush.bf16.msra.mxu0 %v219
  %291 = vmatpush.bf16.msra.mxu0 %v218
  %292 = vmatpush.bf16.msra.mxu0 %v217
  %293 = vmatpush.bf16.msra.mxu0 %v216
  %294 = vmatmul.bf16.gmra.mxu0 %v87
  %v295 = vpop.f32.mrf.mxu0
  %v296 = vadd.f32 %v282, %v295
  %v297 = vpop.f32.mrf.mxu0
  %v298 = vadd.f32 %v284, %v297
  %299 = vdwg.mxu0
  %300 = vmatpush.bf16.msra.mxu0 0
  %301 = vmatpush.bf16.msra.mxu0 0
  %302 = vmatpush.bf16.msra.mxu0 0
  %303 = vmatpush.bf16.msra.mxu0 0
  %304 = vmatpush.bf16.msra.mxu0 0
  %305 = vmatpush.bf16.msra.mxu0 %v226
  %306 = vmatpush.bf16.msra.mxu0 %v225
  %307 = vmatpush.bf16.msra.mxu0 %v224
  %308 = vmatmul.bf16.gmra.mxu0 %v256
  %v309 = vpop.f32.mrf.mxu0
  %v310 = vadd.f32 %v296, %v309
  %v311 = vpop.f32.mrf.mxu0
  %v312 = vadd.f32 %v298, %v311
  %313 = vdwg.mxu0
  %v314 = vpack.c.bf16 %v310, %v310
  %v315 = vpack.c.bf16 %v312, %v312
  %vm316 = vcmask 125952
  %317 = vst.msk [vmem:[%s2] sm:$0xf] %vm316, %v314
  %318 = vst.msk [vmem:[%s2 + $0x4] sm:$0xf] %vm316, %v315
  %vm319 = vcmask 130048
  %v320 = vsel %vm319, %v310, 0.0
  %v321 = vsel %vm319, %v312, 0.0
  %v322 = vadd.f32 %v320, %v321
  %v323 = vrot.slane %v322, 4
  %v324 = vadd.f32 %v322, %v323
  %v325 = vrot.slane %v324, 2
  %v326 = vadd.f32 %v324, %v325
  %v327 = vrot.slane %v326, 1
  %v328 = vadd.f32 %v326, %v327
  %vm329 = vcmask 122880
  %330 = vst.msk [vmem:[%s3] sm:$0x1] %vm329, %v328
  %v331 = vmul.f32 %v310, %v310
  %v332 = vmul.f32 %v312, %v312
  %v333 = vsel %vm319, %v331, 0.0
  %v334 = vsel %vm319, %v332, 0.0
  %v335 = vadd.f32 %v333, %v334
  %v336 = vrot.slane %v335, 4
  %v337 = vadd.f32 %v335, %v336
  %v338 = vrot.slane %v337, 2
  %v339 = vadd.f32 %v337, %v338
  %v340 = vrot.slane %v339, 1
  %v341 = vadd.f32 %v339, %v340
  %342 = vst.msk [vmem:[%s4] sm:$0x1] %vm329, %v341
  // Predicated region
  $region10: #{refine_net_unet_forward.24} parent=0 // pred_check
    _
  $region11: #{refine_net_unet_forward.24} parent=0 // pred_check_branch
    %344 = sbr.rel (0) target = $region13
  $region12: #{refine_net_unet_forward.24} parent=0 // pred_region
    _
  $region13: #{refine_net_unet_forward.24} parent=0 // pred_fallthru
    _
  // Predicated region
  $region14: #{refine_net_unet_forward.24} parent=0 // pred_check
    _
  $region15: #{refine_net_unet_forward.24} parent=0 // pred_check_branch
    %346 = sbr.rel (0) target = $region17
  $region16: #{refine_net_unet_forward.24} parent=0 // pred_region
    _
  $region17: #{refine_net_unet_forward.24} parent=0 // pred_fallthru
    _
  // Predicated region
  $region18: #{refine_net_unet_forward.24} parent=0 // pred_check
    _
  $region19: #{refine_net_unet_forward.24} parent=0 // pred_check_branch
    %348 = sbr.rel (0) target = $region21
  $region20: #{refine_net_unet_forward.24} parent=0 // pred_region
    _
  $region21: #{refine_net_unet_forward.24} parent=0 // pred_fallthru
    _
  // Predicated region
  $region22: #{refine_net_unet_forward.24} parent=0 // pred_check
    _
  $region23: #{refine_net_unet_forward.24} parent=0 // pred_check_branch
    %350 = sbr.rel (0) target = $region25
  $region24: #{refine_net_unet_forward.24} parent=0 // pred_region
    _
  $region25: #{refine_net_unet_forward.24} parent=0 // pred_fallthru
    _
  // Predicated region
  $region26: #{refine_net_unet_forward.24} parent=0 // pred_check
    _
  $region27: #{refine_net_unet_forward.24} parent=0 // pred_check_branch
    %352 = sbr.rel (0) target = $region29
  $region28: #{refine_net_unet_forward.24} parent=0 // pred_region
    _
  $region29: #{refine_net_unet_forward.24} parent=0 // pred_fallthru
    _
  // Predicated region
  $region30: #{refine_net_unet_forward.24} parent=0 // pred_check
    _
  $region31: #{refine_net_unet_forward.24} parent=0 // pred_check_branch
    %354 = sbr.rel (0) target = $region33
  $region32: #{refine_net_unet_forward.24} parent=0 // pred_region
    _
  $region33: #{refine_net_unet_forward.24} parent=0 // pred_fallthru
    _

// kernel: refine_net_unet_forward.26
$region0: #{refine_net_unet_forward.26}
  #allocation0 [shape = 'u32[]', space=smem, size = 0x4, offset = 0x4, fixed_abs, tag = 'smem constant byte address 0x4 - core index']
  #allocation1 [shape = 'u32[72,128]{1,0:T(1,128)}', space=vmem, size = 0x9000, scoped, tag = 'internal scratch']
  %s0 = inlined_call_operand.vmem [shape: bf16[128,648], index: 0, kind: input, shape index: {}]
  %s1 = inlined_call_operand.vmem [shape: bf16[648,8], index: 1, kind: input, shape index: {}]
  %s2 = inlined_call_operand.vmem [shape: bf16[128,8], index: 2, kind: output, shape index: {0}]
  %s3 = inlined_call_operand.vmem [shape: f32[1,1,8], index: 3, kind: output, shape index: {1}]
  %s4 = inlined_call_operand.vmem [shape: f32[1,1,8], index: 4, kind: output, shape index: {2}]
  %5 = xla_tuple %s2, %s3, %s4
  %s6 = sld [smem:[#allocation0]]
  $region34: #{refine_net_unet_forward.26} parent=0
    _
  %s8 = ssub.s32 1, %s6
  %s9 = scalar_select 0, %s8, %s6
  // Predicated region
  $region2: #{refine_net_unet_forward.26} parent=0 // pred_check
    _
  $region3: #{refine_net_unet_forward.26} parent=0 // pred_check_branch
    %11 = sbr.rel (0) target = $region5
  $region4: #{refine_net_unet_forward.26} parent=0 // pred_region
    _
  $region5: #{refine_net_unet_forward.26} parent=0 // pred_fallthru
    _
  // Predicated region
  $region6: #{refine_net_unet_forward.26} parent=0 // pred_check
    _
  $region7: #{refine_net_unet_forward.26} parent=0 // pred_check_branch
    %13 = sbr.rel (0) target = $region9
  $region8: #{refine_net_unet_forward.26} parent=0 // pred_region
    _
  $region9: #{refine_net_unet_forward.26} parent=0 // pred_fallthru
    _
  %v15 = vld [vmem:[%s0] sm:$0xff]
  %v16 = vld [vmem:[%s0 + $0x8] sm:$0xff]
  %v17 = vld [vmem:[%s0 + $0x10] sm:$0xff]
  %v18 = vld [vmem:[%s0 + $0x18] sm:$0xff]
  %v19 = vld [vmem:[%s0 + $0x20] sm:$0xff]
  %v20 = vld [vmem:[%s0 + $0x28] sm:$0xff]
  %v21 = vld [vmem:[%s0 + $0x30] sm:$0xff]
  %v22 = vld [vmem:[%s0 + $0x38] sm:$0xff]
  %v23 = vld [vmem:[%s0 + $0x40] sm:$0xff]
  %v24 = vld [vmem:[%s0 + $0x48] sm:$0xff]
  %v25 = vld [vmem:[%s0 + $0x50] sm:$0xff]
  %v26 = vld [vmem:[%s0 + $0x58] sm:$0xff]
  %v27 = vld [vmem:[%s0 + $0x60] sm:$0xff]
  %v28 = vld [vmem:[%s0 + $0x68] sm:$0xff]
  %v29 = vld [vmem:[%s0 + $0x70] sm:$0xff]
  %v30 = vld [vmem:[%s0 + $0x78] sm:$0xff]
  %v31 = vld [vmem:[%s0 + $0x80] sm:$0xff]
  %v32 = vld [vmem:[%s0 + $0x88] sm:$0xff]
  %v33 = vld [vmem:[%s0 + $0x90] sm:$0xff]
  %v34 = vld [vmem:[%s0 + $0x98] sm:$0xff]
  %v35 = vld [vmem:[%s0 + $0xa0] sm:$0xff]
  %v36 = vld [vmem:[%s0 + $0xa8] sm:$0xff]
  %v37 = vld [vmem:[%s0 + $0xb0] sm:$0xff]
  %v38 = vld [vmem:[%s0 + $0xb8] sm:$0xff]
  %v39 = vld [vmem:[%s0 + $0xc0] sm:$0xff]
  %v40 = vld [vmem:[%s0 + $0xc8] sm:$0xff]
  %v41 = vld [vmem:[%s0 + $0xd0] sm:$0xff]
  %v42 = vld [vmem:[%s0 + $0xd8] sm:$0xff]
  %v43 = vld [vmem:[%s0 + $0xe0] sm:$0xff]
  %v44 = vld [vmem:[%s0 + $0xe8] sm:$0xff]
  %v45 = vld [vmem:[%s0 + $0xf0] sm:$0xff]
  %v46 = vld [vmem:[%s0 + $0xf8] sm:$0xff]
  %v47 = vld [vmem:[%s0 + $0x100] sm:$0xff]
  %v48 = vld [vmem:[%s0 + $0x108] sm:$0xff]
  %v49 = vld [vmem:[%s0 + $0x110] sm:$0xff]
  %v50 = vld [vmem:[%s0 + $0x118] sm:$0xff]
  %v51 = vld [vmem:[%s0 + $0x120] sm:$0xff]
  %v52 = vld [vmem:[%s0 + $0x128] sm:$0xff]
  %v53 = vld [vmem:[%s0 + $0x130] sm:$0xff]
  %v54 = vld [vmem:[%s0 + $0x138] sm:$0xff]
  %v55 = vld [vmem:[%s0 + $0x140] sm:$0xff]
  %v56 = vld [vmem:[%s0 + $0x148] sm:$0xff]
  %v57 = vld [vmem:[%s0 + $0x150] sm:$0xff]
  %v58 = vld [vmem:[%s0 + $0x158] sm:$0xff]
  %v59 = vld [vmem:[%s0 + $0x160] sm:$0xff]
  %v60 = vld [vmem:[%s0 + $0x168] sm:$0xff]
  %v61 = vld [vmem:[%s0 + $0x170] sm:$0xff]
  %v62 = vld [vmem:[%s0 + $0x178] sm:$0xff]
  %v63 = vld [vmem:[%s1] sm:$0xf]
  %v64 = vld [vmem:[%s1 + $0x4] sm:$0xf]
  %v65 = vld [vmem:[%s1 + $0x8] sm:$0xf]
  %v66 = vld [vmem:[%s1 + $0xc] sm:$0xf]
  %v67 = vld [vmem:[%s1 + $0x10] sm:$0xf]
  %v68 = vld [vmem:[%s1 + $0x14] sm:$0xf]
  %v69 = vld [vmem:[%s1 + $0x18] sm:$0xf]
  %v70 = vld [vmem:[%s1 + $0x1c] sm:$0xf]
  %v71 = vld [vmem:[%s1 + $0x20] sm:$0xf]
  %v72 = vld [vmem:[%s1 + $0x24] sm:$0xf]
  %v73 = vld [vmem:[%s1 + $0x28] sm:$0xf]
  %v74 = vld [vmem:[%s1 + $0x2c] sm:$0xf]
  %v75 = vld [vmem:[%s1 + $0x30] sm:$0xf]
  %v76 = vld [vmem:[%s1 + $0x34] sm:$0xf]
  %v77 = vld [vmem:[%s1 + $0x38] sm:$0xf]
  %v78 = vld [vmem:[%s1 + $0x3c] sm:$0xf]
  %v79 = vld [vmem:[%s1 + $0x40] sm:$0xf]
  %v80 = vld [vmem:[%s1 + $0x44] sm:$0xf]
  %v81 = vld [vmem:[%s1 + $0x48] sm:$0xf]
  %v82 = vld [vmem:[%s1 + $0x4c] sm:$0xf]
  %v83 = vld [vmem:[%s1 + $0x50] sm:$0xf]
  %v84 = vld [vmem:[%s1 + $0x54] sm:$0xf]
  %v85 = vld [vmem:[%s1 + $0x58] sm:$0xf]
  %v86 = vld [vmem:[%s1 + $0x5c] sm:$0xf]
  %v87 = vld [vmem:[%s1 + $0x60] sm:$0xf]
  %v88 = vld [vmem:[%s1 + $0x64] sm:$0xf]
  %v89 = vld [vmem:[%s1 + $0x68] sm:$0xf]
  %v90 = vld [vmem:[%s1 + $0x6c] sm:$0xf]
  %v91 = vld [vmem:[%s1 + $0x70] sm:$0xf]
  %v92 = vld [vmem:[%s1 + $0x74] sm:$0xf]
  %v93 = vld [vmem:[%s1 + $0x78] sm:$0xf]
  %v94 = vld [vmem:[%s1 + $0x7c] sm:$0xf]
  %v95 = vld [vmem:[%s1 + $0x80] sm:$0xf]
  %v96 = vld [vmem:[%s1 + $0x84] sm:$0xf]
  %v97 = vld [vmem:[%s1 + $0x88] sm:$0xf]
  %v98 = vld [vmem:[%s1 + $0x8c] sm:$0xf]
  %v99 = vld [vmem:[%s1 + $0x90] sm:$0xf]
  %v100 = vld [vmem:[%s1 + $0x94] sm:$0xf]
  %v101 = vld [vmem:[%s1 + $0x98] sm:$0xf]
  %v102 = vld [vmem:[%s1 + $0x9c] sm:$0xf]
  %v103 = vld [vmem:[%s1 + $0xa0] sm:$0xf]
  %v104 = vld [vmem:[%s1 + $0xa4] sm:$0xf]
  %v105 = vld [vmem:[%s1 + $0xa8] sm:$0xf]
  %v106 = vld [vmem:[%s1 + $0xac] sm:$0xf]
  %v107 = vld [vmem:[%s1 + $0xb0] sm:$0xf]
  %v108 = vld [vmem:[%s1 + $0xb4] sm:$0xf]
  %v109 = vld [vmem:[%s1 + $0xb8] sm:$0xf]
  %v110 = vld [vmem:[%s1 + $0xbc] sm:$0xf]
  %v111 = vld [vmem:[%s1 + $0xc0] sm:$0xf]
  %v112 = vld [vmem:[%s1 + $0xc4] sm:$0xf]
  %v113 = vld [vmem:[%s1 + $0xc8] sm:$0xf]
  %v114 = vld [vmem:[%s1 + $0xcc] sm:$0xf]
  %v115 = vld [vmem:[%s1 + $0xd0] sm:$0xf]
  %v116 = vld [vmem:[%s1 + $0xd4] sm:$0xf]
  %v117 = vld [vmem:[%s1 + $0xd8] sm:$0xf]
  %v118 = vld [vmem:[%s1 + $0xdc] sm:$0xf]
  %v119 = vld [vmem:[%s1 + $0xe0] sm:$0xf]
  %v120 = vld [vmem:[%s1 + $0xe4] sm:$0xf]
  %v121 = vld [vmem:[%s1 + $0xe8] sm:$0xf]
  %v122 = vld [vmem:[%s1 + $0xec] sm:$0xf]
  %v123 = vld [vmem:[%s1 + $0xf0] sm:$0xf]
  %v124 = vld [vmem:[%s1 + $0xf4] sm:$0xf]
  %v125 = vld [vmem:[%s1 + $0xf8] sm:$0xf]
  %v126 = vld [vmem:[%s1 + $0xfc] sm:$0xf]
  %v127 = vld [vmem:[%s1 + $0x100] sm:$0xf]
  %v128 = vld [vmem:[%s1 + $0x104] sm:$0xf]
  %v129 = vld [vmem:[%s1 + $0x108] sm:$0xf]
  %v130 = vld [vmem:[%s1 + $0x10c] sm:$0xf]
  %v131 = vld [vmem:[%s1 + $0x110] sm:$0xf]
  %v132 = vld [vmem:[%s1 + $0x114] sm:$0xf]
  %v133 = vld [vmem:[%s1 + $0x118] sm:$0xf]
  %v134 = vld [vmem:[%s1 + $0x11c] sm:$0xf]
  %v135 = vld [vmem:[%s1 + $0x120] sm:$0xf]
  %v136 = vld [vmem:[%s1 + $0x124] sm:$0xf]
  %v137 = vld [vmem:[%s1 + $0x128] sm:$0xf]
  %v138 = vld [vmem:[%s1 + $0x12c] sm:$0xf]
  %v139 = vld [vmem:[%s1 + $0x130] sm:$0xf]
  %v140 = vld [vmem:[%s1 + $0x134] sm:$0xf]
  %v141 = vld [vmem:[%s1 + $0x138] sm:$0xf]
  %v142 = vld [vmem:[%s1 + $0x13c] sm:$0xf]
  %v143 = vld [vmem:[%s1 + $0x140] sm:$0xf]
  %v192 = vunpack.c.l.b16 %v15
  %v193 = vunpack.c.h.b16 %v15
  %v194 = vunpack.c.l.b16 %v16
  %v195 = vunpack.c.h.b16 %v16
  %v196 = vunpack.c.l.b16 %v17
  %v197 = vunpack.c.h.b16 %v17
  %v198 = vunpack.c.l.b16 %v18
  %v199 = vunpack.c.h.b16 %v18
  %v200 = vunpack.c.l.b16 %v19
  %v201 = vunpack.c.h.b16 %v19
  %v202 = vunpack.c.l.b16 %v20
  %v203 = vunpack.c.h.b16 %v20
  %v204 = vunpack.c.l.b16 %v21
  %v205 = vunpack.c.h.b16 %v21
  %v206 = vunpack.c.l.b16 %v22
  %v207 = vunpack.c.h.b16 %v22
  %v208 = vunpack.c.l.b16 %v23
  %v209 = vunpack.c.h.b16 %v23
  %v210 = vunpack.c.l.b16 %v24
  %v211 = vunpack.c.h.b16 %v24
  %v212 = vunpack.c.l.b16 %v25
  %v213 = vunpack.c.h.b16 %v25
  %v214 = vunpack.c.l.b16 %v26
  %v215 = vunpack.c.h.b16 %v26
  %v216 = vunpack.c.l.b16 %v27
  %v217 = vunpack.c.h.b16 %v27
  %v218 = vunpack.c.l.b16 %v28
  %v219 = vunpack.c.h.b16 %v28
  %v220 = vunpack.c.l.b16 %v29
  %v221 = vunpack.c.h.b16 %v29
  %v222 = vunpack.c.l.b16 %v30
  %v223 = vunpack.c.h.b16 %v30
  %v224 = vunpack.c.l.b16 %v31
  %v225 = vunpack.c.h.b16 %v31
  %v226 = vunpack.c.l.b16 %v32
  %v227 = vunpack.c.h.b16 %v32
  %v228 = vunpack.c.l.b16 %v33
  %v229 = vunpack.c.h.b16 %v33
  %v230 = vunpack.c.l.b16 %v34
  %v231 = vunpack.c.h.b16 %v34
  %v232 = vunpack.c.l.b16 %v35
  %v233 = vunpack.c.h.b16 %v35
  %v234 = vunpack.c.l.b16 %v36
  %v235 = vunpack.c.h.b16 %v36
  %v236 = vunpack.c.l.b16 %v37
  %v237 = vunpack.c.h.b16 %v37
  %v238 = vunpack.c.l.b16 %v38
  %v239 = vunpack.c.h.b16 %v38
  %v240 = vunpack.c.l.b16 %v39
  %v241 = vunpack.c.h.b16 %v39
  %v242 = vunpack.c.l.b16 %v40
  %v243 = vunpack.c.h.b16 %v40
  %v244 = vunpack.c.l.b16 %v41
  %v245 = vunpack.c.h.b16 %v41
  %v246 = vunpack.c.l.b16 %v42
  %v247 = vunpack.c.h.b16 %v42
  %v248 = vunpack.c.l.b16 %v43
  %v249 = vunpack.c.h.b16 %v43
  %v250 = vunpack.c.l.b16 %v44
  %v251 = vunpack.c.h.b16 %v44
  %v252 = vunpack.c.l.b16 %v45
  %v253 = vunpack.c.h.b16 %v45
  %v254 = vunpack.c.l.b16 %v46
  %v255 = vunpack.c.h.b16 %v46
  %v256 = vunpack.c.l.b16 %v47
  %v257 = vunpack.c.h.b16 %v47
  %v258 = vunpack.c.l.b16 %v48
  %v259 = vunpack.c.h.b16 %v48
  %v260 = vunpack.c.l.b16 %v49
  %v261 = vunpack.c.h.b16 %v49
  %v262 = vunpack.c.l.b16 %v50
  %v263 = vunpack.c.h.b16 %v50
  %v264 = vunpack.c.l.b16 %v51
  %v265 = vunpack.c.h.b16 %v51
  %v266 = vunpack.c.l.b16 %v52
  %v267 = vunpack.c.h.b16 %v52
  %v268 = vunpack.c.l.b16 %v53
  %v269 = vunpack.c.h.b16 %v53
  %v270 = vunpack.c.l.b16 %v54
  %v271 = vunpack.c.h.b16 %v54
  %v272 = vunpack.c.l.b16 %v55
  %v273 = vunpack.c.h.b16 %v55
  %v274 = vunpack.c.l.b16 %v56
  %v275 = vunpack.c.h.b16 %v56
  %v276 = vunpack.c.l.b16 %v57
  %v277 = vunpack.c.h.b16 %v57
  %v278 = vunpack.c.l.b16 %v58
  %v279 = vunpack.c.h.b16 %v58
  %v280 = vunpack.c.l.b16 %v59
  %v281 = vunpack.c.h.b16 %v59
  %v282 = vunpack.c.l.b16 %v60
  %v283 = vunpack.c.h.b16 %v60
  %v284 = vunpack.c.l.b16 %v61
  %v285 = vunpack.c.h.b16 %v61
  %v286 = vunpack.c.l.b16 %v62
  %v287 = vunpack.c.h.b16 %v62
  %v288 = vpack.c.b16 %v198, %v192
  %v289 = vpack.c.b16 %v199, %v193
  %v290 = vpack.c.b16 %v200, %v194
  %v291 = vpack.c.b16 %v201, %v195
  %v292 = vpack.c.b16 %v202, %v196
  %v293 = vpack.c.b16 %v203, %v197
  %v294 = vpack.c.b16 %v210, %v204
  %v295 = vpack.c.b16 %v211, %v205
  %v296 = vpack.c.b16 %v212, %v206
  %v297 = vpack.c.b16 %v213, %v207
  %v298 = vpack.c.b16 %v214, %v208
  %v299 = vpack.c.b16 %v215, %v209
  %v300 = vpack.c.b16 %v222, %v216
  %v301 = vpack.c.b16 %v223, %v217
  %v302 = vpack.c.b16 %v224, %v218
  %v303 = vpack.c.b16 %v225, %v219
  %v304 = vpack.c.b16 %v226, %v220
  %v305 = vpack.c.b16 %v227, %v221
  %v306 = vpack.c.b16 %v234, %v228
  %v307 = vpack.c.b16 %v235, %v229
  %v308 = vpack.c.b16 %v236, %v230
  %v309 = vpack.c.b16 %v237, %v231
  %v310 = vpack.c.b16 %v238, %v232
  %v311 = vpack.c.b16 %v239, %v233
  %v312 = vpack.c.b16 %v246, %v240
  %v313 = vpack.c.b16 %v247, %v241
  %v314 = vpack.c.b16 %v248, %v242
  %v315 = vpack.c.b16 %v249, %v243
  %v316 = vpack.c.b16 %v250, %v244
  %v317 = vpack.c.b16 %v251, %v245
  %v318 = vpack.c.b16 %v258, %v252
  %v319 = vpack.c.b16 %v259, %v253
  %v320 = vpack.c.b16 %v260, %v254
  %v321 = vpack.c.b16 %v261, %v255
  %v322 = vpack.c.b16 %v262, %v256
  %v323 = vpack.c.b16 %v263, %v257
  %v324 = vpack.c.b16 %v270, %v264
  %v325 = vpack.c.b16 %v271, %v265
  %v326 = vpack.c.b16 %v272, %v266
  %v327 = vpack.c.b16 %v273, %v267
  %v328 = vpack.c.b16 %v274, %v268
  %v329 = vpack.c.b16 %v275, %v269
  %v330 = vpack.c.b16 %v282, %v276
  %v331 = vpack.c.b16 %v283, %v277
  %v332 = vpack.c.b16 %v284, %v278
  %v333 = vpack.c.b16 %v285, %v279
  %v334 = vpack.c.b16 %v286, %v280
  %v335 = vpack.c.b16 %v287, %v281
  %v457 = vunpack.c.l.b16 %v63
  %v458 = vunpack.c.l.b16 %v64
  %v459 = vunpack.c.l.b16 %v65
  %v460 = vunpack.c.l.b16 %v66
  %v461 = vunpack.c.l.b16 %v67
  %v462 = vunpack.c.l.b16 %v68
  %v463 = vunpack.c.l.b16 %v69
  %v464 = vunpack.c.l.b16 %v70
  %v465 = vunpack.c.l.b16 %v71
  %v466 = vunpack.c.l.b16 %v72
  %v467 = vunpack.c.l.b16 %v73
  %v468 = vunpack.c.l.b16 %v74
  %v469 = vunpack.c.l.b16 %v75
  %v470 = vunpack.c.l.b16 %v76
  %v471 = vunpack.c.l.b16 %v77
  %v472 = vunpack.c.l.b16 %v78
  %v473 = vunpack.c.l.b16 %v79
  %v474 = vunpack.c.l.b16 %v80
  %v475 = vunpack.c.l.b16 %v81
  %v476 = vunpack.c.l.b16 %v82
  %v477 = vunpack.c.l.b16 %v83
  %v478 = vunpack.c.l.b16 %v84
  %v479 = vunpack.c.l.b16 %v85
  %v480 = vunpack.c.l.b16 %v86
  %v481 = vunpack.c.l.b16 %v87
  %v482 = vunpack.c.l.b16 %v88
  %v483 = vunpack.c.l.b16 %v89
  %v484 = vunpack.c.l.b16 %v90
  %v485 = vunpack.c.l.b16 %v91
  %v486 = vunpack.c.l.b16 %v92
  %v487 = vunpack.c.l.b16 %v93
  %v488 = vunpack.c.l.b16 %v94
  %v489 = vunpack.c.l.b16 %v95
  %v490 = vunpack.c.l.b16 %v96
  %v491 = vunpack.c.l.b16 %v97
  %v492 = vunpack.c.l.b16 %v98
  %v493 = vunpack.c.l.b16 %v99
  %v494 = vunpack.c.l.b16 %v100
  %v495 = vunpack.c.l.b16 %v101
  %v496 = vunpack.c.l.b16 %v102
  %v497 = vunpack.c.l.b16 %v103
  %v498 = vunpack.c.l.b16 %v104
  %v499 = vunpack.c.l.b16 %v105
  %v500 = vunpack.c.l.b16 %v106
  %v501 = vunpack.c.l.b16 %v107
  %v502 = vunpack.c.l.b16 %v108
  %v503 = vunpack.c.l.b16 %v109
  %v504 = vunpack.c.l.b16 %v110
  %v505 = vunpack.c.l.b16 %v111
  %v506 = vunpack.c.l.b16 %v112
  %v507 = vunpack.c.l.b16 %v113
  %v508 = vunpack.c.l.b16 %v114
  %v509 = vunpack.c.l.b16 %v115
  %v510 = vunpack.c.l.b16 %v116
  %v511 = vunpack.c.l.b16 %v117
  %v512 = vunpack.c.l.b16 %v118
  %v513 = vunpack.c.l.b16 %v119
  %v514 = vunpack.c.l.b16 %v120
  %v515 = vunpack.c.l.b16 %v121
  %v516 = vunpack.c.l.b16 %v122
  %v517 = vunpack.c.l.b16 %v123
  %v518 = vunpack.c.l.b16 %v124
  %v519 = vunpack.c.l.b16 %v125
  %v520 = vunpack.c.l.b16 %v126
  %v521 = vunpack.c.l.b16 %v127
  %v522 = vunpack.c.l.b16 %v128
  %v523 = vunpack.c.l.b16 %v129
  %v524 = vunpack.c.l.b16 %v130
  %v525 = vunpack.c.l.b16 %v131
  %v526 = vunpack.c.l.b16 %v132
  %v527 = vunpack.c.l.b16 %v133
  %v528 = vunpack.c.l.b16 %v134
  %v529 = vunpack.c.l.b16 %v135
  %v530 = vunpack.c.l.b16 %v136
  %v531 = vunpack.c.l.b16 %v137
  %v532 = vunpack.c.l.b16 %v138
  %v533 = vunpack.c.l.b16 %v139
  %v534 = vunpack.c.l.b16 %v140
  %v535 = vunpack.c.l.b16 %v141
  %v536 = vunpack.c.l.b16 %v142
  %v537 = vunpack.c.l.b16 %v143
  %v538 = vpack.c.b16 %v458, %v457
  %v539 = vpack.c.b16 %v460, %v459
  %v540 = vpack.c.b16 %v462, %v461
  %v541 = vpack.c.b16 %v464, %v463
  %v542 = vpack.c.b16 %v466, %v465
  %v543 = vpack.c.b16 %v468, %v467
  %v544 = vpack.c.b16 %v470, %v469
  %v545 = vpack.c.b16 %v472, %v471
  %v546 = vpack.c.b16 %v474, %v473
  %v547 = vpack.c.b16 %v476, %v475
  %v548 = vpack.c.b16 %v478, %v477
  %v549 = vpack.c.b16 %v480, %v479
  %v550 = vpack.c.b16 %v482, %v481
  %v551 = vpack.c.b16 %v484, %v483
  %v552 = vpack.c.b16 %v486, %v485
  %v553 = vpack.c.b16 %v488, %v487
  %v554 = vpack.c.b16 %v490, %v489
  %v555 = vpack.c.b16 %v492, %v491
  %v556 = vpack.c.b16 %v494, %v493
  %v557 = vpack.c.b16 %v496, %v495
  %v558 = vpack.c.b16 %v498, %v497
  %v559 = vpack.c.b16 %v500, %v499
  %v560 = vpack.c.b16 %v502, %v501
  %v561 = vpack.c.b16 %v504, %v503
  %v562 = vpack.c.b16 %v506, %v505
  %v563 = vpack.c.b16 %v508, %v507
  %v564 = vpack.c.b16 %v510, %v509
  %v565 = vpack.c.b16 %v512, %v511
  %v566 = vpack.c.b16 %v514, %v513
  %v567 = vpack.c.b16 %v516, %v515
  %v568 = vpack.c.b16 %v518, %v517
  %v569 = vpack.c.b16 %v520, %v519
  %v570 = vpack.c.b16 %v522, %v521
  %v571 = vpack.c.b16 %v524, %v523
  %v572 = vpack.c.b16 %v526, %v525
  %v573 = vpack.c.b16 %v528, %v527
  %v574 = vpack.c.b16 %v530, %v529
  %v575 = vpack.c.b16 %v532, %v531
  %v576 = vpack.c.b16 %v534, %v533
  %v577 = vpack.c.b16 %v536, %v535
  %v578 = vpack.c.b16 %v537, %v537
  %vm619 = vcmask 64512
  %v621 = vsel %vm619, %v293, 0
  %v624 = vsel %vm619, %v299, 0
  %v627 = vsel %vm619, %v305, 0
  %v630 = vsel %vm619, %v311, 0
  %v633 = vsel %vm619, %v317, 0
  %v636 = vsel %vm619, %v323, 0
  %v639 = vsel %vm619, %v329, 0
  %v642 = vsel %vm619, %v335, 0
  %vm644 = vcmask 1043456
  %v646 = vsel %vm644, %v578, 0
  %648 = vmatpush.bf16.msra.mxu0 %v545
  %649 = vmatpush.bf16.msra.mxu0 %v544
  %650 = vmatpush.bf16.msra.mxu0 %v543
  %651 = vmatpush.bf16.msra.mxu0 %v542
  %652 = vmatpush.bf16.msra.mxu0 %v541
  %653 = vmatpush.bf16.msra.mxu0 %v540
  %654 = vmatpush.bf16.msra.mxu0 %v539
  %655 = vmatpush.bf16.msra.mxu0 %v538
  %656 = vmatmul.bf16.gmra.mxu0 %v288
  %v657 = vpop.f32.mrf.mxu0
  %v658 = vadd.f32 0.0, %v657
  %v659 = vpop.f32.mrf.mxu0
  %v660 = vadd.f32 0.0, %v659
  %661 = vmatmul.bf16.gmra.mxu0 %v294
  %v662 = vpop.f32.mrf.mxu0
  %v663 = vadd.f32 0.0, %v662
  %v664 = vpop.f32.mrf.mxu0
  %v665 = vadd.f32 0.0, %v664
  %666 = vmatmul.bf16.gmra.mxu0 %v300
  %v667 = vpop.f32.mrf.mxu0
  %v668 = vadd.f32 0.0, %v667
  %v669 = vpop.f32.mrf.mxu0
  %v670 = vadd.f32 0.0, %v669
  %671 = vmatmul.bf16.gmra.mxu0 %v306
  %v672 = vpop.f32.mrf.mxu0
  %v673 = vadd.f32 0.0, %v672
  %v674 = vpop.f32.mrf.mxu0
  %v675 = vadd.f32 0.0, %v674
  %676 = vmatmul.bf16.gmra.mxu0 %v312
  %v677 = vpop.f32.mrf.mxu0
  %v678 = vadd.f32 0.0, %v677
  %v679 = vpop.f32.mrf.mxu0
  %v680 = vadd.f32 0.0, %v679
  %681 = vmatmul.bf16.gmra.mxu0 %v318
  %v682 = vpop.f32.mrf.mxu0
  %v683 = vadd.f32 0.0, %v682
  %v684 = vpop.f32.mrf.mxu0
  %v685 = vadd.f32 0.0, %v684
  %686 = vmatmul.bf16.gmra.mxu0 %v324
  %v687 = vpop.f32.mrf.mxu0
  %v688 = vadd.f32 0.0, %v687
  %v689 = vpop.f32.mrf.mxu0
  %v690 = vadd.f32 0.0, %v689
  %691 = vmatmul.bf16.gmra.mxu0 %v330
  %v692 = vpop.f32.mrf.mxu0
  %v693 = vadd.f32 0.0, %v692
  %v694 = vpop.f32.mrf.mxu0
  %v695 = vadd.f32 0.0, %v694
  %696 = vdwg.mxu0
  %697 = vmatpush.bf16.msra.mxu0 %v553
  %698 = vmatpush.bf16.msra.mxu0 %v552
  %699 = vmatpush.bf16.msra.mxu0 %v551
  %700 = vmatpush.bf16.msra.mxu0 %v550
  %701 = vmatpush.bf16.msra.mxu0 %v549
  %702 = vmatpush.bf16.msra.mxu0 %v548
  %703 = vmatpush.bf16.msra.mxu0 %v547
  %704 = vmatpush.bf16.msra.mxu0 %v546
  %705 = vmatmul.bf16.gmra.mxu0 %v289
  %v706 = vpop.f32.mrf.mxu0
  %v707 = vadd.f32 %v658, %v706
  %v708 = vpop.f32.mrf.mxu0
  %v709 = vadd.f32 %v660, %v708
  %710 = vmatmul.bf16.gmra.mxu0 %v295
  %v711 = vpop.f32.mrf.mxu0
  %v712 = vadd.f32 %v663, %v711
  %v713 = vpop.f32.mrf.mxu0
  %v714 = vadd.f32 %v665, %v713
  %715 = vmatmul.bf16.gmra.mxu0 %v301
  %v716 = vpop.f32.mrf.mxu0
  %v717 = vadd.f32 %v668, %v716
  %v718 = vpop.f32.mrf.mxu0
  %v719 = vadd.f32 %v670, %v718
  %720 = vmatmul.bf16.gmra.mxu0 %v307
  %v721 = vpop.f32.mrf.mxu0
  %v722 = vadd.f32 %v673, %v721
  %v723 = vpop.f32.mrf.mxu0
  %v724 = vadd.f32 %v675, %v723
  %725 = vmatmul.bf16.gmra.mxu0 %v313
  %v726 = vpop.f32.mrf.mxu0
  %v727 = vadd.f32 %v678, %v726
  %v728 = vpop.f32.mrf.mxu0
  %v729 = vadd.f32 %v680, %v728
  %730 = vmatmul.bf16.gmra.mxu0 %v319
  %v731 = vpop.f32.mrf.mxu0
  %v732 = vadd.f32 %v683, %v731
  %v733 = vpop.f32.mrf.mxu0
  %v734 = vadd.f32 %v685, %v733
  %735 = vmatmul.bf16.gmra.mxu0 %v325
  %v736 = vpop.f32.mrf.mxu0
  %v737 = vadd.f32 %v688, %v736
  %v738 = vpop.f32.mrf.mxu0
  %v739 = vadd.f32 %v690, %v738
  %740 = vmatmul.bf16.gmra.mxu0 %v331
  %v741 = vpop.f32.mrf.mxu0
  %v742 = vadd.f32 %v693, %v741
  %v743 = vpop.f32.mrf.mxu0
  %v744 = vadd.f32 %v695, %v743
  %745 = vdwg.mxu0
  %746 = vmatpush.bf16.msra.mxu0 %v561
  %747 = vmatpush.bf16.msra.mxu0 %v560
  %748 = vmatpush.bf16.msra.mxu0 %v559
  %749 = vmatpush.bf16.msra.mxu0 %v558
  %750 = vmatpush.bf16.msra.mxu0 %v557
  %751 = vmatpush.bf16.msra.mxu0 %v556
  %752 = vmatpush.bf16.msra.mxu0 %v555
  %753 = vmatpush.bf16.msra.mxu0 %v554
  %754 = vmatmul.bf16.gmra.mxu0 %v290
  %v755 = vpop.f32.mrf.mxu0
  %v756 = vadd.f32 %v707, %v755
  %v757 = vpop.f32.mrf.mxu0
  %v758 = vadd.f32 %v709, %v757
  %759 = vmatmul.bf16.gmra.mxu0 %v296
  %v760 = vpop.f32.mrf.mxu0
  %v761 = vadd.f32 %v712, %v760
  %v762 = vpop.f32.mrf.mxu0
  %v763 = vadd.f32 %v714, %v762
  %764 = vmatmul.bf16.gmra.mxu0 %v302
  %v765 = vpop.f32.mrf.mxu0
  %v766 = vadd.f32 %v717, %v765
  %v767 = vpop.f32.mrf.mxu0
  %v768 = vadd.f32 %v719, %v767
  %769 = vmatmul.bf16.gmra.mxu0 %v308
  %v770 = vpop.f32.mrf.mxu0
  %v771 = vadd.f32 %v722, %v770
  %v772 = vpop.f32.mrf.mxu0
  %v773 = vadd.f32 %v724, %v772
  %774 = vmatmul.bf16.gmra.mxu0 %v314
  %v775 = vpop.f32.mrf.mxu0
  %v776 = vadd.f32 %v727, %v775
  %v777 = vpop.f32.mrf.mxu0
  %v778 = vadd.f32 %v729, %v777
  %779 = vmatmul.bf16.gmra.mxu0 %v320
  %v780 = vpop.f32.mrf.mxu0
  %v781 = vadd.f32 %v732, %v780
  %v782 = vpop.f32.mrf.mxu0
  %v783 = vadd.f32 %v734, %v782
  %784 = vmatmul.bf16.gmra.mxu0 %v326
  %v785 = vpop.f32.mrf.mxu0
  %v786 = vadd.f32 %v737, %v785
  %v787 = vpop.f32.mrf.mxu0
  %v788 = vadd.f32 %v739, %v787
  %789 = vmatmul.bf16.gmra.mxu0 %v332
  %v790 = vpop.f32.mrf.mxu0
  %v791 = vadd.f32 %v742, %v790
  %v792 = vpop.f32.mrf.mxu0
  %v793 = vadd.f32 %v744, %v792
  %794 = vdwg.mxu0
  %795 = vmatpush.bf16.msra.mxu0 %v569
  %796 = vmatpush.bf16.msra.mxu0 %v568
  %797 = vmatpush.bf16.msra.mxu0 %v567
  %798 = vmatpush.bf16.msra.mxu0 %v566
  %799 = vmatpush.bf16.msra.mxu0 %v565
  %800 = vmatpush.bf16.msra.mxu0 %v564
  %801 = vmatpush.bf16.msra.mxu0 %v563
  %802 = vmatpush.bf16.msra.mxu0 %v562
  %803 = vmatmul.bf16.gmra.mxu0 %v291
  %v804 = vpop.f32.mrf.mxu0
  %v805 = vadd.f32 %v756, %v804
  %v806 = vpop.f32.mrf.mxu0
  %v807 = vadd.f32 %v758, %v806
  %808 = vmatmul.bf16.gmra.mxu0 %v297
  %v809 = vpop.f32.mrf.mxu0
  %v810 = vadd.f32 %v761, %v809
  %v811 = vpop.f32.mrf.mxu0
  %v812 = vadd.f32 %v763, %v811
  %813 = vmatmul.bf16.gmra.mxu0 %v303
  %v814 = vpop.f32.mrf.mxu0
  %v815 = vadd.f32 %v766, %v814
  %v816 = vpop.f32.mrf.mxu0
  %v817 = vadd.f32 %v768, %v816
  %818 = vmatmul.bf16.gmra.mxu0 %v309
  %v819 = vpop.f32.mrf.mxu0
  %v820 = vadd.f32 %v771, %v819
  %v821 = vpop.f32.mrf.mxu0
  %v822 = vadd.f32 %v773, %v821
  %823 = vmatmul.bf16.gmra.mxu0 %v315
  %v824 = vpop.f32.mrf.mxu0
  %v825 = vadd.f32 %v776, %v824
  %v826 = vpop.f32.mrf.mxu0
  %v827 = vadd.f32 %v778, %v826
  %828 = vmatmul.bf16.gmra.mxu0 %v321
  %v829 = vpop.f32.mrf.mxu0
  %v830 = vadd.f32 %v781, %v829
  %v831 = vpop.f32.mrf.mxu0
  %v832 = vadd.f32 %v783, %v831
  %833 = vmatmul.bf16.gmra.mxu0 %v327
  %v834 = vpop.f32.mrf.mxu0
  %v835 = vadd.f32 %v786, %v834
  %v836 = vpop.f32.mrf.mxu0
  %v837 = vadd.f32 %v788, %v836
  %838 = vmatmul.bf16.gmra.mxu0 %v333
  %v839 = vpop.f32.mrf.mxu0
  %v840 = vadd.f32 %v791, %v839
  %v841 = vpop.f32.mrf.mxu0
  %v842 = vadd.f32 %v793, %v841
  %843 = vdwg.mxu0
  %844 = vmatpush.bf16.msra.mxu0 %v577
  %845 = vmatpush.bf16.msra.mxu0 %v576
  %846 = vmatpush.bf16.msra.mxu0 %v575
  %847 = vmatpush.bf16.msra.mxu0 %v574
  %848 = vmatpush.bf16.msra.mxu0 %v573
  %849 = vmatpush.bf16.msra.mxu0 %v572
  %850 = vmatpush.bf16.msra.mxu0 %v571
  %851 = vmatpush.bf16.msra.mxu0 %v570
  %852 = vmatmul.bf16.gmra.mxu0 %v292
  %v853 = vpop.f32.mrf.mxu0
  %v854 = vadd.f32 %v805, %v853
  %v855 = vpop.f32.mrf.mxu0
  %v856 = vadd.f32 %v807, %v855
  %857 = vmatmul.bf16.gmra.mxu0 %v298
  %v858 = vpop.f32.mrf.mxu0
  %v859 = vadd.f32 %v810, %v858
  %v860 = vpop.f32.mrf.mxu0
  %v861 = vadd.f32 %v812, %v860
  %862 = vmatmul.bf16.gmra.mxu0 %v304
  %v863 = vpop.f32.mrf.mxu0
  %v864 = vadd.f32 %v815, %v863
  %v865 = vpop.f32.mrf.mxu0
  %v866 = vadd.f32 %v817, %v865
  %867 = vmatmul.bf16.gmra.mxu0 %v310
  %v868 = vpop.f32.mrf.mxu0
  %v869 = vadd.f32 %v820, %v868
  %v870 = vpop.f32.mrf.mxu0
  %v871 = vadd.f32 %v822, %v870
  %872 = vmatmul.bf16.gmra.mxu0 %v316
  %v873 = vpop.f32.mrf.mxu0
  %v874 = vadd.f32 %v825, %v873
  %v875 = vpop.f32.mrf.mxu0
  %v876 = vadd.f32 %v827, %v875
  %877 = vmatmul.bf16.gmra.mxu0 %v322
  %v878 = vpop.f32.mrf.mxu0
  %v879 = vadd.f32 %v830, %v878
  %v880 = vpop.f32.mrf.mxu0
  %v881 = vadd.f32 %v832, %v880
  %882 = vmatmul.bf16.gmra.mxu0 %v328
  %v883 = vpop.f32.mrf.mxu0
  %v884 = vadd.f32 %v835, %v883
  %v885 = vpop.f32.mrf.mxu0
  %v886 = vadd.f32 %v837, %v885
  %887 = vmatmul.bf16.gmra.mxu0 %v334
  %v888 = vpop.f32.mrf.mxu0
  %v889 = vadd.f32 %v840, %v888
  %v890 = vpop.f32.mrf.mxu0
  %v891 = vadd.f32 %v842, %v890
  %892 = vdwg.mxu0
  %893 = vmatpush.bf16.msra.mxu0 0
  %894 = vmatpush.bf16.msra.mxu0 0
  %895 = vmatpush.bf16.msra.mxu0 0
  %896 = vmatpush.bf16.msra.mxu0 0
  %897 = vmatpush.bf16.msra.mxu0 0
  %898 = vmatpush.bf16.msra.mxu0 0
  %899 = vmatpush.bf16.msra.mxu0 0
  %900 = vmatpush.bf16.msra.mxu0 %v646
  %901 = vmatmul.bf16.gmra.mxu0 %v621
  %v902 = vpop.f32.mrf.mxu0
  %v903 = vadd.f32 %v854, %v902
  %v904 = vpop.f32.mrf.mxu0
  %v905 = vadd.f32 %v856, %v904
  %906 = vmatmul.bf16.gmra.mxu0 %v624
  %v907 = vpop.f32.mrf.mxu0
  %v908 = vadd.f32 %v859, %v907
  %v909 = vpop.f32.mrf.mxu0
  %v910 = vadd.f32 %v861, %v909
  %911 = vmatmul.bf16.gmra.mxu0 %v627
  %v912 = vpop.f32.mrf.mxu0
  %v913 = vadd.f32 %v864, %v912
  %v914 = vpop.f32.mrf.mxu0
  %v915 = vadd.f32 %v866, %v914
  %916 = vmatmul.bf16.gmra.mxu0 %v630
  %v917 = vpop.f32.mrf.mxu0
  %v918 = vadd.f32 %v869, %v917
  %v919 = vpop.f32.mrf.mxu0
  %v920 = vadd.f32 %v871, %v919
  %921 = vmatmul.bf16.gmra.mxu0 %v633
  %v922 = vpop.f32.mrf.mxu0
  %v923 = vadd.f32 %v874, %v922
  %v924 = vpop.f32.mrf.mxu0
  %v925 = vadd.f32 %v876, %v924
  %926 = vmatmul.bf16.gmra.mxu0 %v636
  %v927 = vpop.f32.mrf.mxu0
  %v928 = vadd.f32 %v879, %v927
  %v929 = vpop.f32.mrf.mxu0
  %v930 = vadd.f32 %v881, %v929
  %931 = vmatmul.bf16.gmra.mxu0 %v639
  %v932 = vpop.f32.mrf.mxu0
  %v933 = vadd.f32 %v884, %v932
  %v934 = vpop.f32.mrf.mxu0
  %v935 = vadd.f32 %v886, %v934
  %936 = vmatmul.bf16.gmra.mxu0 %v642
  %v937 = vpop.f32.mrf.mxu0
  %v938 = vadd.f32 %v889, %v937
  %v939 = vpop.f32.mrf.mxu0
  %v940 = vadd.f32 %v891, %v939
  %941 = vdwg.mxu0
  %v942 = vpack.c.bf16 %v903, %v903
  %v943 = vpack.c.bf16 %v905, %v905
  %v944 = vpack.c.bf16 %v908, %v908
  %v945 = vpack.c.bf16 %v910, %v910
  %v946 = vpack.c.bf16 %v913, %v913
  %v947 = vpack.c.bf16 %v915, %v915
  %v948 = vpack.c.bf16 %v918, %v918
  %v949 = vpack.c.bf16 %v920, %v920
  %v950 = vpack.c.bf16 %v923, %v923
  %v951 = vpack.c.bf16 %v925, %v925
  %v952 = vpack.c.bf16 %v928, %v928
  %v953 = vpack.c.bf16 %v930, %v930
  %v954 = vpack.c.bf16 %v933, %v933
  %v955 = vpack.c.bf16 %v935, %v935
  %v956 = vpack.c.bf16 %v938, %v938
  %v957 = vpack.c.bf16 %v940, %v940
  %vm958 = vcmask 60416
  %959 = vst.msk [vmem:[%s2] sm:$0xf] %vm958, %v942
  %960 = vst.msk [vmem:[%s2 + $0x4] sm:$0xf] %vm958, %v943
  %961 = vst.msk [vmem:[%s2 + $0x8] sm:$0xf] %vm958, %v944
  %962 = vst.msk [vmem:[%s2 + $0xc] sm:$0xf] %vm958, %v945
  %963 = vst.msk [vmem:[%s2 + $0x10] sm:$0xf] %vm958, %v946
  %964 = vst.msk [vmem:[%s2 + $0x14] sm:$0xf] %vm958, %v947
  %965 = vst.msk [vmem:[%s2 + $0x18] sm:$0xf] %vm958, %v948
  %966 = vst.msk [vmem:[%s2 + $0x1c] sm:$0xf] %vm958, %v949
  %967 = vst.msk [vmem:[%s2 + $0x20] sm:$0xf] %vm958, %v950
  %968 = vst.msk [vmem:[%s2 + $0x24] sm:$0xf] %vm958, %v951
  %969 = vst.msk [vmem:[%s2 + $0x28] sm:$0xf] %vm958, %v952
  %970 = vst.msk [vmem:[%s2 + $0x2c] sm:$0xf] %vm958, %v953
  %971 = vst.msk [vmem:[%s2 + $0x30] sm:$0xf] %vm958, %v954
  %972 = vst.msk [vmem:[%s2 + $0x34] sm:$0xf] %vm958, %v955
  %973 = vst.msk [vmem:[%s2 + $0x38] sm:$0xf] %vm958, %v956
  %974 = vst.msk [vmem:[%s2 + $0x3c] sm:$0xf] %vm958, %v957
  %v975 = vsel %vm619, %v903, 0.0
  %v976 = vsel %vm619, %v905, 0.0
  %v977 = vadd.f32 %v975, %v976
  %v978 = vsel %vm619, %v908, 0.0
  %v979 = vadd.f32 %v977, %v978
  %v980 = vsel %vm619, %v910, 0.0
  %v981 = vadd.f32 %v979, %v980
  %v982 = vsel %vm619, %v913, 0.0
  %v983 = vadd.f32 %v981, %v982
  %v984 = vsel %vm619, %v915, 0.0
  %v985 = vadd.f32 %v983, %v984
  %v986 = vsel %vm619, %v918, 0.0
  %v987 = vadd.f32 %v985, %v986
  %v988 = vsel %vm619, %v920, 0.0
  %v989 = vadd.f32 %v987, %v988
  %v990 = vsel %vm619, %v923, 0.0
  %v991 = vadd.f32 %v989, %v990
  %v992 = vsel %vm619, %v925, 0.0
  %v993 = vadd.f32 %v991, %v992
  %v994 = vsel %vm619, %v928, 0.0
  %v995 = vadd.f32 %v993, %v994
  %v996 = vsel %vm619, %v930, 0.0
  %v997 = vadd.f32 %v995, %v996
  %v998 = vsel %vm619, %v933, 0.0
  %v999 = vadd.f32 %v997, %v998
  %v1000 = vsel %vm619, %v935, 0.0
  %v1001 = vadd.f32 %v999, %v1000
  %v1002 = vsel %vm619, %v938, 0.0
  %v1003 = vadd.f32 %v1001, %v1002
  %v1004 = vsel %vm619, %v940, 0.0
  %v1005 = vadd.f32 %v1003, %v1004
  %v1006 = vrot.slane %v1005, 4
  %v1007 = vadd.f32 %v1005, %v1006
  %v1008 = vrot.slane %v1007, 2
  %v1009 = vadd.f32 %v1007, %v1008
  %v1010 = vrot.slane %v1009, 1
  %v1011 = vadd.f32 %v1009, %v1010
  %vm1012 = vcmask 57344
  %1013 = vst.msk [vmem:[%s3] sm:$0x1] %vm1012, %v1011
  %v1014 = vmul.f32 %v903, %v903
  %v1015 = vmul.f32 %v905, %v905
  %v1016 = vmul.f32 %v908, %v908
  %v1017 = vmul.f32 %v910, %v910
  %v1018 = vmul.f32 %v913, %v913
  %v1019 = vmul.f32 %v915, %v915
  %v1020 = vmul.f32 %v918, %v918
  %v1021 = vmul.f32 %v920, %v920
  %v1022 = vmul.f32 %v923, %v923
  %v1023 = vmul.f32 %v925, %v925
  %v1024 = vmul.f32 %v928, %v928
  %v1025 = vmul.f32 %v930, %v930
  %v1026 = vmul.f32 %v933, %v933
  %v1027 = vmul.f32 %v935, %v935
  %v1028 = vmul.f32 %v938, %v938
  %v1029 = vmul.f32 %v940, %v940
  %v1030 = vsel %vm619, %v1014, 0.0
  %v1031 = vsel %vm619, %v1015, 0.0
  %v1032 = vadd.f32 %v1030, %v1031
  %v1033 = vsel %vm619, %v1016, 0.0
  %v1034 = vadd.f32 %v1032, %v1033
  %v1035 = vsel %vm619, %v1017, 0.0
  %v1036 = vadd.f32 %v1034, %v1035
  %v1037 = vsel %vm619, %v1018, 0.0
  %v1038 = vadd.f32 %v1036, %v1037
  %v1039 = vsel %vm619, %v1019, 0.0
  %v1040 = vadd.f32 %v1038, %v1039
  %v1041 = vsel %vm619, %v1020, 0.0
  %v1042 = vadd.f32 %v1040, %v1041
  %v1043 = vsel %vm619, %v1021, 0.0
  %v1044 = vadd.f32 %v1042, %v1043
  %v1045 = vsel %vm619, %v1022, 0.0
  %v1046 = vadd.f32 %v1044, %v1045
  %v1047 = vsel %vm619, %v1023, 0.0
  %v1048 = vadd.f32 %v1046, %v1047
  %v1049 = vsel %vm619, %v1024, 0.0
  %v1050 = vadd.f32 %v1048, %v1049
  %v1051 = vsel %vm619, %v1025, 0.0
  %v1052 = vadd.f32 %v1050, %v1051
  %v1053 = vsel %vm619, %v1026, 0.0
  %v1054 = vadd.f32 %v1052, %v1053
  %v1055 = vsel %vm619, %v1027, 0.0
  %v1056 = vadd.f32 %v1054, %v1055
  %v1057 = vsel %vm619, %v1028, 0.0
  %v1058 = vadd.f32 %v1056, %v1057
  %v1059 = vsel %vm619, %v1029, 0.0
  %v1060 = vadd.f32 %v1058, %v1059
  %v1061 = vrot.slane %v1060, 4
  %v1062 = vadd.f32 %v1060, %v1061
  %v1063 = vrot.slane %v1062, 2
  %v1064 = vadd.f32 %v1062, %v1063
  %v1065 = vrot.slane %v1064, 1
  %v1066 = vadd.f32 %v1064, %v1065
  %1067 = vst.msk [vmem:[%s4] sm:$0x1] %vm1012, %v1066
  // Predicated region
  $region10: #{refine_net_unet_forward.26} parent=0 // pred_check
    _
  $region11: #{refine_net_unet_forward.26} parent=0 // pred_check_branch
    %1069 = sbr.rel (0) target = $region13
  $region12: #{refine_net_unet_forward.26} parent=0 // pred_region
    _
  $region13: #{refine_net_unet_forward.26} parent=0 // pred_fallthru
    _
  // Predicated region
  $region14: #{refine_net_unet_forward.26} parent=0 // pred_check
    _
  $region15: #{refine_net_unet_forward.26} parent=0 // pred_check_branch
    %1071 = sbr.rel (0) target = $region17
  $region16: #{refine_net_unet_forward.26} parent=0 // pred_region
    _
  $region17: #{refine_net_unet_forward.26} parent=0 // pred_fallthru
    _
  // Predicated region
  $region18: #{refine_net_unet_forward.26} parent=0 // pred_check
    _
  $region19: #{refine_net_unet_forward.26} parent=0 // pred_check_branch
    %1073 = sbr.rel (0) target = $region21
  $region20: #{refine_net_unet_forward.26} parent=0 // pred_region
    _
  $region21: #{refine_net_unet_forward.26} parent=0 // pred_fallthru
    _
  // Predicated region
  $region22: #{refine_net_unet_forward.26} parent=0 // pred_check
    _
  $region23: #{refine_net_unet_forward.26} parent=0 // pred_check_branch
    %1075 = sbr.rel (0) target = $region25
  $region24: #{refine_net_unet_forward.26} parent=0 // pred_region
    _
  $region25: #{refine_net_unet_forward.26} parent=0 // pred_fallthru
    _
  // Predicated region
  $region26: #{refine_net_unet_forward.26} parent=0 // pred_check
    _
  $region27: #{refine_net_unet_forward.26} parent=0 // pred_check_branch
    %1077 = sbr.rel (0) target = $region29
  $region28: #{refine_net_unet_forward.26} parent=0 // pred_region
    _
  $region29: #{refine_net_unet_forward.26} parent=0 // pred_fallthru
    _
  // Predicated region
  $region30: #{refine_net_unet_forward.26} parent=0 // pred_check
    _
  $region31: #{refine_net_unet_forward.26} parent=0 // pred_check_branch
    %1079 = sbr.rel (0) target = $region33
  $region32: #{refine_net_unet_forward.26} parent=0 // pred_region
    _
  $region33: #{refine_net_unet_forward.26} parent=0 // pred_fallthru
    _

// kernel: refine_net_unet_forward.31
$region0: #{refine_net_unet_forward.31}
  #allocation0 [shape = 'u32[]', space=smem, size = 0x4, offset = 0x4, fixed_abs, tag = 'smem constant byte address 0x4 - core index']
  #allocation1 [shape = 'u32[72,128]{1,0:T(1,128)}', space=vmem, size = 0x9000, scoped, tag = 'internal scratch']
  %s0 = inlined_call_operand.vmem [shape: bf16[1024,4], index: 0, kind: input, shape index: {}]
  %s1 = inlined_call_operand.vmem [shape: f32[1,4], index: 1, kind: input, shape index: {}]
  %s2 = inlined_call_operand.vmem [shape: f32[1,4], index: 2, kind: input, shape index: {}]
  %s3 = inlined_call_operand.vmem [shape: bf16[1024,4], index: 3, kind: output, shape index: {}]
  %s4 = sld [smem:[#allocation0]]
  $region22: #{refine_net_unet_forward.31} parent=0
    _
  %s6 = ssub.s32 1, %s4
  %s7 = scalar_select 0, %s6, %s4
  // Predicated region
  $region2: #{refine_net_unet_forward.31} parent=0 // pred_check
    _
  $region3: #{refine_net_unet_forward.31} parent=0 // pred_check_branch
    %9 = sbr.rel (0) target = $region5
  $region4: #{refine_net_unet_forward.31} parent=0 // pred_region
    _
  $region5: #{refine_net_unet_forward.31} parent=0 // pred_fallthru
    _
  // Predicated region
  $region6: #{refine_net_unet_forward.31} parent=0 // pred_check
    _
  $region7: #{refine_net_unet_forward.31} parent=0 // pred_check_branch
    %11 = sbr.rel (0) target = $region9
  $region8: #{refine_net_unet_forward.31} parent=0 // pred_region
    _
  $region9: #{refine_net_unet_forward.31} parent=0 // pred_fallthru
    _
  // Predicated region
  $region10: #{refine_net_unet_forward.31} parent=0 // pred_check
    _
  $region11: #{refine_net_unet_forward.31} parent=0 // pred_check_branch
    %13 = sbr.rel (0) target = $region13
  $region12: #{refine_net_unet_forward.31} parent=0 // pred_region
    _
  $region13: #{refine_net_unet_forward.31} parent=0 // pred_fallthru
    _
  %v14 = vld [vmem:[%s0] sm:$0xf]
  %v15 = vld [vmem:[%s0 + $0x4] sm:$0xf]
  %v16 = vld [vmem:[%s0 + $0x8] sm:$0xf]
  %v17 = vld [vmem:[%s0 + $0xc] sm:$0xf]
  %v18 = vld [vmem:[%s0 + $0x10] sm:$0xf]
  %v19 = vld [vmem:[%s0 + $0x14] sm:$0xf]
  %v20 = vld [vmem:[%s0 + $0x18] sm:$0xf]
  %v21 = vld [vmem:[%s0 + $0x1c] sm:$0xf]
  %v22 = vld [vmem:[%s0 + $0x20] sm:$0xf]
  %v23 = vld [vmem:[%s0 + $0x24] sm:$0xf]
  %v24 = vld [vmem:[%s0 + $0x28] sm:$0xf]
  %v25 = vld [vmem:[%s0 + $0x2c] sm:$0xf]
  %v26 = vld [vmem:[%s0 + $0x30] sm:$0xf]
  %v27 = vld [vmem:[%s0 + $0x34] sm:$0xf]
  %v28 = vld [vmem:[%s0 + $0x38] sm:$0xf]
  %v29 = vld [vmem:[%s0 + $0x3c] sm:$0xf]
  %v30 = vld [vmem:[%s0 + $0x40] sm:$0xf]
  %v31 = vld [vmem:[%s0 + $0x44] sm:$0xf]
  %v32 = vld [vmem:[%s0 + $0x48] sm:$0xf]
  %v33 = vld [vmem:[%s0 + $0x4c] sm:$0xf]
  %v34 = vld [vmem:[%s0 + $0x50] sm:$0xf]
  %v35 = vld [vmem:[%s0 + $0x54] sm:$0xf]
  %v36 = vld [vmem:[%s0 + $0x58] sm:$0xf]
  %v37 = vld [vmem:[%s0 + $0x5c] sm:$0xf]
  %v38 = vld [vmem:[%s0 + $0x60] sm:$0xf]
  %v39 = vld [vmem:[%s0 + $0x64] sm:$0xf]
  %v40 = vld [vmem:[%s0 + $0x68] sm:$0xf]
  %v41 = vld [vmem:[%s0 + $0x6c] sm:$0xf]
  %v42 = vld [vmem:[%s0 + $0x70] sm:$0xf]
  %v43 = vld [vmem:[%s0 + $0x74] sm:$0xf]
  %v44 = vld [vmem:[%s0 + $0x78] sm:$0xf]
  %v45 = vld [vmem:[%s0 + $0x7c] sm:$0xf]
  %v46 = vld [vmem:[%s0 + $0x80] sm:$0xf]
  %v47 = vld [vmem:[%s0 + $0x84] sm:$0xf]
  %v48 = vld [vmem:[%s0 + $0x88] sm:$0xf]
  %v49 = vld [vmem:[%s0 + $0x8c] sm:$0xf]
  %v50 = vld [vmem:[%s0 + $0x90] sm:$0xf]
  %v51 = vld [vmem:[%s0 + $0x94] sm:$0xf]
  %v52 = vld [vmem:[%s0 + $0x98] sm:$0xf]
  %v53 = vld [vmem:[%s0 + $0x9c] sm:$0xf]
  %v54 = vld [vmem:[%s0 + $0xa0] sm:$0xf]
  %v55 = vld [vmem:[%s0 + $0xa4] sm:$0xf]
  %v56 = vld [vmem:[%s0 + $0xa8] sm:$0xf]
  %v57 = vld [vmem:[%s0 + $0xac] sm:$0xf]
  %v58 = vld [vmem:[%s0 + $0xb0] sm:$0xf]
  %v59 = vld [vmem:[%s0 + $0xb4] sm:$0xf]
  %v60 = vld [vmem:[%s0 + $0xb8] sm:$0xf]
  %v61 = vld [vmem:[%s0 + $0xbc] sm:$0xf]
  %v62 = vld [vmem:[%s0 + $0xc0] sm:$0xf]
  %v63 = vld [vmem:[%s0 + $0xc4] sm:$0xf]
  %v64 = vld [vmem:[%s0 + $0xc8] sm:$0xf]
  %v65 = vld [vmem:[%s0 + $0xcc] sm:$0xf]
  %v66 = vld [vmem:[%s0 + $0xd0] sm:$0xf]
  %v67 = vld [vmem:[%s0 + $0xd4] sm:$0xf]
  %v68 = vld [vmem:[%s0 + $0xd8] sm:$0xf]
  %v69 = vld [vmem:[%s0 + $0xdc] sm:$0xf]
  %v70 = vld [vmem:[%s0 + $0xe0] sm:$0xf]
  %v71 = vld [vmem:[%s0 + $0xe4] sm:$0xf]
  %v72 = vld [vmem:[%s0 + $0xe8] sm:$0xf]
  %v73 = vld [vmem:[%s0 + $0xec] sm:$0xf]
  %v74 = vld [vmem:[%s0 + $0xf0] sm:$0xf]
  %v75 = vld [vmem:[%s0 + $0xf4] sm:$0xf]
  %v76 = vld [vmem:[%s0 + $0xf8] sm:$0xf]
  %v77 = vld [vmem:[%s0 + $0xfc] sm:$0xf]
  %v78 = vld [vmem:[%s0 + $0x100] sm:$0xf]
  %v79 = vld [vmem:[%s0 + $0x104] sm:$0xf]
  %v80 = vld [vmem:[%s0 + $0x108] sm:$0xf]
  %v81 = vld [vmem:[%s0 + $0x10c] sm:$0xf]
  %v82 = vld [vmem:[%s0 + $0x110] sm:$0xf]
  %v83 = vld [vmem:[%s0 + $0x114] sm:$0xf]
  %v84 = vld [vmem:[%s0 + $0x118] sm:$0xf]
  %v85 = vld [vmem:[%s0 + $0x11c] sm:$0xf]
  %v86 = vld [vmem:[%s0 + $0x120] sm:$0xf]
  %v87 = vld [vmem:[%s0 + $0x124] sm:$0xf]
  %v88 = vld [vmem:[%s0 + $0x128] sm:$0xf]
  %v89 = vld [vmem:[%s0 + $0x12c] sm:$0xf]
  %v90 = vld [vmem:[%s0 + $0x130] sm:$0xf]
  %v91 = vld [vmem:[%s0 + $0x134] sm:$0xf]
  %v92 = vld [vmem:[%s0 + $0x138] sm:$0xf]
  %v93 = vld [vmem:[%s0 + $0x13c] sm:$0xf]
  %v94 = vld [vmem:[%s0 + $0x140] sm:$0xf]
  %v95 = vld [vmem:[%s0 + $0x144] sm:$0xf]
  %v96 = vld [vmem:[%s0 + $0x148] sm:$0xf]
  %v97 = vld [vmem:[%s0 + $0x14c] sm:$0xf]
  %v98 = vld [vmem:[%s0 + $0x150] sm:$0xf]
  %v99 = vld [vmem:[%s0 + $0x154] sm:$0xf]
  %v100 = vld [vmem:[%s0 + $0x158] sm:$0xf]
  %v101 = vld [vmem:[%s0 + $0x15c] sm:$0xf]
  %v102 = vld [vmem:[%s0 + $0x160] sm:$0xf]
  %v103 = vld [vmem:[%s0 + $0x164] sm:$0xf]
  %v104 = vld [vmem:[%s0 + $0x168] sm:$0xf]
  %v105 = vld [vmem:[%s0 + $0x16c] sm:$0xf]
  %v106 = vld [vmem:[%s0 + $0x170] sm:$0xf]
  %v107 = vld [vmem:[%s0 + $0x174] sm:$0xf]
  %v108 = vld [vmem:[%s0 + $0x178] sm:$0xf]
  %v109 = vld [vmem:[%s0 + $0x17c] sm:$0xf]
  %v110 = vld [vmem:[%s0 + $0x180] sm:$0xf]
  %v111 = vld [vmem:[%s0 + $0x184] sm:$0xf]
  %v112 = vld [vmem:[%s0 + $0x188] sm:$0xf]
  %v113 = vld [vmem:[%s0 + $0x18c] sm:$0xf]
  %v114 = vld [vmem:[%s0 + $0x190] sm:$0xf]
  %v115 = vld [vmem:[%s0 + $0x194] sm:$0xf]
  %v116 = vld [vmem:[%s0 + $0x198] sm:$0xf]
  %v117 = vld [vmem:[%s0 + $0x19c] sm:$0xf]
  %v118 = vld [vmem:[%s0 + $0x1a0] sm:$0xf]
  %v119 = vld [vmem:[%s0 + $0x1a4] sm:$0xf]
  %v120 = vld [vmem:[%s0 + $0x1a8] sm:$0xf]
  %v121 = vld [vmem:[%s0 + $0x1ac] sm:$0xf]
  %v122 = vld [vmem:[%s0 + $0x1b0] sm:$0xf]
  %v123 = vld [vmem:[%s0 + $0x1b4] sm:$0xf]
  %v124 = vld [vmem:[%s0 + $0x1b8] sm:$0xf]
  %v125 = vld [vmem:[%s0 + $0x1bc] sm:$0xf]
  %v126 = vld [vmem:[%s0 + $0x1c0] sm:$0xf]
  %v127 = vld [vmem:[%s0 + $0x1c4] sm:$0xf]
  %v128 = vld [vmem:[%s0 + $0x1c8] sm:$0xf]
  %v129 = vld [vmem:[%s0 + $0x1cc] sm:$0xf]
  %v130 = vld [vmem:[%s0 + $0x1d0] sm:$0xf]
  %v131 = vld [vmem:[%s0 + $0x1d4] sm:$0xf]
  %v132 = vld [vmem:[%s0 + $0x1d8] sm:$0xf]
  %v133 = vld [vmem:[%s0 + $0x1dc] sm:$0xf]
  %v134 = vld [vmem:[%s0 + $0x1e0] sm:$0xf]
  %v135 = vld [vmem:[%s0 + $0x1e4] sm:$0xf]
  %v136 = vld [vmem:[%s0 + $0x1e8] sm:$0xf]
  %v137 = vld [vmem:[%s0 + $0x1ec] sm:$0xf]
  %v138 = vld [vmem:[%s0 + $0x1f0] sm:$0xf]
  %v139 = vld [vmem:[%s0 + $0x1f4] sm:$0xf]
  %v140 = vld [vmem:[%s0 + $0x1f8] sm:$0xf]
  %v141 = vld [vmem:[%s0 + $0x1fc] sm:$0xf]
  %v142 = vunpack.c.l.bf16 %v14
  %v143 = vunpack.c.l.bf16 %v15
  %v144 = vunpack.c.l.bf16 %v16
  %v145 = vunpack.c.l.bf16 %v17
  %v146 = vunpack.c.l.bf16 %v18
  %v147 = vunpack.c.l.bf16 %v19
  %v148 = vunpack.c.l.bf16 %v20
  %v149 = vunpack.c.l.bf16 %v21
  %v150 = vunpack.c.l.bf16 %v22
  %v151 = vunpack.c.l.bf16 %v23
  %v152 = vunpack.c.l.bf16 %v24
  %v153 = vunpack.c.l.bf16 %v25
  %v154 = vunpack.c.l.bf16 %v26
  %v155 = vunpack.c.l.bf16 %v27
  %v156 = vunpack.c.l.bf16 %v28
  %v157 = vunpack.c.l.bf16 %v29
  %v158 = vunpack.c.l.bf16 %v30
  %v159 = vunpack.c.l.bf16 %v31
  %v160 = vunpack.c.l.bf16 %v32
  %v161 = vunpack.c.l.bf16 %v33
  %v162 = vunpack.c.l.bf16 %v34
  %v163 = vunpack.c.l.bf16 %v35
  %v164 = vunpack.c.l.bf16 %v36
  %v165 = vunpack.c.l.bf16 %v37
  %v166 = vunpack.c.l.bf16 %v38
  %v167 = vunpack.c.l.bf16 %v39
  %v168 = vunpack.c.l.bf16 %v40
  %v169 = vunpack.c.l.bf16 %v41
  %v170 = vunpack.c.l.bf16 %v42
  %v171 = vunpack.c.l.bf16 %v43
  %v172 = vunpack.c.l.bf16 %v44
  %v173 = vunpack.c.l.bf16 %v45
  %v174 = vunpack.c.l.bf16 %v46
  %v175 = vunpack.c.l.bf16 %v47
  %v176 = vunpack.c.l.bf16 %v48
  %v177 = vunpack.c.l.bf16 %v49
  %v178 = vunpack.c.l.bf16 %v50
  %v179 = vunpack.c.l.bf16 %v51
  %v180 = vunpack.c.l.bf16 %v52
  %v181 = vunpack.c.l.bf16 %v53
  %v182 = vunpack.c.l.bf16 %v54
  %v183 = vunpack.c.l.bf16 %v55
  %v184 = vunpack.c.l.bf16 %v56
  %v185 = vunpack.c.l.bf16 %v57
  %v186 = vunpack.c.l.bf16 %v58
  %v187 = vunpack.c.l.bf16 %v59
  %v188 = vunpack.c.l.bf16 %v60
  %v189 = vunpack.c.l.bf16 %v61
  %v190 = vunpack.c.l.bf16 %v62
  %v191 = vunpack.c.l.bf16 %v63
  %v192 = vunpack.c.l.bf16 %v64
  %v193 = vunpack.c.l.bf16 %v65
  %v194 = vunpack.c.l.bf16 %v66
  %v195 = vunpack.c.l.bf16 %v67
  %v196 = vunpack.c.l.bf16 %v68
  %v197 = vunpack.c.l.bf16 %v69
  %v198 = vunpack.c.l.bf16 %v70
  %v199 = vunpack.c.l.bf16 %v71
  %v200 = vunpack.c.l.bf16 %v72
  %v201 = vunpack.c.l.bf16 %v73
  %v202 = vunpack.c.l.bf16 %v74
  %v203 = vunpack.c.l.bf16 %v75
  %v204 = vunpack.c.l.bf16 %v76
  %v205 = vunpack.c.l.bf16 %v77
  %v206 = vunpack.c.l.bf16 %v78
  %v207 = vunpack.c.l.bf16 %v79
  %v208 = vunpack.c.l.bf16 %v80
  %v209 = vunpack.c.l.bf16 %v81
  %v210 = vunpack.c.l.bf16 %v82
  %v211 = vunpack.c.l.bf16 %v83
  %v212 = vunpack.c.l.bf16 %v84
  %v213 = vunpack.c.l.bf16 %v85
  %v214 = vunpack.c.l.bf16 %v86
  %v215 = vunpack.c.l.bf16 %v87
  %v216 = vunpack.c.l.bf16 %v88
  %v217 = vunpack.c.l.bf16 %v89
  %v218 = vunpack.c.l.bf16 %v90
  %v219 = vunpack.c.l.bf16 %v91
  %v220 = vunpack.c.l.bf16 %v92
  %v221 = vunpack.c.l.bf16 %v93
  %v222 = vunpack.c.l.bf16 %v94
  %v223 = vunpack.c.l.bf16 %v95
  %v224 = vunpack.c.l.bf16 %v96
  %v225 = vunpack.c.l.bf16 %v97
  %v226 = vunpack.c.l.bf16 %v98
  %v227 = vunpack.c.l.bf16 %v99
  %v228 = vunpack.c.l.bf16 %v100
  %v229 = vunpack.c.l.bf16 %v101
  %v230 = vunpack.c.l.bf16 %v102
  %v231 = vunpack.c.l.bf16 %v103
  %v232 = vunpack.c.l.bf16 %v104
  %v233 = vunpack.c.l.bf16 %v105
  %v234 = vunpack.c.l.bf16 %v106
  %v235 = vunpack.c.l.bf16 %v107
  %v236 = vunpack.c.l.bf16 %v108
  %v237 = vunpack.c.l.bf16 %v109
  %v238 = vunpack.c.l.bf16 %v110
  %v239 = vunpack.c.l.bf16 %v111
  %v240 = vunpack.c.l.bf16 %v112
  %v241 = vunpack.c.l.bf16 %v113
  %v242 = vunpack.c.l.bf16 %v114
  %v243 = vunpack.c.l.bf16 %v115
  %v244 = vunpack.c.l.bf16 %v116
  %v245 = vunpack.c.l.bf16 %v117
  %v246 = vunpack.c.l.bf16 %v118
  %v247 = vunpack.c.l.bf16 %v119
  %v248 = vunpack.c.l.bf16 %v120
  %v249 = vunpack.c.l.bf16 %v121
  %v250 = vunpack.c.l.bf16 %v122
  %v251 = vunpack.c.l.bf16 %v123
  %v252 = vunpack.c.l.bf16 %v124
  %v253 = vunpack.c.l.bf16 %v125
  %v254 = vunpack.c.l.bf16 %v126
  %v255 = vunpack.c.l.bf16 %v127
  %v256 = vunpack.c.l.bf16 %v128
  %v257 = vunpack.c.l.bf16 %v129
  %v258 = vunpack.c.l.bf16 %v130
  %v259 = vunpack.c.l.bf16 %v131
  %v260 = vunpack.c.l.bf16 %v132
  %v261 = vunpack.c.l.bf16 %v133
  %v262 = vunpack.c.l.bf16 %v134
  %v263 = vunpack.c.l.bf16 %v135
  %v264 = vunpack.c.l.bf16 %v136
  %v265 = vunpack.c.l.bf16 %v137
  %v266 = vunpack.c.l.bf16 %v138
  %v267 = vunpack.c.l.bf16 %v139
  %v268 = vunpack.c.l.bf16 %v140
  %v269 = vunpack.c.l.bf16 %v141
  %v270 = vld [vmem:[%s1] sm:$0x1]
  %v272 = vperm.slane %v270, 0
  %v274 = vmul.f32 %v142, %v272
  %v275 = vmul.f32 %v143, %v272
  %v276 = vmul.f32 %v144, %v272
  %v277 = vmul.f32 %v145, %v272
  %v278 = vmul.f32 %v146, %v272
  %v279 = vmul.f32 %v147, %v272
  %v280 = vmul.f32 %v148, %v272
  %v281 = vmul.f32 %v149, %v272
  %v282 = vmul.f32 %v150, %v272
  %v283 = vmul.f32 %v151, %v272
  %v284 = vmul.f32 %v152, %v272
  %v285 = vmul.f32 %v153, %v272
  %v286 = vmul.f32 %v154, %v272
  %v287 = vmul.f32 %v155, %v272
  %v288 = vmul.f32 %v156, %v272
  %v289 = vmul.f32 %v157, %v272
  %v290 = vmul.f32 %v158, %v272
  %v291 = vmul.f32 %v159, %v272
  %v292 = vmul.f32 %v160, %v272
  %v293 = vmul.f32 %v161, %v272
  %v294 = vmul.f32 %v162, %v272
  %v295 = vmul.f32 %v163, %v272
  %v296 = vmul.f32 %v164, %v272
  %v297 = vmul.f32 %v165, %v272
  %v298 = vmul.f32 %v166, %v272
  %v299 = vmul.f32 %v167, %v272
  %v300 = vmul.f32 %v168, %v272
  %v301 = vmul.f32 %v169, %v272
  %v302 = vmul.f32 %v170, %v272
  %v303 = vmul.f32 %v171, %v272
  %v304 = vmul.f32 %v172, %v272
  %v305 = vmul.f32 %v173, %v272
  %v306 = vmul.f32 %v174, %v272
  %v307 = vmul.f32 %v175, %v272
  %v308 = vmul.f32 %v176, %v272
  %v309 = vmul.f32 %v177, %v272
  %v310 = vmul.f32 %v178, %v272
  %v311 = vmul.f32 %v179, %v272
  %v312 = vmul.f32 %v180, %v272
  %v313 = vmul.f32 %v181, %v272
  %v314 = vmul.f32 %v182, %v272
  %v315 = vmul.f32 %v183, %v272
  %v316 = vmul.f32 %v184, %v272
  %v317 = vmul.f32 %v185, %v272
  %v318 = vmul.f32 %v186, %v272
  %v319 = vmul.f32 %v187, %v272
  %v320 = vmul.f32 %v188, %v272
  %v321 = vmul.f32 %v189, %v272
  %v322 = vmul.f32 %v190, %v272
  %v323 = vmul.f32 %v191, %v272
  %v324 = vmul.f32 %v192, %v272
  %v325 = vmul.f32 %v193, %v272
  %v326 = vmul.f32 %v194, %v272
  %v327 = vmul.f32 %v195, %v272
  %v328 = vmul.f32 %v196, %v272
  %v329 = vmul.f32 %v197, %v272
  %v330 = vmul.f32 %v198, %v272
  %v331 = vmul.f32 %v199, %v272
  %v332 = vmul.f32 %v200, %v272
  %v333 = vmul.f32 %v201, %v272
  %v334 = vmul.f32 %v202, %v272
  %v335 = vmul.f32 %v203, %v272
  %v336 = vmul.f32 %v204, %v272
  %v337 = vmul.f32 %v205, %v272
  %v338 = vmul.f32 %v206, %v272
  %v339 = vmul.f32 %v207, %v272
  %v340 = vmul.f32 %v208, %v272
  %v341 = vmul.f32 %v209, %v272
  %v342 = vmul.f32 %v210, %v272
  %v343 = vmul.f32 %v211, %v272
  %v344 = vmul.f32 %v212, %v272
  %v345 = vmul.f32 %v213, %v272
  %v346 = vmul.f32 %v214, %v272
  %v347 = vmul.f32 %v215, %v272
  %v348 = vmul.f32 %v216, %v272
  %v349 = vmul.f32 %v217, %v272
  %v350 = vmul.f32 %v218, %v272
  %v351 = vmul.f32 %v219, %v272
  %v352 = vmul.f32 %v220, %v272
  %v353 = vmul.f32 %v221, %v272
  %v354 = vmul.f32 %v222, %v272
  %v355 = vmul.f32 %v223, %v272
  %v356 = vmul.f32 %v224, %v272
  %v357 = vmul.f32 %v225, %v272
  %v358 = vmul.f32 %v226, %v272
  %v359 = vmul.f32 %v227, %v272
  %v360 = vmul.f32 %v228, %v272
  %v361 = vmul.f32 %v229, %v272
  %v362 = vmul.f32 %v230, %v272
  %v363 = vmul.f32 %v231, %v272
  %v364 = vmul.f32 %v232, %v272
  %v365 = vmul.f32 %v233, %v272
  %v366 = vmul.f32 %v234, %v272
  %v367 = vmul.f32 %v235, %v272
  %v368 = vmul.f32 %v236, %v272
  %v369 = vmul.f32 %v237, %v272
  %v370 = vmul.f32 %v238, %v272
  %v371 = vmul.f32 %v239, %v272
  %v372 = vmul.f32 %v240, %v272
  %v373 = vmul.f32 %v241, %v272
  %v374 = vmul.f32 %v242, %v272
  %v375 = vmul.f32 %v243, %v272
  %v376 = vmul.f32 %v244, %v272
  %v377 = vmul.f32 %v245, %v272
  %v378 = vmul.f32 %v246, %v272
  %v379 = vmul.f32 %v247, %v272
  %v380 = vmul.f32 %v248, %v272
  %v381 = vmul.f32 %v249, %v272
  %v382 = vmul.f32 %v250, %v272
  %v383 = vmul.f32 %v251, %v272
  %v384 = vmul.f32 %v252, %v272
  %v385 = vmul.f32 %v253, %v272
  %v386 = vmul.f32 %v254, %v272
  %v387 = vmul.f32 %v255, %v272
  %v388 = vmul.f32 %v256, %v272
  %v389 = vmul.f32 %v257, %v272
  %v390 = vmul.f32 %v258, %v272
  %v391 = vmul.f32 %v259, %v272
  %v392 = vmul.f32 %v260, %v272
  %v393 = vmul.f32 %v261, %v272
  %v394 = vmul.f32 %v262, %v272
  %v395 = vmul.f32 %v263, %v272
  %v396 = vmul.f32 %v264, %v272
  %v397 = vmul.f32 %v265, %v272
  %v398 = vmul.f32 %v266, %v272
  %v399 = vmul.f32 %v267, %v272
  %v400 = vmul.f32 %v268, %v272
  %v401 = vmul.f32 %v269, %v272
  %v402 = vld [vmem:[%s2] sm:$0x1]
  %v404 = vperm.slane %v402, 0
  %v406 = vadd.f32 %v274, %v404
  %v407 = vadd.f32 %v275, %v404
  %v408 = vadd.f32 %v276, %v404
  %v409 = vadd.f32 %v277, %v404
  %v410 = vadd.f32 %v278, %v404
  %v411 = vadd.f32 %v279, %v404
  %v412 = vadd.f32 %v280, %v404
  %v413 = vadd.f32 %v281, %v404
  %v414 = vadd.f32 %v282, %v404
  %v415 = vadd.f32 %v283, %v404
  %v416 = vadd.f32 %v284, %v404
  %v417 = vadd.f32 %v285, %v404
  %v418 = vadd.f32 %v286, %v404
  %v419 = vadd.f32 %v287, %v404
  %v420 = vadd.f32 %v288, %v404
  %v421 = vadd.f32 %v289, %v404
  %v422 = vadd.f32 %v290, %v404
  %v423 = vadd.f32 %v291, %v404
  %v424 = vadd.f32 %v292, %v404
  %v425 = vadd.f32 %v293, %v404
  %v426 = vadd.f32 %v294, %v404
  %v427 = vadd.f32 %v295, %v404
  %v428 = vadd.f32 %v296, %v404
  %v429 = vadd.f32 %v297, %v404
  %v430 = vadd.f32 %v298, %v404
  %v431 = vadd.f32 %v299, %v404
  %v432 = vadd.f32 %v300, %v404
  %v433 = vadd.f32 %v301, %v404
  %v434 = vadd.f32 %v302, %v404
  %v435 = vadd.f32 %v303, %v404
  %v436 = vadd.f32 %v304, %v404
  %v437 = vadd.f32 %v305, %v404
  %v438 = vadd.f32 %v306, %v404
  %v439 = vadd.f32 %v307, %v404
  %v440 = vadd.f32 %v308, %v404
  %v441 = vadd.f32 %v309, %v404
  %v442 = vadd.f32 %v310, %v404
  %v443 = vadd.f32 %v311, %v404
  %v444 = vadd.f32 %v312, %v404
  %v445 = vadd.f32 %v313, %v404
  %v446 = vadd.f32 %v314, %v404
  %v447 = vadd.f32 %v315, %v404
  %v448 = vadd.f32 %v316, %v404
  %v449 = vadd.f32 %v317, %v404
  %v450 = vadd.f32 %v318, %v404
  %v451 = vadd.f32 %v319, %v404
  %v452 = vadd.f32 %v320, %v404
  %v453 = vadd.f32 %v321, %v404
  %v454 = vadd.f32 %v322, %v404
  %v455 = vadd.f32 %v323, %v404
  %v456 = vadd.f32 %v324, %v404
  %v457 = vadd.f32 %v325, %v404
  %v458 = vadd.f32 %v326, %v404
  %v459 = vadd.f32 %v327, %v404
  %v460 = vadd.f32 %v328, %v404
  %v461 = vadd.f32 %v329, %v404
  %v462 = vadd.f32 %v330, %v404
  %v463 = vadd.f32 %v331, %v404
  %v464 = vadd.f32 %v332, %v404
  %v465 = vadd.f32 %v333, %v404
  %v466 = vadd.f32 %v334, %v404
  %v467 = vadd.f32 %v335, %v404
  %v468 = vadd.f32 %v336, %v404
  %v469 = vadd.f32 %v337, %v404
  %v470 = vadd.f32 %v338, %v404
  %v471 = vadd.f32 %v339, %v404
  %v472 = vadd.f32 %v340, %v404
  %v473 = vadd.f32 %v341, %v404
  %v474 = vadd.f32 %v342, %v404
  %v475 = vadd.f32 %v343, %v404
  %v476 = vadd.f32 %v344, %v404
  %v477 = vadd.f32 %v345, %v404
  %v478 = vadd.f32 %v346, %v404
  %v479 = vadd.f32 %v347, %v404
  %v480 = vadd.f32 %v348, %v404
  %v481 = vadd.f32 %v349, %v404
  %v482 = vadd.f32 %v350, %v404
  %v483 = vadd.f32 %v351, %v404
  %v484 = vadd.f32 %v352, %v404
  %v485 = vadd.f32 %v353, %v404
  %v486 = vadd.f32 %v354, %v404
  %v487 = vadd.f32 %v355, %v404
  %v488 = vadd.f32 %v356, %v404
  %v489 = vadd.f32 %v357, %v404
  %v490 = vadd.f32 %v358, %v404
  %v491 = vadd.f32 %v359, %v404
  %v492 = vadd.f32 %v360, %v404
  %v493 = vadd.f32 %v361, %v404
  %v494 = vadd.f32 %v362, %v404
  %v495 = vadd.f32 %v363, %v404
  %v496 = vadd.f32 %v364, %v404
  %v497 = vadd.f32 %v365, %v404
  %v498 = vadd.f32 %v366, %v404
  %v499 = vadd.f32 %v367, %v404
  %v500 = vadd.f32 %v368, %v404
  %v501 = vadd.f32 %v369, %v404
  %v502 = vadd.f32 %v370, %v404
  %v503 = vadd.f32 %v371, %v404
  %v504 = vadd.f32 %v372, %v404
  %v505 = vadd.f32 %v373, %v404
  %v506 = vadd.f32 %v374, %v404
  %v507 = vadd.f32 %v375, %v404
  %v508 = vadd.f32 %v376, %v404
  %v509 = vadd.f32 %v377, %v404
  %v510 = vadd.f32 %v378, %v404
  %v511 = vadd.f32 %v379, %v404
  %v512 = vadd.f32 %v380, %v404
  %v513 = vadd.f32 %v381, %v404
  %v514 = vadd.f32 %v382, %v404
  %v515 = vadd.f32 %v383, %v404
  %v516 = vadd.f32 %v384, %v404
  %v517 = vadd.f32 %v385, %v404
  %v518 = vadd.f32 %v386, %v404
  %v519 = vadd.f32 %v387, %v404
  %v520 = vadd.f32 %v388, %v404
  %v521 = vadd.f32 %v389, %v404
  %v522 = vadd.f32 %v390, %v404
  %v523 = vadd.f32 %v391, %v404
  %v524 = vadd.f32 %v392, %v404
  %v525 = vadd.f32 %v393, %v404
  %v526 = vadd.f32 %v394, %v404
  %v527 = vadd.f32 %v395, %v404
  %v528 = vadd.f32 %v396, %v404
  %v529 = vadd.f32 %v397, %v404
  %v530 = vadd.f32 %v398, %v404
  %v531 = vadd.f32 %v399, %v404
  %v532 = vadd.f32 %v400, %v404
  %v533 = vadd.f32 %v401, %v404
  %v534 = vmax.f32 %v406, 0.0
  %v535 = vmax.f32 %v407, 0.0
  %v536 = vmax.f32 %v408, 0.0
  %v537 = vmax.f32 %v409, 0.0
  %v538 = vmax.f32 %v410, 0.0
  %v539 = vmax.f32 %v411, 0.0
  %v540 = vmax.f32 %v412, 0.0
  %v541 = vmax.f32 %v413, 0.0
  %v542 = vmax.f32 %v414, 0.0
  %v543 = vmax.f32 %v415, 0.0
  %v544 = vmax.f32 %v416, 0.0
  %v545 = vmax.f32 %v417, 0.0
  %v546 = vmax.f32 %v418, 0.0
  %v547 = vmax.f32 %v419, 0.0
  %v548 = vmax.f32 %v420, 0.0
  %v549 = vmax.f32 %v421, 0.0
  %v550 = vmax.f32 %v422, 0.0
  %v551 = vmax.f32 %v423, 0.0
  %v552 = vmax.f32 %v424, 0.0
  %v553 = vmax.f32 %v425, 0.0
  %v554 = vmax.f32 %v426, 0.0
  %v555 = vmax.f32 %v427, 0.0
  %v556 = vmax.f32 %v428, 0.0
  %v557 = vmax.f32 %v429, 0.0
  %v558 = vmax.f32 %v430, 0.0
  %v559 = vmax.f32 %v431, 0.0
  %v560 = vmax.f32 %v432, 0.0
  %v561 = vmax.f32 %v433, 0.0
  %v562 = vmax.f32 %v434, 0.0
  %v563 = vmax.f32 %v435, 0.0
  %v564 = vmax.f32 %v436, 0.0
  %v565 = vmax.f32 %v437, 0.0
  %v566 = vmax.f32 %v438, 0.0
  %v567 = vmax.f32 %v439, 0.0
  %v568 = vmax.f32 %v440, 0.0
  %v569 = vmax.f32 %v441, 0.0
  %v570 = vmax.f32 %v442, 0.0
  %v571 = vmax.f32 %v443, 0.0
  %v572 = vmax.f32 %v444, 0.0
  %v573 = vmax.f32 %v445, 0.0
  %v574 = vmax.f32 %v446, 0.0
  %v575 = vmax.f32 %v447, 0.0
  %v576 = vmax.f32 %v448, 0.0
  %v577 = vmax.f32 %v449, 0.0
  %v578 = vmax.f32 %v450, 0.0
  %v579 = vmax.f32 %v451, 0.0
  %v580 = vmax.f32 %v452, 0.0
  %v581 = vmax.f32 %v453, 0.0
  %v582 = vmax.f32 %v454, 0.0
  %v583 = vmax.f32 %v455, 0.0
  %v584 = vmax.f32 %v456, 0.0
  %v585 = vmax.f32 %v457, 0.0
  %v586 = vmax.f32 %v458, 0.0
  %v587 = vmax.f32 %v459, 0.0
  %v588 = vmax.f32 %v460, 0.0
  %v589 = vmax.f32 %v461, 0.0
  %v590 = vmax.f32 %v462, 0.0
  %v591 = vmax.f32 %v463, 0.0
  %v592 = vmax.f32 %v464, 0.0
  %v593 = vmax.f32 %v465, 0.0
  %v594 = vmax.f32 %v466, 0.0
  %v595 = vmax.f32 %v467, 0.0
  %v596 = vmax.f32 %v468, 0.0
  %v597 = vmax.f32 %v469, 0.0
  %v598 = vmax.f32 %v470, 0.0
  %v599 = vmax.f32 %v471, 0.0
  %v600 = vmax.f32 %v472, 0.0
  %v601 = vmax.f32 %v473, 0.0
  %v602 = vmax.f32 %v474, 0.0
  %v603 = vmax.f32 %v475, 0.0
  %v604 = vmax.f32 %v476, 0.0
  %v605 = vmax.f32 %v477, 0.0
  %v606 = vmax.f32 %v478, 0.0
  %v607 = vmax.f32 %v479, 0.0
  %v608 = vmax.f32 %v480, 0.0
  %v609 = vmax.f32 %v481, 0.0
  %v610 = vmax.f32 %v482, 0.0
  %v611 = vmax.f32 %v483, 0.0
  %v612 = vmax.f32 %v484, 0.0
  %v613 = vmax.f32 %v485, 0.0
  %v614 = vmax.f32 %v486, 0.0
  %v615 = vmax.f32 %v487, 0.0
  %v616 = vmax.f32 %v488, 0.0
  %v617 = vmax.f32 %v489, 0.0
  %v618 = vmax.f32 %v490, 0.0
  %v619 = vmax.f32 %v491, 0.0
  %v620 = vmax.f32 %v492, 0.0
  %v621 = vmax.f32 %v493, 0.0
  %v622 = vmax.f32 %v494, 0.0
  %v623 = vmax.f32 %v495, 0.0
  %v624 = vmax.f32 %v496, 0.0
  %v625 = vmax.f32 %v497, 0.0
  %v626 = vmax.f32 %v498, 0.0
  %v627 = vmax.f32 %v499, 0.0
  %v628 = vmax.f32 %v500, 0.0
  %v629 = vmax.f32 %v501, 0.0
  %v630 = vmax.f32 %v502, 0.0
  %v631 = vmax.f32 %v503, 0.0
  %v632 = vmax.f32 %v504, 0.0
  %v633 = vmax.f32 %v505, 0.0
  %v634 = vmax.f32 %v506, 0.0
  %v635 = vmax.f32 %v507, 0.0
  %v636 = vmax.f32 %v508, 0.0
  %v637 = vmax.f32 %v509, 0.0
  %v638 = vmax.f32 %v510, 0.0
  %v639 = vmax.f32 %v511, 0.0
  %v640 = vmax.f32 %v512, 0.0
  %v641 = vmax.f32 %v513, 0.0
  %v642 = vmax.f32 %v514, 0.0
  %v643 = vmax.f32 %v515, 0.0
  %v644 = vmax.f32 %v516, 0.0
  %v645 = vmax.f32 %v517, 0.0
  %v646 = vmax.f32 %v518, 0.0
  %v647 = vmax.f32 %v519, 0.0
  %v648 = vmax.f32 %v520, 0.0
  %v649 = vmax.f32 %v521, 0.0
  %v650 = vmax.f32 %v522, 0.0
  %v651 = vmax.f32 %v523, 0.0
  %v652 = vmax.f32 %v524, 0.0
  %v653 = vmax.f32 %v525, 0.0
  %v654 = vmax.f32 %v526, 0.0
  %v655 = vmax.f32 %v527, 0.0
  %v656 = vmax.f32 %v528, 0.0
  %v657 = vmax.f32 %v529, 0.0
  %v658 = vmax.f32 %v530, 0.0
  %v659 = vmax.f32 %v531, 0.0
  %v660 = vmax.f32 %v532, 0.0
  %v661 = vmax.f32 %v533, 0.0
  %v662 = vpack.c.bf16 %v534, %v534
  %v663 = vpack.c.bf16 %v535, %v535
  %v664 = vpack.c.bf16 %v536, %v536
  %v665 = vpack.c.bf16 %v537, %v537
  %v666 = vpack.c.bf16 %v538, %v538
  %v667 = vpack.c.bf16 %v539, %v539
  %v668 = vpack.c.bf16 %v540, %v540
  %v669 = vpack.c.bf16 %v541, %v541
  %v670 = vpack.c.bf16 %v542, %v542
  %v671 = vpack.c.bf16 %v543, %v543
  %v672 = vpack.c.bf16 %v544, %v544
  %v673 = vpack.c.bf16 %v545, %v545
  %v674 = vpack.c.bf16 %v546, %v546
  %v675 = vpack.c.bf16 %v547, %v547
  %v676 = vpack.c.bf16 %v548, %v548
  %v677 = vpack.c.bf16 %v549, %v549
  %v678 = vpack.c.bf16 %v550, %v550
  %v679 = vpack.c.bf16 %v551, %v551
  %v680 = vpack.c.bf16 %v552, %v552
  %v681 = vpack.c.bf16 %v553, %v553
  %v682 = vpack.c.bf16 %v554, %v554
  %v683 = vpack.c.bf16 %v555, %v555
  %v684 = vpack.c.bf16 %v556, %v556
  %v685 = vpack.c.bf16 %v557, %v557
  %v686 = vpack.c.bf16 %v558, %v558
  %v687 = vpack.c.bf16 %v559, %v559
  %v688 = vpack.c.bf16 %v560, %v560
  %v689 = vpack.c.bf16 %v561, %v561
  %v690 = vpack.c.bf16 %v562, %v562
  %v691 = vpack.c.bf16 %v563, %v563
  %v692 = vpack.c.bf16 %v564, %v564
  %v693 = vpack.c.bf16 %v565, %v565
  %v694 = vpack.c.bf16 %v566, %v566
  %v695 = vpack.c.bf16 %v567, %v567
  %v696 = vpack.c.bf16 %v568, %v568
  %v697 = vpack.c.bf16 %v569, %v569
  %v698 = vpack.c.bf16 %v570, %v570
  %v699 = vpack.c.bf16 %v571, %v571
  %v700 = vpack.c.bf16 %v572, %v572
  %v701 = vpack.c.bf16 %v573, %v573
  %v702 = vpack.c.bf16 %v574, %v574
  %v703 = vpack.c.bf16 %v575, %v575
  %v704 = vpack.c.bf16 %v576, %v576
  %v705 = vpack.c.bf16 %v577, %v577
  %v706 = vpack.c.bf16 %v578, %v578
  %v707 = vpack.c.bf16 %v579, %v579
  %v708 = vpack.c.bf16 %v580, %v580
  %v709 = vpack.c.bf16 %v581, %v581
  %v710 = vpack.c.bf16 %v582, %v582
  %v711 = vpack.c.bf16 %v583, %v583
  %v712 = vpack.c.bf16 %v584, %v584
  %v713 = vpack.c.bf16 %v585, %v585
  %v714 = vpack.c.bf16 %v586, %v586
  %v715 = vpack.c.bf16 %v587, %v587
  %v716 = vpack.c.bf16 %v588, %v588
  %v717 = vpack.c.bf16 %v589, %v589
  %v718 = vpack.c.bf16 %v590, %v590
  %v719 = vpack.c.bf16 %v591, %v591
  %v720 = vpack.c.bf16 %v592, %v592
  %v721 = vpack.c.bf16 %v593, %v593
  %v722 = vpack.c.bf16 %v594, %v594
  %v723 = vpack.c.bf16 %v595, %v595
  %v724 = vpack.c.bf16 %v596, %v596
  %v725 = vpack.c.bf16 %v597, %v597
  %v726 = vpack.c.bf16 %v598, %v598
  %v727 = vpack.c.bf16 %v599, %v599
  %v728 = vpack.c.bf16 %v600, %v600
  %v729 = vpack.c.bf16 %v601, %v601
  %v730 = vpack.c.bf16 %v602, %v602
  %v731 = vpack.c.bf16 %v603, %v603
  %v732 = vpack.c.bf16 %v604, %v604
  %v733 = vpack.c.bf16 %v605, %v605
  %v734 = vpack.c.bf16 %v606, %v606
  %v735 = vpack.c.bf16 %v607, %v607
  %v736 = vpack.c.bf16 %v608, %v608
  %v737 = vpack.c.bf16 %v609, %v609
  %v738 = vpack.c.bf16 %v610, %v610
  %v739 = vpack.c.bf16 %v611, %v611
  %v740 = vpack.c.bf16 %v612, %v612
  %v741 = vpack.c.bf16 %v613, %v613
  %v742 = vpack.c.bf16 %v614, %v614
  %v743 = vpack.c.bf16 %v615, %v615
  %v744 = vpack.c.bf16 %v616, %v616
  %v745 = vpack.c.bf16 %v617, %v617
  %v746 = vpack.c.bf16 %v618, %v618
  %v747 = vpack.c.bf16 %v619, %v619
  %v748 = vpack.c.bf16 %v620, %v620
  %v749 = vpack.c.bf16 %v621, %v621
  %v750 = vpack.c.bf16 %v622, %v622
  %v751 = vpack.c.bf16 %v623, %v623
  %v752 = vpack.c.bf16 %v624, %v624
  %v753 = vpack.c.bf16 %v625, %v625
  %v754 = vpack.c.bf16 %v626, %v626
  %v755 = vpack.c.bf16 %v627, %v627
  %v756 = vpack.c.bf16 %v628, %v628
  %v757 = vpack.c.bf16 %v629, %v629
  %v758 = vpack.c.bf16 %v630, %v630
  %v759 = vpack.c.bf16 %v631, %v631
  %v760 = vpack.c.bf16 %v632, %v632
  %v761 = vpack.c.bf16 %v633, %v633
  %v762 = vpack.c.bf16 %v634, %v634
  %v763 = vpack.c.bf16 %v635, %v635
  %v764 = vpack.c.bf16 %v636, %v636
  %v765 = vpack.c.bf16 %v637, %v637
  %v766 = vpack.c.bf16 %v638, %v638
  %v767 = vpack.c.bf16 %v639, %v639
  %v768 = vpack.c.bf16 %v640, %v640
  %v769 = vpack.c.bf16 %v641, %v641
  %v770 = vpack.c.bf16 %v642, %v642
  %v771 = vpack.c.bf16 %v643, %v643
  %v772 = vpack.c.bf16 %v644, %v644
  %v773 = vpack.c.bf16 %v645, %v645
  %v774 = vpack.c.bf16 %v646, %v646
  %v775 = vpack.c.bf16 %v647, %v647
  %v776 = vpack.c.bf16 %v648, %v648
  %v777 = vpack.c.bf16 %v649, %v649
  %v778 = vpack.c.bf16 %v650, %v650
  %v779 = vpack.c.bf16 %v651, %v651
  %v780 = vpack.c.bf16 %v652, %v652
  %v781 = vpack.c.bf16 %v653, %v653
  %v782 = vpack.c.bf16 %v654, %v654
  %v783 = vpack.c.bf16 %v655, %v655
  %v784 = vpack.c.bf16 %v656, %v656
  %v785 = vpack.c.bf16 %v657, %v657
  %v786 = vpack.c.bf16 %v658, %v658
  %v787 = vpack.c.bf16 %v659, %v659
  %v788 = vpack.c.bf16 %v660, %v660
  %v789 = vpack.c.bf16 %v661, %v661
  %vm790 = vcmask 27648
  %791 = vst.msk [vmem:[%s3] sm:$0xf] %vm790, %v662
  %792 = vst.msk [vmem:[%s3 + $0x4] sm:$0xf] %vm790, %v663
  %793 = vst.msk [vmem:[%s3 + $0x8] sm:$0xf] %vm790, %v664
  %794 = vst.msk [vmem:[%s3 + $0xc] sm:$0xf] %vm790, %v665
  %795 = vst.msk [vmem:[%s3 + $0x10] sm:$0xf] %vm790, %v666
  %796 = vst.msk [vmem:[%s3 + $0x14] sm:$0xf] %vm790, %v667
  %797 = vst.msk [vmem:[%s3 + $0x18] sm:$0xf] %vm790, %v668
  %798 = vst.msk [vmem:[%s3 + $0x1c] sm:$0xf] %vm790, %v669
  %799 = vst.msk [vmem:[%s3 + $0x20] sm:$0xf] %vm790, %v670
  %800 = vst.msk [vmem:[%s3 + $0x24] sm:$0xf] %vm790, %v671
  %801 = vst.msk [vmem:[%s3 + $0x28] sm:$0xf] %vm790, %v672
  %802 = vst.msk [vmem:[%s3 + $0x2c] sm:$0xf] %vm790, %v673
  %803 = vst.msk [vmem:[%s3 + $0x30] sm:$0xf] %vm790, %v674
  %804 = vst.msk [vmem:[%s3 + $0x34] sm:$0xf] %vm790, %v675
  %805 = vst.msk [vmem:[%s3 + $0x38] sm:$0xf] %vm790, %v676
  %806 = vst.msk [vmem:[%s3 + $0x3c] sm:$0xf] %vm790, %v677
  %807 = vst.msk [vmem:[%s3 + $0x40] sm:$0xf] %vm790, %v678
  %808 = vst.msk [vmem:[%s3 + $0x44] sm:$0xf] %vm790, %v679
  %809 = vst.msk [vmem:[%s3 + $0x48] sm:$0xf] %vm790, %v680
  %810 = vst.msk [vmem:[%s3 + $0x4c] sm:$0xf] %vm790, %v681
  %811 = vst.msk [vmem:[%s3 + $0x50] sm:$0xf] %vm790, %v682
  %812 = vst.msk [vmem:[%s3 + $0x54] sm:$0xf] %vm790, %v683
  %813 = vst.msk [vmem:[%s3 + $0x58] sm:$0xf] %vm790, %v684
  %814 = vst.msk [vmem:[%s3 + $0x5c] sm:$0xf] %vm790, %v685
  %815 = vst.msk [vmem:[%s3 + $0x60] sm:$0xf] %vm790, %v686
  %816 = vst.msk [vmem:[%s3 + $0x64] sm:$0xf] %vm790, %v687
  %817 = vst.msk [vmem:[%s3 + $0x68] sm:$0xf] %vm790, %v688
  %818 = vst.msk [vmem:[%s3 + $0x6c] sm:$0xf] %vm790, %v689
  %819 = vst.msk [vmem:[%s3 + $0x70] sm:$0xf] %vm790, %v690
  %820 = vst.msk [vmem:[%s3 + $0x74] sm:$0xf] %vm790, %v691
  %821 = vst.msk [vmem:[%s3 + $0x78] sm:$0xf] %vm790, %v692
  %822 = vst.msk [vmem:[%s3 + $0x7c] sm:$0xf] %vm790, %v693
  %823 = vst.msk [vmem:[%s3 + $0x80] sm:$0xf] %vm790, %v694
  %824 = vst.msk [vmem:[%s3 + $0x84] sm:$0xf] %vm790, %v695
  %825 = vst.msk [vmem:[%s3 + $0x88] sm:$0xf] %vm790, %v696
  %826 = vst.msk [vmem:[%s3 + $0x8c] sm:$0xf] %vm790, %v697
  %827 = vst.msk [vmem:[%s3 + $0x90] sm:$0xf] %vm790, %v698
  %828 = vst.msk [vmem:[%s3 + $0x94] sm:$0xf] %vm790, %v699
  %829 = vst.msk [vmem:[%s3 + $0x98] sm:$0xf] %vm790, %v700
  %830 = vst.msk [vmem:[%s3 + $0x9c] sm:$0xf] %vm790, %v701
  %831 = vst.msk [vmem:[%s3 + $0xa0] sm:$0xf] %vm790, %v702
  %832 = vst.msk [vmem:[%s3 + $0xa4] sm:$0xf] %vm790, %v703
  %833 = vst.msk [vmem:[%s3 + $0xa8] sm:$0xf] %vm790, %v704
  %834 = vst.msk [vmem:[%s3 + $0xac] sm:$0xf] %vm790, %v705
  %835 = vst.msk [vmem:[%s3 + $0xb0] sm:$0xf] %vm790, %v706
  %836 = vst.msk [vmem:[%s3 + $0xb4] sm:$0xf] %vm790, %v707
  %837 = vst.msk [vmem:[%s3 + $0xb8] sm:$0xf] %vm790, %v708
  %838 = vst.msk [vmem:[%s3 + $0xbc] sm:$0xf] %vm790, %v709
  %839 = vst.msk [vmem:[%s3 + $0xc0] sm:$0xf] %vm790, %v710
  %840 = vst.msk [vmem:[%s3 + $0xc4] sm:$0xf] %vm790, %v711
  %841 = vst.msk [vmem:[%s3 + $0xc8] sm:$0xf] %vm790, %v712
  %842 = vst.msk [vmem:[%s3 + $0xcc] sm:$0xf] %vm790, %v713
  %843 = vst.msk [vmem:[%s3 + $0xd0] sm:$0xf] %vm790, %v714
  %844 = vst.msk [vmem:[%s3 + $0xd4] sm:$0xf] %vm790, %v715
  %845 = vst.msk [vmem:[%s3 + $0xd8] sm:$0xf] %vm790, %v716
  %846 = vst.msk [vmem:[%s3 + $0xdc] sm:$0xf] %vm790, %v717
  %847 = vst.msk [vmem:[%s3 + $0xe0] sm:$0xf] %vm790, %v718
  %848 = vst.msk [vmem:[%s3 + $0xe4] sm:$0xf] %vm790, %v719
  %849 = vst.msk [vmem:[%s3 + $0xe8] sm:$0xf] %vm790, %v720
  %850 = vst.msk [vmem:[%s3 + $0xec] sm:$0xf] %vm790, %v721
  %851 = vst.msk [vmem:[%s3 + $0xf0] sm:$0xf] %vm790, %v722
  %852 = vst.msk [vmem:[%s3 + $0xf4] sm:$0xf] %vm790, %v723
  %853 = vst.msk [vmem:[%s3 + $0xf8] sm:$0xf] %vm790, %v724
  %854 = vst.msk [vmem:[%s3 + $0xfc] sm:$0xf] %vm790, %v725
  %855 = vst.msk [vmem:[%s3 + $0x100] sm:$0xf] %vm790, %v726
  %856 = vst.msk [vmem:[%s3 + $0x104] sm:$0xf] %vm790, %v727
  %857 = vst.msk [vmem:[%s3 + $0x108] sm:$0xf] %vm790, %v728
  %858 = vst.msk [vmem:[%s3 + $0x10c] sm:$0xf] %vm790, %v729
  %859 = vst.msk [vmem:[%s3 + $0x110] sm:$0xf] %vm790, %v730
  %860 = vst.msk [vmem:[%s3 + $0x114] sm:$0xf] %vm790, %v731
  %861 = vst.msk [vmem:[%s3 + $0x118] sm:$0xf] %vm790, %v732
  %862 = vst.msk [vmem:[%s3 + $0x11c] sm:$0xf] %vm790, %v733
  %863 = vst.msk [vmem:[%s3 + $0x120] sm:$0xf] %vm790, %v734
  %864 = vst.msk [vmem:[%s3 + $0x124] sm:$0xf] %vm790, %v735
  %865 = vst.msk [vmem:[%s3 + $0x128] sm:$0xf] %vm790, %v736
  %866 = vst.msk [vmem:[%s3 + $0x12c] sm:$0xf] %vm790, %v737
  %867 = vst.msk [vmem:[%s3 + $0x130] sm:$0xf] %vm790, %v738
  %868 = vst.msk [vmem:[%s3 + $0x134] sm:$0xf] %vm790, %v739
  %869 = vst.msk [vmem:[%s3 + $0x138] sm:$0xf] %vm790, %v740
  %870 = vst.msk [vmem:[%s3 + $0x13c] sm:$0xf] %vm790, %v741
  %871 = vst.msk [vmem:[%s3 + $0x140] sm:$0xf] %vm790, %v742
  %872 = vst.msk [vmem:[%s3 + $0x144] sm:$0xf] %vm790, %v743
  %873 = vst.msk [vmem:[%s3 + $0x148] sm:$0xf] %vm790, %v744
  %874 = vst.msk [vmem:[%s3 + $0x14c] sm:$0xf] %vm790, %v745
  %875 = vst.msk [vmem:[%s3 + $0x150] sm:$0xf] %vm790, %v746
  %876 = vst.msk [vmem:[%s3 + $0x154] sm:$0xf] %vm790, %v747
  %877 = vst.msk [vmem:[%s3 + $0x158] sm:$0xf] %vm790, %v748
  %878 = vst.msk [vmem:[%s3 + $0x15c] sm:$0xf] %vm790, %v749
  %879 = vst.msk [vmem:[%s3 + $0x160] sm:$0xf] %vm790, %v750
  %880 = vst.msk [vmem:[%s3 + $0x164] sm:$0xf] %vm790, %v751
  %881 = vst.msk [vmem:[%s3 + $0x168] sm:$0xf] %vm790, %v752
  %882 = vst.msk [vmem:[%s3 + $0x16c] sm:$0xf] %vm790, %v753
  %883 = vst.msk [vmem:[%s3 + $0x170] sm:$0xf] %vm790, %v754
  %884 = vst.msk [vmem:[%s3 + $0x174] sm:$0xf] %vm790, %v755
  %885 = vst.msk [vmem:[%s3 + $0x178] sm:$0xf] %vm790, %v756
  %886 = vst.msk [vmem:[%s3 + $0x17c] sm:$0xf] %vm790, %v757
  %887 = vst.msk [vmem:[%s3 + $0x180] sm:$0xf] %vm790, %v758
  %888 = vst.msk [vmem:[%s3 + $0x184] sm:$0xf] %vm790, %v759
  %889 = vst.msk [vmem:[%s3 + $0x188] sm:$0xf] %vm790, %v760
  %890 = vst.msk [vmem:[%s3 + $0x18c] sm:$0xf] %vm790, %v761
  %891 = vst.msk [vmem:[%s3 + $0x190] sm:$0xf] %vm790, %v762
  %892 = vst.msk [vmem:[%s3 + $0x194] sm:$0xf] %vm790, %v763
  %893 = vst.msk [vmem:[%s3 + $0x198] sm:$0xf] %vm790, %v764
  %894 = vst.msk [vmem:[%s3 + $0x19c] sm:$0xf] %vm790, %v765
  %895 = vst.msk [vmem:[%s3 + $0x1a0] sm:$0xf] %vm790, %v766
  %896 = vst.msk [vmem:[%s3 + $0x1a4] sm:$0xf] %vm790, %v767
  %897 = vst.msk [vmem:[%s3 + $0x1a8] sm:$0xf] %vm790, %v768
  %898 = vst.msk [vmem:[%s3 + $0x1ac] sm:$0xf] %vm790, %v769
  %899 = vst.msk [vmem:[%s3 + $0x1b0] sm:$0xf] %vm790, %v770
  %900 = vst.msk [vmem:[%s3 + $0x1b4] sm:$0xf] %vm790, %v771
  %901 = vst.msk [vmem:[%s3 + $0x1b8] sm:$0xf] %vm790, %v772
  %902 = vst.msk [vmem:[%s3 + $0x1bc] sm:$0xf] %vm790, %v773
  %903 = vst.msk [vmem:[%s3 + $0x1c0] sm:$0xf] %vm790, %v774
  %904 = vst.msk [vmem:[%s3 + $0x1c4] sm:$0xf] %vm790, %v775
  %905 = vst.msk [vmem:[%s3 + $0x1c8] sm:$0xf] %vm790, %v776
  %906 = vst.msk [vmem:[%s3 + $0x1cc] sm:$0xf] %vm790, %v777
  %907 = vst.msk [vmem:[%s3 + $0x1d0] sm:$0xf] %vm790, %v778
  %908 = vst.msk [vmem:[%s3 + $0x1d4] sm:$0xf] %vm790, %v779
  %909 = vst.msk [vmem:[%s3 + $0x1d8] sm:$0xf] %vm790, %v780
  %910 = vst.msk [vmem:[%s3 + $0x1dc] sm:$0xf] %vm790, %v781
  %911 = vst.msk [vmem:[%s3 + $0x1e0] sm:$0xf] %vm790, %v782
  %912 = vst.msk [vmem:[%s3 + $0x1e4] sm:$0xf] %vm790, %v783
  %913 = vst.msk [vmem:[%s3 + $0x1e8] sm:$0xf] %vm790, %v784
  %914 = vst.msk [vmem:[%s3 + $0x1ec] sm:$0xf] %vm790, %v785
  %915 = vst.msk [vmem:[%s3 + $0x1f0] sm:$0xf] %vm790, %v786
  %916 = vst.msk [vmem:[%s3 + $0x1f4] sm:$0xf] %vm790, %v787
  %917 = vst.msk [vmem:[%s3 + $0x1f8] sm:$0xf] %vm790, %v788
  %918 = vst.msk [vmem:[%s3 + $0x1fc] sm:$0xf] %vm790, %v789
  // Predicated region
  $region14: #{refine_net_unet_forward.31} parent=0 // pred_check
    _
  $region15: #{refine_net_unet_forward.31} parent=0 // pred_check_branch
    %920 = sbr.rel (0) target = $region17
  $region16: #{refine_net_unet_forward.31} parent=0 // pred_region
    _
  $region17: #{refine_net_unet_forward.31} parent=0 // pred_fallthru
    _
  // Predicated region
  $region18: #{refine_net_unet_forward.31} parent=0 // pred_check
    _
  $region19: #{refine_net_unet_forward.31} parent=0 // pred_check_branch
    %922 = sbr.rel (0) target = $region21
  $region20: #{refine_net_unet_forward.31} parent=0 // pred_region
    _
  $region21: #{refine_net_unet_forward.31} parent=0 // pred_fallthru
    _

// kernel: refine_net_unet_forward.30
$region0: #{refine_net_unet_forward.30}
  #allocation0 [shape = 'u32[]', space=smem, size = 0x4, offset = 0x4, fixed_abs, tag = 'smem constant byte address 0x4 - core index']
  #allocation1 [shape = 'u32[72,128]{1,0:T(1,128)}', space=vmem, size = 0x9000, scoped, tag = 'internal scratch']
  %s0 = inlined_call_operand.vmem [shape: bf16[1024,324], index: 0, kind: input, shape index: {}]
  %s1 = inlined_call_operand.vmem [shape: bf16[324,4], index: 1, kind: input, shape index: {}]
  %s2 = inlined_call_operand.vmem [shape: bf16[1024,4], index: 2, kind: output, shape index: {0}]
  %s3 = inlined_call_operand.vmem [shape: f32[1,1,4], index: 3, kind: output, shape index: {1}]
  %s4 = inlined_call_operand.vmem [shape: f32[1,1,4], index: 4, kind: output, shape index: {2}]
  %5 = xla_tuple %s2, %s3, %s4
  %s6 = sld [smem:[#allocation0]]
  $region34: #{refine_net_unet_forward.30} parent=0
    _
  %s8 = ssub.s32 1, %s6
  %s9 = scalar_select 0, %s8, %s6
  // Predicated region
  $region2: #{refine_net_unet_forward.30} parent=0 // pred_check
    _
  $region3: #{refine_net_unet_forward.30} parent=0 // pred_check_branch
    %11 = sbr.rel (0) target = $region5
  $region4: #{refine_net_unet_forward.30} parent=0 // pred_region
    _
  $region5: #{refine_net_unet_forward.30} parent=0 // pred_fallthru
    _
  // Predicated region
  $region6: #{refine_net_unet_forward.30} parent=0 // pred_check
    _
  $region7: #{refine_net_unet_forward.30} parent=0 // pred_check_branch
    %13 = sbr.rel (0) target = $region9
  $region8: #{refine_net_unet_forward.30} parent=0 // pred_region
    _
  $region9: #{refine_net_unet_forward.30} parent=0 // pred_fallthru
    _
  %v15 = vld [vmem:[%s0] sm:$0xff]
  %v16 = vld [vmem:[%s0 + $0x8] sm:$0xf]
  %v17 = vld [vmem:[%s0 + $0xc] sm:$0xff]
  %v18 = vld [vmem:[%s0 + $0x14] sm:$0xf]
  %v19 = vld [vmem:[%s0 + $0x18] sm:$0xff]
  %v20 = vld [vmem:[%s0 + $0x20] sm:$0xf]
  %v21 = vld [vmem:[%s0 + $0x24] sm:$0xff]
  %v22 = vld [vmem:[%s0 + $0x2c] sm:$0xf]
  %v23 = vld [vmem:[%s0 + $0x30] sm:$0xff]
  %v24 = vld [vmem:[%s0 + $0x38] sm:$0xf]
  %v25 = vld [vmem:[%s0 + $0x3c] sm:$0xff]
  %v26 = vld [vmem:[%s0 + $0x44] sm:$0xf]
  %v27 = vld [vmem:[%s0 + $0x48] sm:$0xff]
  %v28 = vld [vmem:[%s0 + $0x50] sm:$0xf]
  %v29 = vld [vmem:[%s0 + $0x54] sm:$0xff]
  %v30 = vld [vmem:[%s0 + $0x5c] sm:$0xf]
  %v31 = vld [vmem:[%s0 + $0x60] sm:$0xff]
  %v32 = vld [vmem:[%s0 + $0x68] sm:$0xf]
  %v33 = vld [vmem:[%s0 + $0x6c] sm:$0xff]
  %v34 = vld [vmem:[%s0 + $0x74] sm:$0xf]
  %v35 = vld [vmem:[%s0 + $0x78] sm:$0xff]
  %v36 = vld [vmem:[%s0 + $0x80] sm:$0xf]
  %v37 = vld [vmem:[%s0 + $0x84] sm:$0xff]
  %v38 = vld [vmem:[%s0 + $0x8c] sm:$0xf]
  %v39 = vld [vmem:[%s0 + $0x90] sm:$0xff]
  %v40 = vld [vmem:[%s0 + $0x98] sm:$0xf]
  %v41 = vld [vmem:[%s0 + $0x9c] sm:$0xff]
  %v42 = vld [vmem:[%s0 + $0xa4] sm:$0xf]
  %v43 = vld [vmem:[%s0 + $0xa8] sm:$0xff]
  %v44 = vld [vmem:[%s0 + $0xb0] sm:$0xf]
  %v45 = vld [vmem:[%s0 + $0xb4] sm:$0xff]
  %v46 = vld [vmem:[%s0 + $0xbc] sm:$0xf]
  %v47 = vld [vmem:[%s0 + $0xc0] sm:$0xff]
  %v48 = vld [vmem:[%s0 + $0xc8] sm:$0xf]
  %v49 = vld [vmem:[%s0 + $0xcc] sm:$0xff]
  %v50 = vld [vmem:[%s0 + $0xd4] sm:$0xf]
  %v51 = vld [vmem:[%s0 + $0xd8] sm:$0xff]
  %v52 = vld [vmem:[%s0 + $0xe0] sm:$0xf]
  %v53 = vld [vmem:[%s0 + $0xe4] sm:$0xff]
  %v54 = vld [vmem:[%s0 + $0xec] sm:$0xf]
  %v55 = vld [vmem:[%s0 + $0xf0] sm:$0xff]
  %v56 = vld [vmem:[%s0 + $0xf8] sm:$0xf]
  %v57 = vld [vmem:[%s0 + $0xfc] sm:$0xff]
  %v58 = vld [vmem:[%s0 + $0x104] sm:$0xf]
  %v59 = vld [vmem:[%s0 + $0x108] sm:$0xff]
  %v60 = vld [vmem:[%s0 + $0x110] sm:$0xf]
  %v61 = vld [vmem:[%s0 + $0x114] sm:$0xff]
  %v62 = vld [vmem:[%s0 + $0x11c] sm:$0xf]
  %v63 = vld [vmem:[%s0 + $0x120] sm:$0xff]
  %v64 = vld [vmem:[%s0 + $0x128] sm:$0xf]
  %v65 = vld [vmem:[%s0 + $0x12c] sm:$0xff]
  %v66 = vld [vmem:[%s0 + $0x134] sm:$0xf]
  %v67 = vld [vmem:[%s0 + $0x138] sm:$0xff]
  %v68 = vld [vmem:[%s0 + $0x140] sm:$0xf]
  %v69 = vld [vmem:[%s0 + $0x144] sm:$0xff]
  %v70 = vld [vmem:[%s0 + $0x14c] sm:$0xf]
  %v71 = vld [vmem:[%s0 + $0x150] sm:$0xff]
  %v72 = vld [vmem:[%s0 + $0x158] sm:$0xf]
  %v73 = vld [vmem:[%s0 + $0x15c] sm:$0xff]
  %v74 = vld [vmem:[%s0 + $0x164] sm:$0xf]
  %v75 = vld [vmem:[%s0 + $0x168] sm:$0xff]
  %v76 = vld [vmem:[%s0 + $0x170] sm:$0xf]
  %v77 = vld [vmem:[%s0 + $0x174] sm:$0xff]
  %v78 = vld [vmem:[%s0 + $0x17c] sm:$0xf]
  %v79 = vld [vmem:[%s0 + $0x180] sm:$0xff]
  %v80 = vld [vmem:[%s0 + $0x188] sm:$0xf]
  %v81 = vld [vmem:[%s0 + $0x18c] sm:$0xff]
  %v82 = vld [vmem:[%s0 + $0x194] sm:$0xf]
  %v83 = vld [vmem:[%s0 + $0x198] sm:$0xff]
  %v84 = vld [vmem:[%s0 + $0x1a0] sm:$0xf]
  %v85 = vld [vmem:[%s0 + $0x1a4] sm:$0xff]
  %v86 = vld [vmem:[%s0 + $0x1ac] sm:$0xf]
  %v87 = vld [vmem:[%s0 + $0x1b0] sm:$0xff]
  %v88 = vld [vmem:[%s0 + $0x1b8] sm:$0xf]
  %v89 = vld [vmem:[%s0 + $0x1bc] sm:$0xff]
  %v90 = vld [vmem:[%s0 + $0x1c4] sm:$0xf]
  %v91 = vld [vmem:[%s0 + $0x1c8] sm:$0xff]
  %v92 = vld [vmem:[%s0 + $0x1d0] sm:$0xf]
  %v93 = vld [vmem:[%s0 + $0x1d4] sm:$0xff]
  %v94 = vld [vmem:[%s0 + $0x1dc] sm:$0xf]
  %v95 = vld [vmem:[%s0 + $0x1e0] sm:$0xff]
  %v96 = vld [vmem:[%s0 + $0x1e8] sm:$0xf]
  %v97 = vld [vmem:[%s0 + $0x1ec] sm:$0xff]
  %v98 = vld [vmem:[%s0 + $0x1f4] sm:$0xf]
  %v99 = vld [vmem:[%s0 + $0x1f8] sm:$0xff]
  %v100 = vld [vmem:[%s0 + $0x200] sm:$0xf]
  %v101 = vld [vmem:[%s0 + $0x204] sm:$0xff]
  %v102 = vld [vmem:[%s0 + $0x20c] sm:$0xf]
  %v103 = vld [vmem:[%s0 + $0x210] sm:$0xff]
  %v104 = vld [vmem:[%s0 + $0x218] sm:$0xf]
  %v105 = vld [vmem:[%s0 + $0x21c] sm:$0xff]
  %v106 = vld [vmem:[%s0 + $0x224] sm:$0xf]
  %v107 = vld [vmem:[%s0 + $0x228] sm:$0xff]
  %v108 = vld [vmem:[%s0 + $0x230] sm:$0xf]
  %v109 = vld [vmem:[%s0 + $0x234] sm:$0xff]
  %v110 = vld [vmem:[%s0 + $0x23c] sm:$0xf]
  %v111 = vld [vmem:[%s0 + $0x240] sm:$0xff]
  %v112 = vld [vmem:[%s0 + $0x248] sm:$0xf]
  %v113 = vld [vmem:[%s0 + $0x24c] sm:$0xff]
  %v114 = vld [vmem:[%s0 + $0x254] sm:$0xf]
  %v115 = vld [vmem:[%s0 + $0x258] sm:$0xff]
  %v116 = vld [vmem:[%s0 + $0x260] sm:$0xf]
  %v117 = vld [vmem:[%s0 + $0x264] sm:$0xff]
  %v118 = vld [vmem:[%s0 + $0x26c] sm:$0xf]
  %v119 = vld [vmem:[%s0 + $0x270] sm:$0xff]
  %v120 = vld [vmem:[%s0 + $0x278] sm:$0xf]
  %v121 = vld [vmem:[%s0 + $0x27c] sm:$0xff]
  %v122 = vld [vmem:[%s0 + $0x284] sm:$0xf]
  %v123 = vld [vmem:[%s0 + $0x288] sm:$0xff]
  %v124 = vld [vmem:[%s0 + $0x290] sm:$0xf]
  %v125 = vld [vmem:[%s0 + $0x294] sm:$0xff]
  %v126 = vld [vmem:[%s0 + $0x29c] sm:$0xf]
  %v127 = vld [vmem:[%s0 + $0x2a0] sm:$0xff]
  %v128 = vld [vmem:[%s0 + $0x2a8] sm:$0xf]
  %v129 = vld [vmem:[%s0 + $0x2ac] sm:$0xff]
  %v130 = vld [vmem:[%s0 + $0x2b4] sm:$0xf]
  %v131 = vld [vmem:[%s0 + $0x2b8] sm:$0xff]
  %v132 = vld [vmem:[%s0 + $0x2c0] sm:$0xf]
  %v133 = vld [vmem:[%s0 + $0x2c4] sm:$0xff]
  %v134 = vld [vmem:[%s0 + $0x2cc] sm:$0xf]
  %v135 = vld [vmem:[%s0 + $0x2d0] sm:$0xff]
  %v136 = vld [vmem:[%s0 + $0x2d8] sm:$0xf]
  %v137 = vld [vmem:[%s0 + $0x2dc] sm:$0xff]
  %v138 = vld [vmem:[%s0 + $0x2e4] sm:$0xf]
  %v139 = vld [vmem:[%s0 + $0x2e8] sm:$0xff]
  %v140 = vld [vmem:[%s0 + $0x2f0] sm:$0xf]
  %v141 = vld [vmem:[%s0 + $0x2f4] sm:$0xff]
  %v142 = vld [vmem:[%s0 + $0x2fc] sm:$0xf]
  %v143 = vld [vmem:[%s0 + $0x300] sm:$0xff]
  %v144 = vld [vmem:[%s0 + $0x308] sm:$0xf]
  %v145 = vld [vmem:[%s0 + $0x30c] sm:$0xff]
  %v146 = vld [vmem:[%s0 + $0x314] sm:$0xf]
  %v147 = vld [vmem:[%s0 + $0x318] sm:$0xff]
  %v148 = vld [vmem:[%s0 + $0x320] sm:$0xf]
  %v149 = vld [vmem:[%s0 + $0x324] sm:$0xff]
  %v150 = vld [vmem:[%s0 + $0x32c] sm:$0xf]
  %v151 = vld [vmem:[%s0 + $0x330] sm:$0xff]
  %v152 = vld [vmem:[%s0 + $0x338] sm:$0xf]
  %v153 = vld [vmem:[%s0 + $0x33c] sm:$0xff]
  %v154 = vld [vmem:[%s0 + $0x344] sm:$0xf]
  %v155 = vld [vmem:[%s0 + $0x348] sm:$0xff]
  %v156 = vld [vmem:[%s0 + $0x350] sm:$0xf]
  %v157 = vld [vmem:[%s0 + $0x354] sm:$0xff]
  %v158 = vld [vmem:[%s0 + $0x35c] sm:$0xf]
  %v159 = vld [vmem:[%s0 + $0x360] sm:$0xff]
  %v160 = vld [vmem:[%s0 + $0x368] sm:$0xf]
  %v161 = vld [vmem:[%s0 + $0x36c] sm:$0xff]
  %v162 = vld [vmem:[%s0 + $0x374] sm:$0xf]
  %v163 = vld [vmem:[%s0 + $0x378] sm:$0xff]
  %v164 = vld [vmem:[%s0 + $0x380] sm:$0xf]
  %v165 = vld [vmem:[%s0 + $0x384] sm:$0xff]
  %v166 = vld [vmem:[%s0 + $0x38c] sm:$0xf]
  %v167 = vld [vmem:[%s0 + $0x390] sm:$0xff]
  %v168 = vld [vmem:[%s0 + $0x398] sm:$0xf]
  %v169 = vld [vmem:[%s0 + $0x39c] sm:$0xff]
  %v170 = vld [vmem:[%s0 + $0x3a4] sm:$0xf]
  %v171 = vld [vmem:[%s0 + $0x3a8] sm:$0xff]
  %v172 = vld [vmem:[%s0 + $0x3b0] sm:$0xf]
  %v173 = vld [vmem:[%s0 + $0x3b4] sm:$0xff]
  %v174 = vld [vmem:[%s0 + $0x3bc] sm:$0xf]
  %v175 = vld [vmem:[%s0 + $0x3c0] sm:$0xff]
  %v176 = vld [vmem:[%s0 + $0x3c8] sm:$0xf]
  %v177 = vld [vmem:[%s0 + $0x3cc] sm:$0xff]
  %v178 = vld [vmem:[%s0 + $0x3d4] sm:$0xf]
  %v179 = vld [vmem:[%s0 + $0x3d8] sm:$0xff]
  %v180 = vld [vmem:[%s0 + $0x3e0] sm:$0xf]
  %v181 = vld [vmem:[%s0 + $0x3e4] sm:$0xff]
  %v182 = vld [vmem:[%s0 + $0x3ec] sm:$0xf]
  %v183 = vld [vmem:[%s0 + $0x3f0] sm:$0xff]
  %v184 = vld [vmem:[%s0 + $0x3f8] sm:$0xf]
  %v185 = vld [vmem:[%s0 + $0x3fc] sm:$0xff]
  %v186 = vld [vmem:[%s0 + $0x404] sm:$0xf]
  %v187 = vld [vmem:[%s0 + $0x408] sm:$0xff]
  %v188 = vld [vmem:[%s0 + $0x410] sm:$0xf]
  %v189 = vld [vmem:[%s0 + $0x414] sm:$0xff]
  %v190 = vld [vmem:[%s0 + $0x41c] sm:$0xf]
  %v191 = vld [vmem:[%s0 + $0x420] sm:$0xff]
  %v192 = vld [vmem:[%s0 + $0x428] sm:$0xf]
  %v193 = vld [vmem:[%s0 + $0x42c] sm:$0xff]
  %v194 = vld [vmem:[%s0 + $0x434] sm:$0xf]
  %v195 = vld [vmem:[%s0 + $0x438] sm:$0xff]
  %v196 = vld [vmem:[%s0 + $0x440] sm:$0xf]
  %v197 = vld [vmem:[%s0 + $0x444] sm:$0xff]
  %v198 = vld [vmem:[%s0 + $0x44c] sm:$0xf]
  %v199 = vld [vmem:[%s0 + $0x450] sm:$0xff]
  %v200 = vld [vmem:[%s0 + $0x458] sm:$0xf]
  %v201 = vld [vmem:[%s0 + $0x45c] sm:$0xff]
  %v202 = vld [vmem:[%s0 + $0x464] sm:$0xf]
  %v203 = vld [vmem:[%s0 + $0x468] sm:$0xff]
  %v204 = vld [vmem:[%s0 + $0x470] sm:$0xf]
  %v205 = vld [vmem:[%s0 + $0x474] sm:$0xff]
  %v206 = vld [vmem:[%s0 + $0x47c] sm:$0xf]
  %v207 = vld [vmem:[%s0 + $0x480] sm:$0xff]
  %v208 = vld [vmem:[%s0 + $0x488] sm:$0xf]
  %v209 = vld [vmem:[%s0 + $0x48c] sm:$0xff]
  %v210 = vld [vmem:[%s0 + $0x494] sm:$0xf]
  %v211 = vld [vmem:[%s0 + $0x498] sm:$0xff]
  %v212 = vld [vmem:[%s0 + $0x4a0] sm:$0xf]
  %v213 = vld [vmem:[%s0 + $0x4a4] sm:$0xff]
  %v214 = vld [vmem:[%s0 + $0x4ac] sm:$0xf]
  %v215 = vld [vmem:[%s0 + $0x4b0] sm:$0xff]
  %v216 = vld [vmem:[%s0 + $0x4b8] sm:$0xf]
  %v217 = vld [vmem:[%s0 + $0x4bc] sm:$0xff]
  %v218 = vld [vmem:[%s0 + $0x4c4] sm:$0xf]
  %v219 = vld [vmem:[%s0 + $0x4c8] sm:$0xff]
  %v220 = vld [vmem:[%s0 + $0x4d0] sm:$0xf]
  %v221 = vld [vmem:[%s0 + $0x4d4] sm:$0xff]
  %v222 = vld [vmem:[%s0 + $0x4dc] sm:$0xf]
  %v223 = vld [vmem:[%s0 + $0x4e0] sm:$0xff]
  %v224 = vld [vmem:[%s0 + $0x4e8] sm:$0xf]
  %v225 = vld [vmem:[%s0 + $0x4ec] sm:$0xff]
  %v226 = vld [vmem:[%s0 + $0x4f4] sm:$0xf]
  %v227 = vld [vmem:[%s0 + $0x4f8] sm:$0xff]
  %v228 = vld [vmem:[%s0 + $0x500] sm:$0xf]
  %v229 = vld [vmem:[%s0 + $0x504] sm:$0xff]
  %v230 = vld [vmem:[%s0 + $0x50c] sm:$0xf]
  %v231 = vld [vmem:[%s0 + $0x510] sm:$0xff]
  %v232 = vld [vmem:[%s0 + $0x518] sm:$0xf]
  %v233 = vld [vmem:[%s0 + $0x51c] sm:$0xff]
  %v234 = vld [vmem:[%s0 + $0x524] sm:$0xf]
  %v235 = vld [vmem:[%s0 + $0x528] sm:$0xff]
  %v236 = vld [vmem:[%s0 + $0x530] sm:$0xf]
  %v237 = vld [vmem:[%s0 + $0x534] sm:$0xff]
  %v238 = vld [vmem:[%s0 + $0x53c] sm:$0xf]
  %v239 = vld [vmem:[%s0 + $0x540] sm:$0xff]
  %v240 = vld [vmem:[%s0 + $0x548] sm:$0xf]
  %v241 = vld [vmem:[%s0 + $0x54c] sm:$0xff]
  %v242 = vld [vmem:[%s0 + $0x554] sm:$0xf]
  %v243 = vld [vmem:[%s0 + $0x558] sm:$0xff]
  %v244 = vld [vmem:[%s0 + $0x560] sm:$0xf]
  %v245 = vld [vmem:[%s0 + $0x564] sm:$0xff]
  %v246 = vld [vmem:[%s0 + $0x56c] sm:$0xf]
  %v247 = vld [vmem:[%s0 + $0x570] sm:$0xff]
  %v248 = vld [vmem:[%s0 + $0x578] sm:$0xf]
  %v249 = vld [vmem:[%s0 + $0x57c] sm:$0xff]
  %v250 = vld [vmem:[%s0 + $0x584] sm:$0xf]
  %v251 = vld [vmem:[%s0 + $0x588] sm:$0xff]
  %v252 = vld [vmem:[%s0 + $0x590] sm:$0xf]
  %v253 = vld [vmem:[%s0 + $0x594] sm:$0xff]
  %v254 = vld [vmem:[%s0 + $0x59c] sm:$0xf]
  %v255 = vld [vmem:[%s0 + $0x5a0] sm:$0xff]
  %v256 = vld [vmem:[%s0 + $0x5a8] sm:$0xf]
  %v257 = vld [vmem:[%s0 + $0x5ac] sm:$0xff]
  %v258 = vld [vmem:[%s0 + $0x5b4] sm:$0xf]
  %v259 = vld [vmem:[%s0 + $0x5b8] sm:$0xff]
  %v260 = vld [vmem:[%s0 + $0x5c0] sm:$0xf]
  %v261 = vld [vmem:[%s0 + $0x5c4] sm:$0xff]
  %v262 = vld [vmem:[%s0 + $0x5cc] sm:$0xf]
  %v263 = vld [vmem:[%s0 + $0x5d0] sm:$0xff]
  %v264 = vld [vmem:[%s0 + $0x5d8] sm:$0xf]
  %v265 = vld [vmem:[%s0 + $0x5dc] sm:$0xff]
  %v266 = vld [vmem:[%s0 + $0x5e4] sm:$0xf]
  %v267 = vld [vmem:[%s0 + $0x5e8] sm:$0xff]
  %v268 = vld [vmem:[%s0 + $0x5f0] sm:$0xf]
  %v269 = vld [vmem:[%s0 + $0x5f4] sm:$0xff]
  %v270 = vld [vmem:[%s0 + $0x5fc] sm:$0xf]
  %v271 = vld [vmem:[%s1] sm:$0xf]
  %v272 = vld [vmem:[%s1 + $0x4] sm:$0xf]
  %v273 = vld [vmem:[%s1 + $0x8] sm:$0xf]
  %v274 = vld [vmem:[%s1 + $0xc] sm:$0xf]
  %v275 = vld [vmem:[%s1 + $0x10] sm:$0xf]
  %v276 = vld [vmem:[%s1 + $0x14] sm:$0xf]
  %v277 = vld [vmem:[%s1 + $0x18] sm:$0xf]
  %v278 = vld [vmem:[%s1 + $0x1c] sm:$0xf]
  %v279 = vld [vmem:[%s1 + $0x20] sm:$0xf]
  %v280 = vld [vmem:[%s1 + $0x24] sm:$0xf]
  %v281 = vld [vmem:[%s1 + $0x28] sm:$0xf]
  %v282 = vld [vmem:[%s1 + $0x2c] sm:$0xf]
  %v283 = vld [vmem:[%s1 + $0x30] sm:$0xf]
  %v284 = vld [vmem:[%s1 + $0x34] sm:$0xf]
  %v285 = vld [vmem:[%s1 + $0x38] sm:$0xf]
  %v286 = vld [vmem:[%s1 + $0x3c] sm:$0xf]
  %v287 = vld [vmem:[%s1 + $0x40] sm:$0xf]
  %v288 = vld [vmem:[%s1 + $0x44] sm:$0xf]
  %v289 = vld [vmem:[%s1 + $0x48] sm:$0xf]
  %v290 = vld [vmem:[%s1 + $0x4c] sm:$0xf]
  %v291 = vld [vmem:[%s1 + $0x50] sm:$0xf]
  %v292 = vld [vmem:[%s1 + $0x54] sm:$0xf]
  %v293 = vld [vmem:[%s1 + $0x58] sm:$0xf]
  %v294 = vld [vmem:[%s1 + $0x5c] sm:$0xf]
  %v295 = vld [vmem:[%s1 + $0x60] sm:$0xf]
  %v296 = vld [vmem:[%s1 + $0x64] sm:$0xf]
  %v297 = vld [vmem:[%s1 + $0x68] sm:$0xf]
  %v298 = vld [vmem:[%s1 + $0x6c] sm:$0xf]
  %v299 = vld [vmem:[%s1 + $0x70] sm:$0xf]
  %v300 = vld [vmem:[%s1 + $0x74] sm:$0xf]
  %v301 = vld [vmem:[%s1 + $0x78] sm:$0xf]
  %v302 = vld [vmem:[%s1 + $0x7c] sm:$0xf]
  %v303 = vld [vmem:[%s1 + $0x80] sm:$0xf]
  %v304 = vld [vmem:[%s1 + $0x84] sm:$0xf]
  %v305 = vld [vmem:[%s1 + $0x88] sm:$0xf]
  %v306 = vld [vmem:[%s1 + $0x8c] sm:$0xf]
  %v307 = vld [vmem:[%s1 + $0x90] sm:$0xf]
  %v308 = vld [vmem:[%s1 + $0x94] sm:$0xf]
  %v309 = vld [vmem:[%s1 + $0x98] sm:$0xf]
  %v310 = vld [vmem:[%s1 + $0x9c] sm:$0xf]
  %v311 = vld [vmem:[%s1 + $0xa0] sm:$0x3]
  %v568 = vunpack.c.l.b16 %v15
  %v569 = vunpack.c.h.b16 %v15
  %v570 = vunpack.c.l.b16 %v16
  %v571 = vunpack.c.l.b16 %v17
  %v572 = vunpack.c.h.b16 %v17
  %v573 = vunpack.c.l.b16 %v18
  %v574 = vunpack.c.l.b16 %v19
  %v575 = vunpack.c.h.b16 %v19
  %v576 = vunpack.c.l.b16 %v20
  %v577 = vunpack.c.l.b16 %v21
  %v578 = vunpack.c.h.b16 %v21
  %v579 = vunpack.c.l.b16 %v22
  %v580 = vunpack.c.l.b16 %v23
  %v581 = vunpack.c.h.b16 %v23
  %v582 = vunpack.c.l.b16 %v24
  %v583 = vunpack.c.l.b16 %v25
  %v584 = vunpack.c.h.b16 %v25
  %v585 = vunpack.c.l.b16 %v26
  %v586 = vunpack.c.l.b16 %v27
  %v587 = vunpack.c.h.b16 %v27
  %v588 = vunpack.c.l.b16 %v28
  %v589 = vunpack.c.l.b16 %v29
  %v590 = vunpack.c.h.b16 %v29
  %v591 = vunpack.c.l.b16 %v30
  %v592 = vunpack.c.l.b16 %v31
  %v593 = vunpack.c.h.b16 %v31
  %v594 = vunpack.c.l.b16 %v32
  %v595 = vunpack.c.l.b16 %v33
  %v596 = vunpack.c.h.b16 %v33
  %v597 = vunpack.c.l.b16 %v34
  %v598 = vunpack.c.l.b16 %v35
  %v599 = vunpack.c.h.b16 %v35
  %v600 = vunpack.c.l.b16 %v36
  %v601 = vunpack.c.l.b16 %v37
  %v602 = vunpack.c.h.b16 %v37
  %v603 = vunpack.c.l.b16 %v38
  %v604 = vunpack.c.l.b16 %v39
  %v605 = vunpack.c.h.b16 %v39
  %v606 = vunpack.c.l.b16 %v40
  %v607 = vunpack.c.l.b16 %v41
  %v608 = vunpack.c.h.b16 %v41
  %v609 = vunpack.c.l.b16 %v42
  %v610 = vunpack.c.l.b16 %v43
  %v611 = vunpack.c.h.b16 %v43
  %v612 = vunpack.c.l.b16 %v44
  %v613 = vunpack.c.l.b16 %v45
  %v614 = vunpack.c.h.b16 %v45
  %v615 = vunpack.c.l.b16 %v46
  %v616 = vunpack.c.l.b16 %v47
  %v617 = vunpack.c.h.b16 %v47
  %v618 = vunpack.c.l.b16 %v48
  %v619 = vunpack.c.l.b16 %v49
  %v620 = vunpack.c.h.b16 %v49
  %v621 = vunpack.c.l.b16 %v50
  %v622 = vunpack.c.l.b16 %v51
  %v623 = vunpack.c.h.b16 %v51
  %v624 = vunpack.c.l.b16 %v52
  %v625 = vunpack.c.l.b16 %v53
  %v626 = vunpack.c.h.b16 %v53
  %v627 = vunpack.c.l.b16 %v54
  %v628 = vunpack.c.l.b16 %v55
  %v629 = vunpack.c.h.b16 %v55
  %v630 = vunpack.c.l.b16 %v56
  %v631 = vunpack.c.l.b16 %v57
  %v632 = vunpack.c.h.b16 %v57
  %v633 = vunpack.c.l.b16 %v58
  %v634 = vunpack.c.l.b16 %v59
  %v635 = vunpack.c.h.b16 %v59
  %v636 = vunpack.c.l.b16 %v60
  %v637 = vunpack.c.l.b16 %v61
  %v638 = vunpack.c.h.b16 %v61
  %v639 = vunpack.c.l.b16 %v62
  %v640 = vunpack.c.l.b16 %v63
  %v641 = vunpack.c.h.b16 %v63
  %v642 = vunpack.c.l.b16 %v64
  %v643 = vunpack.c.l.b16 %v65
  %v644 = vunpack.c.h.b16 %v65
  %v645 = vunpack.c.l.b16 %v66
  %v646 = vunpack.c.l.b16 %v67
  %v647 = vunpack.c.h.b16 %v67
  %v648 = vunpack.c.l.b16 %v68
  %v649 = vunpack.c.l.b16 %v69
  %v650 = vunpack.c.h.b16 %v69
  %v651 = vunpack.c.l.b16 %v70
  %v652 = vunpack.c.l.b16 %v71
  %v653 = vunpack.c.h.b16 %v71
  %v654 = vunpack.c.l.b16 %v72
  %v655 = vunpack.c.l.b16 %v73
  %v656 = vunpack.c.h.b16 %v73
  %v657 = vunpack.c.l.b16 %v74
  %v658 = vunpack.c.l.b16 %v75
  %v659 = vunpack.c.h.b16 %v75
  %v660 = vunpack.c.l.b16 %v76
  %v661 = vunpack.c.l.b16 %v77
  %v662 = vunpack.c.h.b16 %v77
  %v663 = vunpack.c.l.b16 %v78
  %v664 = vunpack.c.l.b16 %v79
  %v665 = vunpack.c.h.b16 %v79
  %v666 = vunpack.c.l.b16 %v80
  %v667 = vunpack.c.l.b16 %v81
  %v668 = vunpack.c.h.b16 %v81
  %v669 = vunpack.c.l.b16 %v82
  %v670 = vunpack.c.l.b16 %v83
  %v671 = vunpack.c.h.b16 %v83
  %v672 = vunpack.c.l.b16 %v84
  %v673 = vunpack.c.l.b16 %v85
  %v674 = vunpack.c.h.b16 %v85
  %v675 = vunpack.c.l.b16 %v86
  %v676 = vunpack.c.l.b16 %v87
  %v677 = vunpack.c.h.b16 %v87
  %v678 = vunpack.c.l.b16 %v88
  %v679 = vunpack.c.l.b16 %v89
  %v680 = vunpack.c.h.b16 %v89
  %v681 = vunpack.c.l.b16 %v90
  %v682 = vunpack.c.l.b16 %v91
  %v683 = vunpack.c.h.b16 %v91
  %v684 = vunpack.c.l.b16 %v92
  %v685 = vunpack.c.l.b16 %v93
  %v686 = vunpack.c.h.b16 %v93
  %v687 = vunpack.c.l.b16 %v94
  %v688 = vunpack.c.l.b16 %v95
  %v689 = vunpack.c.h.b16 %v95
  %v690 = vunpack.c.l.b16 %v96
  %v691 = vunpack.c.l.b16 %v97
  %v692 = vunpack.c.h.b16 %v97
  %v693 = vunpack.c.l.b16 %v98
  %v694 = vunpack.c.l.b16 %v99
  %v695 = vunpack.c.h.b16 %v99
  %v696 = vunpack.c.l.b16 %v100
  %v697 = vunpack.c.l.b16 %v101
  %v698 = vunpack.c.h.b16 %v101
  %v699 = vunpack.c.l.b16 %v102
  %v700 = vunpack.c.l.b16 %v103
  %v701 = vunpack.c.h.b16 %v103
  %v702 = vunpack.c.l.b16 %v104
  %v703 = vunpack.c.l.b16 %v105
  %v704 = vunpack.c.h.b16 %v105
  %v705 = vunpack.c.l.b16 %v106
  %v706 = vunpack.c.l.b16 %v107
  %v707 = vunpack.c.h.b16 %v107
  %v708 = vunpack.c.l.b16 %v108
  %v709 = vunpack.c.l.b16 %v109
  %v710 = vunpack.c.h.b16 %v109
  %v711 = vunpack.c.l.b16 %v110
  %v712 = vunpack.c.l.b16 %v111
  %v713 = vunpack.c.h.b16 %v111
  %v714 = vunpack.c.l.b16 %v112
  %v715 = vunpack.c.l.b16 %v113
  %v716 = vunpack.c.h.b16 %v113
  %v717 = vunpack.c.l.b16 %v114
  %v718 = vunpack.c.l.b16 %v115
  %v719 = vunpack.c.h.b16 %v115
  %v720 = vunpack.c.l.b16 %v116
  %v721 = vunpack.c.l.b16 %v117
  %v722 = vunpack.c.h.b16 %v117
  %v723 = vunpack.c.l.b16 %v118
  %v724 = vunpack.c.l.b16 %v119
  %v725 = vunpack.c.h.b16 %v119
  %v726 = vunpack.c.l.b16 %v120
  %v727 = vunpack.c.l.b16 %v121
  %v728 = vunpack.c.h.b16 %v121
  %v729 = vunpack.c.l.b16 %v122
  %v730 = vunpack.c.l.b16 %v123
  %v731 = vunpack.c.h.b16 %v123
  %v732 = vunpack.c.l.b16 %v124
  %v733 = vunpack.c.l.b16 %v125
  %v734 = vunpack.c.h.b16 %v125
  %v735 = vunpack.c.l.b16 %v126
  %v736 = vunpack.c.l.b16 %v127
  %v737 = vunpack.c.h.b16 %v127
  %v738 = vunpack.c.l.b16 %v128
  %v739 = vunpack.c.l.b16 %v129
  %v740 = vunpack.c.h.b16 %v129
  %v741 = vunpack.c.l.b16 %v130
  %v742 = vunpack.c.l.b16 %v131
  %v743 = vunpack.c.h.b16 %v131
  %v744 = vunpack.c.l.b16 %v132
  %v745 = vunpack.c.l.b16 %v133
  %v746 = vunpack.c.h.b16 %v133
  %v747 = vunpack.c.l.b16 %v134
  %v748 = vunpack.c.l.b16 %v135
  %v749 = vunpack.c.h.b16 %v135
  %v750 = vunpack.c.l.b16 %v136
  %v751 = vunpack.c.l.b16 %v137
  %v752 = vunpack.c.h.b16 %v137
  %v753 = vunpack.c.l.b16 %v138
  %v754 = vunpack.c.l.b16 %v139
  %v755 = vunpack.c.h.b16 %v139
  %v756 = vunpack.c.l.b16 %v140
  %v757 = vunpack.c.l.b16 %v141
  %v758 = vunpack.c.h.b16 %v141
  %v759 = vunpack.c.l.b16 %v142
  %v760 = vunpack.c.l.b16 %v143
  %v761 = vunpack.c.h.b16 %v143
  %v762 = vunpack.c.l.b16 %v144
  %v763 = vunpack.c.l.b16 %v145
  %v764 = vunpack.c.h.b16 %v145
  %v765 = vunpack.c.l.b16 %v146
  %v766 = vunpack.c.l.b16 %v147
  %v767 = vunpack.c.h.b16 %v147
  %v768 = vunpack.c.l.b16 %v148
  %v769 = vunpack.c.l.b16 %v149
  %v770 = vunpack.c.h.b16 %v149
  %v771 = vunpack.c.l.b16 %v150
  %v772 = vunpack.c.l.b16 %v151
  %v773 = vunpack.c.h.b16 %v151
  %v774 = vunpack.c.l.b16 %v152
  %v775 = vunpack.c.l.b16 %v153
  %v776 = vunpack.c.h.b16 %v153
  %v777 = vunpack.c.l.b16 %v154
  %v778 = vunpack.c.l.b16 %v155
  %v779 = vunpack.c.h.b16 %v155
  %v780 = vunpack.c.l.b16 %v156
  %v781 = vunpack.c.l.b16 %v157
  %v782 = vunpack.c.h.b16 %v157
  %v783 = vunpack.c.l.b16 %v158
  %v784 = vunpack.c.l.b16 %v159
  %v785 = vunpack.c.h.b16 %v159
  %v786 = vunpack.c.l.b16 %v160
  %v787 = vunpack.c.l.b16 %v161
  %v788 = vunpack.c.h.b16 %v161
  %v789 = vunpack.c.l.b16 %v162
  %v790 = vunpack.c.l.b16 %v163
  %v791 = vunpack.c.h.b16 %v163
  %v792 = vunpack.c.l.b16 %v164
  %v793 = vunpack.c.l.b16 %v165
  %v794 = vunpack.c.h.b16 %v165
  %v795 = vunpack.c.l.b16 %v166
  %v796 = vunpack.c.l.b16 %v167
  %v797 = vunpack.c.h.b16 %v167
  %v798 = vunpack.c.l.b16 %v168
  %v799 = vunpack.c.l.b16 %v169
  %v800 = vunpack.c.h.b16 %v169
  %v801 = vunpack.c.l.b16 %v170
  %v802 = vunpack.c.l.b16 %v171
  %v803 = vunpack.c.h.b16 %v171
  %v804 = vunpack.c.l.b16 %v172
  %v805 = vunpack.c.l.b16 %v173
  %v806 = vunpack.c.h.b16 %v173
  %v807 = vunpack.c.l.b16 %v174
  %v808 = vunpack.c.l.b16 %v175
  %v809 = vunpack.c.h.b16 %v175
  %v810 = vunpack.c.l.b16 %v176
  %v811 = vunpack.c.l.b16 %v177
  %v812 = vunpack.c.h.b16 %v177
  %v813 = vunpack.c.l.b16 %v178
  %v814 = vunpack.c.l.b16 %v179
  %v815 = vunpack.c.h.b16 %v179
  %v816 = vunpack.c.l.b16 %v180
  %v817 = vunpack.c.l.b16 %v181
  %v818 = vunpack.c.h.b16 %v181
  %v819 = vunpack.c.l.b16 %v182
  %v820 = vunpack.c.l.b16 %v183
  %v821 = vunpack.c.h.b16 %v183
  %v822 = vunpack.c.l.b16 %v184
  %v823 = vunpack.c.l.b16 %v185
  %v824 = vunpack.c.h.b16 %v185
  %v825 = vunpack.c.l.b16 %v186
  %v826 = vunpack.c.l.b16 %v187
  %v827 = vunpack.c.h.b16 %v187
  %v828 = vunpack.c.l.b16 %v188
  %v829 = vunpack.c.l.b16 %v189
  %v830 = vunpack.c.h.b16 %v189
  %v831 = vunpack.c.l.b16 %v190
  %v832 = vunpack.c.l.b16 %v191
  %v833 = vunpack.c.h.b16 %v191
  %v834 = vunpack.c.l.b16 %v192
  %v835 = vunpack.c.l.b16 %v193
  %v836 = vunpack.c.h.b16 %v193
  %v837 = vunpack.c.l.b16 %v194
  %v838 = vunpack.c.l.b16 %v195
  %v839 = vunpack.c.h.b16 %v195
  %v840 = vunpack.c.l.b16 %v196
  %v841 = vunpack.c.l.b16 %v197
  %v842 = vunpack.c.h.b16 %v197
  %v843 = vunpack.c.l.b16 %v198
  %v844 = vunpack.c.l.b16 %v199
  %v845 = vunpack.c.h.b16 %v199
  %v846 = vunpack.c.l.b16 %v200
  %v847 = vunpack.c.l.b16 %v201
  %v848 = vunpack.c.h.b16 %v201
  %v849 = vunpack.c.l.b16 %v202
  %v850 = vunpack.c.l.b16 %v203
  %v851 = vunpack.c.h.b16 %v203
  %v852 = vunpack.c.l.b16 %v204
  %v853 = vunpack.c.l.b16 %v205
  %v854 = vunpack.c.h.b16 %v205
  %v855 = vunpack.c.l.b16 %v206
  %v856 = vunpack.c.l.b16 %v207
  %v857 = vunpack.c.h.b16 %v207
  %v858 = vunpack.c.l.b16 %v208
  %v859 = vunpack.c.l.b16 %v209
  %v860 = vunpack.c.h.b16 %v209
  %v861 = vunpack.c.l.b16 %v210
  %v862 = vunpack.c.l.b16 %v211
  %v863 = vunpack.c.h.b16 %v211
  %v864 = vunpack.c.l.b16 %v212
  %v865 = vunpack.c.l.b16 %v213
  %v866 = vunpack.c.h.b16 %v213
  %v867 = vunpack.c.l.b16 %v214
  %v868 = vunpack.c.l.b16 %v215
  %v869 = vunpack.c.h.b16 %v215
  %v870 = vunpack.c.l.b16 %v216
  %v871 = vunpack.c.l.b16 %v217
  %v872 = vunpack.c.h.b16 %v217
  %v873 = vunpack.c.l.b16 %v218
  %v874 = vunpack.c.l.b16 %v219
  %v875 = vunpack.c.h.b16 %v219
  %v876 = vunpack.c.l.b16 %v220
  %v877 = vunpack.c.l.b16 %v221
  %v878 = vunpack.c.h.b16 %v221
  %v879 = vunpack.c.l.b16 %v222
  %v880 = vunpack.c.l.b16 %v223
  %v881 = vunpack.c.h.b16 %v223
  %v882 = vunpack.c.l.b16 %v224
  %v883 = vunpack.c.l.b16 %v225
  %v884 = vunpack.c.h.b16 %v225
  %v885 = vunpack.c.l.b16 %v226
  %v886 = vunpack.c.l.b16 %v227
  %v887 = vunpack.c.h.b16 %v227
  %v888 = vunpack.c.l.b16 %v228
  %v889 = vunpack.c.l.b16 %v229
  %v890 = vunpack.c.h.b16 %v229
  %v891 = vunpack.c.l.b16 %v230
  %v892 = vunpack.c.l.b16 %v231
  %v893 = vunpack.c.h.b16 %v231
  %v894 = vunpack.c.l.b16 %v232
  %v895 = vunpack.c.l.b16 %v233
  %v896 = vunpack.c.h.b16 %v233
  %v897 = vunpack.c.l.b16 %v234
  %v898 = vunpack.c.l.b16 %v235
  %v899 = vunpack.c.h.b16 %v235
  %v900 = vunpack.c.l.b16 %v236
  %v901 = vunpack.c.l.b16 %v237
  %v902 = vunpack.c.h.b16 %v237
  %v903 = vunpack.c.l.b16 %v238
  %v904 = vunpack.c.l.b16 %v239
  %v905 = vunpack.c.h.b16 %v239
  %v906 = vunpack.c.l.b16 %v240
  %v907 = vunpack.c.l.b16 %v241
  %v908 = vunpack.c.h.b16 %v241
  %v909 = vunpack.c.l.b16 %v242
  %v910 = vunpack.c.l.b16 %v243
  %v911 = vunpack.c.h.b16 %v243
  %v912 = vunpack.c.l.b16 %v244
  %v913 = vunpack.c.l.b16 %v245
  %v914 = vunpack.c.h.b16 %v245
  %v915 = vunpack.c.l.b16 %v246
  %v916 = vunpack.c.l.b16 %v247
  %v917 = vunpack.c.h.b16 %v247
  %v918 = vunpack.c.l.b16 %v248
  %v919 = vunpack.c.l.b16 %v249
  %v920 = vunpack.c.h.b16 %v249
  %v921 = vunpack.c.l.b16 %v250
  %v922 = vunpack.c.l.b16 %v251
  %v923 = vunpack.c.h.b16 %v251
  %v924 = vunpack.c.l.b16 %v252
  %v925 = vunpack.c.l.b16 %v253
  %v926 = vunpack.c.h.b16 %v253
  %v927 = vunpack.c.l.b16 %v254
  %v928 = vunpack.c.l.b16 %v255
  %v929 = vunpack.c.h.b16 %v255
  %v930 = vunpack.c.l.b16 %v256
  %v931 = vunpack.c.l.b16 %v257
  %v932 = vunpack.c.h.b16 %v257
  %v933 = vunpack.c.l.b16 %v258
  %v934 = vunpack.c.l.b16 %v259
  %v935 = vunpack.c.h.b16 %v259
  %v936 = vunpack.c.l.b16 %v260
  %v937 = vunpack.c.l.b16 %v261
  %v938 = vunpack.c.h.b16 %v261
  %v939 = vunpack.c.l.b16 %v262
  %v940 = vunpack.c.l.b16 %v263
  %v941 = vunpack.c.h.b16 %v263
  %v942 = vunpack.c.l.b16 %v264
  %v943 = vunpack.c.l.b16 %v265
  %v944 = vunpack.c.h.b16 %v265
  %v945 = vunpack.c.l.b16 %v266
  %v946 = vunpack.c.l.b16 %v267
  %v947 = vunpack.c.h.b16 %v267
  %v948 = vunpack.c.l.b16 %v268
  %v949 = vunpack.c.l.b16 %v269
  %v950 = vunpack.c.h.b16 %v269
  %v951 = vunpack.c.l.b16 %v270
  %v952 = vpack.c.b16 %v571, %v568
  %v953 = vpack.c.b16 %v572, %v569
  %v954 = vpack.c.b16 %v573, %v570
  %v955 = vpack.c.b16 %v577, %v574
  %v956 = vpack.c.b16 %v578, %v575
  %v957 = vpack.c.b16 %v579, %v576
  %v958 = vpack.c.b16 %v583, %v580
  %v959 = vpack.c.b16 %v584, %v581
  %v960 = vpack.c.b16 %v585, %v582
  %v961 = vpack.c.b16 %v589, %v586
  %v962 = vpack.c.b16 %v590, %v587
  %v963 = vpack.c.b16 %v591, %v588
  %v964 = vpack.c.b16 %v595, %v592
  %v965 = vpack.c.b16 %v596, %v593
  %v966 = vpack.c.b16 %v597, %v594
  %v967 = vpack.c.b16 %v601, %v598
  %v968 = vpack.c.b16 %v602, %v599
  %v969 = vpack.c.b16 %v603, %v600
  %v970 = vpack.c.b16 %v607, %v604
  %v971 = vpack.c.b16 %v608, %v605
  %v972 = vpack.c.b16 %v609, %v606
  %v973 = vpack.c.b16 %v613, %v610
  %v974 = vpack.c.b16 %v614, %v611
  %v975 = vpack.c.b16 %v615, %v612
  %v976 = vpack.c.b16 %v619, %v616
  %v977 = vpack.c.b16 %v620, %v617
  %v978 = vpack.c.b16 %v621, %v618
  %v979 = vpack.c.b16 %v625, %v622
  %v980 = vpack.c.b16 %v626, %v623
  %v981 = vpack.c.b16 %v627, %v624
  %v982 = vpack.c.b16 %v631, %v628
  %v983 = vpack.c.b16 %v632, %v629
  %v984 = vpack.c.b16 %v633, %v630
  %v985 = vpack.c.b16 %v637, %v634
  %v986 = vpack.c.b16 %v638, %v635
  %v987 = vpack.c.b16 %v639, %v636
  %v988 = vpack.c.b16 %v643, %v640
  %v989 = vpack.c.b16 %v644, %v641
  %v990 = vpack.c.b16 %v645, %v642
  %v991 = vpack.c.b16 %v649, %v646
  %v992 = vpack.c.b16 %v650, %v647
  %v993 = vpack.c.b16 %v651, %v648
  %v994 = vpack.c.b16 %v655, %v652
  %v995 = vpack.c.b16 %v656, %v653
  %v996 = vpack.c.b16 %v657, %v654
  %v997 = vpack.c.b16 %v661, %v658
  %v998 = vpack.c.b16 %v662, %v659
  %v999 = vpack.c.b16 %v663, %v660
  %v1000 = vpack.c.b16 %v667, %v664
  %v1001 = vpack.c.b16 %v668, %v665
  %v1002 = vpack.c.b16 %v669, %v666
  %v1003 = vpack.c.b16 %v673, %v670
  %v1004 = vpack.c.b16 %v674, %v671
  %v1005 = vpack.c.b16 %v675, %v672
  %v1006 = vpack.c.b16 %v679, %v676
  %v1007 = vpack.c.b16 %v680, %v677
  %v1008 = vpack.c.b16 %v681, %v678
  %v1009 = vpack.c.b16 %v685, %v682
  %v1010 = vpack.c.b16 %v686, %v683
  %v1011 = vpack.c.b16 %v687, %v684
  %v1012 = vpack.c.b16 %v691, %v688
  %v1013 = vpack.c.b16 %v692, %v689
  %v1014 = vpack.c.b16 %v693, %v690
  %v1015 = vpack.c.b16 %v697, %v694
  %v1016 = vpack.c.b16 %v698, %v695
  %v1017 = vpack.c.b16 %v699, %v696
  %v1018 = vpack.c.b16 %v703, %v700
  %v1019 = vpack.c.b16 %v704, %v701
  %v1020 = vpack.c.b16 %v705, %v702
  %v1021 = vpack.c.b16 %v709, %v706
  %v1022 = vpack.c.b16 %v710, %v707
  %v1023 = vpack.c.b16 %v711, %v708
  %v1024 = vpack.c.b16 %v715, %v712
  %v1025 = vpack.c.b16 %v716, %v713
  %v1026 = vpack.c.b16 %v717, %v714
  %v1027 = vpack.c.b16 %v721, %v718
  %v1028 = vpack.c.b16 %v722, %v719
  %v1029 = vpack.c.b16 %v723, %v720
  %v1030 = vpack.c.b16 %v727, %v724
  %v1031 = vpack.c.b16 %v728, %v725
  %v1032 = vpack.c.b16 %v729, %v726
  %v1033 = vpack.c.b16 %v733, %v730
  %v1034 = vpack.c.b16 %v734, %v731
  %v1035 = vpack.c.b16 %v735, %v732
  %v1036 = vpack.c.b16 %v739, %v736
  %v1037 = vpack.c.b16 %v740, %v737
  %v1038 = vpack.c.b16 %v741, %v738
  %v1039 = vpack.c.b16 %v745, %v742
  %v1040 = vpack.c.b16 %v746, %v743
  %v1041 = vpack.c.b16 %v747, %v744
  %v1042 = vpack.c.b16 %v751, %v748
  %v1043 = vpack.c.b16 %v752, %v749
  %v1044 = vpack.c.b16 %v753, %v750
  %v1045 = vpack.c.b16 %v757, %v754
  %v1046 = vpack.c.b16 %v758, %v755
  %v1047 = vpack.c.b16 %v759, %v756
  %v1048 = vpack.c.b16 %v763, %v760
  %v1049 = vpack.c.b16 %v764, %v761
  %v1050 = vpack.c.b16 %v765, %v762
  %v1051 = vpack.c.b16 %v769, %v766
  %v1052 = vpack.c.b16 %v770, %v767
  %v1053 = vpack.c.b16 %v771, %v768
  %v1054 = vpack.c.b16 %v775, %v772
  %v1055 = vpack.c.b16 %v776, %v773
  %v1056 = vpack.c.b16 %v777, %v774
  %v1057 = vpack.c.b16 %v781, %v778
  %v1058 = vpack.c.b16 %v782, %v779
  %v1059 = vpack.c.b16 %v783, %v780
  %v1060 = vpack.c.b16 %v787, %v784
  %v1061 = vpack.c.b16 %v788, %v785
  %v1062 = vpack.c.b16 %v789, %v786
  %v1063 = vpack.c.b16 %v793, %v790
  %v1064 = vpack.c.b16 %v794, %v791
  %v1065 = vpack.c.b16 %v795, %v792
  %v1066 = vpack.c.b16 %v799, %v796
  %v1067 = vpack.c.b16 %v800, %v797
  %v1068 = vpack.c.b16 %v801, %v798
  %v1069 = vpack.c.b16 %v805, %v802
  %v1070 = vpack.c.b16 %v806, %v803
  %v1071 = vpack.c.b16 %v807, %v804
  %v1072 = vpack.c.b16 %v811, %v808
  %v1073 = vpack.c.b16 %v812, %v809
  %v1074 = vpack.c.b16 %v813, %v810
  %v1075 = vpack.c.b16 %v817, %v814
  %v1076 = vpack.c.b16 %v818, %v815
  %v1077 = vpack.c.b16 %v819, %v816
  %v1078 = vpack.c.b16 %v823, %v820
  %v1079 = vpack.c.b16 %v824, %v821
  %v1080 = vpack.c.b16 %v825, %v822
  %v1081 = vpack.c.b16 %v829, %v826
  %v1082 = vpack.c.b16 %v830, %v827
  %v1083 = vpack.c.b16 %v831, %v828
  %v1084 = vpack.c.b16 %v835, %v832
  %v1085 = vpack.c.b16 %v836, %v833
  %v1086 = vpack.c.b16 %v837, %v834
  %v1087 = vpack.c.b16 %v841, %v838
  %v1088 = vpack.c.b16 %v842, %v839
  %v1089 = vpack.c.b16 %v843, %v840
  %v1090 = vpack.c.b16 %v847, %v844
  %v1091 = vpack.c.b16 %v848, %v845
  %v1092 = vpack.c.b16 %v849, %v846
  %v1093 = vpack.c.b16 %v853, %v850
  %v1094 = vpack.c.b16 %v854, %v851
  %v1095 = vpack.c.b16 %v855, %v852
  %v1096 = vpack.c.b16 %v859, %v856
  %v1097 = vpack.c.b16 %v860, %v857
  %v1098 = vpack.c.b16 %v861, %v858
  %v1099 = vpack.c.b16 %v865, %v862
  %v1100 = vpack.c.b16 %v866, %v863
  %v1101 = vpack.c.b16 %v867, %v864
  %v1102 = vpack.c.b16 %v871, %v868
  %v1103 = vpack.c.b16 %v872, %v869
  %v1104 = vpack.c.b16 %v873, %v870
  %v1105 = vpack.c.b16 %v877, %v874
  %v1106 = vpack.c.b16 %v878, %v875
  %v1107 = vpack.c.b16 %v879, %v876
  %v1108 = vpack.c.b16 %v883, %v880
  %v1109 = vpack.c.b16 %v884, %v881
  %v1110 = vpack.c.b16 %v885, %v882
  %v1111 = vpack.c.b16 %v889, %v886
  %v1112 = vpack.c.b16 %v890, %v887
  %v1113 = vpack.c.b16 %v891, %v888
  %v1114 = vpack.c.b16 %v895, %v892
  %v1115 = vpack.c.b16 %v896, %v893
  %v1116 = vpack.c.b16 %v897, %v894
  %v1117 = vpack.c.b16 %v901, %v898
  %v1118 = vpack.c.b16 %v902, %v899
  %v1119 = vpack.c.b16 %v903, %v900
  %v1120 = vpack.c.b16 %v907, %v904
  %v1121 = vpack.c.b16 %v908, %v905
  %v1122 = vpack.c.b16 %v909, %v906
  %v1123 = vpack.c.b16 %v913, %v910
  %v1124 = vpack.c.b16 %v914, %v911
  %v1125 = vpack.c.b16 %v915, %v912
  %v1126 = vpack.c.b16 %v919, %v916
  %v1127 = vpack.c.b16 %v920, %v917
  %v1128 = vpack.c.b16 %v921, %v918
  %v1129 = vpack.c.b16 %v925, %v922
  %v1130 = vpack.c.b16 %v926, %v923
  %v1131 = vpack.c.b16 %v927, %v924
  %v1132 = vpack.c.b16 %v931, %v928
  %v1133 = vpack.c.b16 %v932, %v929
  %v1134 = vpack.c.b16 %v933, %v930
  %v1135 = vpack.c.b16 %v937, %v934
  %v1136 = vpack.c.b16 %v938, %v935
  %v1137 = vpack.c.b16 %v939, %v936
  %v1138 = vpack.c.b16 %v943, %v940
  %v1139 = vpack.c.b16 %v944, %v941
  %v1140 = vpack.c.b16 %v945, %v942
  %v1141 = vpack.c.b16 %v949, %v946
  %v1142 = vpack.c.b16 %v950, %v947
  %v1143 = vpack.c.b16 %v951, %v948
  %v1313 = vunpack.c.l.b16 %v271
  %v1314 = vunpack.c.l.b16 %v272
  %v1315 = vunpack.c.l.b16 %v273
  %v1316 = vunpack.c.l.b16 %v274
  %v1317 = vunpack.c.l.b16 %v275
  %v1318 = vunpack.c.l.b16 %v276
  %v1319 = vunpack.c.l.b16 %v277
  %v1320 = vunpack.c.l.b16 %v278
  %v1321 = vunpack.c.l.b16 %v279
  %v1322 = vunpack.c.l.b16 %v280
  %v1323 = vunpack.c.l.b16 %v281
  %v1324 = vunpack.c.l.b16 %v282
  %v1325 = vunpack.c.l.b16 %v283
  %v1326 = vunpack.c.l.b16 %v284
  %v1327 = vunpack.c.l.b16 %v285
  %v1328 = vunpack.c.l.b16 %v286
  %v1329 = vunpack.c.l.b16 %v287
  %v1330 = vunpack.c.l.b16 %v288
  %v1331 = vunpack.c.l.b16 %v289
  %v1332 = vunpack.c.l.b16 %v290
  %v1333 = vunpack.c.l.b16 %v291
  %v1334 = vunpack.c.l.b16 %v292
  %v1335 = vunpack.c.l.b16 %v293
  %v1336 = vunpack.c.l.b16 %v294
  %v1337 = vunpack.c.l.b16 %v295
  %v1338 = vunpack.c.l.b16 %v296
  %v1339 = vunpack.c.l.b16 %v297
  %v1340 = vunpack.c.l.b16 %v298
  %v1341 = vunpack.c.l.b16 %v299
  %v1342 = vunpack.c.l.b16 %v300
  %v1343 = vunpack.c.l.b16 %v301
  %v1344 = vunpack.c.l.b16 %v302
  %v1345 = vunpack.c.l.b16 %v303
  %v1346 = vunpack.c.l.b16 %v304
  %v1347 = vunpack.c.l.b16 %v305
  %v1348 = vunpack.c.l.b16 %v306
  %v1349 = vunpack.c.l.b16 %v307
  %v1350 = vunpack.c.l.b16 %v308
  %v1351 = vunpack.c.l.b16 %v309
  %v1352 = vunpack.c.l.b16 %v310
  %v1353 = vunpack.c.l.b16 %v311
  %v1354 = vpack.c.b16 %v1314, %v1313
  %v1355 = vpack.c.b16 %v1316, %v1315
  %v1356 = vpack.c.b16 %v1318, %v1317
  %v1357 = vpack.c.b16 %v1320, %v1319
  %v1358 = vpack.c.b16 %v1322, %v1321
  %v1359 = vpack.c.b16 %v1324, %v1323
  %v1360 = vpack.c.b16 %v1326, %v1325
  %v1361 = vpack.c.b16 %v1328, %v1327
  %v1362 = vpack.c.b16 %v1330, %v1329
  %v1363 = vpack.c.b16 %v1332, %v1331
  %v1364 = vpack.c.b16 %v1334, %v1333
  %v1365 = vpack.c.b16 %v1336, %v1335
  %v1366 = vpack.c.b16 %v1338, %v1337
  %v1367 = vpack.c.b16 %v1340, %v1339
  %v1368 = vpack.c.b16 %v1342, %v1341
  %v1369 = vpack.c.b16 %v1344, %v1343
  %v1370 = vpack.c.b16 %v1346, %v1345
  %v1371 = vpack.c.b16 %v1348, %v1347
  %v1372 = vpack.c.b16 %v1350, %v1349
  %v1373 = vpack.c.b16 %v1352, %v1351
  %v1374 = vpack.c.b16 %v1353, %v1353
  %vm1395 = vcmask 556032
  %v1397 = vsel %vm1395, %v954, 0
  %v1400 = vsel %vm1395, %v957, 0
  %v1403 = vsel %vm1395, %v960, 0
  %v1406 = vsel %vm1395, %v963, 0
  %v1409 = vsel %vm1395, %v966, 0
  %v1412 = vsel %vm1395, %v969, 0
  %v1415 = vsel %vm1395, %v972, 0
  %v1418 = vsel %vm1395, %v975, 0
  %v1421 = vsel %vm1395, %v978, 0
  %v1424 = vsel %vm1395, %v981, 0
  %v1427 = vsel %vm1395, %v984, 0
  %v1430 = vsel %vm1395, %v987, 0
  %v1433 = vsel %vm1395, %v990, 0
  %v1436 = vsel %vm1395, %v993, 0
  %v1439 = vsel %vm1395, %v996, 0
  %v1442 = vsel %vm1395, %v999, 0
  %v1445 = vsel %vm1395, %v1002, 0
  %v1448 = vsel %vm1395, %v1005, 0
  %v1451 = vsel %vm1395, %v1008, 0
  %v1454 = vsel %vm1395, %v1011, 0
  %v1457 = vsel %vm1395, %v1014, 0
  %v1460 = vsel %vm1395, %v1017, 0
  %v1463 = vsel %vm1395, %v1020, 0
  %v1466 = vsel %vm1395, %v1023, 0
  %v1469 = vsel %vm1395, %v1026, 0
  %v1472 = vsel %vm1395, %v1029, 0
  %v1475 = vsel %vm1395, %v1032, 0
  %v1478 = vsel %vm1395, %v1035, 0
  %v1481 = vsel %vm1395, %v1038, 0
  %v1484 = vsel %vm1395, %v1041, 0
  %v1487 = vsel %vm1395, %v1044, 0
  %v1490 = vsel %vm1395, %v1047, 0
  %v1493 = vsel %vm1395, %v1050, 0
  %v1496 = vsel %vm1395, %v1053, 0
  %v1499 = vsel %vm1395, %v1056, 0
  %v1502 = vsel %vm1395, %v1059, 0
  %v1505 = vsel %vm1395, %v1062, 0
  %v1508 = vsel %vm1395, %v1065, 0
  %v1511 = vsel %vm1395, %v1068, 0
  %v1514 = vsel %vm1395, %v1071, 0
  %v1517 = vsel %vm1395, %v1074, 0
  %v1520 = vsel %vm1395, %v1077, 0
  %v1523 = vsel %vm1395, %v1080, 0
  %v1526 = vsel %vm1395, %v1083, 0
  %v1529 = vsel %vm1395, %v1086, 0
  %v1532 = vsel %vm1395, %v1089, 0
  %v1535 = vsel %vm1395, %v1092, 0
  %v1538 = vsel %vm1395, %v1095, 0
  %v1541 = vsel %vm1395, %v1098, 0
  %v1544 = vsel %vm1395, %v1101, 0
  %v1547 = vsel %vm1395, %v1104, 0
  %v1550 = vsel %vm1395, %v1107, 0
  %v1553 = vsel %vm1395, %v1110, 0
  %v1556 = vsel %vm1395, %v1113, 0
  %v1559 = vsel %vm1395, %v1116, 0
  %v1562 = vsel %vm1395, %v1119, 0
  %v1565 = vsel %vm1395, %v1122, 0
  %v1568 = vsel %vm1395, %v1125, 0
  %v1571 = vsel %vm1395, %v1128, 0
  %v1574 = vsel %vm1395, %v1131, 0
  %v1577 = vsel %vm1395, %v1134, 0
  %v1580 = vsel %vm1395, %v1137, 0
  %v1583 = vsel %vm1395, %v1140, 0
  %v1586 = vsel %vm1395, %v1143, 0
  %vm1588 = vcmask 1041408
  %v1590 = vsel %vm1588, %v1374, 0
  %1592 = vmatpush.bf16.msra.mxu0 %v1361
  %1593 = vmatpush.bf16.msra.mxu0 %v1360
  %1594 = vmatpush.bf16.msra.mxu0 %v1359
  %1595 = vmatpush.bf16.msra.mxu0 %v1358
  %1596 = vmatpush.bf16.msra.mxu0 %v1357
  %1597 = vmatpush.bf16.msra.mxu0 %v1356
  %1598 = vmatpush.bf16.msra.mxu0 %v1355
  %1599 = vmatpush.bf16.msra.mxu0 %v1354
  %1600 = vmatmul.bf16.gmra.mxu0 %v952
  %v1601 = vpop.f32.mrf.mxu0
  %v1602 = vadd.f32 0.0, %v1601
  %v1603 = vpop.f32.mrf.mxu0
  %v1604 = vadd.f32 0.0, %v1603
  %1605 = vmatmul.bf16.gmra.mxu0 %v955
  %v1606 = vpop.f32.mrf.mxu0
  %v1607 = vadd.f32 0.0, %v1606
  %v1608 = vpop.f32.mrf.mxu0
  %v1609 = vadd.f32 0.0, %v1608
  %1610 = vmatmul.bf16.gmra.mxu0 %v958
  %v1611 = vpop.f32.mrf.mxu0
  %v1612 = vadd.f32 0.0, %v1611
  %v1613 = vpop.f32.mrf.mxu0
  %v1614 = vadd.f32 0.0, %v1613
  %1615 = vmatmul.bf16.gmra.mxu0 %v961
  %v1616 = vpop.f32.mrf.mxu0
  %v1617 = vadd.f32 0.0, %v1616
  %v1618 = vpop.f32.mrf.mxu0
  %v1619 = vadd.f32 0.0, %v1618
  %1620 = vmatmul.bf16.gmra.mxu0 %v964
  %v1621 = vpop.f32.mrf.mxu0
  %v1622 = vadd.f32 0.0, %v1621
  %v1623 = vpop.f32.mrf.mxu0
  %v1624 = vadd.f32 0.0, %v1623
  %1625 = vmatmul.bf16.gmra.mxu0 %v967
  %v1626 = vpop.f32.mrf.mxu0
  %v1627 = vadd.f32 0.0, %v1626
  %v1628 = vpop.f32.mrf.mxu0
  %v1629 = vadd.f32 0.0, %v1628
  %1630 = vmatmul.bf16.gmra.mxu0 %v970
  %v1631 = vpop.f32.mrf.mxu0
  %v1632 = vadd.f32 0.0, %v1631
  %v1633 = vpop.f32.mrf.mxu0
  %v1634 = vadd.f32 0.0, %v1633
  %1635 = vmatmul.bf16.gmra.mxu0 %v973
  %v1636 = vpop.f32.mrf.mxu0
  %v1637 = vadd.f32 0.0, %v1636
  %v1638 = vpop.f32.mrf.mxu0
  %v1639 = vadd.f32 0.0, %v1638
  %1640 = vmatmul.bf16.gmra.mxu0 %v976
  %v1641 = vpop.f32.mrf.mxu0
  %v1642 = vadd.f32 0.0, %v1641
  %v1643 = vpop.f32.mrf.mxu0
  %v1644 = vadd.f32 0.0, %v1643
  %1645 = vmatmul.bf16.gmra.mxu0 %v979
  %v1646 = vpop.f32.mrf.mxu0
  %v1647 = vadd.f32 0.0, %v1646
  %v1648 = vpop.f32.mrf.mxu0
  %v1649 = vadd.f32 0.0, %v1648
  %1650 = vmatmul.bf16.gmra.mxu0 %v982
  %v1651 = vpop.f32.mrf.mxu0
  %v1652 = vadd.f32 0.0, %v1651
  %v1653 = vpop.f32.mrf.mxu0
  %v1654 = vadd.f32 0.0, %v1653
  %1655 = vmatmul.bf16.gmra.mxu0 %v985
  %v1656 = vpop.f32.mrf.mxu0
  %v1657 = vadd.f32 0.0, %v1656
  %v1658 = vpop.f32.mrf.mxu0
  %v1659 = vadd.f32 0.0, %v1658
  %1660 = vmatmul.bf16.gmra.mxu0 %v988
  %v1661 = vpop.f32.mrf.mxu0
  %v1662 = vadd.f32 0.0, %v1661
  %v1663 = vpop.f32.mrf.mxu0
  %v1664 = vadd.f32 0.0, %v1663
  %1665 = vmatmul.bf16.gmra.mxu0 %v991
  %v1666 = vpop.f32.mrf.mxu0
  %v1667 = vadd.f32 0.0, %v1666
  %v1668 = vpop.f32.mrf.mxu0
  %v1669 = vadd.f32 0.0, %v1668
  %1670 = vmatmul.bf16.gmra.mxu0 %v994
  %v1671 = vpop.f32.mrf.mxu0
  %v1672 = vadd.f32 0.0, %v1671
  %v1673 = vpop.f32.mrf.mxu0
  %v1674 = vadd.f32 0.0, %v1673
  %1675 = vmatmul.bf16.gmra.mxu0 %v997
  %v1676 = vpop.f32.mrf.mxu0
  %v1677 = vadd.f32 0.0, %v1676
  %v1678 = vpop.f32.mrf.mxu0
  %v1679 = vadd.f32 0.0, %v1678
  %1680 = vmatmul.bf16.gmra.mxu0 %v1000
  %v1681 = vpop.f32.mrf.mxu0
  %v1682 = vadd.f32 0.0, %v1681
  %v1683 = vpop.f32.mrf.mxu0
  %v1684 = vadd.f32 0.0, %v1683
  %1685 = vmatmul.bf16.gmra.mxu0 %v1003
  %v1686 = vpop.f32.mrf.mxu0
  %v1687 = vadd.f32 0.0, %v1686
  %v1688 = vpop.f32.mrf.mxu0
  %v1689 = vadd.f32 0.0, %v1688
  %1690 = vmatmul.bf16.gmra.mxu0 %v1006
  %v1691 = vpop.f32.mrf.mxu0
  %v1692 = vadd.f32 0.0, %v1691
  %v1693 = vpop.f32.mrf.mxu0
  %v1694 = vadd.f32 0.0, %v1693
  %1695 = vmatmul.bf16.gmra.mxu0 %v1009
  %v1696 = vpop.f32.mrf.mxu0
  %v1697 = vadd.f32 0.0, %v1696
  %v1698 = vpop.f32.mrf.mxu0
  %v1699 = vadd.f32 0.0, %v1698
  %1700 = vmatmul.bf16.gmra.mxu0 %v1012
  %v1701 = vpop.f32.mrf.mxu0
  %v1702 = vadd.f32 0.0, %v1701
  %v1703 = vpop.f32.mrf.mxu0
  %v1704 = vadd.f32 0.0, %v1703
  %1705 = vmatmul.bf16.gmra.mxu0 %v1015
  %v1706 = vpop.f32.mrf.mxu0
  %v1707 = vadd.f32 0.0, %v1706
  %v1708 = vpop.f32.mrf.mxu0
  %v1709 = vadd.f32 0.0, %v1708
  %1710 = vmatmul.bf16.gmra.mxu0 %v1018
  %v1711 = vpop.f32.mrf.mxu0
  %v1712 = vadd.f32 0.0, %v1711
  %v1713 = vpop.f32.mrf.mxu0
  %v1714 = vadd.f32 0.0, %v1713
  %1715 = vmatmul.bf16.gmra.mxu0 %v1021
  %v1716 = vpop.f32.mrf.mxu0
  %v1717 = vadd.f32 0.0, %v1716
  %v1718 = vpop.f32.mrf.mxu0
  %v1719 = vadd.f32 0.0, %v1718
  %1720 = vmatmul.bf16.gmra.mxu0 %v1024
  %v1721 = vpop.f32.mrf.mxu0
  %v1722 = vadd.f32 0.0, %v1721
  %v1723 = vpop.f32.mrf.mxu0
  %v1724 = vadd.f32 0.0, %v1723
  %1725 = vmatmul.bf16.gmra.mxu0 %v1027
  %v1726 = vpop.f32.mrf.mxu0
  %v1727 = vadd.f32 0.0, %v1726
  %v1728 = vpop.f32.mrf.mxu0
  %v1729 = vadd.f32 0.0, %v1728
  %1730 = vmatmul.bf16.gmra.mxu0 %v1030
  %v1731 = vpop.f32.mrf.mxu0
  %v1732 = vadd.f32 0.0, %v1731
  %v1733 = vpop.f32.mrf.mxu0
  %v1734 = vadd.f32 0.0, %v1733
  %1735 = vmatmul.bf16.gmra.mxu0 %v1033
  %v1736 = vpop.f32.mrf.mxu0
  %v1737 = vadd.f32 0.0, %v1736
  %v1738 = vpop.f32.mrf.mxu0
  %v1739 = vadd.f32 0.0, %v1738
  %1740 = vmatmul.bf16.gmra.mxu0 %v1036
  %v1741 = vpop.f32.mrf.mxu0
  %v1742 = vadd.f32 0.0, %v1741
  %v1743 = vpop.f32.mrf.mxu0
  %v1744 = vadd.f32 0.0, %v1743
  %1745 = vmatmul.bf16.gmra.mxu0 %v1039
  %v1746 = vpop.f32.mrf.mxu0
  %v1747 = vadd.f32 0.0, %v1746
  %v1748 = vpop.f32.mrf.mxu0
  %v1749 = vadd.f32 0.0, %v1748
  %1750 = vmatmul.bf16.gmra.mxu0 %v1042
  %v1751 = vpop.f32.mrf.mxu0
  %v1752 = vadd.f32 0.0, %v1751
  %v1753 = vpop.f32.mrf.mxu0
  %v1754 = vadd.f32 0.0, %v1753
  %1755 = vmatmul.bf16.gmra.mxu0 %v1045
  %v1756 = vpop.f32.mrf.mxu0
  %v1757 = vadd.f32 0.0, %v1756
  %v1758 = vpop.f32.mrf.mxu0
  %v1759 = vadd.f32 0.0, %v1758
  %1760 = vmatmul.bf16.gmra.mxu0 %v1048
  %v1761 = vpop.f32.mrf.mxu0
  %v1762 = vadd.f32 0.0, %v1761
  %v1763 = vpop.f32.mrf.mxu0
  %v1764 = vadd.f32 0.0, %v1763
  %1765 = vmatmul.bf16.gmra.mxu0 %v1051
  %v1766 = vpop.f32.mrf.mxu0
  %v1767 = vadd.f32 0.0, %v1766
  %v1768 = vpop.f32.mrf.mxu0
  %v1769 = vadd.f32 0.0, %v1768
  %1770 = vmatmul.bf16.gmra.mxu0 %v1054
  %v1771 = vpop.f32.mrf.mxu0
  %v1772 = vadd.f32 0.0, %v1771
  %v1773 = vpop.f32.mrf.mxu0
  %v1774 = vadd.f32 0.0, %v1773
  %1775 = vmatmul.bf16.gmra.mxu0 %v1057
  %v1776 = vpop.f32.mrf.mxu0
  %v1777 = vadd.f32 0.0, %v1776
  %v1778 = vpop.f32.mrf.mxu0
  %v1779 = vadd.f32 0.0, %v1778
  %1780 = vmatmul.bf16.gmra.mxu0 %v1060
  %v1781 = vpop.f32.mrf.mxu0
  %v1782 = vadd.f32 0.0, %v1781
  %v1783 = vpop.f32.mrf.mxu0
  %v1784 = vadd.f32 0.0, %v1783
  %1785 = vmatmul.bf16.gmra.mxu0 %v1063
  %v1786 = vpop.f32.mrf.mxu0
  %v1787 = vadd.f32 0.0, %v1786
  %v1788 = vpop.f32.mrf.mxu0
  %v1789 = vadd.f32 0.0, %v1788
  %1790 = vmatmul.bf16.gmra.mxu0 %v1066
  %v1791 = vpop.f32.mrf.mxu0
  %v1792 = vadd.f32 0.0, %v1791
  %v1793 = vpop.f32.mrf.mxu0
  %v1794 = vadd.f32 0.0, %v1793
  %1795 = vmatmul.bf16.gmra.mxu0 %v1069
  %v1796 = vpop.f32.mrf.mxu0
  %v1797 = vadd.f32 0.0, %v1796
  %v1798 = vpop.f32.mrf.mxu0
  %v1799 = vadd.f32 0.0, %v1798
  %1800 = vmatmul.bf16.gmra.mxu0 %v1072
  %v1801 = vpop.f32.mrf.mxu0
  %v1802 = vadd.f32 0.0, %v1801
  %v1803 = vpop.f32.mrf.mxu0
  %v1804 = vadd.f32 0.0, %v1803
  %1805 = vmatmul.bf16.gmra.mxu0 %v1075
  %v1806 = vpop.f32.mrf.mxu0
  %v1807 = vadd.f32 0.0, %v1806
  %v1808 = vpop.f32.mrf.mxu0
  %v1809 = vadd.f32 0.0, %v1808
  %1810 = vmatmul.bf16.gmra.mxu0 %v1078
  %v1811 = vpop.f32.mrf.mxu0
  %v1812 = vadd.f32 0.0, %v1811
  %v1813 = vpop.f32.mrf.mxu0
  %v1814 = vadd.f32 0.0, %v1813
  %1815 = vmatmul.bf16.gmra.mxu0 %v1081
  %v1816 = vpop.f32.mrf.mxu0
  %v1817 = vadd.f32 0.0, %v1816
  %v1818 = vpop.f32.mrf.mxu0
  %v1819 = vadd.f32 0.0, %v1818
  %1820 = vmatmul.bf16.gmra.mxu0 %v1084
  %v1821 = vpop.f32.mrf.mxu0
  %v1822 = vadd.f32 0.0, %v1821
  %v1823 = vpop.f32.mrf.mxu0
  %v1824 = vadd.f32 0.0, %v1823
  %1825 = vmatmul.bf16.gmra.mxu0 %v1087
  %v1826 = vpop.f32.mrf.mxu0
  %v1827 = vadd.f32 0.0, %v1826
  %v1828 = vpop.f32.mrf.mxu0
  %v1829 = vadd.f32 0.0, %v1828
  %1830 = vmatmul.bf16.gmra.mxu0 %v1090
  %v1831 = vpop.f32.mrf.mxu0
  %v1832 = vadd.f32 0.0, %v1831
  %v1833 = vpop.f32.mrf.mxu0
  %v1834 = vadd.f32 0.0, %v1833
  %1835 = vmatmul.bf16.gmra.mxu0 %v1093
  %v1836 = vpop.f32.mrf.mxu0
  %v1837 = vadd.f32 0.0, %v1836
  %v1838 = vpop.f32.mrf.mxu0
  %v1839 = vadd.f32 0.0, %v1838
  %1840 = vmatmul.bf16.gmra.mxu0 %v1096
  %v1841 = vpop.f32.mrf.mxu0
  %v1842 = vadd.f32 0.0, %v1841
  %v1843 = vpop.f32.mrf.mxu0
  %v1844 = vadd.f32 0.0, %v1843
  %1845 = vmatmul.bf16.gmra.mxu0 %v1099
  %v1846 = vpop.f32.mrf.mxu0
  %v1847 = vadd.f32 0.0, %v1846
  %v1848 = vpop.f32.mrf.mxu0
  %v1849 = vadd.f32 0.0, %v1848
  %1850 = vmatmul.bf16.gmra.mxu0 %v1102
  %v1851 = vpop.f32.mrf.mxu0
  %v1852 = vadd.f32 0.0, %v1851
  %v1853 = vpop.f32.mrf.mxu0
  %v1854 = vadd.f32 0.0, %v1853
  %1855 = vmatmul.bf16.gmra.mxu0 %v1105
  %v1856 = vpop.f32.mrf.mxu0
  %v1857 = vadd.f32 0.0, %v1856
  %v1858 = vpop.f32.mrf.mxu0
  %v1859 = vadd.f32 0.0, %v1858
  %1860 = vmatmul.bf16.gmra.mxu0 %v1108
  %v1861 = vpop.f32.mrf.mxu0
  %v1862 = vadd.f32 0.0, %v1861
  %v1863 = vpop.f32.mrf.mxu0
  %v1864 = vadd.f32 0.0, %v1863
  %1865 = vmatmul.bf16.gmra.mxu0 %v1111
  %v1866 = vpop.f32.mrf.mxu0
  %v1867 = vadd.f32 0.0, %v1866
  %v1868 = vpop.f32.mrf.mxu0
  %v1869 = vadd.f32 0.0, %v1868
  %1870 = vmatmul.bf16.gmra.mxu0 %v1114
  %v1871 = vpop.f32.mrf.mxu0
  %v1872 = vadd.f32 0.0, %v1871
  %v1873 = vpop.f32.mrf.mxu0
  %v1874 = vadd.f32 0.0, %v1873
  %1875 = vmatmul.bf16.gmra.mxu0 %v1117
  %v1876 = vpop.f32.mrf.mxu0
  %v1877 = vadd.f32 0.0, %v1876
  %v1878 = vpop.f32.mrf.mxu0
  %v1879 = vadd.f32 0.0, %v1878
  %1880 = vmatmul.bf16.gmra.mxu0 %v1120
  %v1881 = vpop.f32.mrf.mxu0
  %v1882 = vadd.f32 0.0, %v1881
  %v1883 = vpop.f32.mrf.mxu0
  %v1884 = vadd.f32 0.0, %v1883
  %1885 = vmatmul.bf16.gmra.mxu0 %v1123
  %v1886 = vpop.f32.mrf.mxu0
  %v1887 = vadd.f32 0.0, %v1886
  %v1888 = vpop.f32.mrf.mxu0
  %v1889 = vadd.f32 0.0, %v1888
  %1890 = vmatmul.bf16.gmra.mxu0 %v1126
  %v1891 = vpop.f32.mrf.mxu0
  %v1892 = vadd.f32 0.0, %v1891
  %v1893 = vpop.f32.mrf.mxu0
  %v1894 = vadd.f32 0.0, %v1893
  %1895 = vmatmul.bf16.gmra.mxu0 %v1129
  %v1896 = vpop.f32.mrf.mxu0
  %v1897 = vadd.f32 0.0, %v1896
  %v1898 = vpop.f32.mrf.mxu0
  %v1899 = vadd.f32 0.0, %v1898
  %1900 = vmatmul.bf16.gmra.mxu0 %v1132
  %v1901 = vpop.f32.mrf.mxu0
  %v1902 = vadd.f32 0.0, %v1901
  %v1903 = vpop.f32.mrf.mxu0
  %v1904 = vadd.f32 0.0, %v1903
  %1905 = vmatmul.bf16.gmra.mxu0 %v1135
  %v1906 = vpop.f32.mrf.mxu0
  %v1907 = vadd.f32 0.0, %v1906
  %v1908 = vpop.f32.mrf.mxu0
  %v1909 = vadd.f32 0.0, %v1908
  %1910 = vmatmul.bf16.gmra.mxu0 %v1138
  %v1911 = vpop.f32.mrf.mxu0
  %v1912 = vadd.f32 0.0, %v1911
  %v1913 = vpop.f32.mrf.mxu0
  %v1914 = vadd.f32 0.0, %v1913
  %1915 = vmatmul.bf16.gmra.mxu0 %v1141
  %v1916 = vpop.f32.mrf.mxu0
  %v1917 = vadd.f32 0.0, %v1916
  %v1918 = vpop.f32.mrf.mxu0
  %v1919 = vadd.f32 0.0, %v1918
  %1920 = vdwg.mxu0
  %1921 = vmatpush.bf16.msra.mxu0 %v1369
  %1922 = vmatpush.bf16.msra.mxu0 %v1368
  %1923 = vmatpush.bf16.msra.mxu0 %v1367
  %1924 = vmatpush.bf16.msra.mxu0 %v1366
  %1925 = vmatpush.bf16.msra.mxu0 %v1365
  %1926 = vmatpush.bf16.msra.mxu0 %v1364
  %1927 = vmatpush.bf16.msra.mxu0 %v1363
  %1928 = vmatpush.bf16.msra.mxu0 %v1362
  %1929 = vmatmul.bf16.gmra.mxu0 %v953
  %v1930 = vpop.f32.mrf.mxu0
  %v1931 = vadd.f32 %v1602, %v1930
  %v1932 = vpop.f32.mrf.mxu0
  %v1933 = vadd.f32 %v1604, %v1932
  %1934 = vmatmul.bf16.gmra.mxu0 %v956
  %v1935 = vpop.f32.mrf.mxu0
  %v1936 = vadd.f32 %v1607, %v1935
  %v1937 = vpop.f32.mrf.mxu0
  %v1938 = vadd.f32 %v1609, %v1937
  %1939 = vmatmul.bf16.gmra.mxu0 %v959
  %v1940 = vpop.f32.mrf.mxu0
  %v1941 = vadd.f32 %v1612, %v1940
  %v1942 = vpop.f32.mrf.mxu0
  %v1943 = vadd.f32 %v1614, %v1942
  %1944 = vmatmul.bf16.gmra.mxu0 %v962
  %v1945 = vpop.f32.mrf.mxu0
  %v1946 = vadd.f32 %v1617, %v1945
  %v1947 = vpop.f32.mrf.mxu0
  %v1948 = vadd.f32 %v1619, %v1947
  %1949 = vmatmul.bf16.gmra.mxu0 %v965
  %v1950 = vpop.f32.mrf.mxu0
  %v1951 = vadd.f32 %v1622, %v1950
  %v1952 = vpop.f32.mrf.mxu0
  %v1953 = vadd.f32 %v1624, %v1952
  %1954 = vmatmul.bf16.gmra.mxu0 %v968
  %v1955 = vpop.f32.mrf.mxu0
  %v1956 = vadd.f32 %v1627, %v1955
  %v1957 = vpop.f32.mrf.mxu0
  %v1958 = vadd.f32 %v1629, %v1957
  %1959 = vmatmul.bf16.gmra.mxu0 %v971
  %v1960 = vpop.f32.mrf.mxu0
  %v1961 = vadd.f32 %v1632, %v1960
  %v1962 = vpop.f32.mrf.mxu0
  %v1963 = vadd.f32 %v1634, %v1962
  %1964 = vmatmul.bf16.gmra.mxu0 %v974
  %v1965 = vpop.f32.mrf.mxu0
  %v1966 = vadd.f32 %v1637, %v1965
  %v1967 = vpop.f32.mrf.mxu0
  %v1968 = vadd.f32 %v1639, %v1967
  %1969 = vmatmul.bf16.gmra.mxu0 %v977
  %v1970 = vpop.f32.mrf.mxu0
  %v1971 = vadd.f32 %v1642, %v1970
  %v1972 = vpop.f32.mrf.mxu0
  %v1973 = vadd.f32 %v1644, %v1972
  %1974 = vmatmul.bf16.gmra.mxu0 %v980
  %v1975 = vpop.f32.mrf.mxu0
  %v1976 = vadd.f32 %v1647, %v1975
  %v1977 = vpop.f32.mrf.mxu0
  %v1978 = vadd.f32 %v1649, %v1977
  %1979 = vmatmul.bf16.gmra.mxu0 %v983
  %v1980 = vpop.f32.mrf.mxu0
  %v1981 = vadd.f32 %v1652, %v1980
  %v1982 = vpop.f32.mrf.mxu0
  %v1983 = vadd.f32 %v1654, %v1982
  %1984 = vmatmul.bf16.gmra.mxu0 %v986
  %v1985 = vpop.f32.mrf.mxu0
  %v1986 = vadd.f32 %v1657, %v1985
  %v1987 = vpop.f32.mrf.mxu0
  %v1988 = vadd.f32 %v1659, %v1987
  %1989 = vmatmul.bf16.gmra.mxu0 %v989
  %v1990 = vpop.f32.mrf.mxu0
  %v1991 = vadd.f32 %v1662, %v1990
  %v1992 = vpop.f32.mrf.mxu0
  %v1993 = vadd.f32 %v1664, %v1992
  %1994 = vmatmul.bf16.gmra.mxu0 %v992
  %v1995 = vpop.f32.mrf.mxu0
  %v1996 = vadd.f32 %v1667, %v1995
  %v1997 = vpop.f32.mrf.mxu0
  %v1998 = vadd.f32 %v1669, %v1997
  %1999 = vmatmul.bf16.gmra.mxu0 %v995
  %v2000 = vpop.f32.mrf.mxu0
  %v2001 = vadd.f32 %v1672, %v2000
  %v2002 = vpop.f32.mrf.mxu0
  %v2003 = vadd.f32 %v1674, %v2002
  %2004 = vmatmul.bf16.gmra.mxu0 %v998
  %v2005 = vpop.f32.mrf.mxu0
  %v2006 = vadd.f32 %v1677, %v2005
  %v2007 = vpop.f32.mrf.mxu0
  %v2008 = vadd.f32 %v1679, %v2007
  %2009 = vmatmul.bf16.gmra.mxu0 %v1001
  %v2010 = vpop.f32.mrf.mxu0
  %v2011 = vadd.f32 %v1682, %v2010
  %v2012 = vpop.f32.mrf.mxu0
  %v2013 = vadd.f32 %v1684, %v2012
  %2014 = vmatmul.bf16.gmra.mxu0 %v1004
  %v2015 = vpop.f32.mrf.mxu0
  %v2016 = vadd.f32 %v1687, %v2015
  %v2017 = vpop.f32.mrf.mxu0
  %v2018 = vadd.f32 %v1689, %v2017
  %2019 = vmatmul.bf16.gmra.mxu0 %v1007
  %v2020 = vpop.f32.mrf.mxu0
  %v2021 = vadd.f32 %v1692, %v2020
  %v2022 = vpop.f32.mrf.mxu0
  %v2023 = vadd.f32 %v1694, %v2022
  %2024 = vmatmul.bf16.gmra.mxu0 %v1010
  %v2025 = vpop.f32.mrf.mxu0
  %v2026 = vadd.f32 %v1697, %v2025
  %v2027 = vpop.f32.mrf.mxu0
  %v2028 = vadd.f32 %v1699, %v2027
  %2029 = vmatmul.bf16.gmra.mxu0 %v1013
  %v2030 = vpop.f32.mrf.mxu0
  %v2031 = vadd.f32 %v1702, %v2030
  %v2032 = vpop.f32.mrf.mxu0
  %v2033 = vadd.f32 %v1704, %v2032
  %2034 = vmatmul.bf16.gmra.mxu0 %v1016
  %v2035 = vpop.f32.mrf.mxu0
  %v2036 = vadd.f32 %v1707, %v2035
  %v2037 = vpop.f32.mrf.mxu0
  %v2038 = vadd.f32 %v1709, %v2037
  %2039 = vmatmul.bf16.gmra.mxu0 %v1019
  %v2040 = vpop.f32.mrf.mxu0
  %v2041 = vadd.f32 %v1712, %v2040
  %v2042 = vpop.f32.mrf.mxu0
  %v2043 = vadd.f32 %v1714, %v2042
  %2044 = vmatmul.bf16.gmra.mxu0 %v1022
  %v2045 = vpop.f32.mrf.mxu0
  %v2046 = vadd.f32 %v1717, %v2045
  %v2047 = vpop.f32.mrf.mxu0
  %v2048 = vadd.f32 %v1719, %v2047
  %2049 = vmatmul.bf16.gmra.mxu0 %v1025
  %v2050 = vpop.f32.mrf.mxu0
  %v2051 = vadd.f32 %v1722, %v2050
  %v2052 = vpop.f32.mrf.mxu0
  %v2053 = vadd.f32 %v1724, %v2052
  %2054 = vmatmul.bf16.gmra.mxu0 %v1028
  %v2055 = vpop.f32.mrf.mxu0
  %v2056 = vadd.f32 %v1727, %v2055
  %v2057 = vpop.f32.mrf.mxu0
  %v2058 = vadd.f32 %v1729, %v2057
  %2059 = vmatmul.bf16.gmra.mxu0 %v1031
  %v2060 = vpop.f32.mrf.mxu0
  %v2061 = vadd.f32 %v1732, %v2060
  %v2062 = vpop.f32.mrf.mxu0
  %v2063 = vadd.f32 %v1734, %v2062
  %2064 = vmatmul.bf16.gmra.mxu0 %v1034
  %v2065 = vpop.f32.mrf.mxu0
  %v2066 = vadd.f32 %v1737, %v2065
  %v2067 = vpop.f32.mrf.mxu0
  %v2068 = vadd.f32 %v1739, %v2067
  %2069 = vmatmul.bf16.gmra.mxu0 %v1037
  %v2070 = vpop.f32.mrf.mxu0
  %v2071 = vadd.f32 %v1742, %v2070
  %v2072 = vpop.f32.mrf.mxu0
  %v2073 = vadd.f32 %v1744, %v2072
  %2074 = vmatmul.bf16.gmra.mxu0 %v1040
  %v2075 = vpop.f32.mrf.mxu0
  %v2076 = vadd.f32 %v1747, %v2075
  %v2077 = vpop.f32.mrf.mxu0
  %v2078 = vadd.f32 %v1749, %v2077
  %2079 = vmatmul.bf16.gmra.mxu0 %v1043
  %v2080 = vpop.f32.mrf.mxu0
  %v2081 = vadd.f32 %v1752, %v2080
  %v2082 = vpop.f32.mrf.mxu0
  %v2083 = vadd.f32 %v1754, %v2082
  %2084 = vmatmul.bf16.gmra.mxu0 %v1046
  %v2085 = vpop.f32.mrf.mxu0
  %v2086 = vadd.f32 %v1757, %v2085
  %v2087 = vpop.f32.mrf.mxu0
  %v2088 = vadd.f32 %v1759, %v2087
  %2089 = vmatmul.bf16.gmra.mxu0 %v1049
  %v2090 = vpop.f32.mrf.mxu0
  %v2091 = vadd.f32 %v1762, %v2090
  %v2092 = vpop.f32.mrf.mxu0
  %v2093 = vadd.f32 %v1764, %v2092
  %2094 = vmatmul.bf16.gmra.mxu0 %v1052
  %v2095 = vpop.f32.mrf.mxu0
  %v2096 = vadd.f32 %v1767, %v2095
  %v2097 = vpop.f32.mrf.mxu0
  %v2098 = vadd.f32 %v1769, %v2097
  %2099 = vmatmul.bf16.gmra.mxu0 %v1055
  %v2100 = vpop.f32.mrf.mxu0
  %v2101 = vadd.f32 %v1772, %v2100
  %v2102 = vpop.f32.mrf.mxu0
  %v2103 = vadd.f32 %v1774, %v2102
  %2104 = vmatmul.bf16.gmra.mxu0 %v1058
  %v2105 = vpop.f32.mrf.mxu0
  %v2106 = vadd.f32 %v1777, %v2105
  %v2107 = vpop.f32.mrf.mxu0
  %v2108 = vadd.f32 %v1779, %v2107
  %2109 = vmatmul.bf16.gmra.mxu0 %v1061
  %v2110 = vpop.f32.mrf.mxu0
  %v2111 = vadd.f32 %v1782, %v2110
  %v2112 = vpop.f32.mrf.mxu0
  %v2113 = vadd.f32 %v1784, %v2112
  %2114 = vmatmul.bf16.gmra.mxu0 %v1064
  %v2115 = vpop.f32.mrf.mxu0
  %v2116 = vadd.f32 %v1787, %v2115
  %v2117 = vpop.f32.mrf.mxu0
  %v2118 = vadd.f32 %v1789, %v2117
  %2119 = vmatmul.bf16.gmra.mxu0 %v1067
  %v2120 = vpop.f32.mrf.mxu0
  %v2121 = vadd.f32 %v1792, %v2120
  %v2122 = vpop.f32.mrf.mxu0
  %v2123 = vadd.f32 %v1794, %v2122
  %2124 = vmatmul.bf16.gmra.mxu0 %v1070
  %v2125 = vpop.f32.mrf.mxu0
  %v2126 = vadd.f32 %v1797, %v2125
  %v2127 = vpop.f32.mrf.mxu0
  %v2128 = vadd.f32 %v1799, %v2127
  %2129 = vmatmul.bf16.gmra.mxu0 %v1073
  %v2130 = vpop.f32.mrf.mxu0
  %v2131 = vadd.f32 %v1802, %v2130
  %v2132 = vpop.f32.mrf.mxu0
  %v2133 = vadd.f32 %v1804, %v2132
  %2134 = vmatmul.bf16.gmra.mxu0 %v1076
  %v2135 = vpop.f32.mrf.mxu0
  %v2136 = vadd.f32 %v1807, %v2135
  %v2137 = vpop.f32.mrf.mxu0
  %v2138 = vadd.f32 %v1809, %v2137
  %2139 = vmatmul.bf16.gmra.mxu0 %v1079
  %v2140 = vpop.f32.mrf.mxu0
  %v2141 = vadd.f32 %v1812, %v2140
  %v2142 = vpop.f32.mrf.mxu0
  %v2143 = vadd.f32 %v1814, %v2142
  %2144 = vmatmul.bf16.gmra.mxu0 %v1082
  %v2145 = vpop.f32.mrf.mxu0
  %v2146 = vadd.f32 %v1817, %v2145
  %v2147 = vpop.f32.mrf.mxu0
  %v2148 = vadd.f32 %v1819, %v2147
  %2149 = vmatmul.bf16.gmra.mxu0 %v1085
  %v2150 = vpop.f32.mrf.mxu0
  %v2151 = vadd.f32 %v1822, %v2150
  %v2152 = vpop.f32.mrf.mxu0
  %v2153 = vadd.f32 %v1824, %v2152
  %2154 = vmatmul.bf16.gmra.mxu0 %v1088
  %v2155 = vpop.f32.mrf.mxu0
  %v2156 = vadd.f32 %v1827, %v2155
  %v2157 = vpop.f32.mrf.mxu0
  %v2158 = vadd.f32 %v1829, %v2157
  %2159 = vmatmul.bf16.gmra.mxu0 %v1091
  %v2160 = vpop.f32.mrf.mxu0
  %v2161 = vadd.f32 %v1832, %v2160
  %v2162 = vpop.f32.mrf.mxu0
  %v2163 = vadd.f32 %v1834, %v2162
  %2164 = vmatmul.bf16.gmra.mxu0 %v1094
  %v2165 = vpop.f32.mrf.mxu0
  %v2166 = vadd.f32 %v1837, %v2165
  %v2167 = vpop.f32.mrf.mxu0
  %v2168 = vadd.f32 %v1839, %v2167
  %2169 = vmatmul.bf16.gmra.mxu0 %v1097
  %v2170 = vpop.f32.mrf.mxu0
  %v2171 = vadd.f32 %v1842, %v2170
  %v2172 = vpop.f32.mrf.mxu0
  %v2173 = vadd.f32 %v1844, %v2172
  %2174 = vmatmul.bf16.gmra.mxu0 %v1100
  %v2175 = vpop.f32.mrf.mxu0
  %v2176 = vadd.f32 %v1847, %v2175
  %v2177 = vpop.f32.mrf.mxu0
  %v2178 = vadd.f32 %v1849, %v2177
  %2179 = vmatmul.bf16.gmra.mxu0 %v1103
  %v2180 = vpop.f32.mrf.mxu0
  %v2181 = vadd.f32 %v1852, %v2180
  %v2182 = vpop.f32.mrf.mxu0
  %v2183 = vadd.f32 %v1854, %v2182
  %2184 = vmatmul.bf16.gmra.mxu0 %v1106
  %v2185 = vpop.f32.mrf.mxu0
  %v2186 = vadd.f32 %v1857, %v2185
  %v2187 = vpop.f32.mrf.mxu0
  %v2188 = vadd.f32 %v1859, %v2187
  %2189 = vmatmul.bf16.gmra.mxu0 %v1109
  %v2190 = vpop.f32.mrf.mxu0
  %v2191 = vadd.f32 %v1862, %v2190
  %v2192 = vpop.f32.mrf.mxu0
  %v2193 = vadd.f32 %v1864, %v2192
  %2194 = vmatmul.bf16.gmra.mxu0 %v1112
  %v2195 = vpop.f32.mrf.mxu0
  %v2196 = vadd.f32 %v1867, %v2195
  %v2197 = vpop.f32.mrf.mxu0
  %v2198 = vadd.f32 %v1869, %v2197
  %2199 = vmatmul.bf16.gmra.mxu0 %v1115
  %v2200 = vpop.f32.mrf.mxu0
  %v2201 = vadd.f32 %v1872, %v2200
  %v2202 = vpop.f32.mrf.mxu0
  %v2203 = vadd.f32 %v1874, %v2202
  %2204 = vmatmul.bf16.gmra.mxu0 %v1118
  %v2205 = vpop.f32.mrf.mxu0
  %v2206 = vadd.f32 %v1877, %v2205
  %v2207 = vpop.f32.mrf.mxu0
  %v2208 = vadd.f32 %v1879, %v2207
  %2209 = vmatmul.bf16.gmra.mxu0 %v1121
  %v2210 = vpop.f32.mrf.mxu0
  %v2211 = vadd.f32 %v1882, %v2210
  %v2212 = vpop.f32.mrf.mxu0
  %v2213 = vadd.f32 %v1884, %v2212
  %2214 = vmatmul.bf16.gmra.mxu0 %v1124
  %v2215 = vpop.f32.mrf.mxu0
  %v2216 = vadd.f32 %v1887, %v2215
  %v2217 = vpop.f32.mrf.mxu0
  %v2218 = vadd.f32 %v1889, %v2217
  %2219 = vmatmul.bf16.gmra.mxu0 %v1127
  %v2220 = vpop.f32.mrf.mxu0
  %v2221 = vadd.f32 %v1892, %v2220
  %v2222 = vpop.f32.mrf.mxu0
  %v2223 = vadd.f32 %v1894, %v2222
  %2224 = vmatmul.bf16.gmra.mxu0 %v1130
  %v2225 = vpop.f32.mrf.mxu0
  %v2226 = vadd.f32 %v1897, %v2225
  %v2227 = vpop.f32.mrf.mxu0
  %v2228 = vadd.f32 %v1899, %v2227
  %2229 = vmatmul.bf16.gmra.mxu0 %v1133
  %v2230 = vpop.f32.mrf.mxu0
  %v2231 = vadd.f32 %v1902, %v2230
  %v2232 = vpop.f32.mrf.mxu0
  %v2233 = vadd.f32 %v1904, %v2232
  %2234 = vmatmul.bf16.gmra.mxu0 %v1136
  %v2235 = vpop.f32.mrf.mxu0
  %v2236 = vadd.f32 %v1907, %v2235
  %v2237 = vpop.f32.mrf.mxu0
  %v2238 = vadd.f32 %v1909, %v2237
  %2239 = vmatmul.bf16.gmra.mxu0 %v1139
  %v2240 = vpop.f32.mrf.mxu0
  %v2241 = vadd.f32 %v1912, %v2240
  %v2242 = vpop.f32.mrf.mxu0
  %v2243 = vadd.f32 %v1914, %v2242
  %2244 = vmatmul.bf16.gmra.mxu0 %v1142
  %v2245 = vpop.f32.mrf.mxu0
  %v2246 = vadd.f32 %v1917, %v2245
  %v2247 = vpop.f32.mrf.mxu0
  %v2248 = vadd.f32 %v1919, %v2247
  %2249 = vdwg.mxu0
  %2250 = vmatpush.bf16.msra.mxu0 0
  %2251 = vmatpush.bf16.msra.mxu0 0
  %2252 = vmatpush.bf16.msra.mxu0 0
  %2253 = vmatpush.bf16.msra.mxu0 %v1590
  %2254 = vmatpush.bf16.msra.mxu0 %v1373
  %2255 = vmatpush.bf16.msra.mxu0 %v1372
  %2256 = vmatpush.bf16.msra.mxu0 %v1371
  %2257 = vmatpush.bf16.msra.mxu0 %v1370
  %2258 = vmatmul.bf16.gmra.mxu0 %v1397
  %v2259 = vpop.f32.mrf.mxu0
  %v2260 = vadd.f32 %v1931, %v2259
  %v2261 = vpop.f32.mrf.mxu0
  %v2262 = vadd.f32 %v1933, %v2261
  %2263 = vmatmul.bf16.gmra.mxu0 %v1400
  %v2264 = vpop.f32.mrf.mxu0
  %v2265 = vadd.f32 %v1936, %v2264
  %v2266 = vpop.f32.mrf.mxu0
  %v2267 = vadd.f32 %v1938, %v2266
  %2268 = vmatmul.bf16.gmra.mxu0 %v1403
  %v2269 = vpop.f32.mrf.mxu0
  %v2270 = vadd.f32 %v1941, %v2269
  %v2271 = vpop.f32.mrf.mxu0
  %v2272 = vadd.f32 %v1943, %v2271
  %2273 = vmatmul.bf16.gmra.mxu0 %v1406
  %v2274 = vpop.f32.mrf.mxu0
  %v2275 = vadd.f32 %v1946, %v2274
  %v2276 = vpop.f32.mrf.mxu0
  %v2277 = vadd.f32 %v1948, %v2276
  %2278 = vmatmul.bf16.gmra.mxu0 %v1409
  %v2279 = vpop.f32.mrf.mxu0
  %v2280 = vadd.f32 %v1951, %v2279
  %v2281 = vpop.f32.mrf.mxu0
  %v2282 = vadd.f32 %v1953, %v2281
  %2283 = vmatmul.bf16.gmra.mxu0 %v1412
  %v2284 = vpop.f32.mrf.mxu0
  %v2285 = vadd.f32 %v1956, %v2284
  %v2286 = vpop.f32.mrf.mxu0
  %v2287 = vadd.f32 %v1958, %v2286
  %2288 = vmatmul.bf16.gmra.mxu0 %v1415
  %v2289 = vpop.f32.mrf.mxu0
  %v2290 = vadd.f32 %v1961, %v2289
  %v2291 = vpop.f32.mrf.mxu0
  %v2292 = vadd.f32 %v1963, %v2291
  %2293 = vmatmul.bf16.gmra.mxu0 %v1418
  %v2294 = vpop.f32.mrf.mxu0
  %v2295 = vadd.f32 %v1966, %v2294
  %v2296 = vpop.f32.mrf.mxu0
  %v2297 = vadd.f32 %v1968, %v2296
  %2298 = vmatmul.bf16.gmra.mxu0 %v1421
  %v2299 = vpop.f32.mrf.mxu0
  %v2300 = vadd.f32 %v1971, %v2299
  %v2301 = vpop.f32.mrf.mxu0
  %v2302 = vadd.f32 %v1973, %v2301
  %2303 = vmatmul.bf16.gmra.mxu0 %v1424
  %v2304 = vpop.f32.mrf.mxu0
  %v2305 = vadd.f32 %v1976, %v2304
  %v2306 = vpop.f32.mrf.mxu0
  %v2307 = vadd.f32 %v1978, %v2306
  %2308 = vmatmul.bf16.gmra.mxu0 %v1427
  %v2309 = vpop.f32.mrf.mxu0
  %v2310 = vadd.f32 %v1981, %v2309
  %v2311 = vpop.f32.mrf.mxu0
  %v2312 = vadd.f32 %v1983, %v2311
  %2313 = vmatmul.bf16.gmra.mxu0 %v1430
  %v2314 = vpop.f32.mrf.mxu0
  %v2315 = vadd.f32 %v1986, %v2314
  %v2316 = vpop.f32.mrf.mxu0
  %v2317 = vadd.f32 %v1988, %v2316
  %2318 = vmatmul.bf16.gmra.mxu0 %v1433
  %v2319 = vpop.f32.mrf.mxu0
  %v2320 = vadd.f32 %v1991, %v2319
  %v2321 = vpop.f32.mrf.mxu0
  %v2322 = vadd.f32 %v1993, %v2321
  %2323 = vmatmul.bf16.gmra.mxu0 %v1436
  %v2324 = vpop.f32.mrf.mxu0
  %v2325 = vadd.f32 %v1996, %v2324
  %v2326 = vpop.f32.mrf.mxu0
  %v2327 = vadd.f32 %v1998, %v2326
  %2328 = vmatmul.bf16.gmra.mxu0 %v1439
  %v2329 = vpop.f32.mrf.mxu0
  %v2330 = vadd.f32 %v2001, %v2329
  %v2331 = vpop.f32.mrf.mxu0
  %v2332 = vadd.f32 %v2003, %v2331
  %2333 = vmatmul.bf16.gmra.mxu0 %v1442
  %v2334 = vpop.f32.mrf.mxu0
  %v2335 = vadd.f32 %v2006, %v2334
  %v2336 = vpop.f32.mrf.mxu0
  %v2337 = vadd.f32 %v2008, %v2336
  %2338 = vmatmul.bf16.gmra.mxu0 %v1445
  %v2339 = vpop.f32.mrf.mxu0
  %v2340 = vadd.f32 %v2011, %v2339
  %v2341 = vpop.f32.mrf.mxu0
  %v2342 = vadd.f32 %v2013, %v2341
  %2343 = vmatmul.bf16.gmra.mxu0 %v1448
  %v2344 = vpop.f32.mrf.mxu0
  %v2345 = vadd.f32 %v2016, %v2344
  %v2346 = vpop.f32.mrf.mxu0
  %v2347 = vadd.f32 %v2018, %v2346
  %2348 = vmatmul.bf16.gmra.mxu0 %v1451
  %v2349 = vpop.f32.mrf.mxu0
  %v2350 = vadd.f32 %v2021, %v2349
  %v2351 = vpop.f32.mrf.mxu0
  %v2352 = vadd.f32 %v2023, %v2351
  %2353 = vmatmul.bf16.gmra.mxu0 %v1454
  %v2354 = vpop.f32.mrf.mxu0
  %v2355 = vadd.f32 %v2026, %v2354
  %v2356 = vpop.f32.mrf.mxu0
  %v2357 = vadd.f32 %v2028, %v2356
  %2358 = vmatmul.bf16.gmra.mxu0 %v1457
  %v2359 = vpop.f32.mrf.mxu0
  %v2360 = vadd.f32 %v2031, %v2359
  %v2361 = vpop.f32.mrf.mxu0
  %v2362 = vadd.f32 %v2033, %v2361
  %2363 = vmatmul.bf16.gmra.mxu0 %v1460
  %v2364 = vpop.f32.mrf.mxu0
  %v2365 = vadd.f32 %v2036, %v2364
  %v2366 = vpop.f32.mrf.mxu0
  %v2367 = vadd.f32 %v2038, %v2366
  %2368 = vmatmul.bf16.gmra.mxu0 %v1463
  %v2369 = vpop.f32.mrf.mxu0
  %v2370 = vadd.f32 %v2041, %v2369
  %v2371 = vpop.f32.mrf.mxu0
  %v2372 = vadd.f32 %v2043, %v2371
  %2373 = vmatmul.bf16.gmra.mxu0 %v1466
  %v2374 = vpop.f32.mrf.mxu0
  %v2375 = vadd.f32 %v2046, %v2374
  %v2376 = vpop.f32.mrf.mxu0
  %v2377 = vadd.f32 %v2048, %v2376
  %2378 = vmatmul.bf16.gmra.mxu0 %v1469
  %v2379 = vpop.f32.mrf.mxu0
  %v2380 = vadd.f32 %v2051, %v2379
  %v2381 = vpop.f32.mrf.mxu0
  %v2382 = vadd.f32 %v2053, %v2381
  %2383 = vmatmul.bf16.gmra.mxu0 %v1472
  %v2384 = vpop.f32.mrf.mxu0
  %v2385 = vadd.f32 %v2056, %v2384
  %v2386 = vpop.f32.mrf.mxu0
  %v2387 = vadd.f32 %v2058, %v2386
  %2388 = vmatmul.bf16.gmra.mxu0 %v1475
  %v2389 = vpop.f32.mrf.mxu0
  %v2390 = vadd.f32 %v2061, %v2389
  %v2391 = vpop.f32.mrf.mxu0
  %v2392 = vadd.f32 %v2063, %v2391
  %2393 = vmatmul.bf16.gmra.mxu0 %v1478
  %v2394 = vpop.f32.mrf.mxu0
  %v2395 = vadd.f32 %v2066, %v2394
  %v2396 = vpop.f32.mrf.mxu0
  %v2397 = vadd.f32 %v2068, %v2396
  %2398 = vmatmul.bf16.gmra.mxu0 %v1481
  %v2399 = vpop.f32.mrf.mxu0
  %v2400 = vadd.f32 %v2071, %v2399
  %v2401 = vpop.f32.mrf.mxu0
  %v2402 = vadd.f32 %v2073, %v2401
  %2403 = vmatmul.bf16.gmra.mxu0 %v1484
  %v2404 = vpop.f32.mrf.mxu0
  %v2405 = vadd.f32 %v2076, %v2404
  %v2406 = vpop.f32.mrf.mxu0
  %v2407 = vadd.f32 %v2078, %v2406
  %2408 = vmatmul.bf16.gmra.mxu0 %v1487
  %v2409 = vpop.f32.mrf.mxu0
  %v2410 = vadd.f32 %v2081, %v2409
  %v2411 = vpop.f32.mrf.mxu0
  %v2412 = vadd.f32 %v2083, %v2411
  %2413 = vmatmul.bf16.gmra.mxu0 %v1490
  %v2414 = vpop.f32.mrf.mxu0
  %v2415 = vadd.f32 %v2086, %v2414
  %v2416 = vpop.f32.mrf.mxu0
  %v2417 = vadd.f32 %v2088, %v2416
  %2418 = vmatmul.bf16.gmra.mxu0 %v1493
  %v2419 = vpop.f32.mrf.mxu0
  %v2420 = vadd.f32 %v2091, %v2419
  %v2421 = vpop.f32.mrf.mxu0
  %v2422 = vadd.f32 %v2093, %v2421
  %2423 = vmatmul.bf16.gmra.mxu0 %v1496
  %v2424 = vpop.f32.mrf.mxu0
  %v2425 = vadd.f32 %v2096, %v2424
  %v2426 = vpop.f32.mrf.mxu0
  %v2427 = vadd.f32 %v2098, %v2426
  %2428 = vmatmul.bf16.gmra.mxu0 %v1499
  %v2429 = vpop.f32.mrf.mxu0
  %v2430 = vadd.f32 %v2101, %v2429
  %v2431 = vpop.f32.mrf.mxu0
  %v2432 = vadd.f32 %v2103, %v2431
  %2433 = vmatmul.bf16.gmra.mxu0 %v1502
  %v2434 = vpop.f32.mrf.mxu0
  %v2435 = vadd.f32 %v2106, %v2434
  %v2436 = vpop.f32.mrf.mxu0
  %v2437 = vadd.f32 %v2108, %v2436
  %2438 = vmatmul.bf16.gmra.mxu0 %v1505
  %v2439 = vpop.f32.mrf.mxu0
  %v2440 = vadd.f32 %v2111, %v2439
  %v2441 = vpop.f32.mrf.mxu0
  %v2442 = vadd.f32 %v2113, %v2441
  %2443 = vmatmul.bf16.gmra.mxu0 %v1508
  %v2444 = vpop.f32.mrf.mxu0
  %v2445 = vadd.f32 %v2116, %v2444
  %v2446 = vpop.f32.mrf.mxu0
  %v2447 = vadd.f32 %v2118, %v2446
  %2448 = vmatmul.bf16.gmra.mxu0 %v1511
  %v2449 = vpop.f32.mrf.mxu0
  %v2450 = vadd.f32 %v2121, %v2449
  %v2451 = vpop.f32.mrf.mxu0
  %v2452 = vadd.f32 %v2123, %v2451
  %2453 = vmatmul.bf16.gmra.mxu0 %v1514
  %v2454 = vpop.f32.mrf.mxu0
  %v2455 = vadd.f32 %v2126, %v2454
  %v2456 = vpop.f32.mrf.mxu0
  %v2457 = vadd.f32 %v2128, %v2456
  %2458 = vmatmul.bf16.gmra.mxu0 %v1517
  %v2459 = vpop.f32.mrf.mxu0
  %v2460 = vadd.f32 %v2131, %v2459
  %v2461 = vpop.f32.mrf.mxu0
  %v2462 = vadd.f32 %v2133, %v2461
  %2463 = vmatmul.bf16.gmra.mxu0 %v1520
  %v2464 = vpop.f32.mrf.mxu0
  %v2465 = vadd.f32 %v2136, %v2464
  %v2466 = vpop.f32.mrf.mxu0
  %v2467 = vadd.f32 %v2138, %v2466
  %2468 = vmatmul.bf16.gmra.mxu0 %v1523
  %v2469 = vpop.f32.mrf.mxu0
  %v2470 = vadd.f32 %v2141, %v2469
  %v2471 = vpop.f32.mrf.mxu0
  %v2472 = vadd.f32 %v2143, %v2471
  %2473 = vmatmul.bf16.gmra.mxu0 %v1526
  %v2474 = vpop.f32.mrf.mxu0
  %v2475 = vadd.f32 %v2146, %v2474
  %v2476 = vpop.f32.mrf.mxu0
  %v2477 = vadd.f32 %v2148, %v2476
  %2478 = vmatmul.bf16.gmra.mxu0 %v1529
  %v2479 = vpop.f32.mrf.mxu0
  %v2480 = vadd.f32 %v2151, %v2479
  %v2481 = vpop.f32.mrf.mxu0
  %v2482 = vadd.f32 %v2153, %v2481
  %2483 = vmatmul.bf16.gmra.mxu0 %v1532
  %v2484 = vpop.f32.mrf.mxu0
  %v2485 = vadd.f32 %v2156, %v2484
  %v2486 = vpop.f32.mrf.mxu0
  %v2487 = vadd.f32 %v2158, %v2486
  %2488 = vmatmul.bf16.gmra.mxu0 %v1535
  %v2489 = vpop.f32.mrf.mxu0
  %v2490 = vadd.f32 %v2161, %v2489
  %v2491 = vpop.f32.mrf.mxu0
  %v2492 = vadd.f32 %v2163, %v2491
  %2493 = vmatmul.bf16.gmra.mxu0 %v1538
  %v2494 = vpop.f32.mrf.mxu0
  %v2495 = vadd.f32 %v2166, %v2494
  %v2496 = vpop.f32.mrf.mxu0
  %v2497 = vadd.f32 %v2168, %v2496
  %2498 = vmatmul.bf16.gmra.mxu0 %v1541
  %v2499 = vpop.f32.mrf.mxu0
  %v2500 = vadd.f32 %v2171, %v2499
  %v2501 = vpop.f32.mrf.mxu0
  %v2502 = vadd.f32 %v2173, %v2501
  %2503 = vmatmul.bf16.gmra.mxu0 %v1544
  %v2504 = vpop.f32.mrf.mxu0
  %v2505 = vadd.f32 %v2176, %v2504
  %v2506 = vpop.f32.mrf.mxu0
  %v2507 = vadd.f32 %v2178, %v2506
  %2508 = vmatmul.bf16.gmra.mxu0 %v1547
  %v2509 = vpop.f32.mrf.mxu0
  %v2510 = vadd.f32 %v2181, %v2509
  %v2511 = vpop.f32.mrf.mxu0
  %v2512 = vadd.f32 %v2183, %v2511
  %2513 = vmatmul.bf16.gmra.mxu0 %v1550
  %v2514 = vpop.f32.mrf.mxu0
  %v2515 = vadd.f32 %v2186, %v2514
  %v2516 = vpop.f32.mrf.mxu0
  %v2517 = vadd.f32 %v2188, %v2516
  %2518 = vmatmul.bf16.gmra.mxu0 %v1553
  %v2519 = vpop.f32.mrf.mxu0
  %v2520 = vadd.f32 %v2191, %v2519
  %v2521 = vpop.f32.mrf.mxu0
  %v2522 = vadd.f32 %v2193, %v2521
  %2523 = vmatmul.bf16.gmra.mxu0 %v1556
  %v2524 = vpop.f32.mrf.mxu0
  %v2525 = vadd.f32 %v2196, %v2524
  %v2526 = vpop.f32.mrf.mxu0
  %v2527 = vadd.f32 %v2198, %v2526
  %2528 = vmatmul.bf16.gmra.mxu0 %v1559
  %v2529 = vpop.f32.mrf.mxu0
  %v2530 = vadd.f32 %v2201, %v2529
  %v2531 = vpop.f32.mrf.mxu0
  %v2532 = vadd.f32 %v2203, %v2531
  %2533 = vmatmul.bf16.gmra.mxu0 %v1562
  %v2534 = vpop.f32.mrf.mxu0
  %v2535 = vadd.f32 %v2206, %v2534
  %v2536 = vpop.f32.mrf.mxu0
  %v2537 = vadd.f32 %v2208, %v2536
  %2538 = vmatmul.bf16.gmra.mxu0 %v1565
  %v2539 = vpop.f32.mrf.mxu0
  %v2540 = vadd.f32 %v2211, %v2539
  %v2541 = vpop.f32.mrf.mxu0
  %v2542 = vadd.f32 %v2213, %v2541
  %2543 = vmatmul.bf16.gmra.mxu0 %v1568
  %v2544 = vpop.f32.mrf.mxu0
  %v2545 = vadd.f32 %v2216, %v2544
  %v2546 = vpop.f32.mrf.mxu0
  %v2547 = vadd.f32 %v2218, %v2546
  %2548 = vmatmul.bf16.gmra.mxu0 %v1571
  %v2549 = vpop.f32.mrf.mxu0
  %v2550 = vadd.f32 %v2221, %v2549
  %v2551 = vpop.f32.mrf.mxu0
  %v2552 = vadd.f32 %v2223, %v2551
  %2553 = vmatmul.bf16.gmra.mxu0 %v1574
  %v2554 = vpop.f32.mrf.mxu0
  %v2555 = vadd.f32 %v2226, %v2554
  %v2556 = vpop.f32.mrf.mxu0
  %v2557 = vadd.f32 %v2228, %v2556
  %2558 = vmatmul.bf16.gmra.mxu0 %v1577
  %v2559 = vpop.f32.mrf.mxu0
  %v2560 = vadd.f32 %v2231, %v2559
  %v2561 = vpop.f32.mrf.mxu0
  %v2562 = vadd.f32 %v2233, %v2561
  %2563 = vmatmul.bf16.gmra.mxu0 %v1580
  %v2564 = vpop.f32.mrf.mxu0
  %v2565 = vadd.f32 %v2236, %v2564
  %v2566 = vpop.f32.mrf.mxu0
  %v2567 = vadd.f32 %v2238, %v2566
  %2568 = vmatmul.bf16.gmra.mxu0 %v1583
  %v2569 = vpop.f32.mrf.mxu0
  %v2570 = vadd.f32 %v2241, %v2569
  %v2571 = vpop.f32.mrf.mxu0
  %v2572 = vadd.f32 %v2243, %v2571
  %2573 = vmatmul.bf16.gmra.mxu0 %v1586
  %v2574 = vpop.f32.mrf.mxu0
  %v2575 = vadd.f32 %v2246, %v2574
  %v2576 = vpop.f32.mrf.mxu0
  %v2577 = vadd.f32 %v2248, %v2576
  %2578 = vdwg.mxu0
  %v2579 = vpack.c.bf16 %v2260, %v2260
  %v2580 = vpack.c.bf16 %v2262, %v2262
  %v2581 = vpack.c.bf16 %v2265, %v2265
  %v2582 = vpack.c.bf16 %v2267, %v2267
  %v2583 = vpack.c.bf16 %v2270, %v2270
  %v2584 = vpack.c.bf16 %v2272, %v2272
  %v2585 = vpack.c.bf16 %v2275, %v2275
  %v2586 = vpack.c.bf16 %v2277, %v2277
  %v2587 = vpack.c.bf16 %v2280, %v2280
  %v2588 = vpack.c.bf16 %v2282, %v2282
  %v2589 = vpack.c.bf16 %v2285, %v2285
  %v2590 = vpack.c.bf16 %v2287, %v2287
  %v2591 = vpack.c.bf16 %v2290, %v2290
  %v2592 = vpack.c.bf16 %v2292, %v2292
  %v2593 = vpack.c.bf16 %v2295, %v2295
  %v2594 = vpack.c.bf16 %v2297, %v2297
  %v2595 = vpack.c.bf16 %v2300, %v2300
  %v2596 = vpack.c.bf16 %v2302, %v2302
  %v2597 = vpack.c.bf16 %v2305, %v2305
  %v2598 = vpack.c.bf16 %v2307, %v2307
  %v2599 = vpack.c.bf16 %v2310, %v2310
  %v2600 = vpack.c.bf16 %v2312, %v2312
  %v2601 = vpack.c.bf16 %v2315, %v2315
  %v2602 = vpack.c.bf16 %v2317, %v2317
  %v2603 = vpack.c.bf16 %v2320, %v2320
  %v2604 = vpack.c.bf16 %v2322, %v2322
  %v2605 = vpack.c.bf16 %v2325, %v2325
  %v2606 = vpack.c.bf16 %v2327, %v2327
  %v2607 = vpack.c.bf16 %v2330, %v2330
  %v2608 = vpack.c.bf16 %v2332, %v2332
  %v2609 = vpack.c.bf16 %v2335, %v2335
  %v2610 = vpack.c.bf16 %v2337, %v2337
  %v2611 = vpack.c.bf16 %v2340, %v2340
  %v2612 = vpack.c.bf16 %v2342, %v2342
  %v2613 = vpack.c.bf16 %v2345, %v2345
  %v2614 = vpack.c.bf16 %v2347, %v2347
  %v2615 = vpack.c.bf16 %v2350, %v2350
  %v2616 = vpack.c.bf16 %v2352, %v2352
  %v2617 = vpack.c.bf16 %v2355, %v2355
  %v2618 = vpack.c.bf16 %v2357, %v2357
  %v2619 = vpack.c.bf16 %v2360, %v2360
  %v2620 = vpack.c.bf16 %v2362, %v2362
  %v2621 = vpack.c.bf16 %v2365, %v2365
  %v2622 = vpack.c.bf16 %v2367, %v2367
  %v2623 = vpack.c.bf16 %v2370, %v2370
  %v2624 = vpack.c.bf16 %v2372, %v2372
  %v2625 = vpack.c.bf16 %v2375, %v2375
  %v2626 = vpack.c.bf16 %v2377, %v2377
  %v2627 = vpack.c.bf16 %v2380, %v2380
  %v2628 = vpack.c.bf16 %v2382, %v2382
  %v2629 = vpack.c.bf16 %v2385, %v2385
  %v2630 = vpack.c.bf16 %v2387, %v2387
  %v2631 = vpack.c.bf16 %v2390, %v2390
  %v2632 = vpack.c.bf16 %v2392, %v2392
  %v2633 = vpack.c.bf16 %v2395, %v2395
  %v2634 = vpack.c.bf16 %v2397, %v2397
  %v2635 = vpack.c.bf16 %v2400, %v2400
  %v2636 = vpack.c.bf16 %v2402, %v2402
  %v2637 = vpack.c.bf16 %v2405, %v2405
  %v2638 = vpack.c.bf16 %v2407, %v2407
  %v2639 = vpack.c.bf16 %v2410, %v2410
  %v2640 = vpack.c.bf16 %v2412, %v2412
  %v2641 = vpack.c.bf16 %v2415, %v2415
  %v2642 = vpack.c.bf16 %v2417, %v2417
  %v2643 = vpack.c.bf16 %v2420, %v2420
  %v2644 = vpack.c.bf16 %v2422, %v2422
  %v2645 = vpack.c.bf16 %v2425, %v2425
  %v2646 = vpack.c.bf16 %v2427, %v2427
  %v2647 = vpack.c.bf16 %v2430, %v2430
  %v2648 = vpack.c.bf16 %v2432, %v2432
  %v2649 = vpack.c.bf16 %v2435, %v2435
  %v2650 = vpack.c.bf16 %v2437, %v2437
  %v2651 = vpack.c.bf16 %v2440, %v2440
  %v2652 = vpack.c.bf16 %v2442, %v2442
  %v2653 = vpack.c.bf16 %v2445, %v2445
  %v2654 = vpack.c.bf16 %v2447, %v2447
  %v2655 = vpack.c.bf16 %v2450, %v2450
  %v2656 = vpack.c.bf16 %v2452, %v2452
  %v2657 = vpack.c.bf16 %v2455, %v2455
  %v2658 = vpack.c.bf16 %v2457, %v2457
  %v2659 = vpack.c.bf16 %v2460, %v2460
  %v2660 = vpack.c.bf16 %v2462, %v2462
  %v2661 = vpack.c.bf16 %v2465, %v2465
  %v2662 = vpack.c.bf16 %v2467, %v2467
  %v2663 = vpack.c.bf16 %v2470, %v2470
  %v2664 = vpack.c.bf16 %v2472, %v2472
  %v2665 = vpack.c.bf16 %v2475, %v2475
  %v2666 = vpack.c.bf16 %v2477, %v2477
  %v2667 = vpack.c.bf16 %v2480, %v2480
  %v2668 = vpack.c.bf16 %v2482, %v2482
  %v2669 = vpack.c.bf16 %v2485, %v2485
  %v2670 = vpack.c.bf16 %v2487, %v2487
  %v2671 = vpack.c.bf16 %v2490, %v2490
  %v2672 = vpack.c.bf16 %v2492, %v2492
  %v2673 = vpack.c.bf16 %v2495, %v2495
  %v2674 = vpack.c.bf16 %v2497, %v2497
  %v2675 = vpack.c.bf16 %v2500, %v2500
  %v2676 = vpack.c.bf16 %v2502, %v2502
  %v2677 = vpack.c.bf16 %v2505, %v2505
  %v2678 = vpack.c.bf16 %v2507, %v2507
  %v2679 = vpack.c.bf16 %v2510, %v2510
  %v2680 = vpack.c.bf16 %v2512, %v2512
  %v2681 = vpack.c.bf16 %v2515, %v2515
  %v2682 = vpack.c.bf16 %v2517, %v2517
  %v2683 = vpack.c.bf16 %v2520, %v2520
  %v2684 = vpack.c.bf16 %v2522, %v2522
  %v2685 = vpack.c.bf16 %v2525, %v2525
  %v2686 = vpack.c.bf16 %v2527, %v2527
  %v2687 = vpack.c.bf16 %v2530, %v2530
  %v2688 = vpack.c.bf16 %v2532, %v2532
  %v2689 = vpack.c.bf16 %v2535, %v2535
  %v2690 = vpack.c.bf16 %v2537, %v2537
  %v2691 = vpack.c.bf16 %v2540, %v2540
  %v2692 = vpack.c.bf16 %v2542, %v2542
  %v2693 = vpack.c.bf16 %v2545, %v2545
  %v2694 = vpack.c.bf16 %v2547, %v2547
  %v2695 = vpack.c.bf16 %v2550, %v2550
  %v2696 = vpack.c.bf16 %v2552, %v2552
  %v2697 = vpack.c.bf16 %v2555, %v2555
  %v2698 = vpack.c.bf16 %v2557, %v2557
  %v2699 = vpack.c.bf16 %v2560, %v2560
  %v2700 = vpack.c.bf16 %v2562, %v2562
  %v2701 = vpack.c.bf16 %v2565, %v2565
  %v2702 = vpack.c.bf16 %v2567, %v2567
  %v2703 = vpack.c.bf16 %v2570, %v2570
  %v2704 = vpack.c.bf16 %v2572, %v2572
  %v2705 = vpack.c.bf16 %v2575, %v2575
  %v2706 = vpack.c.bf16 %v2577, %v2577
  %vm2707 = vcmask 27648
  %2708 = vst.msk [vmem:[%s2] sm:$0xf] %vm2707, %v2579
  %2709 = vst.msk [vmem:[%s2 + $0x4] sm:$0xf] %vm2707, %v2580
  %2710 = vst.msk [vmem:[%s2 + $0x8] sm:$0xf] %vm2707, %v2581
  %2711 = vst.msk [vmem:[%s2 + $0xc] sm:$0xf] %vm2707, %v2582
  %2712 = vst.msk [vmem:[%s2 + $0x10] sm:$0xf] %vm2707, %v2583
  %2713 = vst.msk [vmem:[%s2 + $0x14] sm:$0xf] %vm2707, %v2584
  %2714 = vst.msk [vmem:[%s2 + $0x18] sm:$0xf] %vm2707, %v2585
  %2715 = vst.msk [vmem:[%s2 + $0x1c] sm:$0xf] %vm2707, %v2586
  %2716 = vst.msk [vmem:[%s2 + $0x20] sm:$0xf] %vm2707, %v2587
  %2717 = vst.msk [vmem:[%s2 + $0x24] sm:$0xf] %vm2707, %v2588
  %2718 = vst.msk [vmem:[%s2 + $0x28] sm:$0xf] %vm2707, %v2589
  %2719 = vst.msk [vmem:[%s2 + $0x2c] sm:$0xf] %vm2707, %v2590
  %2720 = vst.msk [vmem:[%s2 + $0x30] sm:$0xf] %vm2707, %v2591
  %2721 = vst.msk [vmem:[%s2 + $0x34] sm:$0xf] %vm2707, %v2592
  %2722 = vst.msk [vmem:[%s2 + $0x38] sm:$0xf] %vm2707, %v2593
  %2723 = vst.msk [vmem:[%s2 + $0x3c] sm:$0xf] %vm2707, %v2594
  %2724 = vst.msk [vmem:[%s2 + $0x40] sm:$0xf] %vm2707, %v2595
  %2725 = vst.msk [vmem:[%s2 + $0x44] sm:$0xf] %vm2707, %v2596
  %2726 = vst.msk [vmem:[%s2 + $0x48] sm:$0xf] %vm2707, %v2597
  %2727 = vst.msk [vmem:[%s2 + $0x4c] sm:$0xf] %vm2707, %v2598
  %2728 = vst.msk [vmem:[%s2 + $0x50] sm:$0xf] %vm2707, %v2599
  %2729 = vst.msk [vmem:[%s2 + $0x54] sm:$0xf] %vm2707, %v2600
  %2730 = vst.msk [vmem:[%s2 + $0x58] sm:$0xf] %vm2707, %v2601
  %2731 = vst.msk [vmem:[%s2 + $0x5c] sm:$0xf] %vm2707, %v2602
  %2732 = vst.msk [vmem:[%s2 + $0x60] sm:$0xf] %vm2707, %v2603
  %2733 = vst.msk [vmem:[%s2 + $0x64] sm:$0xf] %vm2707, %v2604
  %2734 = vst.msk [vmem:[%s2 + $0x68] sm:$0xf] %vm2707, %v2605
  %2735 = vst.msk [vmem:[%s2 + $0x6c] sm:$0xf] %vm2707, %v2606
  %2736 = vst.msk [vmem:[%s2 + $0x70] sm:$0xf] %vm2707, %v2607
  %2737 = vst.msk [vmem:[%s2 + $0x74] sm:$0xf] %vm2707, %v2608
  %2738 = vst.msk [vmem:[%s2 + $0x78] sm:$0xf] %vm2707, %v2609
  %2739 = vst.msk [vmem:[%s2 + $0x7c] sm:$0xf] %vm2707, %v2610
  %2740 = vst.msk [vmem:[%s2 + $0x80] sm:$0xf] %vm2707, %v2611
  %2741 = vst.msk [vmem:[%s2 + $0x84] sm:$0xf] %vm2707, %v2612
  %2742 = vst.msk [vmem:[%s2 + $0x88] sm:$0xf] %vm2707, %v2613
  %2743 = vst.msk [vmem:[%s2 + $0x8c] sm:$0xf] %vm2707, %v2614
  %2744 = vst.msk [vmem:[%s2 + $0x90] sm:$0xf] %vm2707, %v2615
  %2745 = vst.msk [vmem:[%s2 + $0x94] sm:$0xf] %vm2707, %v2616
  %2746 = vst.msk [vmem:[%s2 + $0x98] sm:$0xf] %vm2707, %v2617
  %2747 = vst.msk [vmem:[%s2 + $0x9c] sm:$0xf] %vm2707, %v2618
  %2748 = vst.msk [vmem:[%s2 + $0xa0] sm:$0xf] %vm2707, %v2619
  %2749 = vst.msk [vmem:[%s2 + $0xa4] sm:$0xf] %vm2707, %v2620
  %2750 = vst.msk [vmem:[%s2 + $0xa8] sm:$0xf] %vm2707, %v2621
  %2751 = vst.msk [vmem:[%s2 + $0xac] sm:$0xf] %vm2707, %v2622
  %2752 = vst.msk [vmem:[%s2 + $0xb0] sm:$0xf] %vm2707, %v2623
  %2753 = vst.msk [vmem:[%s2 + $0xb4] sm:$0xf] %vm2707, %v2624
  %2754 = vst.msk [vmem:[%s2 + $0xb8] sm:$0xf] %vm2707, %v2625
  %2755 = vst.msk [vmem:[%s2 + $0xbc] sm:$0xf] %vm2707, %v2626
  %2756 = vst.msk [vmem:[%s2 + $0xc0] sm:$0xf] %vm2707, %v2627
  %2757 = vst.msk [vmem:[%s2 + $0xc4] sm:$0xf] %vm2707, %v2628
  %2758 = vst.msk [vmem:[%s2 + $0xc8] sm:$0xf] %vm2707, %v2629
  %2759 = vst.msk [vmem:[%s2 + $0xcc] sm:$0xf] %vm2707, %v2630
  %2760 = vst.msk [vmem:[%s2 + $0xd0] sm:$0xf] %vm2707, %v2631
  %2761 = vst.msk [vmem:[%s2 + $0xd4] sm:$0xf] %vm2707, %v2632
  %2762 = vst.msk [vmem:[%s2 + $0xd8] sm:$0xf] %vm2707, %v2633
  %2763 = vst.msk [vmem:[%s2 + $0xdc] sm:$0xf] %vm2707, %v2634
  %2764 = vst.msk [vmem:[%s2 + $0xe0] sm:$0xf] %vm2707, %v2635
  %2765 = vst.msk [vmem:[%s2 + $0xe4] sm:$0xf] %vm2707, %v2636
  %2766 = vst.msk [vmem:[%s2 + $0xe8] sm:$0xf] %vm2707, %v2637
  %2767 = vst.msk [vmem:[%s2 + $0xec] sm:$0xf] %vm2707, %v2638
  %2768 = vst.msk [vmem:[%s2 + $0xf0] sm:$0xf] %vm2707, %v2639
  %2769 = vst.msk [vmem:[%s2 + $0xf4] sm:$0xf] %vm2707, %v2640
  %2770 = vst.msk [vmem:[%s2 + $0xf8] sm:$0xf] %vm2707, %v2641
  %2771 = vst.msk [vmem:[%s2 + $0xfc] sm:$0xf] %vm2707, %v2642
  %2772 = vst.msk [vmem:[%s2 + $0x100] sm:$0xf] %vm2707, %v2643
  %2773 = vst.msk [vmem:[%s2 + $0x104] sm:$0xf] %vm2707, %v2644
  %2774 = vst.msk [vmem:[%s2 + $0x108] sm:$0xf] %vm2707, %v2645
  %2775 = vst.msk [vmem:[%s2 + $0x10c] sm:$0xf] %vm2707, %v2646
  %2776 = vst.msk [vmem:[%s2 + $0x110] sm:$0xf] %vm2707, %v2647
  %2777 = vst.msk [vmem:[%s2 + $0x114] sm:$0xf] %vm2707, %v2648
  %2778 = vst.msk [vmem:[%s2 + $0x118] sm:$0xf] %vm2707, %v2649
  %2779 = vst.msk [vmem:[%s2 + $0x11c] sm:$0xf] %vm2707, %v2650
  %2780 = vst.msk [vmem:[%s2 + $0x120] sm:$0xf] %vm2707, %v2651
  %2781 = vst.msk [vmem:[%s2 + $0x124] sm:$0xf] %vm2707, %v2652
  %2782 = vst.msk [vmem:[%s2 + $0x128] sm:$0xf] %vm2707, %v2653
  %2783 = vst.msk [vmem:[%s2 + $0x12c] sm:$0xf] %vm2707, %v2654
  %2784 = vst.msk [vmem:[%s2 + $0x130] sm:$0xf] %vm2707, %v2655
  %2785 = vst.msk [vmem:[%s2 + $0x134] sm:$0xf] %vm2707, %v2656
  %2786 = vst.msk [vmem:[%s2 + $0x138] sm:$0xf] %vm2707, %v2657
  %2787 = vst.msk [vmem:[%s2 + $0x13c] sm:$0xf] %vm2707, %v2658
  %2788 = vst.msk [vmem:[%s2 + $0x140] sm:$0xf] %vm2707, %v2659
  %2789 = vst.msk [vmem:[%s2 + $0x144] sm:$0xf] %vm2707, %v2660
  %2790 = vst.msk [vmem:[%s2 + $0x148] sm:$0xf] %vm2707, %v2661
  %2791 = vst.msk [vmem:[%s2 + $0x14c] sm:$0xf] %vm2707, %v2662
  %2792 = vst.msk [vmem:[%s2 + $0x150] sm:$0xf] %vm2707, %v2663
  %2793 = vst.msk [vmem:[%s2 + $0x154] sm:$0xf] %vm2707, %v2664
  %2794 = vst.msk [vmem:[%s2 + $0x158] sm:$0xf] %vm2707, %v2665
  %2795 = vst.msk [vmem:[%s2 + $0x15c] sm:$0xf] %vm2707, %v2666
  %2796 = vst.msk [vmem:[%s2 + $0x160] sm:$0xf] %vm2707, %v2667
  %2797 = vst.msk [vmem:[%s2 + $0x164] sm:$0xf] %vm2707, %v2668
  %2798 = vst.msk [vmem:[%s2 + $0x168] sm:$0xf] %vm2707, %v2669
  %2799 = vst.msk [vmem:[%s2 + $0x16c] sm:$0xf] %vm2707, %v2670
  %2800 = vst.msk [vmem:[%s2 + $0x170] sm:$0xf] %vm2707, %v2671
  %2801 = vst.msk [vmem:[%s2 + $0x174] sm:$0xf] %vm2707, %v2672
  %2802 = vst.msk [vmem:[%s2 + $0x178] sm:$0xf] %vm2707, %v2673
  %2803 = vst.msk [vmem:[%s2 + $0x17c] sm:$0xf] %vm2707, %v2674
  %2804 = vst.msk [vmem:[%s2 + $0x180] sm:$0xf] %vm2707, %v2675
  %2805 = vst.msk [vmem:[%s2 + $0x184] sm:$0xf] %vm2707, %v2676
  %2806 = vst.msk [vmem:[%s2 + $0x188] sm:$0xf] %vm2707, %v2677
  %2807 = vst.msk [vmem:[%s2 + $0x18c] sm:$0xf] %vm2707, %v2678
  %2808 = vst.msk [vmem:[%s2 + $0x190] sm:$0xf] %vm2707, %v2679
  %2809 = vst.msk [vmem:[%s2 + $0x194] sm:$0xf] %vm2707, %v2680
  %2810 = vst.msk [vmem:[%s2 + $0x198] sm:$0xf] %vm2707, %v2681
  %2811 = vst.msk [vmem:[%s2 + $0x19c] sm:$0xf] %vm2707, %v2682
  %2812 = vst.msk [vmem:[%s2 + $0x1a0] sm:$0xf] %vm2707, %v2683
  %2813 = vst.msk [vmem:[%s2 + $0x1a4] sm:$0xf] %vm2707, %v2684
  %2814 = vst.msk [vmem:[%s2 + $0x1a8] sm:$0xf] %vm2707, %v2685
  %2815 = vst.msk [vmem:[%s2 + $0x1ac] sm:$0xf] %vm2707, %v2686
  %2816 = vst.msk [vmem:[%s2 + $0x1b0] sm:$0xf] %vm2707, %v2687
  %2817 = vst.msk [vmem:[%s2 + $0x1b4] sm:$0xf] %vm2707, %v2688
  %2818 = vst.msk [vmem:[%s2 + $0x1b8] sm:$0xf] %vm2707, %v2689
  %2819 = vst.msk [vmem:[%s2 + $0x1bc] sm:$0xf] %vm2707, %v2690
  %2820 = vst.msk [vmem:[%s2 + $0x1c0] sm:$0xf] %vm2707, %v2691
  %2821 = vst.msk [vmem:[%s2 + $0x1c4] sm:$0xf] %vm2707, %v2692
  %2822 = vst.msk [vmem:[%s2 + $0x1c8] sm:$0xf] %vm2707, %v2693
  %2823 = vst.msk [vmem:[%s2 + $0x1cc] sm:$0xf] %vm2707, %v2694
  %2824 = vst.msk [vmem:[%s2 + $0x1d0] sm:$0xf] %vm2707, %v2695
  %2825 = vst.msk [vmem:[%s2 + $0x1d4] sm:$0xf] %vm2707, %v2696
  %2826 = vst.msk [vmem:[%s2 + $0x1d8] sm:$0xf] %vm2707, %v2697
  %2827 = vst.msk [vmem:[%s2 + $0x1dc] sm:$0xf] %vm2707, %v2698
  %2828 = vst.msk [vmem:[%s2 + $0x1e0] sm:$0xf] %vm2707, %v2699
  %2829 = vst.msk [vmem:[%s2 + $0x1e4] sm:$0xf] %vm2707, %v2700
  %2830 = vst.msk [vmem:[%s2 + $0x1e8] sm:$0xf] %vm2707, %v2701
  %2831 = vst.msk [vmem:[%s2 + $0x1ec] sm:$0xf] %vm2707, %v2702
  %2832 = vst.msk [vmem:[%s2 + $0x1f0] sm:$0xf] %vm2707, %v2703
  %2833 = vst.msk [vmem:[%s2 + $0x1f4] sm:$0xf] %vm2707, %v2704
  %2834 = vst.msk [vmem:[%s2 + $0x1f8] sm:$0xf] %vm2707, %v2705
  %2835 = vst.msk [vmem:[%s2 + $0x1fc] sm:$0xf] %vm2707, %v2706
  %vm2836 = vcmask 31744
  %v2837 = vsel %vm2836, %v2260, 0.0
  %v2838 = vsel %vm2836, %v2262, 0.0
  %v2839 = vadd.f32 %v2837, %v2838
  %v2840 = vsel %vm2836, %v2265, 0.0
  %v2841 = vadd.f32 %v2839, %v2840
  %v2842 = vsel %vm2836, %v2267, 0.0
  %v2843 = vadd.f32 %v2841, %v2842
  %v2844 = vsel %vm2836, %v2270, 0.0
  %v2845 = vadd.f32 %v2843, %v2844
  %v2846 = vsel %vm2836, %v2272, 0.0
  %v2847 = vadd.f32 %v2845, %v2846
  %v2848 = vsel %vm2836, %v2275, 0.0
  %v2849 = vadd.f32 %v2847, %v2848
  %v2850 = vsel %vm2836, %v2277, 0.0
  %v2851 = vadd.f32 %v2849, %v2850
  %v2852 = vsel %vm2836, %v2280, 0.0
  %v2853 = vadd.f32 %v2851, %v2852
  %v2854 = vsel %vm2836, %v2282, 0.0
  %v2855 = vadd.f32 %v2853, %v2854
  %v2856 = vsel %vm2836, %v2285, 0.0
  %v2857 = vadd.f32 %v2855, %v2856
  %v2858 = vsel %vm2836, %v2287, 0.0
  %v2859 = vadd.f32 %v2857, %v2858
  %v2860 = vsel %vm2836, %v2290, 0.0
  %v2861 = vadd.f32 %v2859, %v2860
  %v2862 = vsel %vm2836, %v2292, 0.0
  %v2863 = vadd.f32 %v2861, %v2862
  %v2864 = vsel %vm2836, %v2295, 0.0
  %v2865 = vadd.f32 %v2863, %v2864
  %v2866 = vsel %vm2836, %v2297, 0.0
  %v2867 = vadd.f32 %v2865, %v2866
  %v2868 = vsel %vm2836, %v2300, 0.0
  %v2869 = vadd.f32 %v2867, %v2868
  %v2870 = vsel %vm2836, %v2302, 0.0
  %v2871 = vadd.f32 %v2869, %v2870
  %v2872 = vsel %vm2836, %v2305, 0.0
  %v2873 = vadd.f32 %v2871, %v2872
  %v2874 = vsel %vm2836, %v2307, 0.0
  %v2875 = vadd.f32 %v2873, %v2874
  %v2876 = vsel %vm2836, %v2310, 0.0
  %v2877 = vadd.f32 %v2875, %v2876
  %v2878 = vsel %vm2836, %v2312, 0.0
  %v2879 = vadd.f32 %v2877, %v2878
  %v2880 = vsel %vm2836, %v2315, 0.0
  %v2881 = vadd.f32 %v2879, %v2880
  %v2882 = vsel %vm2836, %v2317, 0.0
  %v2883 = vadd.f32 %v2881, %v2882
  %v2884 = vsel %vm2836, %v2320, 0.0
  %v2885 = vadd.f32 %v2883, %v2884
  %v2886 = vsel %vm2836, %v2322, 0.0
  %v2887 = vadd.f32 %v2885, %v2886
  %v2888 = vsel %vm2836, %v2325, 0.0
  %v2889 = vadd.f32 %v2887, %v2888
  %v2890 = vsel %vm2836, %v2327, 0.0
  %v2891 = vadd.f32 %v2889, %v2890
  %v2892 = vsel %vm2836, %v2330, 0.0
  %v2893 = vadd.f32 %v2891, %v2892
  %v2894 = vsel %vm2836, %v2332, 0.0
  %v2895 = vadd.f32 %v2893, %v2894
  %v2896 = vsel %vm2836, %v2335, 0.0
  %v2897 = vadd.f32 %v2895, %v2896
  %v2898 = vsel %vm2836, %v2337, 0.0
  %v2899 = vadd.f32 %v2897, %v2898
  %v2900 = vsel %vm2836, %v2340, 0.0
  %v2901 = vadd.f32 %v2899, %v2900
  %v2902 = vsel %vm2836, %v2342, 0.0
  %v2903 = vadd.f32 %v2901, %v2902
  %v2904 = vsel %vm2836, %v2345, 0.0
  %v2905 = vadd.f32 %v2903, %v2904
  %v2906 = vsel %vm2836, %v2347, 0.0
  %v2907 = vadd.f32 %v2905, %v2906
  %v2908 = vsel %vm2836, %v2350, 0.0
  %v2909 = vadd.f32 %v2907, %v2908
  %v2910 = vsel %vm2836, %v2352, 0.0
  %v2911 = vadd.f32 %v2909, %v2910
  %v2912 = vsel %vm2836, %v2355, 0.0
  %v2913 = vadd.f32 %v2911, %v2912
  %v2914 = vsel %vm2836, %v2357, 0.0
  %v2915 = vadd.f32 %v2913, %v2914
  %v2916 = vsel %vm2836, %v2360, 0.0
  %v2917 = vadd.f32 %v2915, %v2916
  %v2918 = vsel %vm2836, %v2362, 0.0
  %v2919 = vadd.f32 %v2917, %v2918
  %v2920 = vsel %vm2836, %v2365, 0.0
  %v2921 = vadd.f32 %v2919, %v2920
  %v2922 = vsel %vm2836, %v2367, 0.0
  %v2923 = vadd.f32 %v2921, %v2922
  %v2924 = vsel %vm2836, %v2370, 0.0
  %v2925 = vadd.f32 %v2923, %v2924
  %v2926 = vsel %vm2836, %v2372, 0.0
  %v2927 = vadd.f32 %v2925, %v2926
  %v2928 = vsel %vm2836, %v2375, 0.0
  %v2929 = vadd.f32 %v2927, %v2928
  %v2930 = vsel %vm2836, %v2377, 0.0
  %v2931 = vadd.f32 %v2929, %v2930
  %v2932 = vsel %vm2836, %v2380, 0.0
  %v2933 = vadd.f32 %v2931, %v2932
  %v2934 = vsel %vm2836, %v2382, 0.0
  %v2935 = vadd.f32 %v2933, %v2934
  %v2936 = vsel %vm2836, %v2385, 0.0
  %v2937 = vadd.f32 %v2935, %v2936
  %v2938 = vsel %vm2836, %v2387, 0.0
  %v2939 = vadd.f32 %v2937, %v2938
  %v2940 = vsel %vm2836, %v2390, 0.0
  %v2941 = vadd.f32 %v2939, %v2940
  %v2942 = vsel %vm2836, %v2392, 0.0
  %v2943 = vadd.f32 %v2941, %v2942
  %v2944 = vsel %vm2836, %v2395, 0.0
  %v2945 = vadd.f32 %v2943, %v2944
  %v2946 = vsel %vm2836, %v2397, 0.0
  %v2947 = vadd.f32 %v2945, %v2946
  %v2948 = vsel %vm2836, %v2400, 0.0
  %v2949 = vadd.f32 %v2947, %v2948
  %v2950 = vsel %vm2836, %v2402, 0.0
  %v2951 = vadd.f32 %v2949, %v2950
  %v2952 = vsel %vm2836, %v2405, 0.0
  %v2953 = vadd.f32 %v2951, %v2952
  %v2954 = vsel %vm2836, %v2407, 0.0
  %v2955 = vadd.f32 %v2953, %v2954
  %v2956 = vsel %vm2836, %v2410, 0.0
  %v2957 = vadd.f32 %v2955, %v2956
  %v2958 = vsel %vm2836, %v2412, 0.0
  %v2959 = vadd.f32 %v2957, %v2958
  %v2960 = vsel %vm2836, %v2415, 0.0
  %v2961 = vadd.f32 %v2959, %v2960
  %v2962 = vsel %vm2836, %v2417, 0.0
  %v2963 = vadd.f32 %v2961, %v2962
  %v2964 = vsel %vm2836, %v2420, 0.0
  %v2965 = vadd.f32 %v2963, %v2964
  %v2966 = vsel %vm2836, %v2422, 0.0
  %v2967 = vadd.f32 %v2965, %v2966
  %v2968 = vsel %vm2836, %v2425, 0.0
  %v2969 = vadd.f32 %v2967, %v2968
  %v2970 = vsel %vm2836, %v2427, 0.0
  %v2971 = vadd.f32 %v2969, %v2970
  %v2972 = vsel %vm2836, %v2430, 0.0
  %v2973 = vadd.f32 %v2971, %v2972
  %v2974 = vsel %vm2836, %v2432, 0.0
  %v2975 = vadd.f32 %v2973, %v2974
  %v2976 = vsel %vm2836, %v2435, 0.0
  %v2977 = vadd.f32 %v2975, %v2976
  %v2978 = vsel %vm2836, %v2437, 0.0
  %v2979 = vadd.f32 %v2977, %v2978
  %v2980 = vsel %vm2836, %v2440, 0.0
  %v2981 = vadd.f32 %v2979, %v2980
  %v2982 = vsel %vm2836, %v2442, 0.0
  %v2983 = vadd.f32 %v2981, %v2982
  %v2984 = vsel %vm2836, %v2445, 0.0
  %v2985 = vadd.f32 %v2983, %v2984
  %v2986 = vsel %vm2836, %v2447, 0.0
  %v2987 = vadd.f32 %v2985, %v2986
  %v2988 = vsel %vm2836, %v2450, 0.0
  %v2989 = vadd.f32 %v2987, %v2988
  %v2990 = vsel %vm2836, %v2452, 0.0
  %v2991 = vadd.f32 %v2989, %v2990
  %v2992 = vsel %vm2836, %v2455, 0.0
  %v2993 = vadd.f32 %v2991, %v2992
  %v2994 = vsel %vm2836, %v2457, 0.0
  %v2995 = vadd.f32 %v2993, %v2994
  %v2996 = vsel %vm2836, %v2460, 0.0
  %v2997 = vadd.f32 %v2995, %v2996
  %v2998 = vsel %vm2836, %v2462, 0.0
  %v2999 = vadd.f32 %v2997, %v2998
  %v3000 = vsel %vm2836, %v2465, 0.0
  %v3001 = vadd.f32 %v2999, %v3000
  %v3002 = vsel %vm2836, %v2467, 0.0
  %v3003 = vadd.f32 %v3001, %v3002
  %v3004 = vsel %vm2836, %v2470, 0.0
  %v3005 = vadd.f32 %v3003, %v3004
  %v3006 = vsel %vm2836, %v2472, 0.0
  %v3007 = vadd.f32 %v3005, %v3006
  %v3008 = vsel %vm2836, %v2475, 0.0
  %v3009 = vadd.f32 %v3007, %v3008
  %v3010 = vsel %vm2836, %v2477, 0.0
  %v3011 = vadd.f32 %v3009, %v3010
  %v3012 = vsel %vm2836, %v2480, 0.0
  %v3013 = vadd.f32 %v3011, %v3012
  %v3014 = vsel %vm2836, %v2482, 0.0
  %v3015 = vadd.f32 %v3013, %v3014
  %v3016 = vsel %vm2836, %v2485, 0.0
  %v3017 = vadd.f32 %v3015, %v3016
  %v3018 = vsel %vm2836, %v2487, 0.0
  %v3019 = vadd.f32 %v3017, %v3018
  %v3020 = vsel %vm2836, %v2490, 0.0
  %v3021 = vadd.f32 %v3019, %v3020
  %v3022 = vsel %vm2836, %v2492, 0.0
  %v3023 = vadd.f32 %v3021, %v3022
  %v3024 = vsel %vm2836, %v2495, 0.0
  %v3025 = vadd.f32 %v3023, %v3024
  %v3026 = vsel %vm2836, %v2497, 0.0
  %v3027 = vadd.f32 %v3025, %v3026
  %v3028 = vsel %vm2836, %v2500, 0.0
  %v3029 = vadd.f32 %v3027, %v3028
  %v3030 = vsel %vm2836, %v2502, 0.0
  %v3031 = vadd.f32 %v3029, %v3030
  %v3032 = vsel %vm2836, %v2505, 0.0
  %v3033 = vadd.f32 %v3031, %v3032
  %v3034 = vsel %vm2836, %v2507, 0.0
  %v3035 = vadd.f32 %v3033, %v3034
  %v3036 = vsel %vm2836, %v2510, 0.0
  %v3037 = vadd.f32 %v3035, %v3036
  %v3038 = vsel %vm2836, %v2512, 0.0
  %v3039 = vadd.f32 %v3037, %v3038
  %v3040 = vsel %vm2836, %v2515, 0.0
  %v3041 = vadd.f32 %v3039, %v3040
  %v3042 = vsel %vm2836, %v2517, 0.0
  %v3043 = vadd.f32 %v3041, %v3042
  %v3044 = vsel %vm2836, %v2520, 0.0
  %v3045 = vadd.f32 %v3043, %v3044
  %v3046 = vsel %vm2836, %v2522, 0.0
  %v3047 = vadd.f32 %v3045, %v3046
  %v3048 = vsel %vm2836, %v2525, 0.0
  %v3049 = vadd.f32 %v3047, %v3048
  %v3050 = vsel %vm2836, %v2527, 0.0
  %v3051 = vadd.f32 %v3049, %v3050
  %v3052 = vsel %vm2836, %v2530, 0.0
  %v3053 = vadd.f32 %v3051, %v3052
  %v3054 = vsel %vm2836, %v2532, 0.0
  %v3055 = vadd.f32 %v3053, %v3054
  %v3056 = vsel %vm2836, %v2535, 0.0
  %v3057 = vadd.f32 %v3055, %v3056
  %v3058 = vsel %vm2836, %v2537, 0.0
  %v3059 = vadd.f32 %v3057, %v3058
  %v3060 = vsel %vm2836, %v2540, 0.0
  %v3061 = vadd.f32 %v3059, %v3060
  %v3062 = vsel %vm2836, %v2542, 0.0
  %v3063 = vadd.f32 %v3061, %v3062
  %v3064 = vsel %vm2836, %v2545, 0.0
  %v3065 = vadd.f32 %v3063, %v3064
  %v3066 = vsel %vm2836, %v2547, 0.0
  %v3067 = vadd.f32 %v3065, %v3066
  %v3068 = vsel %vm2836, %v2550, 0.0
  %v3069 = vadd.f32 %v3067, %v3068
  %v3070 = vsel %vm2836, %v2552, 0.0
  %v3071 = vadd.f32 %v3069, %v3070
  %v3072 = vsel %vm2836, %v2555, 0.0
  %v3073 = vadd.f32 %v3071, %v3072
  %v3074 = vsel %vm2836, %v2557, 0.0
  %v3075 = vadd.f32 %v3073, %v3074
  %v3076 = vsel %vm2836, %v2560, 0.0
  %v3077 = vadd.f32 %v3075, %v3076
  %v3078 = vsel %vm2836, %v2562, 0.0
  %v3079 = vadd.f32 %v3077, %v3078
  %v3080 = vsel %vm2836, %v2565, 0.0
  %v3081 = vadd.f32 %v3079, %v3080
  %v3082 = vsel %vm2836, %v2567, 0.0
  %v3083 = vadd.f32 %v3081, %v3082
  %v3084 = vsel %vm2836, %v2570, 0.0
  %v3085 = vadd.f32 %v3083, %v3084
  %v3086 = vsel %vm2836, %v2572, 0.0
  %v3087 = vadd.f32 %v3085, %v3086
  %v3088 = vsel %vm2836, %v2575, 0.0
  %v3089 = vadd.f32 %v3087, %v3088
  %v3090 = vsel %vm2836, %v2577, 0.0
  %v3091 = vadd.f32 %v3089, %v3090
  %v3092 = vrot.slane %v3091, 4
  %v3093 = vadd.f32 %v3091, %v3092
  %v3094 = vrot.slane %v3093, 2
  %v3095 = vadd.f32 %v3093, %v3094
  %v3096 = vrot.slane %v3095, 1
  %v3097 = vadd.f32 %v3095, %v3096
  %vm3098 = vcmask 24576
  %3099 = vst.msk [vmem:[%s3] sm:$0x1] %vm3098, %v3097
  %v3100 = vmul.f32 %v2260, %v2260
  %v3101 = vmul.f32 %v2262, %v2262
  %v3102 = vmul.f32 %v2265, %v2265
  %v3103 = vmul.f32 %v2267, %v2267
  %v3104 = vmul.f32 %v2270, %v2270
  %v3105 = vmul.f32 %v2272, %v2272
  %v3106 = vmul.f32 %v2275, %v2275
  %v3107 = vmul.f32 %v2277, %v2277
  %v3108 = vmul.f32 %v2280, %v2280
  %v3109 = vmul.f32 %v2282, %v2282
  %v3110 = vmul.f32 %v2285, %v2285
  %v3111 = vmul.f32 %v2287, %v2287
  %v3112 = vmul.f32 %v2290, %v2290
  %v3113 = vmul.f32 %v2292, %v2292
  %v3114 = vmul.f32 %v2295, %v2295
  %v3115 = vmul.f32 %v2297, %v2297
  %v3116 = vmul.f32 %v2300, %v2300
  %v3117 = vmul.f32 %v2302, %v2302
  %v3118 = vmul.f32 %v2305, %v2305
  %v3119 = vmul.f32 %v2307, %v2307
  %v3120 = vmul.f32 %v2310, %v2310
  %v3121 = vmul.f32 %v2312, %v2312
  %v3122 = vmul.f32 %v2315, %v2315
  %v3123 = vmul.f32 %v2317, %v2317
  %v3124 = vmul.f32 %v2320, %v2320
  %v3125 = vmul.f32 %v2322, %v2322
  %v3126 = vmul.f32 %v2325, %v2325
  %v3127 = vmul.f32 %v2327, %v2327
  %v3128 = vmul.f32 %v2330, %v2330
  %v3129 = vmul.f32 %v2332, %v2332
  %v3130 = vmul.f32 %v2335, %v2335
  %v3131 = vmul.f32 %v2337, %v2337
  %v3132 = vmul.f32 %v2340, %v2340
  %v3133 = vmul.f32 %v2342, %v2342
  %v3134 = vmul.f32 %v2345, %v2345
  %v3135 = vmul.f32 %v2347, %v2347
  %v3136 = vmul.f32 %v2350, %v2350
  %v3137 = vmul.f32 %v2352, %v2352
  %v3138 = vmul.f32 %v2355, %v2355
  %v3139 = vmul.f32 %v2357, %v2357
  %v3140 = vmul.f32 %v2360, %v2360
  %v3141 = vmul.f32 %v2362, %v2362
  %v3142 = vmul.f32 %v2365, %v2365
  %v3143 = vmul.f32 %v2367, %v2367
  %v3144 = vmul.f32 %v2370, %v2370
  %v3145 = vmul.f32 %v2372, %v2372
  %v3146 = vmul.f32 %v2375, %v2375
  %v3147 = vmul.f32 %v2377, %v2377
  %v3148 = vmul.f32 %v2380, %v2380
  %v3149 = vmul.f32 %v2382, %v2382
  %v3150 = vmul.f32 %v2385, %v2385
  %v3151 = vmul.f32 %v2387, %v2387
  %v3152 = vmul.f32 %v2390, %v2390
  %v3153 = vmul.f32 %v2392, %v2392
  %v3154 = vmul.f32 %v2395, %v2395
  %v3155 = vmul.f32 %v2397, %v2397
  %v3156 = vmul.f32 %v2400, %v2400
  %v3157 = vmul.f32 %v2402, %v2402
  %v3158 = vmul.f32 %v2405, %v2405
  %v3159 = vmul.f32 %v2407, %v2407
  %v3160 = vmul.f32 %v2410, %v2410
  %v3161 = vmul.f32 %v2412, %v2412
  %v3162 = vmul.f32 %v2415, %v2415
  %v3163 = vmul.f32 %v2417, %v2417
  %v3164 = vmul.f32 %v2420, %v2420
  %v3165 = vmul.f32 %v2422, %v2422
  %v3166 = vmul.f32 %v2425, %v2425
  %v3167 = vmul.f32 %v2427, %v2427
  %v3168 = vmul.f32 %v2430, %v2430
  %v3169 = vmul.f32 %v2432, %v2432
  %v3170 = vmul.f32 %v2435, %v2435
  %v3171 = vmul.f32 %v2437, %v2437
  %v3172 = vmul.f32 %v2440, %v2440
  %v3173 = vmul.f32 %v2442, %v2442
  %v3174 = vmul.f32 %v2445, %v2445
  %v3175 = vmul.f32 %v2447, %v2447
  %v3176 = vmul.f32 %v2450, %v2450
  %v3177 = vmul.f32 %v2452, %v2452
  %v3178 = vmul.f32 %v2455, %v2455
  %v3179 = vmul.f32 %v2457, %v2457
  %v3180 = vmul.f32 %v2460, %v2460
  %v3181 = vmul.f32 %v2462, %v2462
  %v3182 = vmul.f32 %v2465, %v2465
  %v3183 = vmul.f32 %v2467, %v2467
  %v3184 = vmul.f32 %v2470, %v2470
  %v3185 = vmul.f32 %v2472, %v2472
  %v3186 = vmul.f32 %v2475, %v2475
  %v3187 = vmul.f32 %v2477, %v2477
  %v3188 = vmul.f32 %v2480, %v2480
  %v3189 = vmul.f32 %v2482, %v2482
  %v3190 = vmul.f32 %v2485, %v2485
  %v3191 = vmul.f32 %v2487, %v2487
  %v3192 = vmul.f32 %v2490, %v2490
  %v3193 = vmul.f32 %v2492, %v2492
  %v3194 = vmul.f32 %v2495, %v2495
  %v3195 = vmul.f32 %v2497, %v2497
  %v3196 = vmul.f32 %v2500, %v2500
  %v3197 = vmul.f32 %v2502, %v2502
  %v3198 = vmul.f32 %v2505, %v2505
  %v3199 = vmul.f32 %v2507, %v2507
  %v3200 = vmul.f32 %v2510, %v2510
  %v3201 = vmul.f32 %v2512, %v2512
  %v3202 = vmul.f32 %v2515, %v2515
  %v3203 = vmul.f32 %v2517, %v2517
  %v3204 = vmul.f32 %v2520, %v2520
  %v3205 = vmul.f32 %v2522, %v2522
  %v3206 = vmul.f32 %v2525, %v2525
  %v3207 = vmul.f32 %v2527, %v2527
  %v3208 = vmul.f32 %v2530, %v2530
  %v3209 = vmul.f32 %v2532, %v2532
  %v3210 = vmul.f32 %v2535, %v2535
  %v3211 = vmul.f32 %v2537, %v2537
  %v3212 = vmul.f32 %v2540, %v2540
  %v3213 = vmul.f32 %v2542, %v2542
  %v3214 = vmul.f32 %v2545, %v2545
  %v3215 = vmul.f32 %v2547, %v2547
  %v3216 = vmul.f32 %v2550, %v2550
  %v3217 = vmul.f32 %v2552, %v2552
  %v3218 = vmul.f32 %v2555, %v2555
  %v3219 = vmul.f32 %v2557, %v2557
  %v3220 = vmul.f32 %v2560, %v2560
  %v3221 = vmul.f32 %v2562, %v2562
  %v3222 = vmul.f32 %v2565, %v2565
  %v3223 = vmul.f32 %v2567, %v2567
  %v3224 = vmul.f32 %v2570, %v2570
  %v3225 = vmul.f32 %v2572, %v2572
  %v3226 = vmul.f32 %v2575, %v2575
  %v3227 = vmul.f32 %v2577, %v2577
  %v3228 = vsel %vm2836, %v3100, 0.0
  %v3229 = vsel %vm2836, %v3101, 0.0
  %v3230 = vadd.f32 %v3228, %v3229
  %v3231 = vsel %vm2836, %v3102, 0.0
  %v3232 = vadd.f32 %v3230, %v3231
  %v3233 = vsel %vm2836, %v3103, 0.0
  %v3234 = vadd.f32 %v3232, %v3233
  %v3235 = vsel %vm2836, %v3104, 0.0
  %v3236 = vadd.f32 %v3234, %v3235
  %v3237 = vsel %vm2836, %v3105, 0.0
  %v3238 = vadd.f32 %v3236, %v3237
  %v3239 = vsel %vm2836, %v3106, 0.0
  %v3240 = vadd.f32 %v3238, %v3239
  %v3241 = vsel %vm2836, %v3107, 0.0
  %v3242 = vadd.f32 %v3240, %v3241
  %v3243 = vsel %vm2836, %v3108, 0.0
  %v3244 = vadd.f32 %v3242, %v3243
  %v3245 = vsel %vm2836, %v3109, 0.0
  %v3246 = vadd.f32 %v3244, %v3245
  %v3247 = vsel %vm2836, %v3110, 0.0
  %v3248 = vadd.f32 %v3246, %v3247
  %v3249 = vsel %vm2836, %v3111, 0.0
  %v3250 = vadd.f32 %v3248, %v3249
  %v3251 = vsel %vm2836, %v3112, 0.0
  %v3252 = vadd.f32 %v3250, %v3251
  %v3253 = vsel %vm2836, %v3113, 0.0
  %v3254 = vadd.f32 %v3252, %v3253
  %v3255 = vsel %vm2836, %v3114, 0.0
  %v3256 = vadd.f32 %v3254, %v3255
  %v3257 = vsel %vm2836, %v3115, 0.0
  %v3258 = vadd.f32 %v3256, %v3257
  %v3259 = vsel %vm2836, %v3116, 0.0
  %v3260 = vadd.f32 %v3258, %v3259
  %v3261 = vsel %vm2836, %v3117, 0.0
  %v3262 = vadd.f32 %v3260, %v3261
  %v3263 = vsel %vm2836, %v3118, 0.0
  %v3264 = vadd.f32 %v3262, %v3263
  %v3265 = vsel %vm2836, %v3119, 0.0
  %v3266 = vadd.f32 %v3264, %v3265
  %v3267 = vsel %vm2836, %v3120, 0.0
  %v3268 = vadd.f32 %v3266, %v3267
  %v3269 = vsel %vm2836, %v3121, 0.0
  %v3270 = vadd.f32 %v3268, %v3269
  %v3271 = vsel %vm2836, %v3122, 0.0
  %v3272 = vadd.f32 %v3270, %v3271
  %v3273 = vsel %vm2836, %v3123, 0.0
  %v3274 = vadd.f32 %v3272, %v3273
  %v3275 = vsel %vm2836, %v3124, 0.0
  %v3276 = vadd.f32 %v3274, %v3275
  %v3277 = vsel %vm2836, %v3125, 0.0
  %v3278 = vadd.f32 %v3276, %v3277
  %v3279 = vsel %vm2836, %v3126, 0.0
  %v3280 = vadd.f32 %v3278, %v3279
  %v3281 = vsel %vm2836, %v3127, 0.0
  %v3282 = vadd.f32 %v3280, %v3281
  %v3283 = vsel %vm2836, %v3128, 0.0
  %v3284 = vadd.f32 %v3282, %v3283
  %v3285 = vsel %vm2836, %v3129, 0.0
  %v3286 = vadd.f32 %v3284, %v3285
  %v3287 = vsel %vm2836, %v3130, 0.0
  %v3288 = vadd.f32 %v3286, %v3287
  %v3289 = vsel %vm2836, %v3131, 0.0
  %v3290 = vadd.f32 %v3288, %v3289
  %v3291 = vsel %vm2836, %v3132, 0.0
  %v3292 = vadd.f32 %v3290, %v3291
  %v3293 = vsel %vm2836, %v3133, 0.0
  %v3294 = vadd.f32 %v3292, %v3293
  %v3295 = vsel %vm2836, %v3134, 0.0
  %v3296 = vadd.f32 %v3294, %v3295
  %v3297 = vsel %vm2836, %v3135, 0.0
  %v3298 = vadd.f32 %v3296, %v3297
  %v3299 = vsel %vm2836, %v3136, 0.0
  %v3300 = vadd.f32 %v3298, %v3299
  %v3301 = vsel %vm2836, %v3137, 0.0
  %v3302 = vadd.f32 %v3300, %v3301
  %v3303 = vsel %vm2836, %v3138, 0.0
  %v3304 = vadd.f32 %v3302, %v3303
  %v3305 = vsel %vm2836, %v3139, 0.0
  %v3306 = vadd.f32 %v3304, %v3305
  %v3307 = vsel %vm2836, %v3140, 0.0
  %v3308 = vadd.f32 %v3306, %v3307
  %v3309 = vsel %vm2836, %v3141, 0.0
  %v3310 = vadd.f32 %v3308, %v3309
  %v3311 = vsel %vm2836, %v3142, 0.0
  %v3312 = vadd.f32 %v3310, %v3311
  %v3313 = vsel %vm2836, %v3143, 0.0
  %v3314 = vadd.f32 %v3312, %v3313
  %v3315 = vsel %vm2836, %v3144, 0.0
  %v3316 = vadd.f32 %v3314, %v3315
  %v3317 = vsel %vm2836, %v3145, 0.0
  %v3318 = vadd.f32 %v3316, %v3317
  %v3319 = vsel %vm2836, %v3146, 0.0
  %v3320 = vadd.f32 %v3318, %v3319
  %v3321 = vsel %vm2836, %v3147, 0.0
  %v3322 = vadd.f32 %v3320, %v3321
  %v3323 = vsel %vm2836, %v3148, 0.0
  %v3324 = vadd.f32 %v3322, %v3323
  %v3325 = vsel %vm2836, %v3149, 0.0
  %v3326 = vadd.f32 %v3324, %v3325
  %v3327 = vsel %vm2836, %v3150, 0.0
  %v3328 = vadd.f32 %v3326, %v3327
  %v3329 = vsel %vm2836, %v3151, 0.0
  %v3330 = vadd.f32 %v3328, %v3329
  %v3331 = vsel %vm2836, %v3152, 0.0
  %v3332 = vadd.f32 %v3330, %v3331
  %v3333 = vsel %vm2836, %v3153, 0.0
  %v3334 = vadd.f32 %v3332, %v3333
  %v3335 = vsel %vm2836, %v3154, 0.0
  %v3336 = vadd.f32 %v3334, %v3335
  %v3337 = vsel %vm2836, %v3155, 0.0
  %v3338 = vadd.f32 %v3336, %v3337
  %v3339 = vsel %vm2836, %v3156, 0.0
  %v3340 = vadd.f32 %v3338, %v3339
  %v3341 = vsel %vm2836, %v3157, 0.0
  %v3342 = vadd.f32 %v3340, %v3341
  %v3343 = vsel %vm2836, %v3158, 0.0
  %v3344 = vadd.f32 %v3342, %v3343
  %v3345 = vsel %vm2836, %v3159, 0.0
  %v3346 = vadd.f32 %v3344, %v3345
  %v3347 = vsel %vm2836, %v3160, 0.0
  %v3348 = vadd.f32 %v3346, %v3347
  %v3349 = vsel %vm2836, %v3161, 0.0
  %v3350 = vadd.f32 %v3348, %v3349
  %v3351 = vsel %vm2836, %v3162, 0.0
  %v3352 = vadd.f32 %v3350, %v3351
  %v3353 = vsel %vm2836, %v3163, 0.0
  %v3354 = vadd.f32 %v3352, %v3353
  %v3355 = vsel %vm2836, %v3164, 0.0
  %v3356 = vadd.f32 %v3354, %v3355
  %v3357 = vsel %vm2836, %v3165, 0.0
  %v3358 = vadd.f32 %v3356, %v3357
  %v3359 = vsel %vm2836, %v3166, 0.0
  %v3360 = vadd.f32 %v3358, %v3359
  %v3361 = vsel %vm2836, %v3167, 0.0
  %v3362 = vadd.f32 %v3360, %v3361
  %v3363 = vsel %vm2836, %v3168, 0.0
  %v3364 = vadd.f32 %v3362, %v3363
  %v3365 = vsel %vm2836, %v3169, 0.0
  %v3366 = vadd.f32 %v3364, %v3365
  %v3367 = vsel %vm2836, %v3170, 0.0
  %v3368 = vadd.f32 %v3366, %v3367
  %v3369 = vsel %vm2836, %v3171, 0.0
  %v3370 = vadd.f32 %v3368, %v3369
  %v3371 = vsel %vm2836, %v3172, 0.0
  %v3372 = vadd.f32 %v3370, %v3371
  %v3373 = vsel %vm2836, %v3173, 0.0
  %v3374 = vadd.f32 %v3372, %v3373
  %v3375 = vsel %vm2836, %v3174, 0.0
  %v3376 = vadd.f32 %v3374, %v3375
  %v3377 = vsel %vm2836, %v3175, 0.0
  %v3378 = vadd.f32 %v3376, %v3377
  %v3379 = vsel %vm2836, %v3176, 0.0
  %v3380 = vadd.f32 %v3378, %v3379
  %v3381 = vsel %vm2836, %v3177, 0.0
  %v3382 = vadd.f32 %v3380, %v3381
  %v3383 = vsel %vm2836, %v3178, 0.0
  %v3384 = vadd.f32 %v3382, %v3383
  %v3385 = vsel %vm2836, %v3179, 0.0
  %v3386 = vadd.f32 %v3384, %v3385
  %v3387 = vsel %vm2836, %v3180, 0.0
  %v3388 = vadd.f32 %v3386, %v3387
  %v3389 = vsel %vm2836, %v3181, 0.0
  %v3390 = vadd.f32 %v3388, %v3389
  %v3391 = vsel %vm2836, %v3182, 0.0
  %v3392 = vadd.f32 %v3390, %v3391
  %v3393 = vsel %vm2836, %v3183, 0.0
  %v3394 = vadd.f32 %v3392, %v3393
  %v3395 = vsel %vm2836, %v3184, 0.0
  %v3396 = vadd.f32 %v3394, %v3395
  %v3397 = vsel %vm2836, %v3185, 0.0
  %v3398 = vadd.f32 %v3396, %v3397
  %v3399 = vsel %vm2836, %v3186, 0.0
  %v3400 = vadd.f32 %v3398, %v3399
  %v3401 = vsel %vm2836, %v3187, 0.0
  %v3402 = vadd.f32 %v3400, %v3401
  %v3403 = vsel %vm2836, %v3188, 0.0
  %v3404 = vadd.f32 %v3402, %v3403
  %v3405 = vsel %vm2836, %v3189, 0.0
  %v3406 = vadd.f32 %v3404, %v3405
  %v3407 = vsel %vm2836, %v3190, 0.0
  %v3408 = vadd.f32 %v3406, %v3407
  %v3409 = vsel %vm2836, %v3191, 0.0
  %v3410 = vadd.f32 %v3408, %v3409
  %v3411 = vsel %vm2836, %v3192, 0.0
  %v3412 = vadd.f32 %v3410, %v3411
  %v3413 = vsel %vm2836, %v3193, 0.0
  %v3414 = vadd.f32 %v3412, %v3413
  %v3415 = vsel %vm2836, %v3194, 0.0
  %v3416 = vadd.f32 %v3414, %v3415
  %v3417 = vsel %vm2836, %v3195, 0.0
  %v3418 = vadd.f32 %v3416, %v3417
  %v3419 = vsel %vm2836, %v3196, 0.0
  %v3420 = vadd.f32 %v3418, %v3419
  %v3421 = vsel %vm2836, %v3197, 0.0
  %v3422 = vadd.f32 %v3420, %v3421
  %v3423 = vsel %vm2836, %v3198, 0.0
  %v3424 = vadd.f32 %v3422, %v3423
  %v3425 = vsel %vm2836, %v3199, 0.0
  %v3426 = vadd.f32 %v3424, %v3425
  %v3427 = vsel %vm2836, %v3200, 0.0
  %v3428 = vadd.f32 %v3426, %v3427
  %v3429 = vsel %vm2836, %v3201, 0.0
  %v3430 = vadd.f32 %v3428, %v3429
  %v3431 = vsel %vm2836, %v3202, 0.0
  %v3432 = vadd.f32 %v3430, %v3431
  %v3433 = vsel %vm2836, %v3203, 0.0
  %v3434 = vadd.f32 %v3432, %v3433
  %v3435 = vsel %vm2836, %v3204, 0.0
  %v3436 = vadd.f32 %v3434, %v3435
  %v3437 = vsel %vm2836, %v3205, 0.0
  %v3438 = vadd.f32 %v3436, %v3437
  %v3439 = vsel %vm2836, %v3206, 0.0
  %v3440 = vadd.f32 %v3438, %v3439
  %v3441 = vsel %vm2836, %v3207, 0.0
  %v3442 = vadd.f32 %v3440, %v3441
  %v3443 = vsel %vm2836, %v3208, 0.0
  %v3444 = vadd.f32 %v3442, %v3443
  %v3445 = vsel %vm2836, %v3209, 0.0
  %v3446 = vadd.f32 %v3444, %v3445
  %v3447 = vsel %vm2836, %v3210, 0.0
  %v3448 = vadd.f32 %v3446, %v3447
  %v3449 = vsel %vm2836, %v3211, 0.0
  %v3450 = vadd.f32 %v3448, %v3449
  %v3451 = vsel %vm2836, %v3212, 0.0
  %v3452 = vadd.f32 %v3450, %v3451
  %v3453 = vsel %vm2836, %v3213, 0.0
  %v3454 = vadd.f32 %v3452, %v3453
  %v3455 = vsel %vm2836, %v3214, 0.0
  %v3456 = vadd.f32 %v3454, %v3455
  %v3457 = vsel %vm2836, %v3215, 0.0
  %v3458 = vadd.f32 %v3456, %v3457
  %v3459 = vsel %vm2836, %v3216, 0.0
  %v3460 = vadd.f32 %v3458, %v3459
  %v3461 = vsel %vm2836, %v3217, 0.0
  %v3462 = vadd.f32 %v3460, %v3461
  %v3463 = vsel %vm2836, %v3218, 0.0
  %v3464 = vadd.f32 %v3462, %v3463
  %v3465 = vsel %vm2836, %v3219, 0.0
  %v3466 = vadd.f32 %v3464, %v3465
  %v3467 = vsel %vm2836, %v3220, 0.0
  %v3468 = vadd.f32 %v3466, %v3467
  %v3469 = vsel %vm2836, %v3221, 0.0
  %v3470 = vadd.f32 %v3468, %v3469
  %v3471 = vsel %vm2836, %v3222, 0.0
  %v3472 = vadd.f32 %v3470, %v3471
  %v3473 = vsel %vm2836, %v3223, 0.0
  %v3474 = vadd.f32 %v3472, %v3473
  %v3475 = vsel %vm2836, %v3224, 0.0
  %v3476 = vadd.f32 %v3474, %v3475
  %v3477 = vsel %vm2836, %v3225, 0.0
  %v3478 = vadd.f32 %v3476, %v3477
  %v3479 = vsel %vm2836, %v3226, 0.0
  %v3480 = vadd.f32 %v3478, %v3479
  %v3481 = vsel %vm2836, %v3227, 0.0
  %v3482 = vadd.f32 %v3480, %v3481
  %v3483 = vrot.slane %v3482, 4
  %v3484 = vadd.f32 %v3482, %v3483
  %v3485 = vrot.slane %v3484, 2
  %v3486 = vadd.f32 %v3484, %v3485
  %v3487 = vrot.slane %v3486, 1
  %v3488 = vadd.f32 %v3486, %v3487
  %3489 = vst.msk [vmem:[%s4] sm:$0x1] %vm3098, %v3488
  // Predicated region
  $region10: #{refine_net_unet_forward.30} parent=0 // pred_check
    _
  $region11: #{refine_net_unet_forward.30} parent=0 // pred_check_branch
    %3491 = sbr.rel (0) target = $region13
  $region12: #{refine_net_unet_forward.30} parent=0 // pred_region
    _
  $region13: #{refine_net_unet_forward.30} parent=0 // pred_fallthru
    _
  // Predicated region
  $region14: #{refine_net_unet_forward.30} parent=0 // pred_check
    _
  $region15: #{refine_net_unet_forward.30} parent=0 // pred_check_branch
    %3493 = sbr.rel (0) target = $region17
  $region16: #{refine_net_unet_forward.30} parent=0 // pred_region
    _
  $region17: #{refine_net_unet_forward.30} parent=0 // pred_fallthru
    _
  // Predicated region
  $region18: #{refine_net_unet_forward.30} parent=0 // pred_check
    _
  $region19: #{refine_net_unet_forward.30} parent=0 // pred_check_branch
    %3495 = sbr.rel (0) target = $region21
  $region20: #{refine_net_unet_forward.30} parent=0 // pred_region
    _
  $region21: #{refine_net_unet_forward.30} parent=0 // pred_fallthru
    _
  // Predicated region
  $region22: #{refine_net_unet_forward.30} parent=0 // pred_check
    _
  $region23: #{refine_net_unet_forward.30} parent=0 // pred_check_branch
    %3497 = sbr.rel (0) target = $region25
  $region24: #{refine_net_unet_forward.30} parent=0 // pred_region
    _
  $region25: #{refine_net_unet_forward.30} parent=0 // pred_fallthru
    _
  // Predicated region
  $region26: #{refine_net_unet_forward.30} parent=0 // pred_check
    _
  $region27: #{refine_net_unet_forward.30} parent=0 // pred_check_branch
    %3499 = sbr.rel (0) target = $region29
  $region28: #{refine_net_unet_forward.30} parent=0 // pred_region
    _
  $region29: #{refine_net_unet_forward.30} parent=0 // pred_fallthru
    _
  // Predicated region
  $region30: #{refine_net_unet_forward.30} parent=0 // pred_check
    _
  $region31: #{refine_net_unet_forward.30} parent=0 // pred_check_branch
    %3501 = sbr.rel (0) target = $region33
  $region32: #{refine_net_unet_forward.30} parent=0 // pred_region
    _
  $region33: #{refine_net_unet_forward.30} parent=0 // pred_fallthru
    _

// kernel: refine_net_unet_forward.32
$region0: #{refine_net_unet_forward.32}
  #allocation0 [shape = 'u32[]', space=smem, size = 0x4, offset = 0x4, fixed_abs, tag = 'smem constant byte address 0x4 - core index']
  #allocation1 [shape = 'u32[72,128]{1,0:T(1,128)}', space=vmem, size = 0x9000, scoped, tag = 'internal scratch']
  %s0 = inlined_call_operand.vmem [shape: bf16[1024,108], index: 0, kind: input, shape index: {}]
  %s1 = inlined_call_operand.vmem [shape: bf16[108,4], index: 1, kind: input, shape index: {}]
  %s2 = inlined_call_operand.vmem [shape: bf16[1024,4], index: 2, kind: output, shape index: {0}]
  %s3 = inlined_call_operand.vmem [shape: f32[1,1,4], index: 3, kind: output, shape index: {1}]
  %s4 = inlined_call_operand.vmem [shape: f32[1,1,4], index: 4, kind: output, shape index: {2}]
  %5 = xla_tuple %s2, %s3, %s4
  %s6 = sld [smem:[#allocation0]]
  $region34: #{refine_net_unet_forward.32} parent=0
    _
  %s8 = ssub.s32 1, %s6
  %s9 = scalar_select 0, %s8, %s6
  // Predicated region
  $region2: #{refine_net_unet_forward.32} parent=0 // pred_check
    _
  $region3: #{refine_net_unet_forward.32} parent=0 // pred_check_branch
    %11 = sbr.rel (0) target = $region5
  $region4: #{refine_net_unet_forward.32} parent=0 // pred_region
    _
  $region5: #{refine_net_unet_forward.32} parent=0 // pred_fallthru
    _
  // Predicated region
  $region6: #{refine_net_unet_forward.32} parent=0 // pred_check
    _
  $region7: #{refine_net_unet_forward.32} parent=0 // pred_check_branch
    %13 = sbr.rel (0) target = $region9
  $region8: #{refine_net_unet_forward.32} parent=0 // pred_region
    _
  $region9: #{refine_net_unet_forward.32} parent=0 // pred_fallthru
    _
  %v15 = vld [vmem:[%s0] sm:$0xf]
  %v16 = vld [vmem:[%s0 + $0x4] sm:$0xf]
  %v17 = vld [vmem:[%s0 + $0x8] sm:$0xf]
  %v18 = vld [vmem:[%s0 + $0xc] sm:$0xf]
  %v19 = vld [vmem:[%s0 + $0x10] sm:$0xf]
  %v20 = vld [vmem:[%s0 + $0x14] sm:$0xf]
  %v21 = vld [vmem:[%s0 + $0x18] sm:$0xf]
  %v22 = vld [vmem:[%s0 + $0x1c] sm:$0xf]
  %v23 = vld [vmem:[%s0 + $0x20] sm:$0xf]
  %v24 = vld [vmem:[%s0 + $0x24] sm:$0xf]
  %v25 = vld [vmem:[%s0 + $0x28] sm:$0xf]
  %v26 = vld [vmem:[%s0 + $0x2c] sm:$0xf]
  %v27 = vld [vmem:[%s0 + $0x30] sm:$0xf]
  %v28 = vld [vmem:[%s0 + $0x34] sm:$0xf]
  %v29 = vld [vmem:[%s0 + $0x38] sm:$0xf]
  %v30 = vld [vmem:[%s0 + $0x3c] sm:$0xf]
  %v31 = vld [vmem:[%s0 + $0x40] sm:$0xf]
  %v32 = vld [vmem:[%s0 + $0x44] sm:$0xf]
  %v33 = vld [vmem:[%s0 + $0x48] sm:$0xf]
  %v34 = vld [vmem:[%s0 + $0x4c] sm:$0xf]
  %v35 = vld [vmem:[%s0 + $0x50] sm:$0xf]
  %v36 = vld [vmem:[%s0 + $0x54] sm:$0xf]
  %v37 = vld [vmem:[%s0 + $0x58] sm:$0xf]
  %v38 = vld [vmem:[%s0 + $0x5c] sm:$0xf]
  %v39 = vld [vmem:[%s0 + $0x60] sm:$0xf]
  %v40 = vld [vmem:[%s0 + $0x64] sm:$0xf]
  %v41 = vld [vmem:[%s0 + $0x68] sm:$0xf]
  %v42 = vld [vmem:[%s0 + $0x6c] sm:$0xf]
  %v43 = vld [vmem:[%s0 + $0x70] sm:$0xf]
  %v44 = vld [vmem:[%s0 + $0x74] sm:$0xf]
  %v45 = vld [vmem:[%s0 + $0x78] sm:$0xf]
  %v46 = vld [vmem:[%s0 + $0x7c] sm:$0xf]
  %v47 = vld [vmem:[%s0 + $0x80] sm:$0xf]
  %v48 = vld [vmem:[%s0 + $0x84] sm:$0xf]
  %v49 = vld [vmem:[%s0 + $0x88] sm:$0xf]
  %v50 = vld [vmem:[%s0 + $0x8c] sm:$0xf]
  %v51 = vld [vmem:[%s0 + $0x90] sm:$0xf]
  %v52 = vld [vmem:[%s0 + $0x94] sm:$0xf]
  %v53 = vld [vmem:[%s0 + $0x98] sm:$0xf]
  %v54 = vld [vmem:[%s0 + $0x9c] sm:$0xf]
  %v55 = vld [vmem:[%s0 + $0xa0] sm:$0xf]
  %v56 = vld [vmem:[%s0 + $0xa4] sm:$0xf]
  %v57 = vld [vmem:[%s0 + $0xa8] sm:$0xf]
  %v58 = vld [vmem:[%s0 + $0xac] sm:$0xf]
  %v59 = vld [vmem:[%s0 + $0xb0] sm:$0xf]
  %v60 = vld [vmem:[%s0 + $0xb4] sm:$0xf]
  %v61 = vld [vmem:[%s0 + $0xb8] sm:$0xf]
  %v62 = vld [vmem:[%s0 + $0xbc] sm:$0xf]
  %v63 = vld [vmem:[%s0 + $0xc0] sm:$0xf]
  %v64 = vld [vmem:[%s0 + $0xc4] sm:$0xf]
  %v65 = vld [vmem:[%s0 + $0xc8] sm:$0xf]
  %v66 = vld [vmem:[%s0 + $0xcc] sm:$0xf]
  %v67 = vld [vmem:[%s0 + $0xd0] sm:$0xf]
  %v68 = vld [vmem:[%s0 + $0xd4] sm:$0xf]
  %v69 = vld [vmem:[%s0 + $0xd8] sm:$0xf]
  %v70 = vld [vmem:[%s0 + $0xdc] sm:$0xf]
  %v71 = vld [vmem:[%s0 + $0xe0] sm:$0xf]
  %v72 = vld [vmem:[%s0 + $0xe4] sm:$0xf]
  %v73 = vld [vmem:[%s0 + $0xe8] sm:$0xf]
  %v74 = vld [vmem:[%s0 + $0xec] sm:$0xf]
  %v75 = vld [vmem:[%s0 + $0xf0] sm:$0xf]
  %v76 = vld [vmem:[%s0 + $0xf4] sm:$0xf]
  %v77 = vld [vmem:[%s0 + $0xf8] sm:$0xf]
  %v78 = vld [vmem:[%s0 + $0xfc] sm:$0xf]
  %v79 = vld [vmem:[%s0 + $0x100] sm:$0xf]
  %v80 = vld [vmem:[%s0 + $0x104] sm:$0xf]
  %v81 = vld [vmem:[%s0 + $0x108] sm:$0xf]
  %v82 = vld [vmem:[%s0 + $0x10c] sm:$0xf]
  %v83 = vld [vmem:[%s0 + $0x110] sm:$0xf]
  %v84 = vld [vmem:[%s0 + $0x114] sm:$0xf]
  %v85 = vld [vmem:[%s0 + $0x118] sm:$0xf]
  %v86 = vld [vmem:[%s0 + $0x11c] sm:$0xf]
  %v87 = vld [vmem:[%s0 + $0x120] sm:$0xf]
  %v88 = vld [vmem:[%s0 + $0x124] sm:$0xf]
  %v89 = vld [vmem:[%s0 + $0x128] sm:$0xf]
  %v90 = vld [vmem:[%s0 + $0x12c] sm:$0xf]
  %v91 = vld [vmem:[%s0 + $0x130] sm:$0xf]
  %v92 = vld [vmem:[%s0 + $0x134] sm:$0xf]
  %v93 = vld [vmem:[%s0 + $0x138] sm:$0xf]
  %v94 = vld [vmem:[%s0 + $0x13c] sm:$0xf]
  %v95 = vld [vmem:[%s0 + $0x140] sm:$0xf]
  %v96 = vld [vmem:[%s0 + $0x144] sm:$0xf]
  %v97 = vld [vmem:[%s0 + $0x148] sm:$0xf]
  %v98 = vld [vmem:[%s0 + $0x14c] sm:$0xf]
  %v99 = vld [vmem:[%s0 + $0x150] sm:$0xf]
  %v100 = vld [vmem:[%s0 + $0x154] sm:$0xf]
  %v101 = vld [vmem:[%s0 + $0x158] sm:$0xf]
  %v102 = vld [vmem:[%s0 + $0x15c] sm:$0xf]
  %v103 = vld [vmem:[%s0 + $0x160] sm:$0xf]
  %v104 = vld [vmem:[%s0 + $0x164] sm:$0xf]
  %v105 = vld [vmem:[%s0 + $0x168] sm:$0xf]
  %v106 = vld [vmem:[%s0 + $0x16c] sm:$0xf]
  %v107 = vld [vmem:[%s0 + $0x170] sm:$0xf]
  %v108 = vld [vmem:[%s0 + $0x174] sm:$0xf]
  %v109 = vld [vmem:[%s0 + $0x178] sm:$0xf]
  %v110 = vld [vmem:[%s0 + $0x17c] sm:$0xf]
  %v111 = vld [vmem:[%s0 + $0x180] sm:$0xf]
  %v112 = vld [vmem:[%s0 + $0x184] sm:$0xf]
  %v113 = vld [vmem:[%s0 + $0x188] sm:$0xf]
  %v114 = vld [vmem:[%s0 + $0x18c] sm:$0xf]
  %v115 = vld [vmem:[%s0 + $0x190] sm:$0xf]
  %v116 = vld [vmem:[%s0 + $0x194] sm:$0xf]
  %v117 = vld [vmem:[%s0 + $0x198] sm:$0xf]
  %v118 = vld [vmem:[%s0 + $0x19c] sm:$0xf]
  %v119 = vld [vmem:[%s0 + $0x1a0] sm:$0xf]
  %v120 = vld [vmem:[%s0 + $0x1a4] sm:$0xf]
  %v121 = vld [vmem:[%s0 + $0x1a8] sm:$0xf]
  %v122 = vld [vmem:[%s0 + $0x1ac] sm:$0xf]
  %v123 = vld [vmem:[%s0 + $0x1b0] sm:$0xf]
  %v124 = vld [vmem:[%s0 + $0x1b4] sm:$0xf]
  %v125 = vld [vmem:[%s0 + $0x1b8] sm:$0xf]
  %v126 = vld [vmem:[%s0 + $0x1bc] sm:$0xf]
  %v127 = vld [vmem:[%s0 + $0x1c0] sm:$0xf]
  %v128 = vld [vmem:[%s0 + $0x1c4] sm:$0xf]
  %v129 = vld [vmem:[%s0 + $0x1c8] sm:$0xf]
  %v130 = vld [vmem:[%s0 + $0x1cc] sm:$0xf]
  %v131 = vld [vmem:[%s0 + $0x1d0] sm:$0xf]
  %v132 = vld [vmem:[%s0 + $0x1d4] sm:$0xf]
  %v133 = vld [vmem:[%s0 + $0x1d8] sm:$0xf]
  %v134 = vld [vmem:[%s0 + $0x1dc] sm:$0xf]
  %v135 = vld [vmem:[%s0 + $0x1e0] sm:$0xf]
  %v136 = vld [vmem:[%s0 + $0x1e4] sm:$0xf]
  %v137 = vld [vmem:[%s0 + $0x1e8] sm:$0xf]
  %v138 = vld [vmem:[%s0 + $0x1ec] sm:$0xf]
  %v139 = vld [vmem:[%s0 + $0x1f0] sm:$0xf]
  %v140 = vld [vmem:[%s0 + $0x1f4] sm:$0xf]
  %v141 = vld [vmem:[%s0 + $0x1f8] sm:$0xf]
  %v142 = vld [vmem:[%s0 + $0x1fc] sm:$0xf]
  %v143 = vld [vmem:[%s1] sm:$0xf]
  %v144 = vld [vmem:[%s1 + $0x4] sm:$0xf]
  %v145 = vld [vmem:[%s1 + $0x8] sm:$0xf]
  %v146 = vld [vmem:[%s1 + $0xc] sm:$0xf]
  %v147 = vld [vmem:[%s1 + $0x10] sm:$0xf]
  %v148 = vld [vmem:[%s1 + $0x14] sm:$0xf]
  %v149 = vld [vmem:[%s1 + $0x18] sm:$0xf]
  %v150 = vld [vmem:[%s1 + $0x1c] sm:$0xf]
  %v151 = vld [vmem:[%s1 + $0x20] sm:$0xf]
  %v152 = vld [vmem:[%s1 + $0x24] sm:$0xf]
  %v153 = vld [vmem:[%s1 + $0x28] sm:$0xf]
  %v154 = vld [vmem:[%s1 + $0x2c] sm:$0xf]
  %v155 = vld [vmem:[%s1 + $0x30] sm:$0xf]
  %v156 = vld [vmem:[%s1 + $0x34] sm:$0x3]
  %v285 = vunpack.c.l.b16 %v15
  %v286 = vunpack.c.l.b16 %v16
  %v287 = vunpack.c.l.b16 %v17
  %v288 = vunpack.c.l.b16 %v18
  %v289 = vunpack.c.l.b16 %v19
  %v290 = vunpack.c.l.b16 %v20
  %v291 = vunpack.c.l.b16 %v21
  %v292 = vunpack.c.l.b16 %v22
  %v293 = vunpack.c.l.b16 %v23
  %v294 = vunpack.c.l.b16 %v24
  %v295 = vunpack.c.l.b16 %v25
  %v296 = vunpack.c.l.b16 %v26
  %v297 = vunpack.c.l.b16 %v27
  %v298 = vunpack.c.l.b16 %v28
  %v299 = vunpack.c.l.b16 %v29
  %v300 = vunpack.c.l.b16 %v30
  %v301 = vunpack.c.l.b16 %v31
  %v302 = vunpack.c.l.b16 %v32
  %v303 = vunpack.c.l.b16 %v33
  %v304 = vunpack.c.l.b16 %v34
  %v305 = vunpack.c.l.b16 %v35
  %v306 = vunpack.c.l.b16 %v36
  %v307 = vunpack.c.l.b16 %v37
  %v308 = vunpack.c.l.b16 %v38
  %v309 = vunpack.c.l.b16 %v39
  %v310 = vunpack.c.l.b16 %v40
  %v311 = vunpack.c.l.b16 %v41
  %v312 = vunpack.c.l.b16 %v42
  %v313 = vunpack.c.l.b16 %v43
  %v314 = vunpack.c.l.b16 %v44
  %v315 = vunpack.c.l.b16 %v45
  %v316 = vunpack.c.l.b16 %v46
  %v317 = vunpack.c.l.b16 %v47
  %v318 = vunpack.c.l.b16 %v48
  %v319 = vunpack.c.l.b16 %v49
  %v320 = vunpack.c.l.b16 %v50
  %v321 = vunpack.c.l.b16 %v51
  %v322 = vunpack.c.l.b16 %v52
  %v323 = vunpack.c.l.b16 %v53
  %v324 = vunpack.c.l.b16 %v54
  %v325 = vunpack.c.l.b16 %v55
  %v326 = vunpack.c.l.b16 %v56
  %v327 = vunpack.c.l.b16 %v57
  %v328 = vunpack.c.l.b16 %v58
  %v329 = vunpack.c.l.b16 %v59
  %v330 = vunpack.c.l.b16 %v60
  %v331 = vunpack.c.l.b16 %v61
  %v332 = vunpack.c.l.b16 %v62
  %v333 = vunpack.c.l.b16 %v63
  %v334 = vunpack.c.l.b16 %v64
  %v335 = vunpack.c.l.b16 %v65
  %v336 = vunpack.c.l.b16 %v66
  %v337 = vunpack.c.l.b16 %v67
  %v338 = vunpack.c.l.b16 %v68
  %v339 = vunpack.c.l.b16 %v69
  %v340 = vunpack.c.l.b16 %v70
  %v341 = vunpack.c.l.b16 %v71
  %v342 = vunpack.c.l.b16 %v72
  %v343 = vunpack.c.l.b16 %v73
  %v344 = vunpack.c.l.b16 %v74
  %v345 = vunpack.c.l.b16 %v75
  %v346 = vunpack.c.l.b16 %v76
  %v347 = vunpack.c.l.b16 %v77
  %v348 = vunpack.c.l.b16 %v78
  %v349 = vunpack.c.l.b16 %v79
  %v350 = vunpack.c.l.b16 %v80
  %v351 = vunpack.c.l.b16 %v81
  %v352 = vunpack.c.l.b16 %v82
  %v353 = vunpack.c.l.b16 %v83
  %v354 = vunpack.c.l.b16 %v84
  %v355 = vunpack.c.l.b16 %v85
  %v356 = vunpack.c.l.b16 %v86
  %v357 = vunpack.c.l.b16 %v87
  %v358 = vunpack.c.l.b16 %v88
  %v359 = vunpack.c.l.b16 %v89
  %v360 = vunpack.c.l.b16 %v90
  %v361 = vunpack.c.l.b16 %v91
  %v362 = vunpack.c.l.b16 %v92
  %v363 = vunpack.c.l.b16 %v93
  %v364 = vunpack.c.l.b16 %v94
  %v365 = vunpack.c.l.b16 %v95
  %v366 = vunpack.c.l.b16 %v96
  %v367 = vunpack.c.l.b16 %v97
  %v368 = vunpack.c.l.b16 %v98
  %v369 = vunpack.c.l.b16 %v99
  %v370 = vunpack.c.l.b16 %v100
  %v371 = vunpack.c.l.b16 %v101
  %v372 = vunpack.c.l.b16 %v102
  %v373 = vunpack.c.l.b16 %v103
  %v374 = vunpack.c.l.b16 %v104
  %v375 = vunpack.c.l.b16 %v105
  %v376 = vunpack.c.l.b16 %v106
  %v377 = vunpack.c.l.b16 %v107
  %v378 = vunpack.c.l.b16 %v108
  %v379 = vunpack.c.l.b16 %v109
  %v380 = vunpack.c.l.b16 %v110
  %v381 = vunpack.c.l.b16 %v111
  %v382 = vunpack.c.l.b16 %v112
  %v383 = vunpack.c.l.b16 %v113
  %v384 = vunpack.c.l.b16 %v114
  %v385 = vunpack.c.l.b16 %v115
  %v386 = vunpack.c.l.b16 %v116
  %v387 = vunpack.c.l.b16 %v117
  %v388 = vunpack.c.l.b16 %v118
  %v389 = vunpack.c.l.b16 %v119
  %v390 = vunpack.c.l.b16 %v120
  %v391 = vunpack.c.l.b16 %v121
  %v392 = vunpack.c.l.b16 %v122
  %v393 = vunpack.c.l.b16 %v123
  %v394 = vunpack.c.l.b16 %v124
  %v395 = vunpack.c.l.b16 %v125
  %v396 = vunpack.c.l.b16 %v126
  %v397 = vunpack.c.l.b16 %v127
  %v398 = vunpack.c.l.b16 %v128
  %v399 = vunpack.c.l.b16 %v129
  %v400 = vunpack.c.l.b16 %v130
  %v401 = vunpack.c.l.b16 %v131
  %v402 = vunpack.c.l.b16 %v132
  %v403 = vunpack.c.l.b16 %v133
  %v404 = vunpack.c.l.b16 %v134
  %v405 = vunpack.c.l.b16 %v135
  %v406 = vunpack.c.l.b16 %v136
  %v407 = vunpack.c.l.b16 %v137
  %v408 = vunpack.c.l.b16 %v138
  %v409 = vunpack.c.l.b16 %v139
  %v410 = vunpack.c.l.b16 %v140
  %v411 = vunpack.c.l.b16 %v141
  %v412 = vunpack.c.l.b16 %v142
  %v413 = vpack.c.b16 %v286, %v285
  %v414 = vpack.c.b16 %v288, %v287
  %v415 = vpack.c.b16 %v290, %v289
  %v416 = vpack.c.b16 %v292, %v291
  %v417 = vpack.c.b16 %v294, %v293
  %v418 = vpack.c.b16 %v296, %v295
  %v419 = vpack.c.b16 %v298, %v297
  %v420 = vpack.c.b16 %v300, %v299
  %v421 = vpack.c.b16 %v302, %v301
  %v422 = vpack.c.b16 %v304, %v303
  %v423 = vpack.c.b16 %v306, %v305
  %v424 = vpack.c.b16 %v308, %v307
  %v425 = vpack.c.b16 %v310, %v309
  %v426 = vpack.c.b16 %v312, %v311
  %v427 = vpack.c.b16 %v314, %v313
  %v428 = vpack.c.b16 %v316, %v315
  %v429 = vpack.c.b16 %v318, %v317
  %v430 = vpack.c.b16 %v320, %v319
  %v431 = vpack.c.b16 %v322, %v321
  %v432 = vpack.c.b16 %v324, %v323
  %v433 = vpack.c.b16 %v326, %v325
  %v434 = vpack.c.b16 %v328, %v327
  %v435 = vpack.c.b16 %v330, %v329
  %v436 = vpack.c.b16 %v332, %v331
  %v437 = vpack.c.b16 %v334, %v333
  %v438 = vpack.c.b16 %v336, %v335
  %v439 = vpack.c.b16 %v338, %v337
  %v440 = vpack.c.b16 %v340, %v339
  %v441 = vpack.c.b16 %v342, %v341
  %v442 = vpack.c.b16 %v344, %v343
  %v443 = vpack.c.b16 %v346, %v345
  %v444 = vpack.c.b16 %v348, %v347
  %v445 = vpack.c.b16 %v350, %v349
  %v446 = vpack.c.b16 %v352, %v351
  %v447 = vpack.c.b16 %v354, %v353
  %v448 = vpack.c.b16 %v356, %v355
  %v449 = vpack.c.b16 %v358, %v357
  %v450 = vpack.c.b16 %v360, %v359
  %v451 = vpack.c.b16 %v362, %v361
  %v452 = vpack.c.b16 %v364, %v363
  %v453 = vpack.c.b16 %v366, %v365
  %v454 = vpack.c.b16 %v368, %v367
  %v455 = vpack.c.b16 %v370, %v369
  %v456 = vpack.c.b16 %v372, %v371
  %v457 = vpack.c.b16 %v374, %v373
  %v458 = vpack.c.b16 %v376, %v375
  %v459 = vpack.c.b16 %v378, %v377
  %v460 = vpack.c.b16 %v380, %v379
  %v461 = vpack.c.b16 %v382, %v381
  %v462 = vpack.c.b16 %v384, %v383
  %v463 = vpack.c.b16 %v386, %v385
  %v464 = vpack.c.b16 %v388, %v387
  %v465 = vpack.c.b16 %v390, %v389
  %v466 = vpack.c.b16 %v392, %v391
  %v467 = vpack.c.b16 %v394, %v393
  %v468 = vpack.c.b16 %v396, %v395
  %v469 = vpack.c.b16 %v398, %v397
  %v470 = vpack.c.b16 %v400, %v399
  %v471 = vpack.c.b16 %v402, %v401
  %v472 = vpack.c.b16 %v404, %v403
  %v473 = vpack.c.b16 %v406, %v405
  %v474 = vpack.c.b16 %v408, %v407
  %v475 = vpack.c.b16 %v410, %v409
  %v476 = vpack.c.b16 %v412, %v411
  %v491 = vunpack.c.l.b16 %v143
  %v492 = vunpack.c.l.b16 %v144
  %v493 = vunpack.c.l.b16 %v145
  %v494 = vunpack.c.l.b16 %v146
  %v495 = vunpack.c.l.b16 %v147
  %v496 = vunpack.c.l.b16 %v148
  %v497 = vunpack.c.l.b16 %v149
  %v498 = vunpack.c.l.b16 %v150
  %v499 = vunpack.c.l.b16 %v151
  %v500 = vunpack.c.l.b16 %v152
  %v501 = vunpack.c.l.b16 %v153
  %v502 = vunpack.c.l.b16 %v154
  %v503 = vunpack.c.l.b16 %v155
  %v504 = vunpack.c.l.b16 %v156
  %v505 = vpack.c.b16 %v492, %v491
  %v506 = vpack.c.b16 %v494, %v493
  %v507 = vpack.c.b16 %v496, %v495
  %v508 = vpack.c.b16 %v498, %v497
  %v509 = vpack.c.b16 %v500, %v499
  %v510 = vpack.c.b16 %v502, %v501
  %v511 = vpack.c.b16 %v504, %v503
  %vm518 = vcmask 883712
  %v520 = vsel %vm518, %v413, 0
  %v523 = vsel %vm518, %v414, 0
  %v526 = vsel %vm518, %v415, 0
  %v529 = vsel %vm518, %v416, 0
  %v532 = vsel %vm518, %v417, 0
  %v535 = vsel %vm518, %v418, 0
  %v538 = vsel %vm518, %v419, 0
  %v541 = vsel %vm518, %v420, 0
  %v544 = vsel %vm518, %v421, 0
  %v547 = vsel %vm518, %v422, 0
  %v550 = vsel %vm518, %v423, 0
  %v553 = vsel %vm518, %v424, 0
  %v556 = vsel %vm518, %v425, 0
  %v559 = vsel %vm518, %v426, 0
  %v562 = vsel %vm518, %v427, 0
  %v565 = vsel %vm518, %v428, 0
  %v568 = vsel %vm518, %v429, 0
  %v571 = vsel %vm518, %v430, 0
  %v574 = vsel %vm518, %v431, 0
  %v577 = vsel %vm518, %v432, 0
  %v580 = vsel %vm518, %v433, 0
  %v583 = vsel %vm518, %v434, 0
  %v586 = vsel %vm518, %v435, 0
  %v589 = vsel %vm518, %v436, 0
  %v592 = vsel %vm518, %v437, 0
  %v595 = vsel %vm518, %v438, 0
  %v598 = vsel %vm518, %v439, 0
  %v601 = vsel %vm518, %v440, 0
  %v604 = vsel %vm518, %v441, 0
  %v607 = vsel %vm518, %v442, 0
  %v610 = vsel %vm518, %v443, 0
  %v613 = vsel %vm518, %v444, 0
  %v616 = vsel %vm518, %v445, 0
  %v619 = vsel %vm518, %v446, 0
  %v622 = vsel %vm518, %v447, 0
  %v625 = vsel %vm518, %v448, 0
  %v628 = vsel %vm518, %v449, 0
  %v631 = vsel %vm518, %v450, 0
  %v634 = vsel %vm518, %v451, 0
  %v637 = vsel %vm518, %v452, 0
  %v640 = vsel %vm518, %v453, 0
  %v643 = vsel %vm518, %v454, 0
  %v646 = vsel %vm518, %v455, 0
  %v649 = vsel %vm518, %v456, 0
  %v652 = vsel %vm518, %v457, 0
  %v655 = vsel %vm518, %v458, 0
  %v658 = vsel %vm518, %v459, 0
  %v661 = vsel %vm518, %v460, 0
  %v664 = vsel %vm518, %v461, 0
  %v667 = vsel %vm518, %v462, 0
  %v670 = vsel %vm518, %v463, 0
  %v673 = vsel %vm518, %v464, 0
  %v676 = vsel %vm518, %v465, 0
  %v679 = vsel %vm518, %v466, 0
  %v682 = vsel %vm518, %v467, 0
  %v685 = vsel %vm518, %v468, 0
  %v688 = vsel %vm518, %v469, 0
  %v691 = vsel %vm518, %v470, 0
  %v694 = vsel %vm518, %v471, 0
  %v697 = vsel %vm518, %v472, 0
  %v700 = vsel %vm518, %v473, 0
  %v703 = vsel %vm518, %v474, 0
  %v706 = vsel %vm518, %v475, 0
  %v709 = vsel %vm518, %v476, 0
  %vm711 = vcmask 1045504
  %v713 = vsel %vm711, %v511, 0
  %715 = vmatpush.bf16.msra.mxu0 0
  %716 = vmatpush.bf16.msra.mxu0 %v713
  %717 = vmatpush.bf16.msra.mxu0 %v510
  %718 = vmatpush.bf16.msra.mxu0 %v509
  %719 = vmatpush.bf16.msra.mxu0 %v508
  %720 = vmatpush.bf16.msra.mxu0 %v507
  %721 = vmatpush.bf16.msra.mxu0 %v506
  %722 = vmatpush.bf16.msra.mxu0 %v505
  %723 = vmatmul.bf16.gmra.mxu0 %v520
  %v724 = vpop.f32.mrf.mxu0
  %v725 = vadd.f32 0.0, %v724
  %v726 = vpop.f32.mrf.mxu0
  %v727 = vadd.f32 0.0, %v726
  %728 = vmatmul.bf16.gmra.mxu0 %v523
  %v729 = vpop.f32.mrf.mxu0
  %v730 = vadd.f32 0.0, %v729
  %v731 = vpop.f32.mrf.mxu0
  %v732 = vadd.f32 0.0, %v731
  %733 = vmatmul.bf16.gmra.mxu0 %v526
  %v734 = vpop.f32.mrf.mxu0
  %v735 = vadd.f32 0.0, %v734
  %v736 = vpop.f32.mrf.mxu0
  %v737 = vadd.f32 0.0, %v736
  %738 = vmatmul.bf16.gmra.mxu0 %v529
  %v739 = vpop.f32.mrf.mxu0
  %v740 = vadd.f32 0.0, %v739
  %v741 = vpop.f32.mrf.mxu0
  %v742 = vadd.f32 0.0, %v741
  %743 = vmatmul.bf16.gmra.mxu0 %v532
  %v744 = vpop.f32.mrf.mxu0
  %v745 = vadd.f32 0.0, %v744
  %v746 = vpop.f32.mrf.mxu0
  %v747 = vadd.f32 0.0, %v746
  %748 = vmatmul.bf16.gmra.mxu0 %v535
  %v749 = vpop.f32.mrf.mxu0
  %v750 = vadd.f32 0.0, %v749
  %v751 = vpop.f32.mrf.mxu0
  %v752 = vadd.f32 0.0, %v751
  %753 = vmatmul.bf16.gmra.mxu0 %v538
  %v754 = vpop.f32.mrf.mxu0
  %v755 = vadd.f32 0.0, %v754
  %v756 = vpop.f32.mrf.mxu0
  %v757 = vadd.f32 0.0, %v756
  %758 = vmatmul.bf16.gmra.mxu0 %v541
  %v759 = vpop.f32.mrf.mxu0
  %v760 = vadd.f32 0.0, %v759
  %v761 = vpop.f32.mrf.mxu0
  %v762 = vadd.f32 0.0, %v761
  %763 = vmatmul.bf16.gmra.mxu0 %v544
  %v764 = vpop.f32.mrf.mxu0
  %v765 = vadd.f32 0.0, %v764
  %v766 = vpop.f32.mrf.mxu0
  %v767 = vadd.f32 0.0, %v766
  %768 = vmatmul.bf16.gmra.mxu0 %v547
  %v769 = vpop.f32.mrf.mxu0
  %v770 = vadd.f32 0.0, %v769
  %v771 = vpop.f32.mrf.mxu0
  %v772 = vadd.f32 0.0, %v771
  %773 = vmatmul.bf16.gmra.mxu0 %v550
  %v774 = vpop.f32.mrf.mxu0
  %v775 = vadd.f32 0.0, %v774
  %v776 = vpop.f32.mrf.mxu0
  %v777 = vadd.f32 0.0, %v776
  %778 = vmatmul.bf16.gmra.mxu0 %v553
  %v779 = vpop.f32.mrf.mxu0
  %v780 = vadd.f32 0.0, %v779
  %v781 = vpop.f32.mrf.mxu0
  %v782 = vadd.f32 0.0, %v781
  %783 = vmatmul.bf16.gmra.mxu0 %v556
  %v784 = vpop.f32.mrf.mxu0
  %v785 = vadd.f32 0.0, %v784
  %v786 = vpop.f32.mrf.mxu0
  %v787 = vadd.f32 0.0, %v786
  %788 = vmatmul.bf16.gmra.mxu0 %v559
  %v789 = vpop.f32.mrf.mxu0
  %v790 = vadd.f32 0.0, %v789
  %v791 = vpop.f32.mrf.mxu0
  %v792 = vadd.f32 0.0, %v791
  %793 = vmatmul.bf16.gmra.mxu0 %v562
  %v794 = vpop.f32.mrf.mxu0
  %v795 = vadd.f32 0.0, %v794
  %v796 = vpop.f32.mrf.mxu0
  %v797 = vadd.f32 0.0, %v796
  %798 = vmatmul.bf16.gmra.mxu0 %v565
  %v799 = vpop.f32.mrf.mxu0
  %v800 = vadd.f32 0.0, %v799
  %v801 = vpop.f32.mrf.mxu0
  %v802 = vadd.f32 0.0, %v801
  %803 = vmatmul.bf16.gmra.mxu0 %v568
  %v804 = vpop.f32.mrf.mxu0
  %v805 = vadd.f32 0.0, %v804
  %v806 = vpop.f32.mrf.mxu0
  %v807 = vadd.f32 0.0, %v806
  %808 = vmatmul.bf16.gmra.mxu0 %v571
  %v809 = vpop.f32.mrf.mxu0
  %v810 = vadd.f32 0.0, %v809
  %v811 = vpop.f32.mrf.mxu0
  %v812 = vadd.f32 0.0, %v811
  %813 = vmatmul.bf16.gmra.mxu0 %v574
  %v814 = vpop.f32.mrf.mxu0
  %v815 = vadd.f32 0.0, %v814
  %v816 = vpop.f32.mrf.mxu0
  %v817 = vadd.f32 0.0, %v816
  %818 = vmatmul.bf16.gmra.mxu0 %v577
  %v819 = vpop.f32.mrf.mxu0
  %v820 = vadd.f32 0.0, %v819
  %v821 = vpop.f32.mrf.mxu0
  %v822 = vadd.f32 0.0, %v821
  %823 = vmatmul.bf16.gmra.mxu0 %v580
  %v824 = vpop.f32.mrf.mxu0
  %v825 = vadd.f32 0.0, %v824
  %v826 = vpop.f32.mrf.mxu0
  %v827 = vadd.f32 0.0, %v826
  %828 = vmatmul.bf16.gmra.mxu0 %v583
  %v829 = vpop.f32.mrf.mxu0
  %v830 = vadd.f32 0.0, %v829
  %v831 = vpop.f32.mrf.mxu0
  %v832 = vadd.f32 0.0, %v831
  %833 = vmatmul.bf16.gmra.mxu0 %v586
  %v834 = vpop.f32.mrf.mxu0
  %v835 = vadd.f32 0.0, %v834
  %v836 = vpop.f32.mrf.mxu0
  %v837 = vadd.f32 0.0, %v836
  %838 = vmatmul.bf16.gmra.mxu0 %v589
  %v839 = vpop.f32.mrf.mxu0
  %v840 = vadd.f32 0.0, %v839
  %v841 = vpop.f32.mrf.mxu0
  %v842 = vadd.f32 0.0, %v841
  %843 = vmatmul.bf16.gmra.mxu0 %v592
  %v844 = vpop.f32.mrf.mxu0
  %v845 = vadd.f32 0.0, %v844
  %v846 = vpop.f32.mrf.mxu0
  %v847 = vadd.f32 0.0, %v846
  %848 = vmatmul.bf16.gmra.mxu0 %v595
  %v849 = vpop.f32.mrf.mxu0
  %v850 = vadd.f32 0.0, %v849
  %v851 = vpop.f32.mrf.mxu0
  %v852 = vadd.f32 0.0, %v851
  %853 = vmatmul.bf16.gmra.mxu0 %v598
  %v854 = vpop.f32.mrf.mxu0
  %v855 = vadd.f32 0.0, %v854
  %v856 = vpop.f32.mrf.mxu0
  %v857 = vadd.f32 0.0, %v856
  %858 = vmatmul.bf16.gmra.mxu0 %v601
  %v859 = vpop.f32.mrf.mxu0
  %v860 = vadd.f32 0.0, %v859
  %v861 = vpop.f32.mrf.mxu0
  %v862 = vadd.f32 0.0, %v861
  %863 = vmatmul.bf16.gmra.mxu0 %v604
  %v864 = vpop.f32.mrf.mxu0
  %v865 = vadd.f32 0.0, %v864
  %v866 = vpop.f32.mrf.mxu0
  %v867 = vadd.f32 0.0, %v866
  %868 = vmatmul.bf16.gmra.mxu0 %v607
  %v869 = vpop.f32.mrf.mxu0
  %v870 = vadd.f32 0.0, %v869
  %v871 = vpop.f32.mrf.mxu0
  %v872 = vadd.f32 0.0, %v871
  %873 = vmatmul.bf16.gmra.mxu0 %v610
  %v874 = vpop.f32.mrf.mxu0
  %v875 = vadd.f32 0.0, %v874
  %v876 = vpop.f32.mrf.mxu0
  %v877 = vadd.f32 0.0, %v876
  %878 = vmatmul.bf16.gmra.mxu0 %v613
  %v879 = vpop.f32.mrf.mxu0
  %v880 = vadd.f32 0.0, %v879
  %v881 = vpop.f32.mrf.mxu0
  %v882 = vadd.f32 0.0, %v881
  %883 = vmatmul.bf16.gmra.mxu0 %v616
  %v884 = vpop.f32.mrf.mxu0
  %v885 = vadd.f32 0.0, %v884
  %v886 = vpop.f32.mrf.mxu0
  %v887 = vadd.f32 0.0, %v886
  %888 = vmatmul.bf16.gmra.mxu0 %v619
  %v889 = vpop.f32.mrf.mxu0
  %v890 = vadd.f32 0.0, %v889
  %v891 = vpop.f32.mrf.mxu0
  %v892 = vadd.f32 0.0, %v891
  %893 = vmatmul.bf16.gmra.mxu0 %v622
  %v894 = vpop.f32.mrf.mxu0
  %v895 = vadd.f32 0.0, %v894
  %v896 = vpop.f32.mrf.mxu0
  %v897 = vadd.f32 0.0, %v896
  %898 = vmatmul.bf16.gmra.mxu0 %v625
  %v899 = vpop.f32.mrf.mxu0
  %v900 = vadd.f32 0.0, %v899
  %v901 = vpop.f32.mrf.mxu0
  %v902 = vadd.f32 0.0, %v901
  %903 = vmatmul.bf16.gmra.mxu0 %v628
  %v904 = vpop.f32.mrf.mxu0
  %v905 = vadd.f32 0.0, %v904
  %v906 = vpop.f32.mrf.mxu0
  %v907 = vadd.f32 0.0, %v906
  %908 = vmatmul.bf16.gmra.mxu0 %v631
  %v909 = vpop.f32.mrf.mxu0
  %v910 = vadd.f32 0.0, %v909
  %v911 = vpop.f32.mrf.mxu0
  %v912 = vadd.f32 0.0, %v911
  %913 = vmatmul.bf16.gmra.mxu0 %v634
  %v914 = vpop.f32.mrf.mxu0
  %v915 = vadd.f32 0.0, %v914
  %v916 = vpop.f32.mrf.mxu0
  %v917 = vadd.f32 0.0, %v916
  %918 = vmatmul.bf16.gmra.mxu0 %v637
  %v919 = vpop.f32.mrf.mxu0
  %v920 = vadd.f32 0.0, %v919
  %v921 = vpop.f32.mrf.mxu0
  %v922 = vadd.f32 0.0, %v921
  %923 = vmatmul.bf16.gmra.mxu0 %v640
  %v924 = vpop.f32.mrf.mxu0
  %v925 = vadd.f32 0.0, %v924
  %v926 = vpop.f32.mrf.mxu0
  %v927 = vadd.f32 0.0, %v926
  %928 = vmatmul.bf16.gmra.mxu0 %v643
  %v929 = vpop.f32.mrf.mxu0
  %v930 = vadd.f32 0.0, %v929
  %v931 = vpop.f32.mrf.mxu0
  %v932 = vadd.f32 0.0, %v931
  %933 = vmatmul.bf16.gmra.mxu0 %v646
  %v934 = vpop.f32.mrf.mxu0
  %v935 = vadd.f32 0.0, %v934
  %v936 = vpop.f32.mrf.mxu0
  %v937 = vadd.f32 0.0, %v936
  %938 = vmatmul.bf16.gmra.mxu0 %v649
  %v939 = vpop.f32.mrf.mxu0
  %v940 = vadd.f32 0.0, %v939
  %v941 = vpop.f32.mrf.mxu0
  %v942 = vadd.f32 0.0, %v941
  %943 = vmatmul.bf16.gmra.mxu0 %v652
  %v944 = vpop.f32.mrf.mxu0
  %v945 = vadd.f32 0.0, %v944
  %v946 = vpop.f32.mrf.mxu0
  %v947 = vadd.f32 0.0, %v946
  %948 = vmatmul.bf16.gmra.mxu0 %v655
  %v949 = vpop.f32.mrf.mxu0
  %v950 = vadd.f32 0.0, %v949
  %v951 = vpop.f32.mrf.mxu0
  %v952 = vadd.f32 0.0, %v951
  %953 = vmatmul.bf16.gmra.mxu0 %v658
  %v954 = vpop.f32.mrf.mxu0
  %v955 = vadd.f32 0.0, %v954
  %v956 = vpop.f32.mrf.mxu0
  %v957 = vadd.f32 0.0, %v956
  %958 = vmatmul.bf16.gmra.mxu0 %v661
  %v959 = vpop.f32.mrf.mxu0
  %v960 = vadd.f32 0.0, %v959
  %v961 = vpop.f32.mrf.mxu0
  %v962 = vadd.f32 0.0, %v961
  %963 = vmatmul.bf16.gmra.mxu0 %v664
  %v964 = vpop.f32.mrf.mxu0
  %v965 = vadd.f32 0.0, %v964
  %v966 = vpop.f32.mrf.mxu0
  %v967 = vadd.f32 0.0, %v966
  %968 = vmatmul.bf16.gmra.mxu0 %v667
  %v969 = vpop.f32.mrf.mxu0
  %v970 = vadd.f32 0.0, %v969
  %v971 = vpop.f32.mrf.mxu0
  %v972 = vadd.f32 0.0, %v971
  %973 = vmatmul.bf16.gmra.mxu0 %v670
  %v974 = vpop.f32.mrf.mxu0
  %v975 = vadd.f32 0.0, %v974
  %v976 = vpop.f32.mrf.mxu0
  %v977 = vadd.f32 0.0, %v976
  %978 = vmatmul.bf16.gmra.mxu0 %v673
  %v979 = vpop.f32.mrf.mxu0
  %v980 = vadd.f32 0.0, %v979
  %v981 = vpop.f32.mrf.mxu0
  %v982 = vadd.f32 0.0, %v981
  %983 = vmatmul.bf16.gmra.mxu0 %v676
  %v984 = vpop.f32.mrf.mxu0
  %v985 = vadd.f32 0.0, %v984
  %v986 = vpop.f32.mrf.mxu0
  %v987 = vadd.f32 0.0, %v986
  %988 = vmatmul.bf16.gmra.mxu0 %v679
  %v989 = vpop.f32.mrf.mxu0
  %v990 = vadd.f32 0.0, %v989
  %v991 = vpop.f32.mrf.mxu0
  %v992 = vadd.f32 0.0, %v991
  %993 = vmatmul.bf16.gmra.mxu0 %v682
  %v994 = vpop.f32.mrf.mxu0
  %v995 = vadd.f32 0.0, %v994
  %v996 = vpop.f32.mrf.mxu0
  %v997 = vadd.f32 0.0, %v996
  %998 = vmatmul.bf16.gmra.mxu0 %v685
  %v999 = vpop.f32.mrf.mxu0
  %v1000 = vadd.f32 0.0, %v999
  %v1001 = vpop.f32.mrf.mxu0
  %v1002 = vadd.f32 0.0, %v1001
  %1003 = vmatmul.bf16.gmra.mxu0 %v688
  %v1004 = vpop.f32.mrf.mxu0
  %v1005 = vadd.f32 0.0, %v1004
  %v1006 = vpop.f32.mrf.mxu0
  %v1007 = vadd.f32 0.0, %v1006
  %1008 = vmatmul.bf16.gmra.mxu0 %v691
  %v1009 = vpop.f32.mrf.mxu0
  %v1010 = vadd.f32 0.0, %v1009
  %v1011 = vpop.f32.mrf.mxu0
  %v1012 = vadd.f32 0.0, %v1011
  %1013 = vmatmul.bf16.gmra.mxu0 %v694
  %v1014 = vpop.f32.mrf.mxu0
  %v1015 = vadd.f32 0.0, %v1014
  %v1016 = vpop.f32.mrf.mxu0
  %v1017 = vadd.f32 0.0, %v1016
  %1018 = vmatmul.bf16.gmra.mxu0 %v697
  %v1019 = vpop.f32.mrf.mxu0
  %v1020 = vadd.f32 0.0, %v1019
  %v1021 = vpop.f32.mrf.mxu0
  %v1022 = vadd.f32 0.0, %v1021
  %1023 = vmatmul.bf16.gmra.mxu0 %v700
  %v1024 = vpop.f32.mrf.mxu0
  %v1025 = vadd.f32 0.0, %v1024
  %v1026 = vpop.f32.mrf.mxu0
  %v1027 = vadd.f32 0.0, %v1026
  %1028 = vmatmul.bf16.gmra.mxu0 %v703
  %v1029 = vpop.f32.mrf.mxu0
  %v1030 = vadd.f32 0.0, %v1029
  %v1031 = vpop.f32.mrf.mxu0
  %v1032 = vadd.f32 0.0, %v1031
  %1033 = vmatmul.bf16.gmra.mxu0 %v706
  %v1034 = vpop.f32.mrf.mxu0
  %v1035 = vadd.f32 0.0, %v1034
  %v1036 = vpop.f32.mrf.mxu0
  %v1037 = vadd.f32 0.0, %v1036
  %1038 = vmatmul.bf16.gmra.mxu0 %v709
  %v1039 = vpop.f32.mrf.mxu0
  %v1040 = vadd.f32 0.0, %v1039
  %v1041 = vpop.f32.mrf.mxu0
  %v1042 = vadd.f32 0.0, %v1041
  %1043 = vdwg.mxu0
  %v1044 = vpack.c.bf16 %v725, %v725
  %v1045 = vpack.c.bf16 %v727, %v727
  %v1046 = vpack.c.bf16 %v730, %v730
  %v1047 = vpack.c.bf16 %v732, %v732
  %v1048 = vpack.c.bf16 %v735, %v735
  %v1049 = vpack.c.bf16 %v737, %v737
  %v1050 = vpack.c.bf16 %v740, %v740
  %v1051 = vpack.c.bf16 %v742, %v742
  %v1052 = vpack.c.bf16 %v745, %v745
  %v1053 = vpack.c.bf16 %v747, %v747
  %v1054 = vpack.c.bf16 %v750, %v750
  %v1055 = vpack.c.bf16 %v752, %v752
  %v1056 = vpack.c.bf16 %v755, %v755
  %v1057 = vpack.c.bf16 %v757, %v757
  %v1058 = vpack.c.bf16 %v760, %v760
  %v1059 = vpack.c.bf16 %v762, %v762
  %v1060 = vpack.c.bf16 %v765, %v765
  %v1061 = vpack.c.bf16 %v767, %v767
  %v1062 = vpack.c.bf16 %v770, %v770
  %v1063 = vpack.c.bf16 %v772, %v772
  %v1064 = vpack.c.bf16 %v775, %v775
  %v1065 = vpack.c.bf16 %v777, %v777
  %v1066 = vpack.c.bf16 %v780, %v780
  %v1067 = vpack.c.bf16 %v782, %v782
  %v1068 = vpack.c.bf16 %v785, %v785
  %v1069 = vpack.c.bf16 %v787, %v787
  %v1070 = vpack.c.bf16 %v790, %v790
  %v1071 = vpack.c.bf16 %v792, %v792
  %v1072 = vpack.c.bf16 %v795, %v795
  %v1073 = vpack.c.bf16 %v797, %v797
  %v1074 = vpack.c.bf16 %v800, %v800
  %v1075 = vpack.c.bf16 %v802, %v802
  %v1076 = vpack.c.bf16 %v805, %v805
  %v1077 = vpack.c.bf16 %v807, %v807
  %v1078 = vpack.c.bf16 %v810, %v810
  %v1079 = vpack.c.bf16 %v812, %v812
  %v1080 = vpack.c.bf16 %v815, %v815
  %v1081 = vpack.c.bf16 %v817, %v817
  %v1082 = vpack.c.bf16 %v820, %v820
  %v1083 = vpack.c.bf16 %v822, %v822
  %v1084 = vpack.c.bf16 %v825, %v825
  %v1085 = vpack.c.bf16 %v827, %v827
  %v1086 = vpack.c.bf16 %v830, %v830
  %v1087 = vpack.c.bf16 %v832, %v832
  %v1088 = vpack.c.bf16 %v835, %v835
  %v1089 = vpack.c.bf16 %v837, %v837
  %v1090 = vpack.c.bf16 %v840, %v840
  %v1091 = vpack.c.bf16 %v842, %v842
  %v1092 = vpack.c.bf16 %v845, %v845
  %v1093 = vpack.c.bf16 %v847, %v847
  %v1094 = vpack.c.bf16 %v850, %v850
  %v1095 = vpack.c.bf16 %v852, %v852
  %v1096 = vpack.c.bf16 %v855, %v855
  %v1097 = vpack.c.bf16 %v857, %v857
  %v1098 = vpack.c.bf16 %v860, %v860
  %v1099 = vpack.c.bf16 %v862, %v862
  %v1100 = vpack.c.bf16 %v865, %v865
  %v1101 = vpack.c.bf16 %v867, %v867
  %v1102 = vpack.c.bf16 %v870, %v870
  %v1103 = vpack.c.bf16 %v872, %v872
  %v1104 = vpack.c.bf16 %v875, %v875
  %v1105 = vpack.c.bf16 %v877, %v877
  %v1106 = vpack.c.bf16 %v880, %v880
  %v1107 = vpack.c.bf16 %v882, %v882
  %v1108 = vpack.c.bf16 %v885, %v885
  %v1109 = vpack.c.bf16 %v887, %v887
  %v1110 = vpack.c.bf16 %v890, %v890
  %v1111 = vpack.c.bf16 %v892, %v892
  %v1112 = vpack.c.bf16 %v895, %v895
  %v1113 = vpack.c.bf16 %v897, %v897
  %v1114 = vpack.c.bf16 %v900, %v900
  %v1115 = vpack.c.bf16 %v902, %v902
  %v1116 = vpack.c.bf16 %v905, %v905
  %v1117 = vpack.c.bf16 %v907, %v907
  %v1118 = vpack.c.bf16 %v910, %v910
  %v1119 = vpack.c.bf16 %v912, %v912
  %v1120 = vpack.c.bf16 %v915, %v915
  %v1121 = vpack.c.bf16 %v917, %v917
  %v1122 = vpack.c.bf16 %v920, %v920
  %v1123 = vpack.c.bf16 %v922, %v922
  %v1124 = vpack.c.bf16 %v925, %v925
  %v1125 = vpack.c.bf16 %v927, %v927
  %v1126 = vpack.c.bf16 %v930, %v930
  %v1127 = vpack.c.bf16 %v932, %v932
  %v1128 = vpack.c.bf16 %v935, %v935
  %v1129 = vpack.c.bf16 %v937, %v937
  %v1130 = vpack.c.bf16 %v940, %v940
  %v1131 = vpack.c.bf16 %v942, %v942
  %v1132 = vpack.c.bf16 %v945, %v945
  %v1133 = vpack.c.bf16 %v947, %v947
  %v1134 = vpack.c.bf16 %v950, %v950
  %v1135 = vpack.c.bf16 %v952, %v952
  %v1136 = vpack.c.bf16 %v955, %v955
  %v1137 = vpack.c.bf16 %v957, %v957
  %v1138 = vpack.c.bf16 %v960, %v960
  %v1139 = vpack.c.bf16 %v962, %v962
  %v1140 = vpack.c.bf16 %v965, %v965
  %v1141 = vpack.c.bf16 %v967, %v967
  %v1142 = vpack.c.bf16 %v970, %v970
  %v1143 = vpack.c.bf16 %v972, %v972
  %v1144 = vpack.c.bf16 %v975, %v975
  %v1145 = vpack.c.bf16 %v977, %v977
  %v1146 = vpack.c.bf16 %v980, %v980
  %v1147 = vpack.c.bf16 %v982, %v982
  %v1148 = vpack.c.bf16 %v985, %v985
  %v1149 = vpack.c.bf16 %v987, %v987
  %v1150 = vpack.c.bf16 %v990, %v990
  %v1151 = vpack.c.bf16 %v992, %v992
  %v1152 = vpack.c.bf16 %v995, %v995
  %v1153 = vpack.c.bf16 %v997, %v997
  %v1154 = vpack.c.bf16 %v1000, %v1000
  %v1155 = vpack.c.bf16 %v1002, %v1002
  %v1156 = vpack.c.bf16 %v1005, %v1005
  %v1157 = vpack.c.bf16 %v1007, %v1007
  %v1158 = vpack.c.bf16 %v1010, %v1010
  %v1159 = vpack.c.bf16 %v1012, %v1012
  %v1160 = vpack.c.bf16 %v1015, %v1015
  %v1161 = vpack.c.bf16 %v1017, %v1017
  %v1162 = vpack.c.bf16 %v1020, %v1020
  %v1163 = vpack.c.bf16 %v1022, %v1022
  %v1164 = vpack.c.bf16 %v1025, %v1025
  %v1165 = vpack.c.bf16 %v1027, %v1027
  %v1166 = vpack.c.bf16 %v1030, %v1030
  %v1167 = vpack.c.bf16 %v1032, %v1032
  %v1168 = vpack.c.bf16 %v1035, %v1035
  %v1169 = vpack.c.bf16 %v1037, %v1037
  %v1170 = vpack.c.bf16 %v1040, %v1040
  %v1171 = vpack.c.bf16 %v1042, %v1042
  %vm1172 = vcmask 27648
  %1173 = vst.msk [vmem:[%s2] sm:$0xf] %vm1172, %v1044
  %1174 = vst.msk [vmem:[%s2 + $0x4] sm:$0xf] %vm1172, %v1045
  %1175 = vst.msk [vmem:[%s2 + $0x8] sm:$0xf] %vm1172, %v1046
  %1176 = vst.msk [vmem:[%s2 + $0xc] sm:$0xf] %vm1172, %v1047
  %1177 = vst.msk [vmem:[%s2 + $0x10] sm:$0xf] %vm1172, %v1048
  %1178 = vst.msk [vmem:[%s2 + $0x14] sm:$0xf] %vm1172, %v1049
  %1179 = vst.msk [vmem:[%s2 + $0x18] sm:$0xf] %vm1172, %v1050
  %1180 = vst.msk [vmem:[%s2 + $0x1c] sm:$0xf] %vm1172, %v1051
  %1181 = vst.msk [vmem:[%s2 + $0x20] sm:$0xf] %vm1172, %v1052
  %1182 = vst.msk [vmem:[%s2 + $0x24] sm:$0xf] %vm1172, %v1053
  %1183 = vst.msk [vmem:[%s2 + $0x28] sm:$0xf] %vm1172, %v1054
  %1184 = vst.msk [vmem:[%s2 + $0x2c] sm:$0xf] %vm1172, %v1055
  %1185 = vst.msk [vmem:[%s2 + $0x30] sm:$0xf] %vm1172, %v1056
  %1186 = vst.msk [vmem:[%s2 + $0x34] sm:$0xf] %vm1172, %v1057
  %1187 = vst.msk [vmem:[%s2 + $0x38] sm:$0xf] %vm1172, %v1058
  %1188 = vst.msk [vmem:[%s2 + $0x3c] sm:$0xf] %vm1172, %v1059
  %1189 = vst.msk [vmem:[%s2 + $0x40] sm:$0xf] %vm1172, %v1060
  %1190 = vst.msk [vmem:[%s2 + $0x44] sm:$0xf] %vm1172, %v1061
  %1191 = vst.msk [vmem:[%s2 + $0x48] sm:$0xf] %vm1172, %v1062
  %1192 = vst.msk [vmem:[%s2 + $0x4c] sm:$0xf] %vm1172, %v1063
  %1193 = vst.msk [vmem:[%s2 + $0x50] sm:$0xf] %vm1172, %v1064
  %1194 = vst.msk [vmem:[%s2 + $0x54] sm:$0xf] %vm1172, %v1065
  %1195 = vst.msk [vmem:[%s2 + $0x58] sm:$0xf] %vm1172, %v1066
  %1196 = vst.msk [vmem:[%s2 + $0x5c] sm:$0xf] %vm1172, %v1067
  %1197 = vst.msk [vmem:[%s2 + $0x60] sm:$0xf] %vm1172, %v1068
  %1198 = vst.msk [vmem:[%s2 + $0x64] sm:$0xf] %vm1172, %v1069
  %1199 = vst.msk [vmem:[%s2 + $0x68] sm:$0xf] %vm1172, %v1070
  %1200 = vst.msk [vmem:[%s2 + $0x6c] sm:$0xf] %vm1172, %v1071
  %1201 = vst.msk [vmem:[%s2 + $0x70] sm:$0xf] %vm1172, %v1072
  %1202 = vst.msk [vmem:[%s2 + $0x74] sm:$0xf] %vm1172, %v1073
  %1203 = vst.msk [vmem:[%s2 + $0x78] sm:$0xf] %vm1172, %v1074
  %1204 = vst.msk [vmem:[%s2 + $0x7c] sm:$0xf] %vm1172, %v1075
  %1205 = vst.msk [vmem:[%s2 + $0x80] sm:$0xf] %vm1172, %v1076
  %1206 = vst.msk [vmem:[%s2 + $0x84] sm:$0xf] %vm1172, %v1077
  %1207 = vst.msk [vmem:[%s2 + $0x88] sm:$0xf] %vm1172, %v1078
  %1208 = vst.msk [vmem:[%s2 + $0x8c] sm:$0xf] %vm1172, %v1079
  %1209 = vst.msk [vmem:[%s2 + $0x90] sm:$0xf] %vm1172, %v1080
  %1210 = vst.msk [vmem:[%s2 + $0x94] sm:$0xf] %vm1172, %v1081
  %1211 = vst.msk [vmem:[%s2 + $0x98] sm:$0xf] %vm1172, %v1082
  %1212 = vst.msk [vmem:[%s2 + $0x9c] sm:$0xf] %vm1172, %v1083
  %1213 = vst.msk [vmem:[%s2 + $0xa0] sm:$0xf] %vm1172, %v1084
  %1214 = vst.msk [vmem:[%s2 + $0xa4] sm:$0xf] %vm1172, %v1085
  %1215 = vst.msk [vmem:[%s2 + $0xa8] sm:$0xf] %vm1172, %v1086
  %1216 = vst.msk [vmem:[%s2 + $0xac] sm:$0xf] %vm1172, %v1087
  %1217 = vst.msk [vmem:[%s2 + $0xb0] sm:$0xf] %vm1172, %v1088
  %1218 = vst.msk [vmem:[%s2 + $0xb4] sm:$0xf] %vm1172, %v1089
  %1219 = vst.msk [vmem:[%s2 + $0xb8] sm:$0xf] %vm1172, %v1090
  %1220 = vst.msk [vmem:[%s2 + $0xbc] sm:$0xf] %vm1172, %v1091
  %1221 = vst.msk [vmem:[%s2 + $0xc0] sm:$0xf] %vm1172, %v1092
  %1222 = vst.msk [vmem:[%s2 + $0xc4] sm:$0xf] %vm1172, %v1093
  %1223 = vst.msk [vmem:[%s2 + $0xc8] sm:$0xf] %vm1172, %v1094
  %1224 = vst.msk [vmem:[%s2 + $0xcc] sm:$0xf] %vm1172, %v1095
  %1225 = vst.msk [vmem:[%s2 + $0xd0] sm:$0xf] %vm1172, %v1096
  %1226 = vst.msk [vmem:[%s2 + $0xd4] sm:$0xf] %vm1172, %v1097
  %1227 = vst.msk [vmem:[%s2 + $0xd8] sm:$0xf] %vm1172, %v1098
  %1228 = vst.msk [vmem:[%s2 + $0xdc] sm:$0xf] %vm1172, %v1099
  %1229 = vst.msk [vmem:[%s2 + $0xe0] sm:$0xf] %vm1172, %v1100
  %1230 = vst.msk [vmem:[%s2 + $0xe4] sm:$0xf] %vm1172, %v1101
  %1231 = vst.msk [vmem:[%s2 + $0xe8] sm:$0xf] %vm1172, %v1102
  %1232 = vst.msk [vmem:[%s2 + $0xec] sm:$0xf] %vm1172, %v1103
  %1233 = vst.msk [vmem:[%s2 + $0xf0] sm:$0xf] %vm1172, %v1104
  %1234 = vst.msk [vmem:[%s2 + $0xf4] sm:$0xf] %vm1172, %v1105
  %1235 = vst.msk [vmem:[%s2 + $0xf8] sm:$0xf] %vm1172, %v1106
  %1236 = vst.msk [vmem:[%s2 + $0xfc] sm:$0xf] %vm1172, %v1107
  %1237 = vst.msk [vmem:[%s2 + $0x100] sm:$0xf] %vm1172, %v1108
  %1238 = vst.msk [vmem:[%s2 + $0x104] sm:$0xf] %vm1172, %v1109
  %1239 = vst.msk [vmem:[%s2 + $0x108] sm:$0xf] %vm1172, %v1110
  %1240 = vst.msk [vmem:[%s2 + $0x10c] sm:$0xf] %vm1172, %v1111
  %1241 = vst.msk [vmem:[%s2 + $0x110] sm:$0xf] %vm1172, %v1112
  %1242 = vst.msk [vmem:[%s2 + $0x114] sm:$0xf] %vm1172, %v1113
  %1243 = vst.msk [vmem:[%s2 + $0x118] sm:$0xf] %vm1172, %v1114
  %1244 = vst.msk [vmem:[%s2 + $0x11c] sm:$0xf] %vm1172, %v1115
  %1245 = vst.msk [vmem:[%s2 + $0x120] sm:$0xf] %vm1172, %v1116
  %1246 = vst.msk [vmem:[%s2 + $0x124] sm:$0xf] %vm1172, %v1117
  %1247 = vst.msk [vmem:[%s2 + $0x128] sm:$0xf] %vm1172, %v1118
  %1248 = vst.msk [vmem:[%s2 + $0x12c] sm:$0xf] %vm1172, %v1119
  %1249 = vst.msk [vmem:[%s2 + $0x130] sm:$0xf] %vm1172, %v1120
  %1250 = vst.msk [vmem:[%s2 + $0x134] sm:$0xf] %vm1172, %v1121
  %1251 = vst.msk [vmem:[%s2 + $0x138] sm:$0xf] %vm1172, %v1122
  %1252 = vst.msk [vmem:[%s2 + $0x13c] sm:$0xf] %vm1172, %v1123
  %1253 = vst.msk [vmem:[%s2 + $0x140] sm:$0xf] %vm1172, %v1124
  %1254 = vst.msk [vmem:[%s2 + $0x144] sm:$0xf] %vm1172, %v1125
  %1255 = vst.msk [vmem:[%s2 + $0x148] sm:$0xf] %vm1172, %v1126
  %1256 = vst.msk [vmem:[%s2 + $0x14c] sm:$0xf] %vm1172, %v1127
  %1257 = vst.msk [vmem:[%s2 + $0x150] sm:$0xf] %vm1172, %v1128
  %1258 = vst.msk [vmem:[%s2 + $0x154] sm:$0xf] %vm1172, %v1129
  %1259 = vst.msk [vmem:[%s2 + $0x158] sm:$0xf] %vm1172, %v1130
  %1260 = vst.msk [vmem:[%s2 + $0x15c] sm:$0xf] %vm1172, %v1131
  %1261 = vst.msk [vmem:[%s2 + $0x160] sm:$0xf] %vm1172, %v1132
  %1262 = vst.msk [vmem:[%s2 + $0x164] sm:$0xf] %vm1172, %v1133
  %1263 = vst.msk [vmem:[%s2 + $0x168] sm:$0xf] %vm1172, %v1134
  %1264 = vst.msk [vmem:[%s2 + $0x16c] sm:$0xf] %vm1172, %v1135
  %1265 = vst.msk [vmem:[%s2 + $0x170] sm:$0xf] %vm1172, %v1136
  %1266 = vst.msk [vmem:[%s2 + $0x174] sm:$0xf] %vm1172, %v1137
  %1267 = vst.msk [vmem:[%s2 + $0x178] sm:$0xf] %vm1172, %v1138
  %1268 = vst.msk [vmem:[%s2 + $0x17c] sm:$0xf] %vm1172, %v1139
  %1269 = vst.msk [vmem:[%s2 + $0x180] sm:$0xf] %vm1172, %v1140
  %1270 = vst.msk [vmem:[%s2 + $0x184] sm:$0xf] %vm1172, %v1141
  %1271 = vst.msk [vmem:[%s2 + $0x188] sm:$0xf] %vm1172, %v1142
  %1272 = vst.msk [vmem:[%s2 + $0x18c] sm:$0xf] %vm1172, %v1143
  %1273 = vst.msk [vmem:[%s2 + $0x190] sm:$0xf] %vm1172, %v1144
  %1274 = vst.msk [vmem:[%s2 + $0x194] sm:$0xf] %vm1172, %v1145
  %1275 = vst.msk [vmem:[%s2 + $0x198] sm:$0xf] %vm1172, %v1146
  %1276 = vst.msk [vmem:[%s2 + $0x19c] sm:$0xf] %vm1172, %v1147
  %1277 = vst.msk [vmem:[%s2 + $0x1a0] sm:$0xf] %vm1172, %v1148
  %1278 = vst.msk [vmem:[%s2 + $0x1a4] sm:$0xf] %vm1172, %v1149
  %1279 = vst.msk [vmem:[%s2 + $0x1a8] sm:$0xf] %vm1172, %v1150
  %1280 = vst.msk [vmem:[%s2 + $0x1ac] sm:$0xf] %vm1172, %v1151
  %1281 = vst.msk [vmem:[%s2 + $0x1b0] sm:$0xf] %vm1172, %v1152
  %1282 = vst.msk [vmem:[%s2 + $0x1b4] sm:$0xf] %vm1172, %v1153
  %1283 = vst.msk [vmem:[%s2 + $0x1b8] sm:$0xf] %vm1172, %v1154
  %1284 = vst.msk [vmem:[%s2 + $0x1bc] sm:$0xf] %vm1172, %v1155
  %1285 = vst.msk [vmem:[%s2 + $0x1c0] sm:$0xf] %vm1172, %v1156
  %1286 = vst.msk [vmem:[%s2 + $0x1c4] sm:$0xf] %vm1172, %v1157
  %1287 = vst.msk [vmem:[%s2 + $0x1c8] sm:$0xf] %vm1172, %v1158
  %1288 = vst.msk [vmem:[%s2 + $0x1cc] sm:$0xf] %vm1172, %v1159
  %1289 = vst.msk [vmem:[%s2 + $0x1d0] sm:$0xf] %vm1172, %v1160
  %1290 = vst.msk [vmem:[%s2 + $0x1d4] sm:$0xf] %vm1172, %v1161
  %1291 = vst.msk [vmem:[%s2 + $0x1d8] sm:$0xf] %vm1172, %v1162
  %1292 = vst.msk [vmem:[%s2 + $0x1dc] sm:$0xf] %vm1172, %v1163
  %1293 = vst.msk [vmem:[%s2 + $0x1e0] sm:$0xf] %vm1172, %v1164
  %1294 = vst.msk [vmem:[%s2 + $0x1e4] sm:$0xf] %vm1172, %v1165
  %1295 = vst.msk [vmem:[%s2 + $0x1e8] sm:$0xf] %vm1172, %v1166
  %1296 = vst.msk [vmem:[%s2 + $0x1ec] sm:$0xf] %vm1172, %v1167
  %1297 = vst.msk [vmem:[%s2 + $0x1f0] sm:$0xf] %vm1172, %v1168
  %1298 = vst.msk [vmem:[%s2 + $0x1f4] sm:$0xf] %vm1172, %v1169
  %1299 = vst.msk [vmem:[%s2 + $0x1f8] sm:$0xf] %vm1172, %v1170
  %1300 = vst.msk [vmem:[%s2 + $0x1fc] sm:$0xf] %vm1172, %v1171
  %vm1301 = vcmask 31744
  %v1302 = vsel %vm1301, %v725, 0.0
  %v1303 = vsel %vm1301, %v727, 0.0
  %v1304 = vadd.f32 %v1302, %v1303
  %v1305 = vsel %vm1301, %v730, 0.0
  %v1306 = vadd.f32 %v1304, %v1305
  %v1307 = vsel %vm1301, %v732, 0.0
  %v1308 = vadd.f32 %v1306, %v1307
  %v1309 = vsel %vm1301, %v735, 0.0
  %v1310 = vadd.f32 %v1308, %v1309
  %v1311 = vsel %vm1301, %v737, 0.0
  %v1312 = vadd.f32 %v1310, %v1311
  %v1313 = vsel %vm1301, %v740, 0.0
  %v1314 = vadd.f32 %v1312, %v1313
  %v1315 = vsel %vm1301, %v742, 0.0
  %v1316 = vadd.f32 %v1314, %v1315
  %v1317 = vsel %vm1301, %v745, 0.0
  %v1318 = vadd.f32 %v1316, %v1317
  %v1319 = vsel %vm1301, %v747, 0.0
  %v1320 = vadd.f32 %v1318, %v1319
  %v1321 = vsel %vm1301, %v750, 0.0
  %v1322 = vadd.f32 %v1320, %v1321
  %v1323 = vsel %vm1301, %v752, 0.0
  %v1324 = vadd.f32 %v1322, %v1323
  %v1325 = vsel %vm1301, %v755, 0.0
  %v1326 = vadd.f32 %v1324, %v1325
  %v1327 = vsel %vm1301, %v757, 0.0
  %v1328 = vadd.f32 %v1326, %v1327
  %v1329 = vsel %vm1301, %v760, 0.0
  %v1330 = vadd.f32 %v1328, %v1329
  %v1331 = vsel %vm1301, %v762, 0.0
  %v1332 = vadd.f32 %v1330, %v1331
  %v1333 = vsel %vm1301, %v765, 0.0
  %v1334 = vadd.f32 %v1332, %v1333
  %v1335 = vsel %vm1301, %v767, 0.0
  %v1336 = vadd.f32 %v1334, %v1335
  %v1337 = vsel %vm1301, %v770, 0.0
  %v1338 = vadd.f32 %v1336, %v1337
  %v1339 = vsel %vm1301, %v772, 0.0
  %v1340 = vadd.f32 %v1338, %v1339
  %v1341 = vsel %vm1301, %v775, 0.0
  %v1342 = vadd.f32 %v1340, %v1341
  %v1343 = vsel %vm1301, %v777, 0.0
  %v1344 = vadd.f32 %v1342, %v1343
  %v1345 = vsel %vm1301, %v780, 0.0
  %v1346 = vadd.f32 %v1344, %v1345
  %v1347 = vsel %vm1301, %v782, 0.0
  %v1348 = vadd.f32 %v1346, %v1347
  %v1349 = vsel %vm1301, %v785, 0.0
  %v1350 = vadd.f32 %v1348, %v1349
  %v1351 = vsel %vm1301, %v787, 0.0
  %v1352 = vadd.f32 %v1350, %v1351
  %v1353 = vsel %vm1301, %v790, 0.0
  %v1354 = vadd.f32 %v1352, %v1353
  %v1355 = vsel %vm1301, %v792, 0.0
  %v1356 = vadd.f32 %v1354, %v1355
  %v1357 = vsel %vm1301, %v795, 0.0
  %v1358 = vadd.f32 %v1356, %v1357
  %v1359 = vsel %vm1301, %v797, 0.0
  %v1360 = vadd.f32 %v1358, %v1359
  %v1361 = vsel %vm1301, %v800, 0.0
  %v1362 = vadd.f32 %v1360, %v1361
  %v1363 = vsel %vm1301, %v802, 0.0
  %v1364 = vadd.f32 %v1362, %v1363
  %v1365 = vsel %vm1301, %v805, 0.0
  %v1366 = vadd.f32 %v1364, %v1365
  %v1367 = vsel %vm1301, %v807, 0.0
  %v1368 = vadd.f32 %v1366, %v1367
  %v1369 = vsel %vm1301, %v810, 0.0
  %v1370 = vadd.f32 %v1368, %v1369
  %v1371 = vsel %vm1301, %v812, 0.0
  %v1372 = vadd.f32 %v1370, %v1371
  %v1373 = vsel %vm1301, %v815, 0.0
  %v1374 = vadd.f32 %v1372, %v1373
  %v1375 = vsel %vm1301, %v817, 0.0
  %v1376 = vadd.f32 %v1374, %v1375
  %v1377 = vsel %vm1301, %v820, 0.0
  %v1378 = vadd.f32 %v1376, %v1377
  %v1379 = vsel %vm1301, %v822, 0.0
  %v1380 = vadd.f32 %v1378, %v1379
  %v1381 = vsel %vm1301, %v825, 0.0
  %v1382 = vadd.f32 %v1380, %v1381
  %v1383 = vsel %vm1301, %v827, 0.0
  %v1384 = vadd.f32 %v1382, %v1383
  %v1385 = vsel %vm1301, %v830, 0.0
  %v1386 = vadd.f32 %v1384, %v1385
  %v1387 = vsel %vm1301, %v832, 0.0
  %v1388 = vadd.f32 %v1386, %v1387
  %v1389 = vsel %vm1301, %v835, 0.0
  %v1390 = vadd.f32 %v1388, %v1389
  %v1391 = vsel %vm1301, %v837, 0.0
  %v1392 = vadd.f32 %v1390, %v1391
  %v1393 = vsel %vm1301, %v840, 0.0
  %v1394 = vadd.f32 %v1392, %v1393
  %v1395 = vsel %vm1301, %v842, 0.0
  %v1396 = vadd.f32 %v1394, %v1395
  %v1397 = vsel %vm1301, %v845, 0.0
  %v1398 = vadd.f32 %v1396, %v1397
  %v1399 = vsel %vm1301, %v847, 0.0
  %v1400 = vadd.f32 %v1398, %v1399
  %v1401 = vsel %vm1301, %v850, 0.0
  %v1402 = vadd.f32 %v1400, %v1401
  %v1403 = vsel %vm1301, %v852, 0.0
  %v1404 = vadd.f32 %v1402, %v1403
  %v1405 = vsel %vm1301, %v855, 0.0
  %v1406 = vadd.f32 %v1404, %v1405
  %v1407 = vsel %vm1301, %v857, 0.0
  %v1408 = vadd.f32 %v1406, %v1407
  %v1409 = vsel %vm1301, %v860, 0.0
  %v1410 = vadd.f32 %v1408, %v1409
  %v1411 = vsel %vm1301, %v862, 0.0
  %v1412 = vadd.f32 %v1410, %v1411
  %v1413 = vsel %vm1301, %v865, 0.0
  %v1414 = vadd.f32 %v1412, %v1413
  %v1415 = vsel %vm1301, %v867, 0.0
  %v1416 = vadd.f32 %v1414, %v1415
  %v1417 = vsel %vm1301, %v870, 0.0
  %v1418 = vadd.f32 %v1416, %v1417
  %v1419 = vsel %vm1301, %v872, 0.0
  %v1420 = vadd.f32 %v1418, %v1419
  %v1421 = vsel %vm1301, %v875, 0.0
  %v1422 = vadd.f32 %v1420, %v1421
  %v1423 = vsel %vm1301, %v877, 0.0
  %v1424 = vadd.f32 %v1422, %v1423
  %v1425 = vsel %vm1301, %v880, 0.0
  %v1426 = vadd.f32 %v1424, %v1425
  %v1427 = vsel %vm1301, %v882, 0.0
  %v1428 = vadd.f32 %v1426, %v1427
  %v1429 = vsel %vm1301, %v885, 0.0
  %v1430 = vadd.f32 %v1428, %v1429
  %v1431 = vsel %vm1301, %v887, 0.0
  %v1432 = vadd.f32 %v1430, %v1431
  %v1433 = vsel %vm1301, %v890, 0.0
  %v1434 = vadd.f32 %v1432, %v1433
  %v1435 = vsel %vm1301, %v892, 0.0
  %v1436 = vadd.f32 %v1434, %v1435
  %v1437 = vsel %vm1301, %v895, 0.0
  %v1438 = vadd.f32 %v1436, %v1437
  %v1439 = vsel %vm1301, %v897, 0.0
  %v1440 = vadd.f32 %v1438, %v1439
  %v1441 = vsel %vm1301, %v900, 0.0
  %v1442 = vadd.f32 %v1440, %v1441
  %v1443 = vsel %vm1301, %v902, 0.0
  %v1444 = vadd.f32 %v1442, %v1443
  %v1445 = vsel %vm1301, %v905, 0.0
  %v1446 = vadd.f32 %v1444, %v1445
  %v1447 = vsel %vm1301, %v907, 0.0
  %v1448 = vadd.f32 %v1446, %v1447
  %v1449 = vsel %vm1301, %v910, 0.0
  %v1450 = vadd.f32 %v1448, %v1449
  %v1451 = vsel %vm1301, %v912, 0.0
  %v1452 = vadd.f32 %v1450, %v1451
  %v1453 = vsel %vm1301, %v915, 0.0
  %v1454 = vadd.f32 %v1452, %v1453
  %v1455 = vsel %vm1301, %v917, 0.0
  %v1456 = vadd.f32 %v1454, %v1455
  %v1457 = vsel %vm1301, %v920, 0.0
  %v1458 = vadd.f32 %v1456, %v1457
  %v1459 = vsel %vm1301, %v922, 0.0
  %v1460 = vadd.f32 %v1458, %v1459
  %v1461 = vsel %vm1301, %v925, 0.0
  %v1462 = vadd.f32 %v1460, %v1461
  %v1463 = vsel %vm1301, %v927, 0.0
  %v1464 = vadd.f32 %v1462, %v1463
  %v1465 = vsel %vm1301, %v930, 0.0
  %v1466 = vadd.f32 %v1464, %v1465
  %v1467 = vsel %vm1301, %v932, 0.0
  %v1468 = vadd.f32 %v1466, %v1467
  %v1469 = vsel %vm1301, %v935, 0.0
  %v1470 = vadd.f32 %v1468, %v1469
  %v1471 = vsel %vm1301, %v937, 0.0
  %v1472 = vadd.f32 %v1470, %v1471
  %v1473 = vsel %vm1301, %v940, 0.0
  %v1474 = vadd.f32 %v1472, %v1473
  %v1475 = vsel %vm1301, %v942, 0.0
  %v1476 = vadd.f32 %v1474, %v1475
  %v1477 = vsel %vm1301, %v945, 0.0
  %v1478 = vadd.f32 %v1476, %v1477
  %v1479 = vsel %vm1301, %v947, 0.0
  %v1480 = vadd.f32 %v1478, %v1479
  %v1481 = vsel %vm1301, %v950, 0.0
  %v1482 = vadd.f32 %v1480, %v1481
  %v1483 = vsel %vm1301, %v952, 0.0
  %v1484 = vadd.f32 %v1482, %v1483
  %v1485 = vsel %vm1301, %v955, 0.0
  %v1486 = vadd.f32 %v1484, %v1485
  %v1487 = vsel %vm1301, %v957, 0.0
  %v1488 = vadd.f32 %v1486, %v1487
  %v1489 = vsel %vm1301, %v960, 0.0
  %v1490 = vadd.f32 %v1488, %v1489
  %v1491 = vsel %vm1301, %v962, 0.0
  %v1492 = vadd.f32 %v1490, %v1491
  %v1493 = vsel %vm1301, %v965, 0.0
  %v1494 = vadd.f32 %v1492, %v1493
  %v1495 = vsel %vm1301, %v967, 0.0
  %v1496 = vadd.f32 %v1494, %v1495
  %v1497 = vsel %vm1301, %v970, 0.0
  %v1498 = vadd.f32 %v1496, %v1497
  %v1499 = vsel %vm1301, %v972, 0.0
  %v1500 = vadd.f32 %v1498, %v1499
  %v1501 = vsel %vm1301, %v975, 0.0
  %v1502 = vadd.f32 %v1500, %v1501
  %v1503 = vsel %vm1301, %v977, 0.0
  %v1504 = vadd.f32 %v1502, %v1503
  %v1505 = vsel %vm1301, %v980, 0.0
  %v1506 = vadd.f32 %v1504, %v1505
  %v1507 = vsel %vm1301, %v982, 0.0
  %v1508 = vadd.f32 %v1506, %v1507
  %v1509 = vsel %vm1301, %v985, 0.0
  %v1510 = vadd.f32 %v1508, %v1509
  %v1511 = vsel %vm1301, %v987, 0.0
  %v1512 = vadd.f32 %v1510, %v1511
  %v1513 = vsel %vm1301, %v990, 0.0
  %v1514 = vadd.f32 %v1512, %v1513
  %v1515 = vsel %vm1301, %v992, 0.0
  %v1516 = vadd.f32 %v1514, %v1515
  %v1517 = vsel %vm1301, %v995, 0.0
  %v1518 = vadd.f32 %v1516, %v1517
  %v1519 = vsel %vm1301, %v997, 0.0
  %v1520 = vadd.f32 %v1518, %v1519
  %v1521 = vsel %vm1301, %v1000, 0.0
  %v1522 = vadd.f32 %v1520, %v1521
  %v1523 = vsel %vm1301, %v1002, 0.0
  %v1524 = vadd.f32 %v1522, %v1523
  %v1525 = vsel %vm1301, %v1005, 0.0
  %v1526 = vadd.f32 %v1524, %v1525
  %v1527 = vsel %vm1301, %v1007, 0.0
  %v1528 = vadd.f32 %v1526, %v1527
  %v1529 = vsel %vm1301, %v1010, 0.0
  %v1530 = vadd.f32 %v1528, %v1529
  %v1531 = vsel %vm1301, %v1012, 0.0
  %v1532 = vadd.f32 %v1530, %v1531
  %v1533 = vsel %vm1301, %v1015, 0.0
  %v1534 = vadd.f32 %v1532, %v1533
  %v1535 = vsel %vm1301, %v1017, 0.0
  %v1536 = vadd.f32 %v1534, %v1535
  %v1537 = vsel %vm1301, %v1020, 0.0
  %v1538 = vadd.f32 %v1536, %v1537
  %v1539 = vsel %vm1301, %v1022, 0.0
  %v1540 = vadd.f32 %v1538, %v1539
  %v1541 = vsel %vm1301, %v1025, 0.0
  %v1542 = vadd.f32 %v1540, %v1541
  %v1543 = vsel %vm1301, %v1027, 0.0
  %v1544 = vadd.f32 %v1542, %v1543
  %v1545 = vsel %vm1301, %v1030, 0.0
  %v1546 = vadd.f32 %v1544, %v1545
  %v1547 = vsel %vm1301, %v1032, 0.0
  %v1548 = vadd.f32 %v1546, %v1547
  %v1549 = vsel %vm1301, %v1035, 0.0
  %v1550 = vadd.f32 %v1548, %v1549
  %v1551 = vsel %vm1301, %v1037, 0.0
  %v1552 = vadd.f32 %v1550, %v1551
  %v1553 = vsel %vm1301, %v1040, 0.0
  %v1554 = vadd.f32 %v1552, %v1553
  %v1555 = vsel %vm1301, %v1042, 0.0
  %v1556 = vadd.f32 %v1554, %v1555
  %v1557 = vrot.slane %v1556, 4
  %v1558 = vadd.f32 %v1556, %v1557
  %v1559 = vrot.slane %v1558, 2
  %v1560 = vadd.f32 %v1558, %v1559
  %v1561 = vrot.slane %v1560, 1
  %v1562 = vadd.f32 %v1560, %v1561
  %vm1563 = vcmask 24576
  %1564 = vst.msk [vmem:[%s3] sm:$0x1] %vm1563, %v1562
  %v1565 = vmul.f32 %v725, %v725
  %v1566 = vmul.f32 %v727, %v727
  %v1567 = vmul.f32 %v730, %v730
  %v1568 = vmul.f32 %v732, %v732
  %v1569 = vmul.f32 %v735, %v735
  %v1570 = vmul.f32 %v737, %v737
  %v1571 = vmul.f32 %v740, %v740
  %v1572 = vmul.f32 %v742, %v742
  %v1573 = vmul.f32 %v745, %v745
  %v1574 = vmul.f32 %v747, %v747
  %v1575 = vmul.f32 %v750, %v750
  %v1576 = vmul.f32 %v752, %v752
  %v1577 = vmul.f32 %v755, %v755
  %v1578 = vmul.f32 %v757, %v757
  %v1579 = vmul.f32 %v760, %v760
  %v1580 = vmul.f32 %v762, %v762
  %v1581 = vmul.f32 %v765, %v765
  %v1582 = vmul.f32 %v767, %v767
  %v1583 = vmul.f32 %v770, %v770
  %v1584 = vmul.f32 %v772, %v772
  %v1585 = vmul.f32 %v775, %v775
  %v1586 = vmul.f32 %v777, %v777
  %v1587 = vmul.f32 %v780, %v780
  %v1588 = vmul.f32 %v782, %v782
  %v1589 = vmul.f32 %v785, %v785
  %v1590 = vmul.f32 %v787, %v787
  %v1591 = vmul.f32 %v790, %v790
  %v1592 = vmul.f32 %v792, %v792
  %v1593 = vmul.f32 %v795, %v795
  %v1594 = vmul.f32 %v797, %v797
  %v1595 = vmul.f32 %v800, %v800
  %v1596 = vmul.f32 %v802, %v802
  %v1597 = vmul.f32 %v805, %v805
  %v1598 = vmul.f32 %v807, %v807
  %v1599 = vmul.f32 %v810, %v810
  %v1600 = vmul.f32 %v812, %v812
  %v1601 = vmul.f32 %v815, %v815
  %v1602 = vmul.f32 %v817, %v817
  %v1603 = vmul.f32 %v820, %v820
  %v1604 = vmul.f32 %v822, %v822
  %v1605 = vmul.f32 %v825, %v825
  %v1606 = vmul.f32 %v827, %v827
  %v1607 = vmul.f32 %v830, %v830
  %v1608 = vmul.f32 %v832, %v832
  %v1609 = vmul.f32 %v835, %v835
  %v1610 = vmul.f32 %v837, %v837
  %v1611 = vmul.f32 %v840, %v840
  %v1612 = vmul.f32 %v842, %v842
  %v1613 = vmul.f32 %v845, %v845
  %v1614 = vmul.f32 %v847, %v847
  %v1615 = vmul.f32 %v850, %v850
  %v1616 = vmul.f32 %v852, %v852
  %v1617 = vmul.f32 %v855, %v855
  %v1618 = vmul.f32 %v857, %v857
  %v1619 = vmul.f32 %v860, %v860
  %v1620 = vmul.f32 %v862, %v862
  %v1621 = vmul.f32 %v865, %v865
  %v1622 = vmul.f32 %v867, %v867
  %v1623 = vmul.f32 %v870, %v870
  %v1624 = vmul.f32 %v872, %v872
  %v1625 = vmul.f32 %v875, %v875
  %v1626 = vmul.f32 %v877, %v877
  %v1627 = vmul.f32 %v880, %v880
  %v1628 = vmul.f32 %v882, %v882
  %v1629 = vmul.f32 %v885, %v885
  %v1630 = vmul.f32 %v887, %v887
  %v1631 = vmul.f32 %v890, %v890
  %v1632 = vmul.f32 %v892, %v892
  %v1633 = vmul.f32 %v895, %v895
  %v1634 = vmul.f32 %v897, %v897
  %v1635 = vmul.f32 %v900, %v900
  %v1636 = vmul.f32 %v902, %v902
  %v1637 = vmul.f32 %v905, %v905
  %v1638 = vmul.f32 %v907, %v907
  %v1639 = vmul.f32 %v910, %v910
  %v1640 = vmul.f32 %v912, %v912
  %v1641 = vmul.f32 %v915, %v915
  %v1642 = vmul.f32 %v917, %v917
  %v1643 = vmul.f32 %v920, %v920
  %v1644 = vmul.f32 %v922, %v922
  %v1645 = vmul.f32 %v925, %v925
  %v1646 = vmul.f32 %v927, %v927
  %v1647 = vmul.f32 %v930, %v930
  %v1648 = vmul.f32 %v932, %v932
  %v1649 = vmul.f32 %v935, %v935
  %v1650 = vmul.f32 %v937, %v937
  %v1651 = vmul.f32 %v940, %v940
  %v1652 = vmul.f32 %v942, %v942
  %v1653 = vmul.f32 %v945, %v945
  %v1654 = vmul.f32 %v947, %v947
  %v1655 = vmul.f32 %v950, %v950
  %v1656 = vmul.f32 %v952, %v952
  %v1657 = vmul.f32 %v955, %v955
  %v1658 = vmul.f32 %v957, %v957
  %v1659 = vmul.f32 %v960, %v960
  %v1660 = vmul.f32 %v962, %v962
  %v1661 = vmul.f32 %v965, %v965
  %v1662 = vmul.f32 %v967, %v967
  %v1663 = vmul.f32 %v970, %v970
  %v1664 = vmul.f32 %v972, %v972
  %v1665 = vmul.f32 %v975, %v975
  %v1666 = vmul.f32 %v977, %v977
  %v1667 = vmul.f32 %v980, %v980
  %v1668 = vmul.f32 %v982, %v982
  %v1669 = vmul.f32 %v985, %v985
  %v1670 = vmul.f32 %v987, %v987
  %v1671 = vmul.f32 %v990, %v990
  %v1672 = vmul.f32 %v992, %v992
  %v1673 = vmul.f32 %v995, %v995
  %v1674 = vmul.f32 %v997, %v997
  %v1675 = vmul.f32 %v1000, %v1000
  %v1676 = vmul.f32 %v1002, %v1002
  %v1677 = vmul.f32 %v1005, %v1005
  %v1678 = vmul.f32 %v1007, %v1007
  %v1679 = vmul.f32 %v1010, %v1010
  %v1680 = vmul.f32 %v1012, %v1012
  %v1681 = vmul.f32 %v1015, %v1015
  %v1682 = vmul.f32 %v1017, %v1017
  %v1683 = vmul.f32 %v1020, %v1020
  %v1684 = vmul.f32 %v1022, %v1022
  %v1685 = vmul.f32 %v1025, %v1025
  %v1686 = vmul.f32 %v1027, %v1027
  %v1687 = vmul.f32 %v1030, %v1030
  %v1688 = vmul.f32 %v1032, %v1032
  %v1689 = vmul.f32 %v1035, %v1035
  %v1690 = vmul.f32 %v1037, %v1037
  %v1691 = vmul.f32 %v1040, %v1040
  %v1692 = vmul.f32 %v1042, %v1042
  %v1693 = vsel %vm1301, %v1565, 0.0
  %v1694 = vsel %vm1301, %v1566, 0.0
  %v1695 = vadd.f32 %v1693, %v1694
  %v1696 = vsel %vm1301, %v1567, 0.0
  %v1697 = vadd.f32 %v1695, %v1696
  %v1698 = vsel %vm1301, %v1568, 0.0
  %v1699 = vadd.f32 %v1697, %v1698
  %v1700 = vsel %vm1301, %v1569, 0.0
  %v1701 = vadd.f32 %v1699, %v1700
  %v1702 = vsel %vm1301, %v1570, 0.0
  %v1703 = vadd.f32 %v1701, %v1702
  %v1704 = vsel %vm1301, %v1571, 0.0
  %v1705 = vadd.f32 %v1703, %v1704
  %v1706 = vsel %vm1301, %v1572, 0.0
  %v1707 = vadd.f32 %v1705, %v1706
  %v1708 = vsel %vm1301, %v1573, 0.0
  %v1709 = vadd.f32 %v1707, %v1708
  %v1710 = vsel %vm1301, %v1574, 0.0
  %v1711 = vadd.f32 %v1709, %v1710
  %v1712 = vsel %vm1301, %v1575, 0.0
  %v1713 = vadd.f32 %v1711, %v1712
  %v1714 = vsel %vm1301, %v1576, 0.0
  %v1715 = vadd.f32 %v1713, %v1714
  %v1716 = vsel %vm1301, %v1577, 0.0
  %v1717 = vadd.f32 %v1715, %v1716
  %v1718 = vsel %vm1301, %v1578, 0.0
  %v1719 = vadd.f32 %v1717, %v1718
  %v1720 = vsel %vm1301, %v1579, 0.0
  %v1721 = vadd.f32 %v1719, %v1720
  %v1722 = vsel %vm1301, %v1580, 0.0
  %v1723 = vadd.f32 %v1721, %v1722
  %v1724 = vsel %vm1301, %v1581, 0.0
  %v1725 = vadd.f32 %v1723, %v1724
  %v1726 = vsel %vm1301, %v1582, 0.0
  %v1727 = vadd.f32 %v1725, %v1726
  %v1728 = vsel %vm1301, %v1583, 0.0
  %v1729 = vadd.f32 %v1727, %v1728
  %v1730 = vsel %vm1301, %v1584, 0.0
  %v1731 = vadd.f32 %v1729, %v1730
  %v1732 = vsel %vm1301, %v1585, 0.0
  %v1733 = vadd.f32 %v1731, %v1732
  %v1734 = vsel %vm1301, %v1586, 0.0
  %v1735 = vadd.f32 %v1733, %v1734
  %v1736 = vsel %vm1301, %v1587, 0.0
  %v1737 = vadd.f32 %v1735, %v1736
  %v1738 = vsel %vm1301, %v1588, 0.0
  %v1739 = vadd.f32 %v1737, %v1738
  %v1740 = vsel %vm1301, %v1589, 0.0
  %v1741 = vadd.f32 %v1739, %v1740
  %v1742 = vsel %vm1301, %v1590, 0.0
  %v1743 = vadd.f32 %v1741, %v1742
  %v1744 = vsel %vm1301, %v1591, 0.0
  %v1745 = vadd.f32 %v1743, %v1744
  %v1746 = vsel %vm1301, %v1592, 0.0
  %v1747 = vadd.f32 %v1745, %v1746
  %v1748 = vsel %vm1301, %v1593, 0.0
  %v1749 = vadd.f32 %v1747, %v1748
  %v1750 = vsel %vm1301, %v1594, 0.0
  %v1751 = vadd.f32 %v1749, %v1750
  %v1752 = vsel %vm1301, %v1595, 0.0
  %v1753 = vadd.f32 %v1751, %v1752
  %v1754 = vsel %vm1301, %v1596, 0.0
  %v1755 = vadd.f32 %v1753, %v1754
  %v1756 = vsel %vm1301, %v1597, 0.0
  %v1757 = vadd.f32 %v1755, %v1756
  %v1758 = vsel %vm1301, %v1598, 0.0
  %v1759 = vadd.f32 %v1757, %v1758
  %v1760 = vsel %vm1301, %v1599, 0.0
  %v1761 = vadd.f32 %v1759, %v1760
  %v1762 = vsel %vm1301, %v1600, 0.0
  %v1763 = vadd.f32 %v1761, %v1762
  %v1764 = vsel %vm1301, %v1601, 0.0
  %v1765 = vadd.f32 %v1763, %v1764
  %v1766 = vsel %vm1301, %v1602, 0.0
  %v1767 = vadd.f32 %v1765, %v1766
  %v1768 = vsel %vm1301, %v1603, 0.0
  %v1769 = vadd.f32 %v1767, %v1768
  %v1770 = vsel %vm1301, %v1604, 0.0
  %v1771 = vadd.f32 %v1769, %v1770
  %v1772 = vsel %vm1301, %v1605, 0.0
  %v1773 = vadd.f32 %v1771, %v1772
  %v1774 = vsel %vm1301, %v1606, 0.0
  %v1775 = vadd.f32 %v1773, %v1774
  %v1776 = vsel %vm1301, %v1607, 0.0
  %v1777 = vadd.f32 %v1775, %v1776
  %v1778 = vsel %vm1301, %v1608, 0.0
  %v1779 = vadd.f32 %v1777, %v1778
  %v1780 = vsel %vm1301, %v1609, 0.0
  %v1781 = vadd.f32 %v1779, %v1780
  %v1782 = vsel %vm1301, %v1610, 0.0
  %v1783 = vadd.f32 %v1781, %v1782
  %v1784 = vsel %vm1301, %v1611, 0.0
  %v1785 = vadd.f32 %v1783, %v1784
  %v1786 = vsel %vm1301, %v1612, 0.0
  %v1787 = vadd.f32 %v1785, %v1786
  %v1788 = vsel %vm1301, %v1613, 0.0
  %v1789 = vadd.f32 %v1787, %v1788
  %v1790 = vsel %vm1301, %v1614, 0.0
  %v1791 = vadd.f32 %v1789, %v1790
  %v1792 = vsel %vm1301, %v1615, 0.0
  %v1793 = vadd.f32 %v1791, %v1792
  %v1794 = vsel %vm1301, %v1616, 0.0
  %v1795 = vadd.f32 %v1793, %v1794
  %v1796 = vsel %vm1301, %v1617, 0.0
  %v1797 = vadd.f32 %v1795, %v1796
  %v1798 = vsel %vm1301, %v1618, 0.0
  %v1799 = vadd.f32 %v1797, %v1798
  %v1800 = vsel %vm1301, %v1619, 0.0
  %v1801 = vadd.f32 %v1799, %v1800
  %v1802 = vsel %vm1301, %v1620, 0.0
  %v1803 = vadd.f32 %v1801, %v1802
  %v1804 = vsel %vm1301, %v1621, 0.0
  %v1805 = vadd.f32 %v1803, %v1804
  %v1806 = vsel %vm1301, %v1622, 0.0
  %v1807 = vadd.f32 %v1805, %v1806
  %v1808 = vsel %vm1301, %v1623, 0.0
  %v1809 = vadd.f32 %v1807, %v1808
  %v1810 = vsel %vm1301, %v1624, 0.0
  %v1811 = vadd.f32 %v1809, %v1810
  %v1812 = vsel %vm1301, %v1625, 0.0
  %v1813 = vadd.f32 %v1811, %v1812
  %v1814 = vsel %vm1301, %v1626, 0.0
  %v1815 = vadd.f32 %v1813, %v1814
  %v1816 = vsel %vm1301, %v1627, 0.0
  %v1817 = vadd.f32 %v1815, %v1816
  %v1818 = vsel %vm1301, %v1628, 0.0
  %v1819 = vadd.f32 %v1817, %v1818
  %v1820 = vsel %vm1301, %v1629, 0.0
  %v1821 = vadd.f32 %v1819, %v1820
  %v1822 = vsel %vm1301, %v1630, 0.0
  %v1823 = vadd.f32 %v1821, %v1822
  %v1824 = vsel %vm1301, %v1631, 0.0
  %v1825 = vadd.f32 %v1823, %v1824
  %v1826 = vsel %vm1301, %v1632, 0.0
  %v1827 = vadd.f32 %v1825, %v1826
  %v1828 = vsel %vm1301, %v1633, 0.0
  %v1829 = vadd.f32 %v1827, %v1828
  %v1830 = vsel %vm1301, %v1634, 0.0
  %v1831 = vadd.f32 %v1829, %v1830
  %v1832 = vsel %vm1301, %v1635, 0.0
  %v1833 = vadd.f32 %v1831, %v1832
  %v1834 = vsel %vm1301, %v1636, 0.0
  %v1835 = vadd.f32 %v1833, %v1834
  %v1836 = vsel %vm1301, %v1637, 0.0
  %v1837 = vadd.f32 %v1835, %v1836
  %v1838 = vsel %vm1301, %v1638, 0.0
  %v1839 = vadd.f32 %v1837, %v1838
  %v1840 = vsel %vm1301, %v1639, 0.0
  %v1841 = vadd.f32 %v1839, %v1840
  %v1842 = vsel %vm1301, %v1640, 0.0
  %v1843 = vadd.f32 %v1841, %v1842
  %v1844 = vsel %vm1301, %v1641, 0.0
  %v1845 = vadd.f32 %v1843, %v1844
  %v1846 = vsel %vm1301, %v1642, 0.0
  %v1847 = vadd.f32 %v1845, %v1846
  %v1848 = vsel %vm1301, %v1643, 0.0
  %v1849 = vadd.f32 %v1847, %v1848
  %v1850 = vsel %vm1301, %v1644, 0.0
  %v1851 = vadd.f32 %v1849, %v1850
  %v1852 = vsel %vm1301, %v1645, 0.0
  %v1853 = vadd.f32 %v1851, %v1852
  %v1854 = vsel %vm1301, %v1646, 0.0
  %v1855 = vadd.f32 %v1853, %v1854
  %v1856 = vsel %vm1301, %v1647, 0.0
  %v1857 = vadd.f32 %v1855, %v1856
  %v1858 = vsel %vm1301, %v1648, 0.0
  %v1859 = vadd.f32 %v1857, %v1858
  %v1860 = vsel %vm1301, %v1649, 0.0
  %v1861 = vadd.f32 %v1859, %v1860
  %v1862 = vsel %vm1301, %v1650, 0.0
  %v1863 = vadd.f32 %v1861, %v1862
  %v1864 = vsel %vm1301, %v1651, 0.0
  %v1865 = vadd.f32 %v1863, %v1864
  %v1866 = vsel %vm1301, %v1652, 0.0
  %v1867 = vadd.f32 %v1865, %v1866
  %v1868 = vsel %vm1301, %v1653, 0.0
  %v1869 = vadd.f32 %v1867, %v1868
  %v1870 = vsel %vm1301, %v1654, 0.0
  %v1871 = vadd.f32 %v1869, %v1870
  %v1872 = vsel %vm1301, %v1655, 0.0
  %v1873 = vadd.f32 %v1871, %v1872
  %v1874 = vsel %vm1301, %v1656, 0.0
  %v1875 = vadd.f32 %v1873, %v1874
  %v1876 = vsel %vm1301, %v1657, 0.0
  %v1877 = vadd.f32 %v1875, %v1876
  %v1878 = vsel %vm1301, %v1658, 0.0
  %v1879 = vadd.f32 %v1877, %v1878
  %v1880 = vsel %vm1301, %v1659, 0.0
  %v1881 = vadd.f32 %v1879, %v1880
  %v1882 = vsel %vm1301, %v1660, 0.0
  %v1883 = vadd.f32 %v1881, %v1882
  %v1884 = vsel %vm1301, %v1661, 0.0
  %v1885 = vadd.f32 %v1883, %v1884
  %v1886 = vsel %vm1301, %v1662, 0.0
  %v1887 = vadd.f32 %v1885, %v1886
  %v1888 = vsel %vm1301, %v1663, 0.0
  %v1889 = vadd.f32 %v1887, %v1888
  %v1890 = vsel %vm1301, %v1664, 0.0
  %v1891 = vadd.f32 %v1889, %v1890
  %v1892 = vsel %vm1301, %v1665, 0.0
  %v1893 = vadd.f32 %v1891, %v1892
  %v1894 = vsel %vm1301, %v1666, 0.0
  %v1895 = vadd.f32 %v1893, %v1894
  %v1896 = vsel %vm1301, %v1667, 0.0
  %v1897 = vadd.f32 %v1895, %v1896
  %v1898 = vsel %vm1301, %v1668, 0.0
  %v1899 = vadd.f32 %v1897, %v1898
  %v1900 = vsel %vm1301, %v1669, 0.0
  %v1901 = vadd.f32 %v1899, %v1900
  %v1902 = vsel %vm1301, %v1670, 0.0
  %v1903 = vadd.f32 %v1901, %v1902
  %v1904 = vsel %vm1301, %v1671, 0.0
  %v1905 = vadd.f32 %v1903, %v1904
  %v1906 = vsel %vm1301, %v1672, 0.0
  %v1907 = vadd.f32 %v1905, %v1906
  %v1908 = vsel %vm1301, %v1673, 0.0
  %v1909 = vadd.f32 %v1907, %v1908
  %v1910 = vsel %vm1301, %v1674, 0.0
  %v1911 = vadd.f32 %v1909, %v1910
  %v1912 = vsel %vm1301, %v1675, 0.0
  %v1913 = vadd.f32 %v1911, %v1912
  %v1914 = vsel %vm1301, %v1676, 0.0
  %v1915 = vadd.f32 %v1913, %v1914
  %v1916 = vsel %vm1301, %v1677, 0.0
  %v1917 = vadd.f32 %v1915, %v1916
  %v1918 = vsel %vm1301, %v1678, 0.0
  %v1919 = vadd.f32 %v1917, %v1918
  %v1920 = vsel %vm1301, %v1679, 0.0
  %v1921 = vadd.f32 %v1919, %v1920
  %v1922 = vsel %vm1301, %v1680, 0.0
  %v1923 = vadd.f32 %v1921, %v1922
  %v1924 = vsel %vm1301, %v1681, 0.0
  %v1925 = vadd.f32 %v1923, %v1924
  %v1926 = vsel %vm1301, %v1682, 0.0
  %v1927 = vadd.f32 %v1925, %v1926
  %v1928 = vsel %vm1301, %v1683, 0.0
  %v1929 = vadd.f32 %v1927, %v1928
  %v1930 = vsel %vm1301, %v1684, 0.0
  %v1931 = vadd.f32 %v1929, %v1930
  %v1932 = vsel %vm1301, %v1685, 0.0
  %v1933 = vadd.f32 %v1931, %v1932
  %v1934 = vsel %vm1301, %v1686, 0.0
  %v1935 = vadd.f32 %v1933, %v1934
  %v1936 = vsel %vm1301, %v1687, 0.0
  %v1937 = vadd.f32 %v1935, %v1936
  %v1938 = vsel %vm1301, %v1688, 0.0
  %v1939 = vadd.f32 %v1937, %v1938
  %v1940 = vsel %vm1301, %v1689, 0.0
  %v1941 = vadd.f32 %v1939, %v1940
  %v1942 = vsel %vm1301, %v1690, 0.0
  %v1943 = vadd.f32 %v1941, %v1942
  %v1944 = vsel %vm1301, %v1691, 0.0
  %v1945 = vadd.f32 %v1943, %v1944
  %v1946 = vsel %vm1301, %v1692, 0.0
  %v1947 = vadd.f32 %v1945, %v1946
  %v1948 = vrot.slane %v1947, 4
  %v1949 = vadd.f32 %v1947, %v1948
  %v1950 = vrot.slane %v1949, 2
  %v1951 = vadd.f32 %v1949, %v1950
  %v1952 = vrot.slane %v1951, 1
  %v1953 = vadd.f32 %v1951, %v1952
  %1954 = vst.msk [vmem:[%s4] sm:$0x1] %vm1563, %v1953
  // Predicated region
  $region10: #{refine_net_unet_forward.32} parent=0 // pred_check
    _
  $region11: #{refine_net_unet_forward.32} parent=0 // pred_check_branch
    %1956 = sbr.rel (0) target = $region13
  $region12: #{refine_net_unet_forward.32} parent=0 // pred_region
    _
  $region13: #{refine_net_unet_forward.32} parent=0 // pred_fallthru
    _
  // Predicated region
  $region14: #{refine_net_unet_forward.32} parent=0 // pred_check
    _
  $region15: #{refine_net_unet_forward.32} parent=0 // pred_check_branch
    %1958 = sbr.rel (0) target = $region17
  $region16: #{refine_net_unet_forward.32} parent=0 // pred_region
    _
  $region17: #{refine_net_unet_forward.32} parent=0 // pred_fallthru
    _
  // Predicated region
  $region18: #{refine_net_unet_forward.32} parent=0 // pred_check
    _
  $region19: #{refine_net_unet_forward.32} parent=0 // pred_check_branch
    %1960 = sbr.rel (0) target = $region21
  $region20: #{refine_net_unet_forward.32} parent=0 // pred_region
    _
  $region21: #{refine_net_unet_forward.32} parent=0 // pred_fallthru
    _
  // Predicated region
  $region22: #{refine_net_unet_forward.32} parent=0 // pred_check
    _
  $region23: #{refine_net_unet_forward.32} parent=0 // pred_check_branch
    %1962 = sbr.rel (0) target = $region25
  $region24: #{refine_net_unet_forward.32} parent=0 // pred_region
    _
  $region25: #{refine_net_unet_forward.32} parent=0 // pred_fallthru
    _
  // Predicated region
  $region26: #{refine_net_unet_forward.32} parent=0 // pred_check
    _
  $region27: #{refine_net_unet_forward.32} parent=0 // pred_check_branch
    %1964 = sbr.rel (0) target = $region29
  $region28: #{refine_net_unet_forward.32} parent=0 // pred_region
    _
  $region29: #{refine_net_unet_forward.32} parent=0 // pred_fallthru
    _
  // Predicated region
  $region30: #{refine_net_unet_forward.32} parent=0 // pred_check
    _
  $region31: #{refine_net_unet_forward.32} parent=0 // pred_check_branch
    %1966 = sbr.rel (0) target = $region33
  $region32: #{refine_net_unet_forward.32} parent=0 // pred_region
    _
  $region33: #{refine_net_unet_forward.32} parent=0 // pred_fallthru
    _

// kernel: refine_net_unet_forward.34
$region0: #{refine_net_unet_forward.34}
  #allocation0 [shape = 'u32[]', space=smem, size = 0x4, offset = 0x4, fixed_abs, tag = 'smem constant byte address 0x4 - core index']
  #allocation1 [shape = 'u32[72,128]{1,0:T(1,128)}', space=vmem, size = 0x9000, scoped, tag = 'internal scratch']
  %s0 = inlined_call_operand.vmem [shape: bf16[1024,108], index: 0, kind: input, shape index: {}]
  %s1 = inlined_call_operand.vmem [shape: bf16[108,1], index: 1, kind: input, shape index: {}]
  %s2 = inlined_call_operand.vmem [shape: bf16[1024,1], index: 2, kind: output, shape index: {0}]
  %s3 = inlined_call_operand.hbm [shape: f32[1,1,1], index: 3, kind: output, shape index: {1}]
  %s4 = inlined_call_operand.hbm [shape: f32[1,1,1], index: 4, kind: output, shape index: {2}]
  %5 = xla_tuple %s2, %s3, %s4
  %s6 = sld [smem:[#allocation0]]
  $region34: #{refine_net_unet_forward.34} parent=0
    _
  %s8 = ssub.s32 1, %s6
  %s9 = scalar_select 0, %s8, %s6
  $region1: #{refine_net_unet_forward.34} parent=0
    #allocation2 [shape = 'u8[512]{0}', space=vmem, size = 0x400, scoped, tag = 'output window, operand 1, single buffered']
    #allocation3 [shape = 's32[1]{0}', space=sflag, size = 0x4, scoped, tag = 'scoped memory for refine_net_unet_forward.34']
    #allocation4 [shape = 'u8[512]{0}', space=vmem, size = 0x400, scoped, tag = 'output window, operand 2, single buffered']
    #allocation5 [shape = 's32[1]{0}', space=sflag, size = 0x4, scoped, tag = 'scoped memory for refine_net_unet_forward.34']
    %10 = vsyncpa [#allocation3], 0
    %11 = vsyncpa [#allocation5], 0
    // Predicated region
    $region2: #{refine_net_unet_forward.34} parent=1 // pred_check
      _
    $region3: #{refine_net_unet_forward.34} parent=1 // pred_check_branch
      %13 = sbr.rel (0) target = $region5
    $region4: #{refine_net_unet_forward.34} parent=1 // pred_region
      _
    $region5: #{refine_net_unet_forward.34} parent=1 // pred_fallthru
      _
    // Predicated region
    $region6: #{refine_net_unet_forward.34} parent=1 // pred_check
      _
    $region7: #{refine_net_unet_forward.34} parent=1 // pred_check_branch
      %15 = sbr.rel (0) target = $region9
    $region8: #{refine_net_unet_forward.34} parent=1 // pred_region
      _
    $region9: #{refine_net_unet_forward.34} parent=1 // pred_fallthru
      _
    %v17 = vld [vmem:[%s0] sm:$0xf]
    %v18 = vld [vmem:[%s0 + $0x4] sm:$0xf]
    %v19 = vld [vmem:[%s0 + $0x8] sm:$0xf]
    %v20 = vld [vmem:[%s0 + $0xc] sm:$0xf]
    %v21 = vld [vmem:[%s0 + $0x10] sm:$0xf]
    %v22 = vld [vmem:[%s0 + $0x14] sm:$0xf]
    %v23 = vld [vmem:[%s0 + $0x18] sm:$0xf]
    %v24 = vld [vmem:[%s0 + $0x1c] sm:$0xf]
    %v25 = vld [vmem:[%s0 + $0x20] sm:$0xf]
    %v26 = vld [vmem:[%s0 + $0x24] sm:$0xf]
    %v27 = vld [vmem:[%s0 + $0x28] sm:$0xf]
    %v28 = vld [vmem:[%s0 + $0x2c] sm:$0xf]
    %v29 = vld [vmem:[%s0 + $0x30] sm:$0xf]
    %v30 = vld [vmem:[%s0 + $0x34] sm:$0xf]
    %v31 = vld [vmem:[%s0 + $0x38] sm:$0xf]
    %v32 = vld [vmem:[%s0 + $0x3c] sm:$0xf]
    %v33 = vld [vmem:[%s0 + $0x40] sm:$0xf]
    %v34 = vld [vmem:[%s0 + $0x44] sm:$0xf]
    %v35 = vld [vmem:[%s0 + $0x48] sm:$0xf]
    %v36 = vld [vmem:[%s0 + $0x4c] sm:$0xf]
    %v37 = vld [vmem:[%s0 + $0x50] sm:$0xf]
    %v38 = vld [vmem:[%s0 + $0x54] sm:$0xf]
    %v39 = vld [vmem:[%s0 + $0x58] sm:$0xf]
    %v40 = vld [vmem:[%s0 + $0x5c] sm:$0xf]
    %v41 = vld [vmem:[%s0 + $0x60] sm:$0xf]
    %v42 = vld [vmem:[%s0 + $0x64] sm:$0xf]
    %v43 = vld [vmem:[%s0 + $0x68] sm:$0xf]
    %v44 = vld [vmem:[%s0 + $0x6c] sm:$0xf]
    %v45 = vld [vmem:[%s0 + $0x70] sm:$0xf]
    %v46 = vld [vmem:[%s0 + $0x74] sm:$0xf]
    %v47 = vld [vmem:[%s0 + $0x78] sm:$0xf]
    %v48 = vld [vmem:[%s0 + $0x7c] sm:$0xf]
    %v49 = vld [vmem:[%s0 + $0x80] sm:$0xf]
    %v50 = vld [vmem:[%s0 + $0x84] sm:$0xf]
    %v51 = vld [vmem:[%s0 + $0x88] sm:$0xf]
    %v52 = vld [vmem:[%s0 + $0x8c] sm:$0xf]
    %v53 = vld [vmem:[%s0 + $0x90] sm:$0xf]
    %v54 = vld [vmem:[%s0 + $0x94] sm:$0xf]
    %v55 = vld [vmem:[%s0 + $0x98] sm:$0xf]
    %v56 = vld [vmem:[%s0 + $0x9c] sm:$0xf]
    %v57 = vld [vmem:[%s0 + $0xa0] sm:$0xf]
    %v58 = vld [vmem:[%s0 + $0xa4] sm:$0xf]
    %v59 = vld [vmem:[%s0 + $0xa8] sm:$0xf]
    %v60 = vld [vmem:[%s0 + $0xac] sm:$0xf]
    %v61 = vld [vmem:[%s0 + $0xb0] sm:$0xf]
    %v62 = vld [vmem:[%s0 + $0xb4] sm:$0xf]
    %v63 = vld [vmem:[%s0 + $0xb8] sm:$0xf]
    %v64 = vld [vmem:[%s0 + $0xbc] sm:$0xf]
    %v65 = vld [vmem:[%s0 + $0xc0] sm:$0xf]
    %v66 = vld [vmem:[%s0 + $0xc4] sm:$0xf]
    %v67 = vld [vmem:[%s0 + $0xc8] sm:$0xf]
    %v68 = vld [vmem:[%s0 + $0xcc] sm:$0xf]
    %v69 = vld [vmem:[%s0 + $0xd0] sm:$0xf]
    %v70 = vld [vmem:[%s0 + $0xd4] sm:$0xf]
    %v71 = vld [vmem:[%s0 + $0xd8] sm:$0xf]
    %v72 = vld [vmem:[%s0 + $0xdc] sm:$0xf]
    %v73 = vld [vmem:[%s0 + $0xe0] sm:$0xf]
    %v74 = vld [vmem:[%s0 + $0xe4] sm:$0xf]
    %v75 = vld [vmem:[%s0 + $0xe8] sm:$0xf]
    %v76 = vld [vmem:[%s0 + $0xec] sm:$0xf]
    %v77 = vld [vmem:[%s0 + $0xf0] sm:$0xf]
    %v78 = vld [vmem:[%s0 + $0xf4] sm:$0xf]
    %v79 = vld [vmem:[%s0 + $0xf8] sm:$0xf]
    %v80 = vld [vmem:[%s0 + $0xfc] sm:$0xf]
    %v81 = vld [vmem:[%s0 + $0x100] sm:$0xf]
    %v82 = vld [vmem:[%s0 + $0x104] sm:$0xf]
    %v83 = vld [vmem:[%s0 + $0x108] sm:$0xf]
    %v84 = vld [vmem:[%s0 + $0x10c] sm:$0xf]
    %v85 = vld [vmem:[%s0 + $0x110] sm:$0xf]
    %v86 = vld [vmem:[%s0 + $0x114] sm:$0xf]
    %v87 = vld [vmem:[%s0 + $0x118] sm:$0xf]
    %v88 = vld [vmem:[%s0 + $0x11c] sm:$0xf]
    %v89 = vld [vmem:[%s0 + $0x120] sm:$0xf]
    %v90 = vld [vmem:[%s0 + $0x124] sm:$0xf]
    %v91 = vld [vmem:[%s0 + $0x128] sm:$0xf]
    %v92 = vld [vmem:[%s0 + $0x12c] sm:$0xf]
    %v93 = vld [vmem:[%s0 + $0x130] sm:$0xf]
    %v94 = vld [vmem:[%s0 + $0x134] sm:$0xf]
    %v95 = vld [vmem:[%s0 + $0x138] sm:$0xf]
    %v96 = vld [vmem:[%s0 + $0x13c] sm:$0xf]
    %v97 = vld [vmem:[%s0 + $0x140] sm:$0xf]
    %v98 = vld [vmem:[%s0 + $0x144] sm:$0xf]
    %v99 = vld [vmem:[%s0 + $0x148] sm:$0xf]
    %v100 = vld [vmem:[%s0 + $0x14c] sm:$0xf]
    %v101 = vld [vmem:[%s0 + $0x150] sm:$0xf]
    %v102 = vld [vmem:[%s0 + $0x154] sm:$0xf]
    %v103 = vld [vmem:[%s0 + $0x158] sm:$0xf]
    %v104 = vld [vmem:[%s0 + $0x15c] sm:$0xf]
    %v105 = vld [vmem:[%s0 + $0x160] sm:$0xf]
    %v106 = vld [vmem:[%s0 + $0x164] sm:$0xf]
    %v107 = vld [vmem:[%s0 + $0x168] sm:$0xf]
    %v108 = vld [vmem:[%s0 + $0x16c] sm:$0xf]
    %v109 = vld [vmem:[%s0 + $0x170] sm:$0xf]
    %v110 = vld [vmem:[%s0 + $0x174] sm:$0xf]
    %v111 = vld [vmem:[%s0 + $0x178] sm:$0xf]
    %v112 = vld [vmem:[%s0 + $0x17c] sm:$0xf]
    %v113 = vld [vmem:[%s0 + $0x180] sm:$0xf]
    %v114 = vld [vmem:[%s0 + $0x184] sm:$0xf]
    %v115 = vld [vmem:[%s0 + $0x188] sm:$0xf]
    %v116 = vld [vmem:[%s0 + $0x18c] sm:$0xf]
    %v117 = vld [vmem:[%s0 + $0x190] sm:$0xf]
    %v118 = vld [vmem:[%s0 + $0x194] sm:$0xf]
    %v119 = vld [vmem:[%s0 + $0x198] sm:$0xf]
    %v120 = vld [vmem:[%s0 + $0x19c] sm:$0xf]
    %v121 = vld [vmem:[%s0 + $0x1a0] sm:$0xf]
    %v122 = vld [vmem:[%s0 + $0x1a4] sm:$0xf]
    %v123 = vld [vmem:[%s0 + $0x1a8] sm:$0xf]
    %v124 = vld [vmem:[%s0 + $0x1ac] sm:$0xf]
    %v125 = vld [vmem:[%s0 + $0x1b0] sm:$0xf]
    %v126 = vld [vmem:[%s0 + $0x1b4] sm:$0xf]
    %v127 = vld [vmem:[%s0 + $0x1b8] sm:$0xf]
    %v128 = vld [vmem:[%s0 + $0x1bc] sm:$0xf]
    %v129 = vld [vmem:[%s0 + $0x1c0] sm:$0xf]
    %v130 = vld [vmem:[%s0 + $0x1c4] sm:$0xf]
    %v131 = vld [vmem:[%s0 + $0x1c8] sm:$0xf]
    %v132 = vld [vmem:[%s0 + $0x1cc] sm:$0xf]
    %v133 = vld [vmem:[%s0 + $0x1d0] sm:$0xf]
    %v134 = vld [vmem:[%s0 + $0x1d4] sm:$0xf]
    %v135 = vld [vmem:[%s0 + $0x1d8] sm:$0xf]
    %v136 = vld [vmem:[%s0 + $0x1dc] sm:$0xf]
    %v137 = vld [vmem:[%s0 + $0x1e0] sm:$0xf]
    %v138 = vld [vmem:[%s0 + $0x1e4] sm:$0xf]
    %v139 = vld [vmem:[%s0 + $0x1e8] sm:$0xf]
    %v140 = vld [vmem:[%s0 + $0x1ec] sm:$0xf]
    %v141 = vld [vmem:[%s0 + $0x1f0] sm:$0xf]
    %v142 = vld [vmem:[%s0 + $0x1f4] sm:$0xf]
    %v143 = vld [vmem:[%s0 + $0x1f8] sm:$0xf]
    %v144 = vld [vmem:[%s0 + $0x1fc] sm:$0xf]
    %v145 = vld [vmem:[%s1] sm:$0xf]
    %v146 = vld [vmem:[%s1 + $0x4] sm:$0xf]
    %v147 = vld [vmem:[%s1 + $0x8] sm:$0xf]
    %v148 = vld [vmem:[%s1 + $0xc] sm:$0xf]
    %v149 = vld [vmem:[%s1 + $0x10] sm:$0xf]
    %v150 = vld [vmem:[%s1 + $0x14] sm:$0xf]
    %v151 = vld [vmem:[%s1 + $0x18] sm:$0xf]
    %v152 = vld [vmem:[%s1 + $0x1c] sm:$0xf]
    %v153 = vld [vmem:[%s1 + $0x20] sm:$0xf]
    %v154 = vld [vmem:[%s1 + $0x24] sm:$0xf]
    %v155 = vld [vmem:[%s1 + $0x28] sm:$0xf]
    %v156 = vld [vmem:[%s1 + $0x2c] sm:$0xf]
    %v157 = vld [vmem:[%s1 + $0x30] sm:$0xf]
    %v158 = vld [vmem:[%s1 + $0x34] sm:$0x3]
    %v287 = vunpack.c.l.b16 %v17
    %v288 = vunpack.c.l.b16 %v18
    %v289 = vunpack.c.l.b16 %v19
    %v290 = vunpack.c.l.b16 %v20
    %v291 = vunpack.c.l.b16 %v21
    %v292 = vunpack.c.l.b16 %v22
    %v293 = vunpack.c.l.b16 %v23
    %v294 = vunpack.c.l.b16 %v24
    %v295 = vunpack.c.l.b16 %v25
    %v296 = vunpack.c.l.b16 %v26
    %v297 = vunpack.c.l.b16 %v27
    %v298 = vunpack.c.l.b16 %v28
    %v299 = vunpack.c.l.b16 %v29
    %v300 = vunpack.c.l.b16 %v30
    %v301 = vunpack.c.l.b16 %v31
    %v302 = vunpack.c.l.b16 %v32
    %v303 = vunpack.c.l.b16 %v33
    %v304 = vunpack.c.l.b16 %v34
    %v305 = vunpack.c.l.b16 %v35
    %v306 = vunpack.c.l.b16 %v36
    %v307 = vunpack.c.l.b16 %v37
    %v308 = vunpack.c.l.b16 %v38
    %v309 = vunpack.c.l.b16 %v39
    %v310 = vunpack.c.l.b16 %v40
    %v311 = vunpack.c.l.b16 %v41
    %v312 = vunpack.c.l.b16 %v42
    %v313 = vunpack.c.l.b16 %v43
    %v314 = vunpack.c.l.b16 %v44
    %v315 = vunpack.c.l.b16 %v45
    %v316 = vunpack.c.l.b16 %v46
    %v317 = vunpack.c.l.b16 %v47
    %v318 = vunpack.c.l.b16 %v48
    %v319 = vunpack.c.l.b16 %v49
    %v320 = vunpack.c.l.b16 %v50
    %v321 = vunpack.c.l.b16 %v51
    %v322 = vunpack.c.l.b16 %v52
    %v323 = vunpack.c.l.b16 %v53
    %v324 = vunpack.c.l.b16 %v54
    %v325 = vunpack.c.l.b16 %v55
    %v326 = vunpack.c.l.b16 %v56
    %v327 = vunpack.c.l.b16 %v57
    %v328 = vunpack.c.l.b16 %v58
    %v329 = vunpack.c.l.b16 %v59
    %v330 = vunpack.c.l.b16 %v60
    %v331 = vunpack.c.l.b16 %v61
    %v332 = vunpack.c.l.b16 %v62
    %v333 = vunpack.c.l.b16 %v63
    %v334 = vunpack.c.l.b16 %v64
    %v335 = vunpack.c.l.b16 %v65
    %v336 = vunpack.c.l.b16 %v66
    %v337 = vunpack.c.l.b16 %v67
    %v338 = vunpack.c.l.b16 %v68
    %v339 = vunpack.c.l.b16 %v69
    %v340 = vunpack.c.l.b16 %v70
    %v341 = vunpack.c.l.b16 %v71
    %v342 = vunpack.c.l.b16 %v72
    %v343 = vunpack.c.l.b16 %v73
    %v344 = vunpack.c.l.b16 %v74
    %v345 = vunpack.c.l.b16 %v75
    %v346 = vunpack.c.l.b16 %v76
    %v347 = vunpack.c.l.b16 %v77
    %v348 = vunpack.c.l.b16 %v78
    %v349 = vunpack.c.l.b16 %v79
    %v350 = vunpack.c.l.b16 %v80
    %v351 = vunpack.c.l.b16 %v81
    %v352 = vunpack.c.l.b16 %v82
    %v353 = vunpack.c.l.b16 %v83
    %v354 = vunpack.c.l.b16 %v84
    %v355 = vunpack.c.l.b16 %v85
    %v356 = vunpack.c.l.b16 %v86
    %v357 = vunpack.c.l.b16 %v87
    %v358 = vunpack.c.l.b16 %v88
    %v359 = vunpack.c.l.b16 %v89
    %v360 = vunpack.c.l.b16 %v90
    %v361 = vunpack.c.l.b16 %v91
    %v362 = vunpack.c.l.b16 %v92
    %v363 = vunpack.c.l.b16 %v93
    %v364 = vunpack.c.l.b16 %v94
    %v365 = vunpack.c.l.b16 %v95
    %v366 = vunpack.c.l.b16 %v96
    %v367 = vunpack.c.l.b16 %v97
    %v368 = vunpack.c.l.b16 %v98
    %v369 = vunpack.c.l.b16 %v99
    %v370 = vunpack.c.l.b16 %v100
    %v371 = vunpack.c.l.b16 %v101
    %v372 = vunpack.c.l.b16 %v102
    %v373 = vunpack.c.l.b16 %v103
    %v374 = vunpack.c.l.b16 %v104
    %v375 = vunpack.c.l.b16 %v105
    %v376 = vunpack.c.l.b16 %v106
    %v377 = vunpack.c.l.b16 %v107
    %v378 = vunpack.c.l.b16 %v108
    %v379 = vunpack.c.l.b16 %v109
    %v380 = vunpack.c.l.b16 %v110
    %v381 = vunpack.c.l.b16 %v111
    %v382 = vunpack.c.l.b16 %v112
    %v383 = vunpack.c.l.b16 %v113
    %v384 = vunpack.c.l.b16 %v114
    %v385 = vunpack.c.l.b16 %v115
    %v386 = vunpack.c.l.b16 %v116
    %v387 = vunpack.c.l.b16 %v117
    %v388 = vunpack.c.l.b16 %v118
    %v389 = vunpack.c.l.b16 %v119
    %v390 = vunpack.c.l.b16 %v120
    %v391 = vunpack.c.l.b16 %v121
    %v392 = vunpack.c.l.b16 %v122
    %v393 = vunpack.c.l.b16 %v123
    %v394 = vunpack.c.l.b16 %v124
    %v395 = vunpack.c.l.b16 %v125
    %v396 = vunpack.c.l.b16 %v126
    %v397 = vunpack.c.l.b16 %v127
    %v398 = vunpack.c.l.b16 %v128
    %v399 = vunpack.c.l.b16 %v129
    %v400 = vunpack.c.l.b16 %v130
    %v401 = vunpack.c.l.b16 %v131
    %v402 = vunpack.c.l.b16 %v132
    %v403 = vunpack.c.l.b16 %v133
    %v404 = vunpack.c.l.b16 %v134
    %v405 = vunpack.c.l.b16 %v135
    %v406 = vunpack.c.l.b16 %v136
    %v407 = vunpack.c.l.b16 %v137
    %v408 = vunpack.c.l.b16 %v138
    %v409 = vunpack.c.l.b16 %v139
    %v410 = vunpack.c.l.b16 %v140
    %v411 = vunpack.c.l.b16 %v141
    %v412 = vunpack.c.l.b16 %v142
    %v413 = vunpack.c.l.b16 %v143
    %v414 = vunpack.c.l.b16 %v144
    %v415 = vpack.c.b16 %v288, %v287
    %v416 = vpack.c.b16 %v290, %v289
    %v417 = vpack.c.b16 %v292, %v291
    %v418 = vpack.c.b16 %v294, %v293
    %v419 = vpack.c.b16 %v296, %v295
    %v420 = vpack.c.b16 %v298, %v297
    %v421 = vpack.c.b16 %v300, %v299
    %v422 = vpack.c.b16 %v302, %v301
    %v423 = vpack.c.b16 %v304, %v303
    %v424 = vpack.c.b16 %v306, %v305
    %v425 = vpack.c.b16 %v308, %v307
    %v426 = vpack.c.b16 %v310, %v309
    %v427 = vpack.c.b16 %v312, %v311
    %v428 = vpack.c.b16 %v314, %v313
    %v429 = vpack.c.b16 %v316, %v315
    %v430 = vpack.c.b16 %v318, %v317
    %v431 = vpack.c.b16 %v320, %v319
    %v432 = vpack.c.b16 %v322, %v321
    %v433 = vpack.c.b16 %v324, %v323
    %v434 = vpack.c.b16 %v326, %v325
    %v435 = vpack.c.b16 %v328, %v327
    %v436 = vpack.c.b16 %v330, %v329
    %v437 = vpack.c.b16 %v332, %v331
    %v438 = vpack.c.b16 %v334, %v333
    %v439 = vpack.c.b16 %v336, %v335
    %v440 = vpack.c.b16 %v338, %v337
    %v441 = vpack.c.b16 %v340, %v339
    %v442 = vpack.c.b16 %v342, %v341
    %v443 = vpack.c.b16 %v344, %v343
    %v444 = vpack.c.b16 %v346, %v345
    %v445 = vpack.c.b16 %v348, %v347
    %v446 = vpack.c.b16 %v350, %v349
    %v447 = vpack.c.b16 %v352, %v351
    %v448 = vpack.c.b16 %v354, %v353
    %v449 = vpack.c.b16 %v356, %v355
    %v450 = vpack.c.b16 %v358, %v357
    %v451 = vpack.c.b16 %v360, %v359
    %v452 = vpack.c.b16 %v362, %v361
    %v453 = vpack.c.b16 %v364, %v363
    %v454 = vpack.c.b16 %v366, %v365
    %v455 = vpack.c.b16 %v368, %v367
    %v456 = vpack.c.b16 %v370, %v369
    %v457 = vpack.c.b16 %v372, %v371
    %v458 = vpack.c.b16 %v374, %v373
    %v459 = vpack.c.b16 %v376, %v375
    %v460 = vpack.c.b16 %v378, %v377
    %v461 = vpack.c.b16 %v380, %v379
    %v462 = vpack.c.b16 %v382, %v381
    %v463 = vpack.c.b16 %v384, %v383
    %v464 = vpack.c.b16 %v386, %v385
    %v465 = vpack.c.b16 %v388, %v387
    %v466 = vpack.c.b16 %v390, %v389
    %v467 = vpack.c.b16 %v392, %v391
    %v468 = vpack.c.b16 %v394, %v393
    %v469 = vpack.c.b16 %v396, %v395
    %v470 = vpack.c.b16 %v398, %v397
    %v471 = vpack.c.b16 %v400, %v399
    %v472 = vpack.c.b16 %v402, %v401
    %v473 = vpack.c.b16 %v404, %v403
    %v474 = vpack.c.b16 %v406, %v405
    %v475 = vpack.c.b16 %v408, %v407
    %v476 = vpack.c.b16 %v410, %v409
    %v477 = vpack.c.b16 %v412, %v411
    %v478 = vpack.c.b16 %v414, %v413
    %v493 = vunpack.c.l.b16 %v145
    %v494 = vunpack.c.l.b16 %v146
    %v495 = vunpack.c.l.b16 %v147
    %v496 = vunpack.c.l.b16 %v148
    %v497 = vunpack.c.l.b16 %v149
    %v498 = vunpack.c.l.b16 %v150
    %v499 = vunpack.c.l.b16 %v151
    %v500 = vunpack.c.l.b16 %v152
    %v501 = vunpack.c.l.b16 %v153
    %v502 = vunpack.c.l.b16 %v154
    %v503 = vunpack.c.l.b16 %v155
    %v504 = vunpack.c.l.b16 %v156
    %v505 = vunpack.c.l.b16 %v157
    %v506 = vunpack.c.l.b16 %v158
    %v507 = vpack.c.b16 %v494, %v493
    %v508 = vpack.c.b16 %v496, %v495
    %v509 = vpack.c.b16 %v498, %v497
    %v510 = vpack.c.b16 %v500, %v499
    %v511 = vpack.c.b16 %v502, %v501
    %v512 = vpack.c.b16 %v504, %v503
    %v513 = vpack.c.b16 %v506, %v505
    %vm520 = vcmask 883712
    %v522 = vsel %vm520, %v415, 0
    %v525 = vsel %vm520, %v416, 0
    %v528 = vsel %vm520, %v417, 0
    %v531 = vsel %vm520, %v418, 0
    %v534 = vsel %vm520, %v419, 0
    %v537 = vsel %vm520, %v420, 0
    %v540 = vsel %vm520, %v421, 0
    %v543 = vsel %vm520, %v422, 0
    %v546 = vsel %vm520, %v423, 0
    %v549 = vsel %vm520, %v424, 0
    %v552 = vsel %vm520, %v425, 0
    %v555 = vsel %vm520, %v426, 0
    %v558 = vsel %vm520, %v427, 0
    %v561 = vsel %vm520, %v428, 0
    %v564 = vsel %vm520, %v429, 0
    %v567 = vsel %vm520, %v430, 0
    %v570 = vsel %vm520, %v431, 0
    %v573 = vsel %vm520, %v432, 0
    %v576 = vsel %vm520, %v433, 0
    %v579 = vsel %vm520, %v434, 0
    %v582 = vsel %vm520, %v435, 0
    %v585 = vsel %vm520, %v436, 0
    %v588 = vsel %vm520, %v437, 0
    %v591 = vsel %vm520, %v438, 0
    %v594 = vsel %vm520, %v439, 0
    %v597 = vsel %vm520, %v440, 0
    %v600 = vsel %vm520, %v441, 0
    %v603 = vsel %vm520, %v442, 0
    %v606 = vsel %vm520, %v443, 0
    %v609 = vsel %vm520, %v444, 0
    %v612 = vsel %vm520, %v445, 0
    %v615 = vsel %vm520, %v446, 0
    %v618 = vsel %vm520, %v447, 0
    %v621 = vsel %vm520, %v448, 0
    %v624 = vsel %vm520, %v449, 0
    %v627 = vsel %vm520, %v450, 0
    %v630 = vsel %vm520, %v451, 0
    %v633 = vsel %vm520, %v452, 0
    %v636 = vsel %vm520, %v453, 0
    %v639 = vsel %vm520, %v454, 0
    %v642 = vsel %vm520, %v455, 0
    %v645 = vsel %vm520, %v456, 0
    %v648 = vsel %vm520, %v457, 0
    %v651 = vsel %vm520, %v458, 0
    %v654 = vsel %vm520, %v459, 0
    %v657 = vsel %vm520, %v460, 0
    %v660 = vsel %vm520, %v461, 0
    %v663 = vsel %vm520, %v462, 0
    %v666 = vsel %vm520, %v463, 0
    %v669 = vsel %vm520, %v464, 0
    %v672 = vsel %vm520, %v465, 0
    %v675 = vsel %vm520, %v466, 0
    %v678 = vsel %vm520, %v467, 0
    %v681 = vsel %vm520, %v468, 0
    %v684 = vsel %vm520, %v469, 0
    %v687 = vsel %vm520, %v470, 0
    %v690 = vsel %vm520, %v471, 0
    %v693 = vsel %vm520, %v472, 0
    %v696 = vsel %vm520, %v473, 0
    %v699 = vsel %vm520, %v474, 0
    %v702 = vsel %vm520, %v475, 0
    %v705 = vsel %vm520, %v476, 0
    %v708 = vsel %vm520, %v477, 0
    %v711 = vsel %vm520, %v478, 0
    %vm713 = vcmask 1045504
    %v715 = vsel %vm713, %v513, 0
    %717 = vmatpush.bf16.msra.mxu0 0
    %718 = vmatpush.bf16.msra.mxu0 %v715
    %719 = vmatpush.bf16.msra.mxu0 %v512
    %720 = vmatpush.bf16.msra.mxu0 %v511
    %721 = vmatpush.bf16.msra.mxu0 %v510
    %722 = vmatpush.bf16.msra.mxu0 %v509
    %723 = vmatpush.bf16.msra.mxu0 %v508
    %724 = vmatpush.bf16.msra.mxu0 %v507
    %725 = vmatmul.bf16.gmra.mxu0 %v522
    %v726 = vpop.f32.mrf.mxu0
    %v727 = vadd.f32 0.0, %v726
    %v728 = vpop.f32.mrf.mxu0
    %v729 = vadd.f32 0.0, %v728
    %730 = vmatmul.bf16.gmra.mxu0 %v525
    %v731 = vpop.f32.mrf.mxu0
    %v732 = vadd.f32 0.0, %v731
    %v733 = vpop.f32.mrf.mxu0
    %v734 = vadd.f32 0.0, %v733
    %735 = vmatmul.bf16.gmra.mxu0 %v528
    %v736 = vpop.f32.mrf.mxu0
    %v737 = vadd.f32 0.0, %v736
    %v738 = vpop.f32.mrf.mxu0
    %v739 = vadd.f32 0.0, %v738
    %740 = vmatmul.bf16.gmra.mxu0 %v531
    %v741 = vpop.f32.mrf.mxu0
    %v742 = vadd.f32 0.0, %v741
    %v743 = vpop.f32.mrf.mxu0
    %v744 = vadd.f32 0.0, %v743
    %745 = vmatmul.bf16.gmra.mxu0 %v534
    %v746 = vpop.f32.mrf.mxu0
    %v747 = vadd.f32 0.0, %v746
    %v748 = vpop.f32.mrf.mxu0
    %v749 = vadd.f32 0.0, %v748
    %750 = vmatmul.bf16.gmra.mxu0 %v537
    %v751 = vpop.f32.mrf.mxu0
    %v752 = vadd.f32 0.0, %v751
    %v753 = vpop.f32.mrf.mxu0
    %v754 = vadd.f32 0.0, %v753
    %755 = vmatmul.bf16.gmra.mxu0 %v540
    %v756 = vpop.f32.mrf.mxu0
    %v757 = vadd.f32 0.0, %v756
    %v758 = vpop.f32.mrf.mxu0
    %v759 = vadd.f32 0.0, %v758
    %760 = vmatmul.bf16.gmra.mxu0 %v543
    %v761 = vpop.f32.mrf.mxu0
    %v762 = vadd.f32 0.0, %v761
    %v763 = vpop.f32.mrf.mxu0
    %v764 = vadd.f32 0.0, %v763
    %765 = vmatmul.bf16.gmra.mxu0 %v546
    %v766 = vpop.f32.mrf.mxu0
    %v767 = vadd.f32 0.0, %v766
    %v768 = vpop.f32.mrf.mxu0
    %v769 = vadd.f32 0.0, %v768
    %770 = vmatmul.bf16.gmra.mxu0 %v549
    %v771 = vpop.f32.mrf.mxu0
    %v772 = vadd.f32 0.0, %v771
    %v773 = vpop.f32.mrf.mxu0
    %v774 = vadd.f32 0.0, %v773
    %775 = vmatmul.bf16.gmra.mxu0 %v552
    %v776 = vpop.f32.mrf.mxu0
    %v777 = vadd.f32 0.0, %v776
    %v778 = vpop.f32.mrf.mxu0
    %v779 = vadd.f32 0.0, %v778
    %780 = vmatmul.bf16.gmra.mxu0 %v555
    %v781 = vpop.f32.mrf.mxu0
    %v782 = vadd.f32 0.0, %v781
    %v783 = vpop.f32.mrf.mxu0
    %v784 = vadd.f32 0.0, %v783
    %785 = vmatmul.bf16.gmra.mxu0 %v558
    %v786 = vpop.f32.mrf.mxu0
    %v787 = vadd.f32 0.0, %v786
    %v788 = vpop.f32.mrf.mxu0
    %v789 = vadd.f32 0.0, %v788
    %790 = vmatmul.bf16.gmra.mxu0 %v561
    %v791 = vpop.f32.mrf.mxu0
    %v792 = vadd.f32 0.0, %v791
    %v793 = vpop.f32.mrf.mxu0
    %v794 = vadd.f32 0.0, %v793
    %795 = vmatmul.bf16.gmra.mxu0 %v564
    %v796 = vpop.f32.mrf.mxu0
    %v797 = vadd.f32 0.0, %v796
    %v798 = vpop.f32.mrf.mxu0
    %v799 = vadd.f32 0.0, %v798
    %800 = vmatmul.bf16.gmra.mxu0 %v567
    %v801 = vpop.f32.mrf.mxu0
    %v802 = vadd.f32 0.0, %v801
    %v803 = vpop.f32.mrf.mxu0
    %v804 = vadd.f32 0.0, %v803
    %805 = vmatmul.bf16.gmra.mxu0 %v570
    %v806 = vpop.f32.mrf.mxu0
    %v807 = vadd.f32 0.0, %v806
    %v808 = vpop.f32.mrf.mxu0
    %v809 = vadd.f32 0.0, %v808
    %810 = vmatmul.bf16.gmra.mxu0 %v573
    %v811 = vpop.f32.mrf.mxu0
    %v812 = vadd.f32 0.0, %v811
    %v813 = vpop.f32.mrf.mxu0
    %v814 = vadd.f32 0.0, %v813
    %815 = vmatmul.bf16.gmra.mxu0 %v576
    %v816 = vpop.f32.mrf.mxu0
    %v817 = vadd.f32 0.0, %v816
    %v818 = vpop.f32.mrf.mxu0
    %v819 = vadd.f32 0.0, %v818
    %820 = vmatmul.bf16.gmra.mxu0 %v579
    %v821 = vpop.f32.mrf.mxu0
    %v822 = vadd.f32 0.0, %v821
    %v823 = vpop.f32.mrf.mxu0
    %v824 = vadd.f32 0.0, %v823
    %825 = vmatmul.bf16.gmra.mxu0 %v582
    %v826 = vpop.f32.mrf.mxu0
    %v827 = vadd.f32 0.0, %v826
    %v828 = vpop.f32.mrf.mxu0
    %v829 = vadd.f32 0.0, %v828
    %830 = vmatmul.bf16.gmra.mxu0 %v585
    %v831 = vpop.f32.mrf.mxu0
    %v832 = vadd.f32 0.0, %v831
    %v833 = vpop.f32.mrf.mxu0
    %v834 = vadd.f32 0.0, %v833
    %835 = vmatmul.bf16.gmra.mxu0 %v588
    %v836 = vpop.f32.mrf.mxu0
    %v837 = vadd.f32 0.0, %v836
    %v838 = vpop.f32.mrf.mxu0
    %v839 = vadd.f32 0.0, %v838
    %840 = vmatmul.bf16.gmra.mxu0 %v591
    %v841 = vpop.f32.mrf.mxu0
    %v842 = vadd.f32 0.0, %v841
    %v843 = vpop.f32.mrf.mxu0
    %v844 = vadd.f32 0.0, %v843
    %845 = vmatmul.bf16.gmra.mxu0 %v594
    %v846 = vpop.f32.mrf.mxu0
    %v847 = vadd.f32 0.0, %v846
    %v848 = vpop.f32.mrf.mxu0
    %v849 = vadd.f32 0.0, %v848
    %850 = vmatmul.bf16.gmra.mxu0 %v597
    %v851 = vpop.f32.mrf.mxu0
    %v852 = vadd.f32 0.0, %v851
    %v853 = vpop.f32.mrf.mxu0
    %v854 = vadd.f32 0.0, %v853
    %855 = vmatmul.bf16.gmra.mxu0 %v600
    %v856 = vpop.f32.mrf.mxu0
    %v857 = vadd.f32 0.0, %v856
    %v858 = vpop.f32.mrf.mxu0
    %v859 = vadd.f32 0.0, %v858
    %860 = vmatmul.bf16.gmra.mxu0 %v603
    %v861 = vpop.f32.mrf.mxu0
    %v862 = vadd.f32 0.0, %v861
    %v863 = vpop.f32.mrf.mxu0
    %v864 = vadd.f32 0.0, %v863
    %865 = vmatmul.bf16.gmra.mxu0 %v606
    %v866 = vpop.f32.mrf.mxu0
    %v867 = vadd.f32 0.0, %v866
    %v868 = vpop.f32.mrf.mxu0
    %v869 = vadd.f32 0.0, %v868
    %870 = vmatmul.bf16.gmra.mxu0 %v609
    %v871 = vpop.f32.mrf.mxu0
    %v872 = vadd.f32 0.0, %v871
    %v873 = vpop.f32.mrf.mxu0
    %v874 = vadd.f32 0.0, %v873
    %875 = vmatmul.bf16.gmra.mxu0 %v612
    %v876 = vpop.f32.mrf.mxu0
    %v877 = vadd.f32 0.0, %v876
    %v878 = vpop.f32.mrf.mxu0
    %v879 = vadd.f32 0.0, %v878
    %880 = vmatmul.bf16.gmra.mxu0 %v615
    %v881 = vpop.f32.mrf.mxu0
    %v882 = vadd.f32 0.0, %v881
    %v883 = vpop.f32.mrf.mxu0
    %v884 = vadd.f32 0.0, %v883
    %885 = vmatmul.bf16.gmra.mxu0 %v618
    %v886 = vpop.f32.mrf.mxu0
    %v887 = vadd.f32 0.0, %v886
    %v888 = vpop.f32.mrf.mxu0
    %v889 = vadd.f32 0.0, %v888
    %890 = vmatmul.bf16.gmra.mxu0 %v621
    %v891 = vpop.f32.mrf.mxu0
    %v892 = vadd.f32 0.0, %v891
    %v893 = vpop.f32.mrf.mxu0
    %v894 = vadd.f32 0.0, %v893
    %895 = vmatmul.bf16.gmra.mxu0 %v624
    %v896 = vpop.f32.mrf.mxu0
    %v897 = vadd.f32 0.0, %v896
    %v898 = vpop.f32.mrf.mxu0
    %v899 = vadd.f32 0.0, %v898
    %900 = vmatmul.bf16.gmra.mxu0 %v627
    %v901 = vpop.f32.mrf.mxu0
    %v902 = vadd.f32 0.0, %v901
    %v903 = vpop.f32.mrf.mxu0
    %v904 = vadd.f32 0.0, %v903
    %905 = vmatmul.bf16.gmra.mxu0 %v630
    %v906 = vpop.f32.mrf.mxu0
    %v907 = vadd.f32 0.0, %v906
    %v908 = vpop.f32.mrf.mxu0
    %v909 = vadd.f32 0.0, %v908
    %910 = vmatmul.bf16.gmra.mxu0 %v633
    %v911 = vpop.f32.mrf.mxu0
    %v912 = vadd.f32 0.0, %v911
    %v913 = vpop.f32.mrf.mxu0
    %v914 = vadd.f32 0.0, %v913
    %915 = vmatmul.bf16.gmra.mxu0 %v636
    %v916 = vpop.f32.mrf.mxu0
    %v917 = vadd.f32 0.0, %v916
    %v918 = vpop.f32.mrf.mxu0
    %v919 = vadd.f32 0.0, %v918
    %920 = vmatmul.bf16.gmra.mxu0 %v639
    %v921 = vpop.f32.mrf.mxu0
    %v922 = vadd.f32 0.0, %v921
    %v923 = vpop.f32.mrf.mxu0
    %v924 = vadd.f32 0.0, %v923
    %925 = vmatmul.bf16.gmra.mxu0 %v642
    %v926 = vpop.f32.mrf.mxu0
    %v927 = vadd.f32 0.0, %v926
    %v928 = vpop.f32.mrf.mxu0
    %v929 = vadd.f32 0.0, %v928
    %930 = vmatmul.bf16.gmra.mxu0 %v645
    %v931 = vpop.f32.mrf.mxu0
    %v932 = vadd.f32 0.0, %v931
    %v933 = vpop.f32.mrf.mxu0
    %v934 = vadd.f32 0.0, %v933
    %935 = vmatmul.bf16.gmra.mxu0 %v648
    %v936 = vpop.f32.mrf.mxu0
    %v937 = vadd.f32 0.0, %v936
    %v938 = vpop.f32.mrf.mxu0
    %v939 = vadd.f32 0.0, %v938
    %940 = vmatmul.bf16.gmra.mxu0 %v651
    %v941 = vpop.f32.mrf.mxu0
    %v942 = vadd.f32 0.0, %v941
    %v943 = vpop.f32.mrf.mxu0
    %v944 = vadd.f32 0.0, %v943
    %945 = vmatmul.bf16.gmra.mxu0 %v654
    %v946 = vpop.f32.mrf.mxu0
    %v947 = vadd.f32 0.0, %v946
    %v948 = vpop.f32.mrf.mxu0
    %v949 = vadd.f32 0.0, %v948
    %950 = vmatmul.bf16.gmra.mxu0 %v657
    %v951 = vpop.f32.mrf.mxu0
    %v952 = vadd.f32 0.0, %v951
    %v953 = vpop.f32.mrf.mxu0
    %v954 = vadd.f32 0.0, %v953
    %955 = vmatmul.bf16.gmra.mxu0 %v660
    %v956 = vpop.f32.mrf.mxu0
    %v957 = vadd.f32 0.0, %v956
    %v958 = vpop.f32.mrf.mxu0
    %v959 = vadd.f32 0.0, %v958
    %960 = vmatmul.bf16.gmra.mxu0 %v663
    %v961 = vpop.f32.mrf.mxu0
    %v962 = vadd.f32 0.0, %v961
    %v963 = vpop.f32.mrf.mxu0
    %v964 = vadd.f32 0.0, %v963
    %965 = vmatmul.bf16.gmra.mxu0 %v666
    %v966 = vpop.f32.mrf.mxu0
    %v967 = vadd.f32 0.0, %v966
    %v968 = vpop.f32.mrf.mxu0
    %v969 = vadd.f32 0.0, %v968
    %970 = vmatmul.bf16.gmra.mxu0 %v669
    %v971 = vpop.f32.mrf.mxu0
    %v972 = vadd.f32 0.0, %v971
    %v973 = vpop.f32.mrf.mxu0
    %v974 = vadd.f32 0.0, %v973
    %975 = vmatmul.bf16.gmra.mxu0 %v672
    %v976 = vpop.f32.mrf.mxu0
    %v977 = vadd.f32 0.0, %v976
    %v978 = vpop.f32.mrf.mxu0
    %v979 = vadd.f32 0.0, %v978
    %980 = vmatmul.bf16.gmra.mxu0 %v675
    %v981 = vpop.f32.mrf.mxu0
    %v982 = vadd.f32 0.0, %v981
    %v983 = vpop.f32.mrf.mxu0
    %v984 = vadd.f32 0.0, %v983
    %985 = vmatmul.bf16.gmra.mxu0 %v678
    %v986 = vpop.f32.mrf.mxu0
    %v987 = vadd.f32 0.0, %v986
    %v988 = vpop.f32.mrf.mxu0
    %v989 = vadd.f32 0.0, %v988
    %990 = vmatmul.bf16.gmra.mxu0 %v681
    %v991 = vpop.f32.mrf.mxu0
    %v992 = vadd.f32 0.0, %v991
    %v993 = vpop.f32.mrf.mxu0
    %v994 = vadd.f32 0.0, %v993
    %995 = vmatmul.bf16.gmra.mxu0 %v684
    %v996 = vpop.f32.mrf.mxu0
    %v997 = vadd.f32 0.0, %v996
    %v998 = vpop.f32.mrf.mxu0
    %v999 = vadd.f32 0.0, %v998
    %1000 = vmatmul.bf16.gmra.mxu0 %v687
    %v1001 = vpop.f32.mrf.mxu0
    %v1002 = vadd.f32 0.0, %v1001
    %v1003 = vpop.f32.mrf.mxu0
    %v1004 = vadd.f32 0.0, %v1003
    %1005 = vmatmul.bf16.gmra.mxu0 %v690
    %v1006 = vpop.f32.mrf.mxu0
    %v1007 = vadd.f32 0.0, %v1006
    %v1008 = vpop.f32.mrf.mxu0
    %v1009 = vadd.f32 0.0, %v1008
    %1010 = vmatmul.bf16.gmra.mxu0 %v693
    %v1011 = vpop.f32.mrf.mxu0
    %v1012 = vadd.f32 0.0, %v1011
    %v1013 = vpop.f32.mrf.mxu0
    %v1014 = vadd.f32 0.0, %v1013
    %1015 = vmatmul.bf16.gmra.mxu0 %v696
    %v1016 = vpop.f32.mrf.mxu0
    %v1017 = vadd.f32 0.0, %v1016
    %v1018 = vpop.f32.mrf.mxu0
    %v1019 = vadd.f32 0.0, %v1018
    %1020 = vmatmul.bf16.gmra.mxu0 %v699
    %v1021 = vpop.f32.mrf.mxu0
    %v1022 = vadd.f32 0.0, %v1021
    %v1023 = vpop.f32.mrf.mxu0
    %v1024 = vadd.f32 0.0, %v1023
    %1025 = vmatmul.bf16.gmra.mxu0 %v702
    %v1026 = vpop.f32.mrf.mxu0
    %v1027 = vadd.f32 0.0, %v1026
    %v1028 = vpop.f32.mrf.mxu0
    %v1029 = vadd.f32 0.0, %v1028
    %1030 = vmatmul.bf16.gmra.mxu0 %v705
    %v1031 = vpop.f32.mrf.mxu0
    %v1032 = vadd.f32 0.0, %v1031
    %v1033 = vpop.f32.mrf.mxu0
    %v1034 = vadd.f32 0.0, %v1033
    %1035 = vmatmul.bf16.gmra.mxu0 %v708
    %v1036 = vpop.f32.mrf.mxu0
    %v1037 = vadd.f32 0.0, %v1036
    %v1038 = vpop.f32.mrf.mxu0
    %v1039 = vadd.f32 0.0, %v1038
    %1040 = vmatmul.bf16.gmra.mxu0 %v711
    %v1041 = vpop.f32.mrf.mxu0
    %v1042 = vadd.f32 0.0, %v1041
    %v1043 = vpop.f32.mrf.mxu0
    %v1044 = vadd.f32 0.0, %v1043
    %1045 = vdwg.mxu0
    %v1046 = vpack.c.bf16 %v727, %v727
    %v1047 = vpack.c.bf16 %v729, %v729
    %v1048 = vpack.c.bf16 %v732, %v732
    %v1049 = vpack.c.bf16 %v734, %v734
    %v1050 = vpack.c.bf16 %v737, %v737
    %v1051 = vpack.c.bf16 %v739, %v739
    %v1052 = vpack.c.bf16 %v742, %v742
    %v1053 = vpack.c.bf16 %v744, %v744
    %v1054 = vpack.c.bf16 %v747, %v747
    %v1055 = vpack.c.bf16 %v749, %v749
    %v1056 = vpack.c.bf16 %v752, %v752
    %v1057 = vpack.c.bf16 %v754, %v754
    %v1058 = vpack.c.bf16 %v757, %v757
    %v1059 = vpack.c.bf16 %v759, %v759
    %v1060 = vpack.c.bf16 %v762, %v762
    %v1061 = vpack.c.bf16 %v764, %v764
    %v1062 = vpack.c.bf16 %v767, %v767
    %v1063 = vpack.c.bf16 %v769, %v769
    %v1064 = vpack.c.bf16 %v772, %v772
    %v1065 = vpack.c.bf16 %v774, %v774
    %v1066 = vpack.c.bf16 %v777, %v777
    %v1067 = vpack.c.bf16 %v779, %v779
    %v1068 = vpack.c.bf16 %v782, %v782
    %v1069 = vpack.c.bf16 %v784, %v784
    %v1070 = vpack.c.bf16 %v787, %v787
    %v1071 = vpack.c.bf16 %v789, %v789
    %v1072 = vpack.c.bf16 %v792, %v792
    %v1073 = vpack.c.bf16 %v794, %v794
    %v1074 = vpack.c.bf16 %v797, %v797
    %v1075 = vpack.c.bf16 %v799, %v799
    %v1076 = vpack.c.bf16 %v802, %v802
    %v1077 = vpack.c.bf16 %v804, %v804
    %v1078 = vpack.c.bf16 %v807, %v807
    %v1079 = vpack.c.bf16 %v809, %v809
    %v1080 = vpack.c.bf16 %v812, %v812
    %v1081 = vpack.c.bf16 %v814, %v814
    %v1082 = vpack.c.bf16 %v817, %v817
    %v1083 = vpack.c.bf16 %v819, %v819
    %v1084 = vpack.c.bf16 %v822, %v822
    %v1085 = vpack.c.bf16 %v824, %v824
    %v1086 = vpack.c.bf16 %v827, %v827
    %v1087 = vpack.c.bf16 %v829, %v829
    %v1088 = vpack.c.bf16 %v832, %v832
    %v1089 = vpack.c.bf16 %v834, %v834
    %v1090 = vpack.c.bf16 %v837, %v837
    %v1091 = vpack.c.bf16 %v839, %v839
    %v1092 = vpack.c.bf16 %v842, %v842
    %v1093 = vpack.c.bf16 %v844, %v844
    %v1094 = vpack.c.bf16 %v847, %v847
    %v1095 = vpack.c.bf16 %v849, %v849
    %v1096 = vpack.c.bf16 %v852, %v852
    %v1097 = vpack.c.bf16 %v854, %v854
    %v1098 = vpack.c.bf16 %v857, %v857
    %v1099 = vpack.c.bf16 %v859, %v859
    %v1100 = vpack.c.bf16 %v862, %v862
    %v1101 = vpack.c.bf16 %v864, %v864
    %v1102 = vpack.c.bf16 %v867, %v867
    %v1103 = vpack.c.bf16 %v869, %v869
    %v1104 = vpack.c.bf16 %v872, %v872
    %v1105 = vpack.c.bf16 %v874, %v874
    %v1106 = vpack.c.bf16 %v877, %v877
    %v1107 = vpack.c.bf16 %v879, %v879
    %v1108 = vpack.c.bf16 %v882, %v882
    %v1109 = vpack.c.bf16 %v884, %v884
    %v1110 = vpack.c.bf16 %v887, %v887
    %v1111 = vpack.c.bf16 %v889, %v889
    %v1112 = vpack.c.bf16 %v892, %v892
    %v1113 = vpack.c.bf16 %v894, %v894
    %v1114 = vpack.c.bf16 %v897, %v897
    %v1115 = vpack.c.bf16 %v899, %v899
    %v1116 = vpack.c.bf16 %v902, %v902
    %v1117 = vpack.c.bf16 %v904, %v904
    %v1118 = vpack.c.bf16 %v907, %v907
    %v1119 = vpack.c.bf16 %v909, %v909
    %v1120 = vpack.c.bf16 %v912, %v912
    %v1121 = vpack.c.bf16 %v914, %v914
    %v1122 = vpack.c.bf16 %v917, %v917
    %v1123 = vpack.c.bf16 %v919, %v919
    %v1124 = vpack.c.bf16 %v922, %v922
    %v1125 = vpack.c.bf16 %v924, %v924
    %v1126 = vpack.c.bf16 %v927, %v927
    %v1127 = vpack.c.bf16 %v929, %v929
    %v1128 = vpack.c.bf16 %v932, %v932
    %v1129 = vpack.c.bf16 %v934, %v934
    %v1130 = vpack.c.bf16 %v937, %v937
    %v1131 = vpack.c.bf16 %v939, %v939
    %v1132 = vpack.c.bf16 %v942, %v942
    %v1133 = vpack.c.bf16 %v944, %v944
    %v1134 = vpack.c.bf16 %v947, %v947
    %v1135 = vpack.c.bf16 %v949, %v949
    %v1136 = vpack.c.bf16 %v952, %v952
    %v1137 = vpack.c.bf16 %v954, %v954
    %v1138 = vpack.c.bf16 %v957, %v957
    %v1139 = vpack.c.bf16 %v959, %v959
    %v1140 = vpack.c.bf16 %v962, %v962
    %v1141 = vpack.c.bf16 %v964, %v964
    %v1142 = vpack.c.bf16 %v967, %v967
    %v1143 = vpack.c.bf16 %v969, %v969
    %v1144 = vpack.c.bf16 %v972, %v972
    %v1145 = vpack.c.bf16 %v974, %v974
    %v1146 = vpack.c.bf16 %v977, %v977
    %v1147 = vpack.c.bf16 %v979, %v979
    %v1148 = vpack.c.bf16 %v982, %v982
    %v1149 = vpack.c.bf16 %v984, %v984
    %v1150 = vpack.c.bf16 %v987, %v987
    %v1151 = vpack.c.bf16 %v989, %v989
    %v1152 = vpack.c.bf16 %v992, %v992
    %v1153 = vpack.c.bf16 %v994, %v994
    %v1154 = vpack.c.bf16 %v997, %v997
    %v1155 = vpack.c.bf16 %v999, %v999
    %v1156 = vpack.c.bf16 %v1002, %v1002
    %v1157 = vpack.c.bf16 %v1004, %v1004
    %v1158 = vpack.c.bf16 %v1007, %v1007
    %v1159 = vpack.c.bf16 %v1009, %v1009
    %v1160 = vpack.c.bf16 %v1012, %v1012
    %v1161 = vpack.c.bf16 %v1014, %v1014
    %v1162 = vpack.c.bf16 %v1017, %v1017
    %v1163 = vpack.c.bf16 %v1019, %v1019
    %v1164 = vpack.c.bf16 %v1022, %v1022
    %v1165 = vpack.c.bf16 %v1024, %v1024
    %v1166 = vpack.c.bf16 %v1027, %v1027
    %v1167 = vpack.c.bf16 %v1029, %v1029
    %v1168 = vpack.c.bf16 %v1032, %v1032
    %v1169 = vpack.c.bf16 %v1034, %v1034
    %v1170 = vpack.c.bf16 %v1037, %v1037
    %v1171 = vpack.c.bf16 %v1039, %v1039
    %v1172 = vpack.c.bf16 %v1042, %v1042
    %v1173 = vpack.c.bf16 %v1044, %v1044
    %vm1174 = vcmask 3072
    %1175 = vst.msk [vmem:[%s2] sm:$0xf] %vm1174, %v1046
    %1176 = vst.msk [vmem:[%s2 + $0x4] sm:$0xf] %vm1174, %v1047
    %1177 = vst.msk [vmem:[%s2 + $0x8] sm:$0xf] %vm1174, %v1048
    %1178 = vst.msk [vmem:[%s2 + $0xc] sm:$0xf] %vm1174, %v1049
    %1179 = vst.msk [vmem:[%s2 + $0x10] sm:$0xf] %vm1174, %v1050
    %1180 = vst.msk [vmem:[%s2 + $0x14] sm:$0xf] %vm1174, %v1051
    %1181 = vst.msk [vmem:[%s2 + $0x18] sm:$0xf] %vm1174, %v1052
    %1182 = vst.msk [vmem:[%s2 + $0x1c] sm:$0xf] %vm1174, %v1053
    %1183 = vst.msk [vmem:[%s2 + $0x20] sm:$0xf] %vm1174, %v1054
    %1184 = vst.msk [vmem:[%s2 + $0x24] sm:$0xf] %vm1174, %v1055
    %1185 = vst.msk [vmem:[%s2 + $0x28] sm:$0xf] %vm1174, %v1056
    %1186 = vst.msk [vmem:[%s2 + $0x2c] sm:$0xf] %vm1174, %v1057
    %1187 = vst.msk [vmem:[%s2 + $0x30] sm:$0xf] %vm1174, %v1058
    %1188 = vst.msk [vmem:[%s2 + $0x34] sm:$0xf] %vm1174, %v1059
    %1189 = vst.msk [vmem:[%s2 + $0x38] sm:$0xf] %vm1174, %v1060
    %1190 = vst.msk [vmem:[%s2 + $0x3c] sm:$0xf] %vm1174, %v1061
    %1191 = vst.msk [vmem:[%s2 + $0x40] sm:$0xf] %vm1174, %v1062
    %1192 = vst.msk [vmem:[%s2 + $0x44] sm:$0xf] %vm1174, %v1063
    %1193 = vst.msk [vmem:[%s2 + $0x48] sm:$0xf] %vm1174, %v1064
    %1194 = vst.msk [vmem:[%s2 + $0x4c] sm:$0xf] %vm1174, %v1065
    %1195 = vst.msk [vmem:[%s2 + $0x50] sm:$0xf] %vm1174, %v1066
    %1196 = vst.msk [vmem:[%s2 + $0x54] sm:$0xf] %vm1174, %v1067
    %1197 = vst.msk [vmem:[%s2 + $0x58] sm:$0xf] %vm1174, %v1068
    %1198 = vst.msk [vmem:[%s2 + $0x5c] sm:$0xf] %vm1174, %v1069
    %1199 = vst.msk [vmem:[%s2 + $0x60] sm:$0xf] %vm1174, %v1070
    %1200 = vst.msk [vmem:[%s2 + $0x64] sm:$0xf] %vm1174, %v1071
    %1201 = vst.msk [vmem:[%s2 + $0x68] sm:$0xf] %vm1174, %v1072
    %1202 = vst.msk [vmem:[%s2 + $0x6c] sm:$0xf] %vm1174, %v1073
    %1203 = vst.msk [vmem:[%s2 + $0x70] sm:$0xf] %vm1174, %v1074
    %1204 = vst.msk [vmem:[%s2 + $0x74] sm:$0xf] %vm1174, %v1075
    %1205 = vst.msk [vmem:[%s2 + $0x78] sm:$0xf] %vm1174, %v1076
    %1206 = vst.msk [vmem:[%s2 + $0x7c] sm:$0xf] %vm1174, %v1077
    %1207 = vst.msk [vmem:[%s2 + $0x80] sm:$0xf] %vm1174, %v1078
    %1208 = vst.msk [vmem:[%s2 + $0x84] sm:$0xf] %vm1174, %v1079
    %1209 = vst.msk [vmem:[%s2 + $0x88] sm:$0xf] %vm1174, %v1080
    %1210 = vst.msk [vmem:[%s2 + $0x8c] sm:$0xf] %vm1174, %v1081
    %1211 = vst.msk [vmem:[%s2 + $0x90] sm:$0xf] %vm1174, %v1082
    %1212 = vst.msk [vmem:[%s2 + $0x94] sm:$0xf] %vm1174, %v1083
    %1213 = vst.msk [vmem:[%s2 + $0x98] sm:$0xf] %vm1174, %v1084
    %1214 = vst.msk [vmem:[%s2 + $0x9c] sm:$0xf] %vm1174, %v1085
    %1215 = vst.msk [vmem:[%s2 + $0xa0] sm:$0xf] %vm1174, %v1086
    %1216 = vst.msk [vmem:[%s2 + $0xa4] sm:$0xf] %vm1174, %v1087
    %1217 = vst.msk [vmem:[%s2 + $0xa8] sm:$0xf] %vm1174, %v1088
    %1218 = vst.msk [vmem:[%s2 + $0xac] sm:$0xf] %vm1174, %v1089
    %1219 = vst.msk [vmem:[%s2 + $0xb0] sm:$0xf] %vm1174, %v1090
    %1220 = vst.msk [vmem:[%s2 + $0xb4] sm:$0xf] %vm1174, %v1091
    %1221 = vst.msk [vmem:[%s2 + $0xb8] sm:$0xf] %vm1174, %v1092
    %1222 = vst.msk [vmem:[%s2 + $0xbc] sm:$0xf] %vm1174, %v1093
    %1223 = vst.msk [vmem:[%s2 + $0xc0] sm:$0xf] %vm1174, %v1094
    %1224 = vst.msk [vmem:[%s2 + $0xc4] sm:$0xf] %vm1174, %v1095
    %1225 = vst.msk [vmem:[%s2 + $0xc8] sm:$0xf] %vm1174, %v1096
    %1226 = vst.msk [vmem:[%s2 + $0xcc] sm:$0xf] %vm1174, %v1097
    %1227 = vst.msk [vmem:[%s2 + $0xd0] sm:$0xf] %vm1174, %v1098
    %1228 = vst.msk [vmem:[%s2 + $0xd4] sm:$0xf] %vm1174, %v1099
    %1229 = vst.msk [vmem:[%s2 + $0xd8] sm:$0xf] %vm1174, %v1100
    %1230 = vst.msk [vmem:[%s2 + $0xdc] sm:$0xf] %vm1174, %v1101
    %1231 = vst.msk [vmem:[%s2 + $0xe0] sm:$0xf] %vm1174, %v1102
    %1232 = vst.msk [vmem:[%s2 + $0xe4] sm:$0xf] %vm1174, %v1103
    %1233 = vst.msk [vmem:[%s2 + $0xe8] sm:$0xf] %vm1174, %v1104
    %1234 = vst.msk [vmem:[%s2 + $0xec] sm:$0xf] %vm1174, %v1105
    %1235 = vst.msk [vmem:[%s2 + $0xf0] sm:$0xf] %vm1174, %v1106
    %1236 = vst.msk [vmem:[%s2 + $0xf4] sm:$0xf] %vm1174, %v1107
    %1237 = vst.msk [vmem:[%s2 + $0xf8] sm:$0xf] %vm1174, %v1108
    %1238 = vst.msk [vmem:[%s2 + $0xfc] sm:$0xf] %vm1174, %v1109
    %1239 = vst.msk [vmem:[%s2 + $0x100] sm:$0xf] %vm1174, %v1110
    %1240 = vst.msk [vmem:[%s2 + $0x104] sm:$0xf] %vm1174, %v1111
    %1241 = vst.msk [vmem:[%s2 + $0x108] sm:$0xf] %vm1174, %v1112
    %1242 = vst.msk [vmem:[%s2 + $0x10c] sm:$0xf] %vm1174, %v1113
    %1243 = vst.msk [vmem:[%s2 + $0x110] sm:$0xf] %vm1174, %v1114
    %1244 = vst.msk [vmem:[%s2 + $0x114] sm:$0xf] %vm1174, %v1115
    %1245 = vst.msk [vmem:[%s2 + $0x118] sm:$0xf] %vm1174, %v1116
    %1246 = vst.msk [vmem:[%s2 + $0x11c] sm:$0xf] %vm1174, %v1117
    %1247 = vst.msk [vmem:[%s2 + $0x120] sm:$0xf] %vm1174, %v1118
    %1248 = vst.msk [vmem:[%s2 + $0x124] sm:$0xf] %vm1174, %v1119
    %1249 = vst.msk [vmem:[%s2 + $0x128] sm:$0xf] %vm1174, %v1120
    %1250 = vst.msk [vmem:[%s2 + $0x12c] sm:$0xf] %vm1174, %v1121
    %1251 = vst.msk [vmem:[%s2 + $0x130] sm:$0xf] %vm1174, %v1122
    %1252 = vst.msk [vmem:[%s2 + $0x134] sm:$0xf] %vm1174, %v1123
    %1253 = vst.msk [vmem:[%s2 + $0x138] sm:$0xf] %vm1174, %v1124
    %1254 = vst.msk [vmem:[%s2 + $0x13c] sm:$0xf] %vm1174, %v1125
    %1255 = vst.msk [vmem:[%s2 + $0x140] sm:$0xf] %vm1174, %v1126
    %1256 = vst.msk [vmem:[%s2 + $0x144] sm:$0xf] %vm1174, %v1127
    %1257 = vst.msk [vmem:[%s2 + $0x148] sm:$0xf] %vm1174, %v1128
    %1258 = vst.msk [vmem:[%s2 + $0x14c] sm:$0xf] %vm1174, %v1129
    %1259 = vst.msk [vmem:[%s2 + $0x150] sm:$0xf] %vm1174, %v1130
    %1260 = vst.msk [vmem:[%s2 + $0x154] sm:$0xf] %vm1174, %v1131
    %1261 = vst.msk [vmem:[%s2 + $0x158] sm:$0xf] %vm1174, %v1132
    %1262 = vst.msk [vmem:[%s2 + $0x15c] sm:$0xf] %vm1174, %v1133
    %1263 = vst.msk [vmem:[%s2 + $0x160] sm:$0xf] %vm1174, %v1134
    %1264 = vst.msk [vmem:[%s2 + $0x164] sm:$0xf] %vm1174, %v1135
    %1265 = vst.msk [vmem:[%s2 + $0x168] sm:$0xf] %vm1174, %v1136
    %1266 = vst.msk [vmem:[%s2 + $0x16c] sm:$0xf] %vm1174, %v1137
    %1267 = vst.msk [vmem:[%s2 + $0x170] sm:$0xf] %vm1174, %v1138
    %1268 = vst.msk [vmem:[%s2 + $0x174] sm:$0xf] %vm1174, %v1139
    %1269 = vst.msk [vmem:[%s2 + $0x178] sm:$0xf] %vm1174, %v1140
    %1270 = vst.msk [vmem:[%s2 + $0x17c] sm:$0xf] %vm1174, %v1141
    %1271 = vst.msk [vmem:[%s2 + $0x180] sm:$0xf] %vm1174, %v1142
    %1272 = vst.msk [vmem:[%s2 + $0x184] sm:$0xf] %vm1174, %v1143
    %1273 = vst.msk [vmem:[%s2 + $0x188] sm:$0xf] %vm1174, %v1144
    %1274 = vst.msk [vmem:[%s2 + $0x18c] sm:$0xf] %vm1174, %v1145
    %1275 = vst.msk [vmem:[%s2 + $0x190] sm:$0xf] %vm1174, %v1146
    %1276 = vst.msk [vmem:[%s2 + $0x194] sm:$0xf] %vm1174, %v1147
    %1277 = vst.msk [vmem:[%s2 + $0x198] sm:$0xf] %vm1174, %v1148
    %1278 = vst.msk [vmem:[%s2 + $0x19c] sm:$0xf] %vm1174, %v1149
    %1279 = vst.msk [vmem:[%s2 + $0x1a0] sm:$0xf] %vm1174, %v1150
    %1280 = vst.msk [vmem:[%s2 + $0x1a4] sm:$0xf] %vm1174, %v1151
    %1281 = vst.msk [vmem:[%s2 + $0x1a8] sm:$0xf] %vm1174, %v1152
    %1282 = vst.msk [vmem:[%s2 + $0x1ac] sm:$0xf] %vm1174, %v1153
    %1283 = vst.msk [vmem:[%s2 + $0x1b0] sm:$0xf] %vm1174, %v1154
    %1284 = vst.msk [vmem:[%s2 + $0x1b4] sm:$0xf] %vm1174, %v1155
    %1285 = vst.msk [vmem:[%s2 + $0x1b8] sm:$0xf] %vm1174, %v1156
    %1286 = vst.msk [vmem:[%s2 + $0x1bc] sm:$0xf] %vm1174, %v1157
    %1287 = vst.msk [vmem:[%s2 + $0x1c0] sm:$0xf] %vm1174, %v1158
    %1288 = vst.msk [vmem:[%s2 + $0x1c4] sm:$0xf] %vm1174, %v1159
    %1289 = vst.msk [vmem:[%s2 + $0x1c8] sm:$0xf] %vm1174, %v1160
    %1290 = vst.msk [vmem:[%s2 + $0x1cc] sm:$0xf] %vm1174, %v1161
    %1291 = vst.msk [vmem:[%s2 + $0x1d0] sm:$0xf] %vm1174, %v1162
    %1292 = vst.msk [vmem:[%s2 + $0x1d4] sm:$0xf] %vm1174, %v1163
    %1293 = vst.msk [vmem:[%s2 + $0x1d8] sm:$0xf] %vm1174, %v1164
    %1294 = vst.msk [vmem:[%s2 + $0x1dc] sm:$0xf] %vm1174, %v1165
    %1295 = vst.msk [vmem:[%s2 + $0x1e0] sm:$0xf] %vm1174, %v1166
    %1296 = vst.msk [vmem:[%s2 + $0x1e4] sm:$0xf] %vm1174, %v1167
    %1297 = vst.msk [vmem:[%s2 + $0x1e8] sm:$0xf] %vm1174, %v1168
    %1298 = vst.msk [vmem:[%s2 + $0x1ec] sm:$0xf] %vm1174, %v1169
    %1299 = vst.msk [vmem:[%s2 + $0x1f0] sm:$0xf] %vm1174, %v1170
    %1300 = vst.msk [vmem:[%s2 + $0x1f4] sm:$0xf] %vm1174, %v1171
    %1301 = vst.msk [vmem:[%s2 + $0x1f8] sm:$0xf] %vm1174, %v1172
    %1302 = vst.msk [vmem:[%s2 + $0x1fc] sm:$0xf] %vm1174, %v1173
    %vm1303 = vcmask 7168
    %v1304 = vsel %vm1303, %v727, 0.0
    %v1305 = vsel %vm1303, %v729, 0.0
    %v1306 = vadd.f32 %v1304, %v1305
    %v1307 = vsel %vm1303, %v732, 0.0
    %v1308 = vadd.f32 %v1306, %v1307
    %v1309 = vsel %vm1303, %v734, 0.0
    %v1310 = vadd.f32 %v1308, %v1309
    %v1311 = vsel %vm1303, %v737, 0.0
    %v1312 = vadd.f32 %v1310, %v1311
    %v1313 = vsel %vm1303, %v739, 0.0
    %v1314 = vadd.f32 %v1312, %v1313
    %v1315 = vsel %vm1303, %v742, 0.0
    %v1316 = vadd.f32 %v1314, %v1315
    %v1317 = vsel %vm1303, %v744, 0.0
    %v1318 = vadd.f32 %v1316, %v1317
    %v1319 = vsel %vm1303, %v747, 0.0
    %v1320 = vadd.f32 %v1318, %v1319
    %v1321 = vsel %vm1303, %v749, 0.0
    %v1322 = vadd.f32 %v1320, %v1321
    %v1323 = vsel %vm1303, %v752, 0.0
    %v1324 = vadd.f32 %v1322, %v1323
    %v1325 = vsel %vm1303, %v754, 0.0
    %v1326 = vadd.f32 %v1324, %v1325
    %v1327 = vsel %vm1303, %v757, 0.0
    %v1328 = vadd.f32 %v1326, %v1327
    %v1329 = vsel %vm1303, %v759, 0.0
    %v1330 = vadd.f32 %v1328, %v1329
    %v1331 = vsel %vm1303, %v762, 0.0
    %v1332 = vadd.f32 %v1330, %v1331
    %v1333 = vsel %vm1303, %v764, 0.0
    %v1334 = vadd.f32 %v1332, %v1333
    %v1335 = vsel %vm1303, %v767, 0.0
    %v1336 = vadd.f32 %v1334, %v1335
    %v1337 = vsel %vm1303, %v769, 0.0
    %v1338 = vadd.f32 %v1336, %v1337
    %v1339 = vsel %vm1303, %v772, 0.0
    %v1340 = vadd.f32 %v1338, %v1339
    %v1341 = vsel %vm1303, %v774, 0.0
    %v1342 = vadd.f32 %v1340, %v1341
    %v1343 = vsel %vm1303, %v777, 0.0
    %v1344 = vadd.f32 %v1342, %v1343
    %v1345 = vsel %vm1303, %v779, 0.0
    %v1346 = vadd.f32 %v1344, %v1345
    %v1347 = vsel %vm1303, %v782, 0.0
    %v1348 = vadd.f32 %v1346, %v1347
    %v1349 = vsel %vm1303, %v784, 0.0
    %v1350 = vadd.f32 %v1348, %v1349
    %v1351 = vsel %vm1303, %v787, 0.0
    %v1352 = vadd.f32 %v1350, %v1351
    %v1353 = vsel %vm1303, %v789, 0.0
    %v1354 = vadd.f32 %v1352, %v1353
    %v1355 = vsel %vm1303, %v792, 0.0
    %v1356 = vadd.f32 %v1354, %v1355
    %v1357 = vsel %vm1303, %v794, 0.0
    %v1358 = vadd.f32 %v1356, %v1357
    %v1359 = vsel %vm1303, %v797, 0.0
    %v1360 = vadd.f32 %v1358, %v1359
    %v1361 = vsel %vm1303, %v799, 0.0
    %v1362 = vadd.f32 %v1360, %v1361
    %v1363 = vsel %vm1303, %v802, 0.0
    %v1364 = vadd.f32 %v1362, %v1363
    %v1365 = vsel %vm1303, %v804, 0.0
    %v1366 = vadd.f32 %v1364, %v1365
    %v1367 = vsel %vm1303, %v807, 0.0
    %v1368 = vadd.f32 %v1366, %v1367
    %v1369 = vsel %vm1303, %v809, 0.0
    %v1370 = vadd.f32 %v1368, %v1369
    %v1371 = vsel %vm1303, %v812, 0.0
    %v1372 = vadd.f32 %v1370, %v1371
    %v1373 = vsel %vm1303, %v814, 0.0
    %v1374 = vadd.f32 %v1372, %v1373
    %v1375 = vsel %vm1303, %v817, 0.0
    %v1376 = vadd.f32 %v1374, %v1375
    %v1377 = vsel %vm1303, %v819, 0.0
    %v1378 = vadd.f32 %v1376, %v1377
    %v1379 = vsel %vm1303, %v822, 0.0
    %v1380 = vadd.f32 %v1378, %v1379
    %v1381 = vsel %vm1303, %v824, 0.0
    %v1382 = vadd.f32 %v1380, %v1381
    %v1383 = vsel %vm1303, %v827, 0.0
    %v1384 = vadd.f32 %v1382, %v1383
    %v1385 = vsel %vm1303, %v829, 0.0
    %v1386 = vadd.f32 %v1384, %v1385
    %v1387 = vsel %vm1303, %v832, 0.0
    %v1388 = vadd.f32 %v1386, %v1387
    %v1389 = vsel %vm1303, %v834, 0.0
    %v1390 = vadd.f32 %v1388, %v1389
    %v1391 = vsel %vm1303, %v837, 0.0
    %v1392 = vadd.f32 %v1390, %v1391
    %v1393 = vsel %vm1303, %v839, 0.0
    %v1394 = vadd.f32 %v1392, %v1393
    %v1395 = vsel %vm1303, %v842, 0.0
    %v1396 = vadd.f32 %v1394, %v1395
    %v1397 = vsel %vm1303, %v844, 0.0
    %v1398 = vadd.f32 %v1396, %v1397
    %v1399 = vsel %vm1303, %v847, 0.0
    %v1400 = vadd.f32 %v1398, %v1399
    %v1401 = vsel %vm1303, %v849, 0.0
    %v1402 = vadd.f32 %v1400, %v1401
    %v1403 = vsel %vm1303, %v852, 0.0
    %v1404 = vadd.f32 %v1402, %v1403
    %v1405 = vsel %vm1303, %v854, 0.0
    %v1406 = vadd.f32 %v1404, %v1405
    %v1407 = vsel %vm1303, %v857, 0.0
    %v1408 = vadd.f32 %v1406, %v1407
    %v1409 = vsel %vm1303, %v859, 0.0
    %v1410 = vadd.f32 %v1408, %v1409
    %v1411 = vsel %vm1303, %v862, 0.0
    %v1412 = vadd.f32 %v1410, %v1411
    %v1413 = vsel %vm1303, %v864, 0.0
    %v1414 = vadd.f32 %v1412, %v1413
    %v1415 = vsel %vm1303, %v867, 0.0
    %v1416 = vadd.f32 %v1414, %v1415
    %v1417 = vsel %vm1303, %v869, 0.0
    %v1418 = vadd.f32 %v1416, %v1417
    %v1419 = vsel %vm1303, %v872, 0.0
    %v1420 = vadd.f32 %v1418, %v1419
    %v1421 = vsel %vm1303, %v874, 0.0
    %v1422 = vadd.f32 %v1420, %v1421
    %v1423 = vsel %vm1303, %v877, 0.0
    %v1424 = vadd.f32 %v1422, %v1423
    %v1425 = vsel %vm1303, %v879, 0.0
    %v1426 = vadd.f32 %v1424, %v1425
    %v1427 = vsel %vm1303, %v882, 0.0
    %v1428 = vadd.f32 %v1426, %v1427
    %v1429 = vsel %vm1303, %v884, 0.0
    %v1430 = vadd.f32 %v1428, %v1429
    %v1431 = vsel %vm1303, %v887, 0.0
    %v1432 = vadd.f32 %v1430, %v1431
    %v1433 = vsel %vm1303, %v889, 0.0
    %v1434 = vadd.f32 %v1432, %v1433
    %v1435 = vsel %vm1303, %v892, 0.0
    %v1436 = vadd.f32 %v1434, %v1435
    %v1437 = vsel %vm1303, %v894, 0.0
    %v1438 = vadd.f32 %v1436, %v1437
    %v1439 = vsel %vm1303, %v897, 0.0
    %v1440 = vadd.f32 %v1438, %v1439
    %v1441 = vsel %vm1303, %v899, 0.0
    %v1442 = vadd.f32 %v1440, %v1441
    %v1443 = vsel %vm1303, %v902, 0.0
    %v1444 = vadd.f32 %v1442, %v1443
    %v1445 = vsel %vm1303, %v904, 0.0
    %v1446 = vadd.f32 %v1444, %v1445
    %v1447 = vsel %vm1303, %v907, 0.0
    %v1448 = vadd.f32 %v1446, %v1447
    %v1449 = vsel %vm1303, %v909, 0.0
    %v1450 = vadd.f32 %v1448, %v1449
    %v1451 = vsel %vm1303, %v912, 0.0
    %v1452 = vadd.f32 %v1450, %v1451
    %v1453 = vsel %vm1303, %v914, 0.0
    %v1454 = vadd.f32 %v1452, %v1453
    %v1455 = vsel %vm1303, %v917, 0.0
    %v1456 = vadd.f32 %v1454, %v1455
    %v1457 = vsel %vm1303, %v919, 0.0
    %v1458 = vadd.f32 %v1456, %v1457
    %v1459 = vsel %vm1303, %v922, 0.0
    %v1460 = vadd.f32 %v1458, %v1459
    %v1461 = vsel %vm1303, %v924, 0.0
    %v1462 = vadd.f32 %v1460, %v1461
    %v1463 = vsel %vm1303, %v927, 0.0
    %v1464 = vadd.f32 %v1462, %v1463
    %v1465 = vsel %vm1303, %v929, 0.0
    %v1466 = vadd.f32 %v1464, %v1465
    %v1467 = vsel %vm1303, %v932, 0.0
    %v1468 = vadd.f32 %v1466, %v1467
    %v1469 = vsel %vm1303, %v934, 0.0
    %v1470 = vadd.f32 %v1468, %v1469
    %v1471 = vsel %vm1303, %v937, 0.0
    %v1472 = vadd.f32 %v1470, %v1471
    %v1473 = vsel %vm1303, %v939, 0.0
    %v1474 = vadd.f32 %v1472, %v1473
    %v1475 = vsel %vm1303, %v942, 0.0
    %v1476 = vadd.f32 %v1474, %v1475
    %v1477 = vsel %vm1303, %v944, 0.0
    %v1478 = vadd.f32 %v1476, %v1477
    %v1479 = vsel %vm1303, %v947, 0.0
    %v1480 = vadd.f32 %v1478, %v1479
    %v1481 = vsel %vm1303, %v949, 0.0
    %v1482 = vadd.f32 %v1480, %v1481
    %v1483 = vsel %vm1303, %v952, 0.0
    %v1484 = vadd.f32 %v1482, %v1483
    %v1485 = vsel %vm1303, %v954, 0.0
    %v1486 = vadd.f32 %v1484, %v1485
    %v1487 = vsel %vm1303, %v957, 0.0
    %v1488 = vadd.f32 %v1486, %v1487
    %v1489 = vsel %vm1303, %v959, 0.0
    %v1490 = vadd.f32 %v1488, %v1489
    %v1491 = vsel %vm1303, %v962, 0.0
    %v1492 = vadd.f32 %v1490, %v1491
    %v1493 = vsel %vm1303, %v964, 0.0
    %v1494 = vadd.f32 %v1492, %v1493
    %v1495 = vsel %vm1303, %v967, 0.0
    %v1496 = vadd.f32 %v1494, %v1495
    %v1497 = vsel %vm1303, %v969, 0.0
    %v1498 = vadd.f32 %v1496, %v1497
    %v1499 = vsel %vm1303, %v972, 0.0
    %v1500 = vadd.f32 %v1498, %v1499
    %v1501 = vsel %vm1303, %v974, 0.0
    %v1502 = vadd.f32 %v1500, %v1501
    %v1503 = vsel %vm1303, %v977, 0.0
    %v1504 = vadd.f32 %v1502, %v1503
    %v1505 = vsel %vm1303, %v979, 0.0
    %v1506 = vadd.f32 %v1504, %v1505
    %v1507 = vsel %vm1303, %v982, 0.0
    %v1508 = vadd.f32 %v1506, %v1507
    %v1509 = vsel %vm1303, %v984, 0.0
    %v1510 = vadd.f32 %v1508, %v1509
    %v1511 = vsel %vm1303, %v987, 0.0
    %v1512 = vadd.f32 %v1510, %v1511
    %v1513 = vsel %vm1303, %v989, 0.0
    %v1514 = vadd.f32 %v1512, %v1513
    %v1515 = vsel %vm1303, %v992, 0.0
    %v1516 = vadd.f32 %v1514, %v1515
    %v1517 = vsel %vm1303, %v994, 0.0
    %v1518 = vadd.f32 %v1516, %v1517
    %v1519 = vsel %vm1303, %v997, 0.0
    %v1520 = vadd.f32 %v1518, %v1519
    %v1521 = vsel %vm1303, %v999, 0.0
    %v1522 = vadd.f32 %v1520, %v1521
    %v1523 = vsel %vm1303, %v1002, 0.0
    %v1524 = vadd.f32 %v1522, %v1523
    %v1525 = vsel %vm1303, %v1004, 0.0
    %v1526 = vadd.f32 %v1524, %v1525
    %v1527 = vsel %vm1303, %v1007, 0.0
    %v1528 = vadd.f32 %v1526, %v1527
    %v1529 = vsel %vm1303, %v1009, 0.0
    %v1530 = vadd.f32 %v1528, %v1529
    %v1531 = vsel %vm1303, %v1012, 0.0
    %v1532 = vadd.f32 %v1530, %v1531
    %v1533 = vsel %vm1303, %v1014, 0.0
    %v1534 = vadd.f32 %v1532, %v1533
    %v1535 = vsel %vm1303, %v1017, 0.0
    %v1536 = vadd.f32 %v1534, %v1535
    %v1537 = vsel %vm1303, %v1019, 0.0
    %v1538 = vadd.f32 %v1536, %v1537
    %v1539 = vsel %vm1303, %v1022, 0.0
    %v1540 = vadd.f32 %v1538, %v1539
    %v1541 = vsel %vm1303, %v1024, 0.0
    %v1542 = vadd.f32 %v1540, %v1541
    %v1543 = vsel %vm1303, %v1027, 0.0
    %v1544 = vadd.f32 %v1542, %v1543
    %v1545 = vsel %vm1303, %v1029, 0.0
    %v1546 = vadd.f32 %v1544, %v1545
    %v1547 = vsel %vm1303, %v1032, 0.0
    %v1548 = vadd.f32 %v1546, %v1547
    %v1549 = vsel %vm1303, %v1034, 0.0
    %v1550 = vadd.f32 %v1548, %v1549
    %v1551 = vsel %vm1303, %v1037, 0.0
    %v1552 = vadd.f32 %v1550, %v1551
    %v1553 = vsel %vm1303, %v1039, 0.0
    %v1554 = vadd.f32 %v1552, %v1553
    %v1555 = vsel %vm1303, %v1042, 0.0
    %v1556 = vadd.f32 %v1554, %v1555
    %v1557 = vsel %vm1303, %v1044, 0.0
    %v1558 = vadd.f32 %v1556, %v1557
    %v1559 = vrot.slane %v1558, 4
    %v1560 = vadd.f32 %v1558, %v1559
    %v1561 = vrot.slane %v1560, 2
    %v1562 = vadd.f32 %v1560, %v1561
    %v1563 = vrot.slane %v1562, 1
    %v1564 = vadd.f32 %v1562, %v1563
    %vm1565 = vcmask 0
    %1566 = vst.msk [vmem:[#allocation2] sm:$0x1] %vm1565, %v1564
    %v1567 = vmul.f32 %v727, %v727
    %v1568 = vmul.f32 %v729, %v729
    %v1569 = vmul.f32 %v732, %v732
    %v1570 = vmul.f32 %v734, %v734
    %v1571 = vmul.f32 %v737, %v737
    %v1572 = vmul.f32 %v739, %v739
    %v1573 = vmul.f32 %v742, %v742
    %v1574 = vmul.f32 %v744, %v744
    %v1575 = vmul.f32 %v747, %v747
    %v1576 = vmul.f32 %v749, %v749
    %v1577 = vmul.f32 %v752, %v752
    %v1578 = vmul.f32 %v754, %v754
    %v1579 = vmul.f32 %v757, %v757
    %v1580 = vmul.f32 %v759, %v759
    %v1581 = vmul.f32 %v762, %v762
    %v1582 = vmul.f32 %v764, %v764
    %v1583 = vmul.f32 %v767, %v767
    %v1584 = vmul.f32 %v769, %v769
    %v1585 = vmul.f32 %v772, %v772
    %v1586 = vmul.f32 %v774, %v774
    %v1587 = vmul.f32 %v777, %v777
    %v1588 = vmul.f32 %v779, %v779
    %v1589 = vmul.f32 %v782, %v782
    %v1590 = vmul.f32 %v784, %v784
    %v1591 = vmul.f32 %v787, %v787
    %v1592 = vmul.f32 %v789, %v789
    %v1593 = vmul.f32 %v792, %v792
    %v1594 = vmul.f32 %v794, %v794
    %v1595 = vmul.f32 %v797, %v797
    %v1596 = vmul.f32 %v799, %v799
    %v1597 = vmul.f32 %v802, %v802
    %v1598 = vmul.f32 %v804, %v804
    %v1599 = vmul.f32 %v807, %v807
    %v1600 = vmul.f32 %v809, %v809
    %v1601 = vmul.f32 %v812, %v812
    %v1602 = vmul.f32 %v814, %v814
    %v1603 = vmul.f32 %v817, %v817
    %v1604 = vmul.f32 %v819, %v819
    %v1605 = vmul.f32 %v822, %v822
    %v1606 = vmul.f32 %v824, %v824
    %v1607 = vmul.f32 %v827, %v827
    %v1608 = vmul.f32 %v829, %v829
    %v1609 = vmul.f32 %v832, %v832
    %v1610 = vmul.f32 %v834, %v834
    %v1611 = vmul.f32 %v837, %v837
    %v1612 = vmul.f32 %v839, %v839
    %v1613 = vmul.f32 %v842, %v842
    %v1614 = vmul.f32 %v844, %v844
    %v1615 = vmul.f32 %v847, %v847
    %v1616 = vmul.f32 %v849, %v849
    %v1617 = vmul.f32 %v852, %v852
    %v1618 = vmul.f32 %v854, %v854
    %v1619 = vmul.f32 %v857, %v857
    %v1620 = vmul.f32 %v859, %v859
    %v1621 = vmul.f32 %v862, %v862
    %v1622 = vmul.f32 %v864, %v864
    %v1623 = vmul.f32 %v867, %v867
    %v1624 = vmul.f32 %v869, %v869
    %v1625 = vmul.f32 %v872, %v872
    %v1626 = vmul.f32 %v874, %v874
    %v1627 = vmul.f32 %v877, %v877
    %v1628 = vmul.f32 %v879, %v879
    %v1629 = vmul.f32 %v882, %v882
    %v1630 = vmul.f32 %v884, %v884
    %v1631 = vmul.f32 %v887, %v887
    %v1632 = vmul.f32 %v889, %v889
    %v1633 = vmul.f32 %v892, %v892
    %v1634 = vmul.f32 %v894, %v894
    %v1635 = vmul.f32 %v897, %v897
    %v1636 = vmul.f32 %v899, %v899
    %v1637 = vmul.f32 %v902, %v902
    %v1638 = vmul.f32 %v904, %v904
    %v1639 = vmul.f32 %v907, %v907
    %v1640 = vmul.f32 %v909, %v909
    %v1641 = vmul.f32 %v912, %v912
    %v1642 = vmul.f32 %v914, %v914
    %v1643 = vmul.f32 %v917, %v917
    %v1644 = vmul.f32 %v919, %v919
    %v1645 = vmul.f32 %v922, %v922
    %v1646 = vmul.f32 %v924, %v924
    %v1647 = vmul.f32 %v927, %v927
    %v1648 = vmul.f32 %v929, %v929
    %v1649 = vmul.f32 %v932, %v932
    %v1650 = vmul.f32 %v934, %v934
    %v1651 = vmul.f32 %v937, %v937
    %v1652 = vmul.f32 %v939, %v939
    %v1653 = vmul.f32 %v942, %v942
    %v1654 = vmul.f32 %v944, %v944
    %v1655 = vmul.f32 %v947, %v947
    %v1656 = vmul.f32 %v949, %v949
    %v1657 = vmul.f32 %v952, %v952
    %v1658 = vmul.f32 %v954, %v954
    %v1659 = vmul.f32 %v957, %v957
    %v1660 = vmul.f32 %v959, %v959
    %v1661 = vmul.f32 %v962, %v962
    %v1662 = vmul.f32 %v964, %v964
    %v1663 = vmul.f32 %v967, %v967
    %v1664 = vmul.f32 %v969, %v969
    %v1665 = vmul.f32 %v972, %v972
    %v1666 = vmul.f32 %v974, %v974
    %v1667 = vmul.f32 %v977, %v977
    %v1668 = vmul.f32 %v979, %v979
    %v1669 = vmul.f32 %v982, %v982
    %v1670 = vmul.f32 %v984, %v984
    %v1671 = vmul.f32 %v987, %v987
    %v1672 = vmul.f32 %v989, %v989
    %v1673 = vmul.f32 %v992, %v992
    %v1674 = vmul.f32 %v994, %v994
    %v1675 = vmul.f32 %v997, %v997
    %v1676 = vmul.f32 %v999, %v999
    %v1677 = vmul.f32 %v1002, %v1002
    %v1678 = vmul.f32 %v1004, %v1004
    %v1679 = vmul.f32 %v1007, %v1007
    %v1680 = vmul.f32 %v1009, %v1009
    %v1681 = vmul.f32 %v1012, %v1012
    %v1682 = vmul.f32 %v1014, %v1014
    %v1683 = vmul.f32 %v1017, %v1017
    %v1684 = vmul.f32 %v1019, %v1019
    %v1685 = vmul.f32 %v1022, %v1022
    %v1686 = vmul.f32 %v1024, %v1024
    %v1687 = vmul.f32 %v1027, %v1027
    %v1688 = vmul.f32 %v1029, %v1029
    %v1689 = vmul.f32 %v1032, %v1032
    %v1690 = vmul.f32 %v1034, %v1034
    %v1691 = vmul.f32 %v1037, %v1037
    %v1692 = vmul.f32 %v1039, %v1039
    %v1693 = vmul.f32 %v1042, %v1042
    %v1694 = vmul.f32 %v1044, %v1044
    %v1695 = vsel %vm1303, %v1567, 0.0
    %v1696 = vsel %vm1303, %v1568, 0.0
    %v1697 = vadd.f32 %v1695, %v1696
    %v1698 = vsel %vm1303, %v1569, 0.0
    %v1699 = vadd.f32 %v1697, %v1698
    %v1700 = vsel %vm1303, %v1570, 0.0
    %v1701 = vadd.f32 %v1699, %v1700
    %v1702 = vsel %vm1303, %v1571, 0.0
    %v1703 = vadd.f32 %v1701, %v1702
    %v1704 = vsel %vm1303, %v1572, 0.0
    %v1705 = vadd.f32 %v1703, %v1704
    %v1706 = vsel %vm1303, %v1573, 0.0
    %v1707 = vadd.f32 %v1705, %v1706
    %v1708 = vsel %vm1303, %v1574, 0.0
    %v1709 = vadd.f32 %v1707, %v1708
    %v1710 = vsel %vm1303, %v1575, 0.0
    %v1711 = vadd.f32 %v1709, %v1710
    %v1712 = vsel %vm1303, %v1576, 0.0
    %v1713 = vadd.f32 %v1711, %v1712
    %v1714 = vsel %vm1303, %v1577, 0.0
    %v1715 = vadd.f32 %v1713, %v1714
    %v1716 = vsel %vm1303, %v1578, 0.0
    %v1717 = vadd.f32 %v1715, %v1716
    %v1718 = vsel %vm1303, %v1579, 0.0
    %v1719 = vadd.f32 %v1717, %v1718
    %v1720 = vsel %vm1303, %v1580, 0.0
    %v1721 = vadd.f32 %v1719, %v1720
    %v1722 = vsel %vm1303, %v1581, 0.0
    %v1723 = vadd.f32 %v1721, %v1722
    %v1724 = vsel %vm1303, %v1582, 0.0
    %v1725 = vadd.f32 %v1723, %v1724
    %v1726 = vsel %vm1303, %v1583, 0.0
    %v1727 = vadd.f32 %v1725, %v1726
    %v1728 = vsel %vm1303, %v1584, 0.0
    %v1729 = vadd.f32 %v1727, %v1728
    %v1730 = vsel %vm1303, %v1585, 0.0
    %v1731 = vadd.f32 %v1729, %v1730
    %v1732 = vsel %vm1303, %v1586, 0.0
    %v1733 = vadd.f32 %v1731, %v1732
    %v1734 = vsel %vm1303, %v1587, 0.0
    %v1735 = vadd.f32 %v1733, %v1734
    %v1736 = vsel %vm1303, %v1588, 0.0
    %v1737 = vadd.f32 %v1735, %v1736
    %v1738 = vsel %vm1303, %v1589, 0.0
    %v1739 = vadd.f32 %v1737, %v1738
    %v1740 = vsel %vm1303, %v1590, 0.0
    %v1741 = vadd.f32 %v1739, %v1740
    %v1742 = vsel %vm1303, %v1591, 0.0
    %v1743 = vadd.f32 %v1741, %v1742
    %v1744 = vsel %vm1303, %v1592, 0.0
    %v1745 = vadd.f32 %v1743, %v1744
    %v1746 = vsel %vm1303, %v1593, 0.0
    %v1747 = vadd.f32 %v1745, %v1746
    %v1748 = vsel %vm1303, %v1594, 0.0
    %v1749 = vadd.f32 %v1747, %v1748
    %v1750 = vsel %vm1303, %v1595, 0.0
    %v1751 = vadd.f32 %v1749, %v1750
    %v1752 = vsel %vm1303, %v1596, 0.0
    %v1753 = vadd.f32 %v1751, %v1752
    %v1754 = vsel %vm1303, %v1597, 0.0
    %v1755 = vadd.f32 %v1753, %v1754
    %v1756 = vsel %vm1303, %v1598, 0.0
    %v1757 = vadd.f32 %v1755, %v1756
    %v1758 = vsel %vm1303, %v1599, 0.0
    %v1759 = vadd.f32 %v1757, %v1758
    %v1760 = vsel %vm1303, %v1600, 0.0
    %v1761 = vadd.f32 %v1759, %v1760
    %v1762 = vsel %vm1303, %v1601, 0.0
    %v1763 = vadd.f32 %v1761, %v1762
    %v1764 = vsel %vm1303, %v1602, 0.0
    %v1765 = vadd.f32 %v1763, %v1764
    %v1766 = vsel %vm1303, %v1603, 0.0
    %v1767 = vadd.f32 %v1765, %v1766
    %v1768 = vsel %vm1303, %v1604, 0.0
    %v1769 = vadd.f32 %v1767, %v1768
    %v1770 = vsel %vm1303, %v1605, 0.0
    %v1771 = vadd.f32 %v1769, %v1770
    %v1772 = vsel %vm1303, %v1606, 0.0
    %v1773 = vadd.f32 %v1771, %v1772
    %v1774 = vsel %vm1303, %v1607, 0.0
    %v1775 = vadd.f32 %v1773, %v1774
    %v1776 = vsel %vm1303, %v1608, 0.0
    %v1777 = vadd.f32 %v1775, %v1776
    %v1778 = vsel %vm1303, %v1609, 0.0
    %v1779 = vadd.f32 %v1777, %v1778
    %v1780 = vsel %vm1303, %v1610, 0.0
    %v1781 = vadd.f32 %v1779, %v1780
    %v1782 = vsel %vm1303, %v1611, 0.0
    %v1783 = vadd.f32 %v1781, %v1782
    %v1784 = vsel %vm1303, %v1612, 0.0
    %v1785 = vadd.f32 %v1783, %v1784
    %v1786 = vsel %vm1303, %v1613, 0.0
    %v1787 = vadd.f32 %v1785, %v1786
    %v1788 = vsel %vm1303, %v1614, 0.0
    %v1789 = vadd.f32 %v1787, %v1788
    %v1790 = vsel %vm1303, %v1615, 0.0
    %v1791 = vadd.f32 %v1789, %v1790
    %v1792 = vsel %vm1303, %v1616, 0.0
    %v1793 = vadd.f32 %v1791, %v1792
    %v1794 = vsel %vm1303, %v1617, 0.0
    %v1795 = vadd.f32 %v1793, %v1794
    %v1796 = vsel %vm1303, %v1618, 0.0
    %v1797 = vadd.f32 %v1795, %v1796
    %v1798 = vsel %vm1303, %v1619, 0.0
    %v1799 = vadd.f32 %v1797, %v1798
    %v1800 = vsel %vm1303, %v1620, 0.0
    %v1801 = vadd.f32 %v1799, %v1800
    %v1802 = vsel %vm1303, %v1621, 0.0
    %v1803 = vadd.f32 %v1801, %v1802
    %v1804 = vsel %vm1303, %v1622, 0.0
    %v1805 = vadd.f32 %v1803, %v1804
    %v1806 = vsel %vm1303, %v1623, 0.0
    %v1807 = vadd.f32 %v1805, %v1806
    %v1808 = vsel %vm1303, %v1624, 0.0
    %v1809 = vadd.f32 %v1807, %v1808
    %v1810 = vsel %vm1303, %v1625, 0.0
    %v1811 = vadd.f32 %v1809, %v1810
    %v1812 = vsel %vm1303, %v1626, 0.0
    %v1813 = vadd.f32 %v1811, %v1812
    %v1814 = vsel %vm1303, %v1627, 0.0
    %v1815 = vadd.f32 %v1813, %v1814
    %v1816 = vsel %vm1303, %v1628, 0.0
    %v1817 = vadd.f32 %v1815, %v1816
    %v1818 = vsel %vm1303, %v1629, 0.0
    %v1819 = vadd.f32 %v1817, %v1818
    %v1820 = vsel %vm1303, %v1630, 0.0
    %v1821 = vadd.f32 %v1819, %v1820
    %v1822 = vsel %vm1303, %v1631, 0.0
    %v1823 = vadd.f32 %v1821, %v1822
    %v1824 = vsel %vm1303, %v1632, 0.0
    %v1825 = vadd.f32 %v1823, %v1824
    %v1826 = vsel %vm1303, %v1633, 0.0
    %v1827 = vadd.f32 %v1825, %v1826
    %v1828 = vsel %vm1303, %v1634, 0.0
    %v1829 = vadd.f32 %v1827, %v1828
    %v1830 = vsel %vm1303, %v1635, 0.0
    %v1831 = vadd.f32 %v1829, %v1830
    %v1832 = vsel %vm1303, %v1636, 0.0
    %v1833 = vadd.f32 %v1831, %v1832
    %v1834 = vsel %vm1303, %v1637, 0.0
    %v1835 = vadd.f32 %v1833, %v1834
    %v1836 = vsel %vm1303, %v1638, 0.0
    %v1837 = vadd.f32 %v1835, %v1836
    %v1838 = vsel %vm1303, %v1639, 0.0
    %v1839 = vadd.f32 %v1837, %v1838
    %v1840 = vsel %vm1303, %v1640, 0.0
    %v1841 = vadd.f32 %v1839, %v1840
    %v1842 = vsel %vm1303, %v1641, 0.0
    %v1843 = vadd.f32 %v1841, %v1842
    %v1844 = vsel %vm1303, %v1642, 0.0
    %v1845 = vadd.f32 %v1843, %v1844
    %v1846 = vsel %vm1303, %v1643, 0.0
    %v1847 = vadd.f32 %v1845, %v1846
    %v1848 = vsel %vm1303, %v1644, 0.0
    %v1849 = vadd.f32 %v1847, %v1848
    %v1850 = vsel %vm1303, %v1645, 0.0
    %v1851 = vadd.f32 %v1849, %v1850
    %v1852 = vsel %vm1303, %v1646, 0.0
    %v1853 = vadd.f32 %v1851, %v1852
    %v1854 = vsel %vm1303, %v1647, 0.0
    %v1855 = vadd.f32 %v1853, %v1854
    %v1856 = vsel %vm1303, %v1648, 0.0
    %v1857 = vadd.f32 %v1855, %v1856
    %v1858 = vsel %vm1303, %v1649, 0.0
    %v1859 = vadd.f32 %v1857, %v1858
    %v1860 = vsel %vm1303, %v1650, 0.0
    %v1861 = vadd.f32 %v1859, %v1860
    %v1862 = vsel %vm1303, %v1651, 0.0
    %v1863 = vadd.f32 %v1861, %v1862
    %v1864 = vsel %vm1303, %v1652, 0.0
    %v1865 = vadd.f32 %v1863, %v1864
    %v1866 = vsel %vm1303, %v1653, 0.0
    %v1867 = vadd.f32 %v1865, %v1866
    %v1868 = vsel %vm1303, %v1654, 0.0
    %v1869 = vadd.f32 %v1867, %v1868
    %v1870 = vsel %vm1303, %v1655, 0.0
    %v1871 = vadd.f32 %v1869, %v1870
    %v1872 = vsel %vm1303, %v1656, 0.0
    %v1873 = vadd.f32 %v1871, %v1872
    %v1874 = vsel %vm1303, %v1657, 0.0
    %v1875 = vadd.f32 %v1873, %v1874
    %v1876 = vsel %vm1303, %v1658, 0.0
    %v1877 = vadd.f32 %v1875, %v1876
    %v1878 = vsel %vm1303, %v1659, 0.0
    %v1879 = vadd.f32 %v1877, %v1878
    %v1880 = vsel %vm1303, %v1660, 0.0
    %v1881 = vadd.f32 %v1879, %v1880
    %v1882 = vsel %vm1303, %v1661, 0.0
    %v1883 = vadd.f32 %v1881, %v1882
    %v1884 = vsel %vm1303, %v1662, 0.0
    %v1885 = vadd.f32 %v1883, %v1884
    %v1886 = vsel %vm1303, %v1663, 0.0
    %v1887 = vadd.f32 %v1885, %v1886
    %v1888 = vsel %vm1303, %v1664, 0.0
    %v1889 = vadd.f32 %v1887, %v1888
    %v1890 = vsel %vm1303, %v1665, 0.0
    %v1891 = vadd.f32 %v1889, %v1890
    %v1892 = vsel %vm1303, %v1666, 0.0
    %v1893 = vadd.f32 %v1891, %v1892
    %v1894 = vsel %vm1303, %v1667, 0.0
    %v1895 = vadd.f32 %v1893, %v1894
    %v1896 = vsel %vm1303, %v1668, 0.0
    %v1897 = vadd.f32 %v1895, %v1896
    %v1898 = vsel %vm1303, %v1669, 0.0
    %v1899 = vadd.f32 %v1897, %v1898
    %v1900 = vsel %vm1303, %v1670, 0.0
    %v1901 = vadd.f32 %v1899, %v1900
    %v1902 = vsel %vm1303, %v1671, 0.0
    %v1903 = vadd.f32 %v1901, %v1902
    %v1904 = vsel %vm1303, %v1672, 0.0
    %v1905 = vadd.f32 %v1903, %v1904
    %v1906 = vsel %vm1303, %v1673, 0.0
    %v1907 = vadd.f32 %v1905, %v1906
    %v1908 = vsel %vm1303, %v1674, 0.0
    %v1909 = vadd.f32 %v1907, %v1908
    %v1910 = vsel %vm1303, %v1675, 0.0
    %v1911 = vadd.f32 %v1909, %v1910
    %v1912 = vsel %vm1303, %v1676, 0.0
    %v1913 = vadd.f32 %v1911, %v1912
    %v1914 = vsel %vm1303, %v1677, 0.0
    %v1915 = vadd.f32 %v1913, %v1914
    %v1916 = vsel %vm1303, %v1678, 0.0
    %v1917 = vadd.f32 %v1915, %v1916
    %v1918 = vsel %vm1303, %v1679, 0.0
    %v1919 = vadd.f32 %v1917, %v1918
    %v1920 = vsel %vm1303, %v1680, 0.0
    %v1921 = vadd.f32 %v1919, %v1920
    %v1922 = vsel %vm1303, %v1681, 0.0
    %v1923 = vadd.f32 %v1921, %v1922
    %v1924 = vsel %vm1303, %v1682, 0.0
    %v1925 = vadd.f32 %v1923, %v1924
    %v1926 = vsel %vm1303, %v1683, 0.0
    %v1927 = vadd.f32 %v1925, %v1926
    %v1928 = vsel %vm1303, %v1684, 0.0
    %v1929 = vadd.f32 %v1927, %v1928
    %v1930 = vsel %vm1303, %v1685, 0.0
    %v1931 = vadd.f32 %v1929, %v1930
    %v1932 = vsel %vm1303, %v1686, 0.0
    %v1933 = vadd.f32 %v1931, %v1932
    %v1934 = vsel %vm1303, %v1687, 0.0
    %v1935 = vadd.f32 %v1933, %v1934
    %v1936 = vsel %vm1303, %v1688, 0.0
    %v1937 = vadd.f32 %v1935, %v1936
    %v1938 = vsel %vm1303, %v1689, 0.0
    %v1939 = vadd.f32 %v1937, %v1938
    %v1940 = vsel %vm1303, %v1690, 0.0
    %v1941 = vadd.f32 %v1939, %v1940
    %v1942 = vsel %vm1303, %v1691, 0.0
    %v1943 = vadd.f32 %v1941, %v1942
    %v1944 = vsel %vm1303, %v1692, 0.0
    %v1945 = vadd.f32 %v1943, %v1944
    %v1946 = vsel %vm1303, %v1693, 0.0
    %v1947 = vadd.f32 %v1945, %v1946
    %v1948 = vsel %vm1303, %v1694, 0.0
    %v1949 = vadd.f32 %v1947, %v1948
    %v1950 = vrot.slane %v1949, 4
    %v1951 = vadd.f32 %v1949, %v1950
    %v1952 = vrot.slane %v1951, 2
    %v1953 = vadd.f32 %v1951, %v1952
    %v1954 = vrot.slane %v1953, 1
    %v1955 = vadd.f32 %v1953, %v1954
    %1956 = vst.msk [vmem:[#allocation4] sm:$0x1] %vm1565, %v1955
    // Predicated region
    $region10: #{refine_net_unet_forward.34} parent=1 // pred_check
      _
    $region11: #{refine_net_unet_forward.34} parent=1 // pred_check_branch
      %1958 = sbr.rel (0) target = $region13
    $region12: #{refine_net_unet_forward.34} parent=1 // pred_region
      _
    $region13: #{refine_net_unet_forward.34} parent=1 // pred_fallthru
      _
    // Predicated region
    $region14: #{refine_net_unet_forward.34} parent=1 // pred_check
      _
    $region15: #{refine_net_unet_forward.34} parent=1 // pred_check_branch
      %1960 = sbr.rel (0) target = $region17
    $region16: #{refine_net_unet_forward.34} parent=1 // pred_region
      %1962 = vsyncadd [#allocation3], 0
      %s1964 = sshll.u32 [#allocation2], 4
      %s1965 = int_to_ptr.vmem [resolvable:$true] %s1964
      %s1966 = sshll.u32 %s3, 4
      %s1967 = int_to_ptr.hbm [resolvable:$true] %s1966
      %1969 = dma.vmem_to_hbm [thread:$0]  %s1965, 16, %s1967, [#allocation3]
    $region17: #{refine_net_unet_forward.34} parent=1 // pred_fallthru
      _
    // Predicated region
    $region18: #{refine_net_unet_forward.34} parent=1 // pred_check
      _
    $region19: #{refine_net_unet_forward.34} parent=1 // pred_check_branch
      %1971 = sbr.rel (0) target = $region21
    $region20: #{refine_net_unet_forward.34} parent=1 // pred_region
      %1973 = vsyncadd [#allocation5], 0
      %s1975 = sshll.u32 [#allocation4], 4
      %s1976 = int_to_ptr.vmem [resolvable:$true] %s1975
      %s1977 = sshll.u32 %s4, 4
      %s1978 = int_to_ptr.hbm [resolvable:$true] %s1977
      %1980 = dma.vmem_to_hbm [thread:$0]  %s1976, 16, %s1978, [#allocation5]
    $region21: #{refine_net_unet_forward.34} parent=1 // pred_fallthru
      _
    // Predicated region
    $region22: #{refine_net_unet_forward.34} parent=1 // pred_check
      _
    $region23: #{refine_net_unet_forward.34} parent=1 // pred_check_branch
      %1982 = sbr.rel (0) target = $region25
    $region24: #{refine_net_unet_forward.34} parent=1 // pred_region
      _
    $region25: #{refine_net_unet_forward.34} parent=1 // pred_fallthru
      _
    // Predicated region
    $region26: #{refine_net_unet_forward.34} parent=1 // pred_check
      _
    $region27: #{refine_net_unet_forward.34} parent=1 // pred_check_branch
      %1984 = sbr.rel (0) target = $region29
    $region28: #{refine_net_unet_forward.34} parent=1 // pred_region
      %1986 = dma.done [#allocation3], 16
    $region29: #{refine_net_unet_forward.34} parent=1 // pred_fallthru
      _
    // Predicated region
    $region30: #{refine_net_unet_forward.34} parent=1 // pred_check
      _
    $region31: #{refine_net_unet_forward.34} parent=1 // pred_check_branch
      %1988 = sbr.rel (0) target = $region33
    $region32: #{refine_net_unet_forward.34} parent=1 // pred_region
      %1990 = dma.done [#allocation5], 16
    $region33: #{refine_net_unet_forward.34} parent=1 // pred_fallthru
      _
    %1991 = vsyncpa [#allocation3], 1
    %1992 = vsyncpa [#allocation5], 1

// kernel: refine_net_unet_forward.35
$region0: #{refine_net_unet_forward.35}
  #allocation0 [shape = 'u32[]', space=smem, size = 0x4, offset = 0x4, fixed_abs, tag = 'smem constant byte address 0x4 - core index']
  #allocation1 [shape = 'u32[72,128]{1,0:T(1,128)}', space=vmem, size = 0x9000, scoped, tag = 'internal scratch']
  #allocation2 [shape = 'f32[1,1]{1,0:T(1,128)S(1)}', space=vmem, size = 0x200, scoped, tag = 'scoped memory for refine_net_unet_forward.35']
  #allocation3 [shape = 'f32[1,1]{1,0:T(1,128)S(1)}', space=vmem, size = 0x200, scoped, tag = 'scoped memory for refine_net_unet_forward.35']
  %s0 = inlined_call_operand.vmem [shape: bf16[1024,1], index: 0, kind: input, shape index: {}]
  %s1 = inlined_call_operand.<no memory space> [shape: f32[1,1], index: 1, kind: input, shape index: {}]
  %s2 = inlined_call_operand.<no memory space> [shape: f32[1,1], index: 2, kind: input, shape index: {}]
  %s3 = inlined_call_operand.vmem [shape: f32[1024,1], index: 3, kind: output, shape index: {}]
  %s4 = sld [smem:[#allocation0]]
  $region22: #{refine_net_unet_forward.35} parent=0
    _
  %s6 = ssub.s32 1, %s4
  %s7 = scalar_select 0, %s6, %s4
  %v8 = vstv %s1
  %9 = vst [vmem:[#allocation2] sm:$0x1] %v8
  %v10 = vstv %s2
  %11 = vst [vmem:[#allocation3] sm:$0x1] %v10
  // Predicated region
  $region2: #{refine_net_unet_forward.35} parent=0 // pred_check
    _
  $region3: #{refine_net_unet_forward.35} parent=0 // pred_check_branch
    %13 = sbr.rel (0) target = $region5
  $region4: #{refine_net_unet_forward.35} parent=0 // pred_region
    _
  $region5: #{refine_net_unet_forward.35} parent=0 // pred_fallthru
    _
  // Predicated region
  $region6: #{refine_net_unet_forward.35} parent=0 // pred_check
    _
  $region7: #{refine_net_unet_forward.35} parent=0 // pred_check_branch
    %15 = sbr.rel (0) target = $region9
  $region8: #{refine_net_unet_forward.35} parent=0 // pred_region
    _
  $region9: #{refine_net_unet_forward.35} parent=0 // pred_fallthru
    _
  // Predicated region
  $region10: #{refine_net_unet_forward.35} parent=0 // pred_check
    _
  $region11: #{refine_net_unet_forward.35} parent=0 // pred_check_branch
    %17 = sbr.rel (0) target = $region13
  $region12: #{refine_net_unet_forward.35} parent=0 // pred_region
    _
  $region13: #{refine_net_unet_forward.35} parent=0 // pred_fallthru
    _
  %v18 = vld [vmem:[%s0] sm:$0xf]
  %v19 = vld [vmem:[%s0 + $0x4] sm:$0xf]
  %v20 = vld [vmem:[%s0 + $0x8] sm:$0xf]
  %v21 = vld [vmem:[%s0 + $0xc] sm:$0xf]
  %v22 = vld [vmem:[%s0 + $0x10] sm:$0xf]
  %v23 = vld [vmem:[%s0 + $0x14] sm:$0xf]
  %v24 = vld [vmem:[%s0 + $0x18] sm:$0xf]
  %v25 = vld [vmem:[%s0 + $0x1c] sm:$0xf]
  %v26 = vld [vmem:[%s0 + $0x20] sm:$0xf]
  %v27 = vld [vmem:[%s0 + $0x24] sm:$0xf]
  %v28 = vld [vmem:[%s0 + $0x28] sm:$0xf]
  %v29 = vld [vmem:[%s0 + $0x2c] sm:$0xf]
  %v30 = vld [vmem:[%s0 + $0x30] sm:$0xf]
  %v31 = vld [vmem:[%s0 + $0x34] sm:$0xf]
  %v32 = vld [vmem:[%s0 + $0x38] sm:$0xf]
  %v33 = vld [vmem:[%s0 + $0x3c] sm:$0xf]
  %v34 = vld [vmem:[%s0 + $0x40] sm:$0xf]
  %v35 = vld [vmem:[%s0 + $0x44] sm:$0xf]
  %v36 = vld [vmem:[%s0 + $0x48] sm:$0xf]
  %v37 = vld [vmem:[%s0 + $0x4c] sm:$0xf]
  %v38 = vld [vmem:[%s0 + $0x50] sm:$0xf]
  %v39 = vld [vmem:[%s0 + $0x54] sm:$0xf]
  %v40 = vld [vmem:[%s0 + $0x58] sm:$0xf]
  %v41 = vld [vmem:[%s0 + $0x5c] sm:$0xf]
  %v42 = vld [vmem:[%s0 + $0x60] sm:$0xf]
  %v43 = vld [vmem:[%s0 + $0x64] sm:$0xf]
  %v44 = vld [vmem:[%s0 + $0x68] sm:$0xf]
  %v45 = vld [vmem:[%s0 + $0x6c] sm:$0xf]
  %v46 = vld [vmem:[%s0 + $0x70] sm:$0xf]
  %v47 = vld [vmem:[%s0 + $0x74] sm:$0xf]
  %v48 = vld [vmem:[%s0 + $0x78] sm:$0xf]
  %v49 = vld [vmem:[%s0 + $0x7c] sm:$0xf]
  %v50 = vld [vmem:[%s0 + $0x80] sm:$0xf]
  %v51 = vld [vmem:[%s0 + $0x84] sm:$0xf]
  %v52 = vld [vmem:[%s0 + $0x88] sm:$0xf]
  %v53 = vld [vmem:[%s0 + $0x8c] sm:$0xf]
  %v54 = vld [vmem:[%s0 + $0x90] sm:$0xf]
  %v55 = vld [vmem:[%s0 + $0x94] sm:$0xf]
  %v56 = vld [vmem:[%s0 + $0x98] sm:$0xf]
  %v57 = vld [vmem:[%s0 + $0x9c] sm:$0xf]
  %v58 = vld [vmem:[%s0 + $0xa0] sm:$0xf]
  %v59 = vld [vmem:[%s0 + $0xa4] sm:$0xf]
  %v60 = vld [vmem:[%s0 + $0xa8] sm:$0xf]
  %v61 = vld [vmem:[%s0 + $0xac] sm:$0xf]
  %v62 = vld [vmem:[%s0 + $0xb0] sm:$0xf]
  %v63 = vld [vmem:[%s0 + $0xb4] sm:$0xf]
  %v64 = vld [vmem:[%s0 + $0xb8] sm:$0xf]
  %v65 = vld [vmem:[%s0 + $0xbc] sm:$0xf]
  %v66 = vld [vmem:[%s0 + $0xc0] sm:$0xf]
  %v67 = vld [vmem:[%s0 + $0xc4] sm:$0xf]
  %v68 = vld [vmem:[%s0 + $0xc8] sm:$0xf]
  %v69 = vld [vmem:[%s0 + $0xcc] sm:$0xf]
  %v70 = vld [vmem:[%s0 + $0xd0] sm:$0xf]
  %v71 = vld [vmem:[%s0 + $0xd4] sm:$0xf]
  %v72 = vld [vmem:[%s0 + $0xd8] sm:$0xf]
  %v73 = vld [vmem:[%s0 + $0xdc] sm:$0xf]
  %v74 = vld [vmem:[%s0 + $0xe0] sm:$0xf]
  %v75 = vld [vmem:[%s0 + $0xe4] sm:$0xf]
  %v76 = vld [vmem:[%s0 + $0xe8] sm:$0xf]
  %v77 = vld [vmem:[%s0 + $0xec] sm:$0xf]
  %v78 = vld [vmem:[%s0 + $0xf0] sm:$0xf]
  %v79 = vld [vmem:[%s0 + $0xf4] sm:$0xf]
  %v80 = vld [vmem:[%s0 + $0xf8] sm:$0xf]
  %v81 = vld [vmem:[%s0 + $0xfc] sm:$0xf]
  %v82 = vld [vmem:[%s0 + $0x100] sm:$0xf]
  %v83 = vld [vmem:[%s0 + $0x104] sm:$0xf]
  %v84 = vld [vmem:[%s0 + $0x108] sm:$0xf]
  %v85 = vld [vmem:[%s0 + $0x10c] sm:$0xf]
  %v86 = vld [vmem:[%s0 + $0x110] sm:$0xf]
  %v87 = vld [vmem:[%s0 + $0x114] sm:$0xf]
  %v88 = vld [vmem:[%s0 + $0x118] sm:$0xf]
  %v89 = vld [vmem:[%s0 + $0x11c] sm:$0xf]
  %v90 = vld [vmem:[%s0 + $0x120] sm:$0xf]
  %v91 = vld [vmem:[%s0 + $0x124] sm:$0xf]
  %v92 = vld [vmem:[%s0 + $0x128] sm:$0xf]
  %v93 = vld [vmem:[%s0 + $0x12c] sm:$0xf]
  %v94 = vld [vmem:[%s0 + $0x130] sm:$0xf]
  %v95 = vld [vmem:[%s0 + $0x134] sm:$0xf]
  %v96 = vld [vmem:[%s0 + $0x138] sm:$0xf]
  %v97 = vld [vmem:[%s0 + $0x13c] sm:$0xf]
  %v98 = vld [vmem:[%s0 + $0x140] sm:$0xf]
  %v99 = vld [vmem:[%s0 + $0x144] sm:$0xf]
  %v100 = vld [vmem:[%s0 + $0x148] sm:$0xf]
  %v101 = vld [vmem:[%s0 + $0x14c] sm:$0xf]
  %v102 = vld [vmem:[%s0 + $0x150] sm:$0xf]
  %v103 = vld [vmem:[%s0 + $0x154] sm:$0xf]
  %v104 = vld [vmem:[%s0 + $0x158] sm:$0xf]
  %v105 = vld [vmem:[%s0 + $0x15c] sm:$0xf]
  %v106 = vld [vmem:[%s0 + $0x160] sm:$0xf]
  %v107 = vld [vmem:[%s0 + $0x164] sm:$0xf]
  %v108 = vld [vmem:[%s0 + $0x168] sm:$0xf]
  %v109 = vld [vmem:[%s0 + $0x16c] sm:$0xf]
  %v110 = vld [vmem:[%s0 + $0x170] sm:$0xf]
  %v111 = vld [vmem:[%s0 + $0x174] sm:$0xf]
  %v112 = vld [vmem:[%s0 + $0x178] sm:$0xf]
  %v113 = vld [vmem:[%s0 + $0x17c] sm:$0xf]
  %v114 = vld [vmem:[%s0 + $0x180] sm:$0xf]
  %v115 = vld [vmem:[%s0 + $0x184] sm:$0xf]
  %v116 = vld [vmem:[%s0 + $0x188] sm:$0xf]
  %v117 = vld [vmem:[%s0 + $0x18c] sm:$0xf]
  %v118 = vld [vmem:[%s0 + $0x190] sm:$0xf]
  %v119 = vld [vmem:[%s0 + $0x194] sm:$0xf]
  %v120 = vld [vmem:[%s0 + $0x198] sm:$0xf]
  %v121 = vld [vmem:[%s0 + $0x19c] sm:$0xf]
  %v122 = vld [vmem:[%s0 + $0x1a0] sm:$0xf]
  %v123 = vld [vmem:[%s0 + $0x1a4] sm:$0xf]
  %v124 = vld [vmem:[%s0 + $0x1a8] sm:$0xf]
  %v125 = vld [vmem:[%s0 + $0x1ac] sm:$0xf]
  %v126 = vld [vmem:[%s0 + $0x1b0] sm:$0xf]
  %v127 = vld [vmem:[%s0 + $0x1b4] sm:$0xf]
  %v128 = vld [vmem:[%s0 + $0x1b8] sm:$0xf]
  %v129 = vld [vmem:[%s0 + $0x1bc] sm:$0xf]
  %v130 = vld [vmem:[%s0 + $0x1c0] sm:$0xf]
  %v131 = vld [vmem:[%s0 + $0x1c4] sm:$0xf]
  %v132 = vld [vmem:[%s0 + $0x1c8] sm:$0xf]
  %v133 = vld [vmem:[%s0 + $0x1cc] sm:$0xf]
  %v134 = vld [vmem:[%s0 + $0x1d0] sm:$0xf]
  %v135 = vld [vmem:[%s0 + $0x1d4] sm:$0xf]
  %v136 = vld [vmem:[%s0 + $0x1d8] sm:$0xf]
  %v137 = vld [vmem:[%s0 + $0x1dc] sm:$0xf]
  %v138 = vld [vmem:[%s0 + $0x1e0] sm:$0xf]
  %v139 = vld [vmem:[%s0 + $0x1e4] sm:$0xf]
  %v140 = vld [vmem:[%s0 + $0x1e8] sm:$0xf]
  %v141 = vld [vmem:[%s0 + $0x1ec] sm:$0xf]
  %v142 = vld [vmem:[%s0 + $0x1f0] sm:$0xf]
  %v143 = vld [vmem:[%s0 + $0x1f4] sm:$0xf]
  %v144 = vld [vmem:[%s0 + $0x1f8] sm:$0xf]
  %v145 = vld [vmem:[%s0 + $0x1fc] sm:$0xf]
  %v146 = vunpack.c.l.bf16 %v18
  %v147 = vunpack.c.l.bf16 %v19
  %v148 = vunpack.c.l.bf16 %v20
  %v149 = vunpack.c.l.bf16 %v21
  %v150 = vunpack.c.l.bf16 %v22
  %v151 = vunpack.c.l.bf16 %v23
  %v152 = vunpack.c.l.bf16 %v24
  %v153 = vunpack.c.l.bf16 %v25
  %v154 = vunpack.c.l.bf16 %v26
  %v155 = vunpack.c.l.bf16 %v27
  %v156 = vunpack.c.l.bf16 %v28
  %v157 = vunpack.c.l.bf16 %v29
  %v158 = vunpack.c.l.bf16 %v30
  %v159 = vunpack.c.l.bf16 %v31
  %v160 = vunpack.c.l.bf16 %v32
  %v161 = vunpack.c.l.bf16 %v33
  %v162 = vunpack.c.l.bf16 %v34
  %v163 = vunpack.c.l.bf16 %v35
  %v164 = vunpack.c.l.bf16 %v36
  %v165 = vunpack.c.l.bf16 %v37
  %v166 = vunpack.c.l.bf16 %v38
  %v167 = vunpack.c.l.bf16 %v39
  %v168 = vunpack.c.l.bf16 %v40
  %v169 = vunpack.c.l.bf16 %v41
  %v170 = vunpack.c.l.bf16 %v42
  %v171 = vunpack.c.l.bf16 %v43
  %v172 = vunpack.c.l.bf16 %v44
  %v173 = vunpack.c.l.bf16 %v45
  %v174 = vunpack.c.l.bf16 %v46
  %v175 = vunpack.c.l.bf16 %v47
  %v176 = vunpack.c.l.bf16 %v48
  %v177 = vunpack.c.l.bf16 %v49
  %v178 = vunpack.c.l.bf16 %v50
  %v179 = vunpack.c.l.bf16 %v51
  %v180 = vunpack.c.l.bf16 %v52
  %v181 = vunpack.c.l.bf16 %v53
  %v182 = vunpack.c.l.bf16 %v54
  %v183 = vunpack.c.l.bf16 %v55
  %v184 = vunpack.c.l.bf16 %v56
  %v185 = vunpack.c.l.bf16 %v57
  %v186 = vunpack.c.l.bf16 %v58
  %v187 = vunpack.c.l.bf16 %v59
  %v188 = vunpack.c.l.bf16 %v60
  %v189 = vunpack.c.l.bf16 %v61
  %v190 = vunpack.c.l.bf16 %v62
  %v191 = vunpack.c.l.bf16 %v63
  %v192 = vunpack.c.l.bf16 %v64
  %v193 = vunpack.c.l.bf16 %v65
  %v194 = vunpack.c.l.bf16 %v66
  %v195 = vunpack.c.l.bf16 %v67
  %v196 = vunpack.c.l.bf16 %v68
  %v197 = vunpack.c.l.bf16 %v69
  %v198 = vunpack.c.l.bf16 %v70
  %v199 = vunpack.c.l.bf16 %v71
  %v200 = vunpack.c.l.bf16 %v72
  %v201 = vunpack.c.l.bf16 %v73
  %v202 = vunpack.c.l.bf16 %v74
  %v203 = vunpack.c.l.bf16 %v75
  %v204 = vunpack.c.l.bf16 %v76
  %v205 = vunpack.c.l.bf16 %v77
  %v206 = vunpack.c.l.bf16 %v78
  %v207 = vunpack.c.l.bf16 %v79
  %v208 = vunpack.c.l.bf16 %v80
  %v209 = vunpack.c.l.bf16 %v81
  %v210 = vunpack.c.l.bf16 %v82
  %v211 = vunpack.c.l.bf16 %v83
  %v212 = vunpack.c.l.bf16 %v84
  %v213 = vunpack.c.l.bf16 %v85
  %v214 = vunpack.c.l.bf16 %v86
  %v215 = vunpack.c.l.bf16 %v87
  %v216 = vunpack.c.l.bf16 %v88
  %v217 = vunpack.c.l.bf16 %v89
  %v218 = vunpack.c.l.bf16 %v90
  %v219 = vunpack.c.l.bf16 %v91
  %v220 = vunpack.c.l.bf16 %v92
  %v221 = vunpack.c.l.bf16 %v93
  %v222 = vunpack.c.l.bf16 %v94
  %v223 = vunpack.c.l.bf16 %v95
  %v224 = vunpack.c.l.bf16 %v96
  %v225 = vunpack.c.l.bf16 %v97
  %v226 = vunpack.c.l.bf16 %v98
  %v227 = vunpack.c.l.bf16 %v99
  %v228 = vunpack.c.l.bf16 %v100
  %v229 = vunpack.c.l.bf16 %v101
  %v230 = vunpack.c.l.bf16 %v102
  %v231 = vunpack.c.l.bf16 %v103
  %v232 = vunpack.c.l.bf16 %v104
  %v233 = vunpack.c.l.bf16 %v105
  %v234 = vunpack.c.l.bf16 %v106
  %v235 = vunpack.c.l.bf16 %v107
  %v236 = vunpack.c.l.bf16 %v108
  %v237 = vunpack.c.l.bf16 %v109
  %v238 = vunpack.c.l.bf16 %v110
  %v239 = vunpack.c.l.bf16 %v111
  %v240 = vunpack.c.l.bf16 %v112
  %v241 = vunpack.c.l.bf16 %v113
  %v242 = vunpack.c.l.bf16 %v114
  %v243 = vunpack.c.l.bf16 %v115
  %v244 = vunpack.c.l.bf16 %v116
  %v245 = vunpack.c.l.bf16 %v117
  %v246 = vunpack.c.l.bf16 %v118
  %v247 = vunpack.c.l.bf16 %v119
  %v248 = vunpack.c.l.bf16 %v120
  %v249 = vunpack.c.l.bf16 %v121
  %v250 = vunpack.c.l.bf16 %v122
  %v251 = vunpack.c.l.bf16 %v123
  %v252 = vunpack.c.l.bf16 %v124
  %v253 = vunpack.c.l.bf16 %v125
  %v254 = vunpack.c.l.bf16 %v126
  %v255 = vunpack.c.l.bf16 %v127
  %v256 = vunpack.c.l.bf16 %v128
  %v257 = vunpack.c.l.bf16 %v129
  %v258 = vunpack.c.l.bf16 %v130
  %v259 = vunpack.c.l.bf16 %v131
  %v260 = vunpack.c.l.bf16 %v132
  %v261 = vunpack.c.l.bf16 %v133
  %v262 = vunpack.c.l.bf16 %v134
  %v263 = vunpack.c.l.bf16 %v135
  %v264 = vunpack.c.l.bf16 %v136
  %v265 = vunpack.c.l.bf16 %v137
  %v266 = vunpack.c.l.bf16 %v138
  %v267 = vunpack.c.l.bf16 %v139
  %v268 = vunpack.c.l.bf16 %v140
  %v269 = vunpack.c.l.bf16 %v141
  %v270 = vunpack.c.l.bf16 %v142
  %v271 = vunpack.c.l.bf16 %v143
  %v272 = vunpack.c.l.bf16 %v144
  %v273 = vunpack.c.l.bf16 %v145
  %v274 = vld [vmem:[#allocation2] sm:$0x1]
  %v276 = vperm.slane %v274, 0
  %v278 = vmul.f32 %v146, %v276
  %v279 = vmul.f32 %v147, %v276
  %v280 = vmul.f32 %v148, %v276
  %v281 = vmul.f32 %v149, %v276
  %v282 = vmul.f32 %v150, %v276
  %v283 = vmul.f32 %v151, %v276
  %v284 = vmul.f32 %v152, %v276
  %v285 = vmul.f32 %v153, %v276
  %v286 = vmul.f32 %v154, %v276
  %v287 = vmul.f32 %v155, %v276
  %v288 = vmul.f32 %v156, %v276
  %v289 = vmul.f32 %v157, %v276
  %v290 = vmul.f32 %v158, %v276
  %v291 = vmul.f32 %v159, %v276
  %v292 = vmul.f32 %v160, %v276
  %v293 = vmul.f32 %v161, %v276
  %v294 = vmul.f32 %v162, %v276
  %v295 = vmul.f32 %v163, %v276
  %v296 = vmul.f32 %v164, %v276
  %v297 = vmul.f32 %v165, %v276
  %v298 = vmul.f32 %v166, %v276
  %v299 = vmul.f32 %v167, %v276
  %v300 = vmul.f32 %v168, %v276
  %v301 = vmul.f32 %v169, %v276
  %v302 = vmul.f32 %v170, %v276
  %v303 = vmul.f32 %v171, %v276
  %v304 = vmul.f32 %v172, %v276
  %v305 = vmul.f32 %v173, %v276
  %v306 = vmul.f32 %v174, %v276
  %v307 = vmul.f32 %v175, %v276
  %v308 = vmul.f32 %v176, %v276
  %v309 = vmul.f32 %v177, %v276
  %v310 = vmul.f32 %v178, %v276
  %v311 = vmul.f32 %v179, %v276
  %v312 = vmul.f32 %v180, %v276
  %v313 = vmul.f32 %v181, %v276
  %v314 = vmul.f32 %v182, %v276
  %v315 = vmul.f32 %v183, %v276
  %v316 = vmul.f32 %v184, %v276
  %v317 = vmul.f32 %v185, %v276
  %v318 = vmul.f32 %v186, %v276
  %v319 = vmul.f32 %v187, %v276
  %v320 = vmul.f32 %v188, %v276
  %v321 = vmul.f32 %v189, %v276
  %v322 = vmul.f32 %v190, %v276
  %v323 = vmul.f32 %v191, %v276
  %v324 = vmul.f32 %v192, %v276
  %v325 = vmul.f32 %v193, %v276
  %v326 = vmul.f32 %v194, %v276
  %v327 = vmul.f32 %v195, %v276
  %v328 = vmul.f32 %v196, %v276
  %v329 = vmul.f32 %v197, %v276
  %v330 = vmul.f32 %v198, %v276
  %v331 = vmul.f32 %v199, %v276
  %v332 = vmul.f32 %v200, %v276
  %v333 = vmul.f32 %v201, %v276
  %v334 = vmul.f32 %v202, %v276
  %v335 = vmul.f32 %v203, %v276
  %v336 = vmul.f32 %v204, %v276
  %v337 = vmul.f32 %v205, %v276
  %v338 = vmul.f32 %v206, %v276
  %v339 = vmul.f32 %v207, %v276
  %v340 = vmul.f32 %v208, %v276
  %v341 = vmul.f32 %v209, %v276
  %v342 = vmul.f32 %v210, %v276
  %v343 = vmul.f32 %v211, %v276
  %v344 = vmul.f32 %v212, %v276
  %v345 = vmul.f32 %v213, %v276
  %v346 = vmul.f32 %v214, %v276
  %v347 = vmul.f32 %v215, %v276
  %v348 = vmul.f32 %v216, %v276
  %v349 = vmul.f32 %v217, %v276
  %v350 = vmul.f32 %v218, %v276
  %v351 = vmul.f32 %v219, %v276
  %v352 = vmul.f32 %v220, %v276
  %v353 = vmul.f32 %v221, %v276
  %v354 = vmul.f32 %v222, %v276
  %v355 = vmul.f32 %v223, %v276
  %v356 = vmul.f32 %v224, %v276
  %v357 = vmul.f32 %v225, %v276
  %v358 = vmul.f32 %v226, %v276
  %v359 = vmul.f32 %v227, %v276
  %v360 = vmul.f32 %v228, %v276
  %v361 = vmul.f32 %v229, %v276
  %v362 = vmul.f32 %v230, %v276
  %v363 = vmul.f32 %v231, %v276
  %v364 = vmul.f32 %v232, %v276
  %v365 = vmul.f32 %v233, %v276
  %v366 = vmul.f32 %v234, %v276
  %v367 = vmul.f32 %v235, %v276
  %v368 = vmul.f32 %v236, %v276
  %v369 = vmul.f32 %v237, %v276
  %v370 = vmul.f32 %v238, %v276
  %v371 = vmul.f32 %v239, %v276
  %v372 = vmul.f32 %v240, %v276
  %v373 = vmul.f32 %v241, %v276
  %v374 = vmul.f32 %v242, %v276
  %v375 = vmul.f32 %v243, %v276
  %v376 = vmul.f32 %v244, %v276
  %v377 = vmul.f32 %v245, %v276
  %v378 = vmul.f32 %v246, %v276
  %v379 = vmul.f32 %v247, %v276
  %v380 = vmul.f32 %v248, %v276
  %v381 = vmul.f32 %v249, %v276
  %v382 = vmul.f32 %v250, %v276
  %v383 = vmul.f32 %v251, %v276
  %v384 = vmul.f32 %v252, %v276
  %v385 = vmul.f32 %v253, %v276
  %v386 = vmul.f32 %v254, %v276
  %v387 = vmul.f32 %v255, %v276
  %v388 = vmul.f32 %v256, %v276
  %v389 = vmul.f32 %v257, %v276
  %v390 = vmul.f32 %v258, %v276
  %v391 = vmul.f32 %v259, %v276
  %v392 = vmul.f32 %v260, %v276
  %v393 = vmul.f32 %v261, %v276
  %v394 = vmul.f32 %v262, %v276
  %v395 = vmul.f32 %v263, %v276
  %v396 = vmul.f32 %v264, %v276
  %v397 = vmul.f32 %v265, %v276
  %v398 = vmul.f32 %v266, %v276
  %v399 = vmul.f32 %v267, %v276
  %v400 = vmul.f32 %v268, %v276
  %v401 = vmul.f32 %v269, %v276
  %v402 = vmul.f32 %v270, %v276
  %v403 = vmul.f32 %v271, %v276
  %v404 = vmul.f32 %v272, %v276
  %v405 = vmul.f32 %v273, %v276
  %v406 = vld [vmem:[#allocation3] sm:$0x1]
  %v408 = vperm.slane %v406, 0
  %v410 = vadd.f32 %v278, %v408
  %v411 = vadd.f32 %v279, %v408
  %v412 = vadd.f32 %v280, %v408
  %v413 = vadd.f32 %v281, %v408
  %v414 = vadd.f32 %v282, %v408
  %v415 = vadd.f32 %v283, %v408
  %v416 = vadd.f32 %v284, %v408
  %v417 = vadd.f32 %v285, %v408
  %v418 = vadd.f32 %v286, %v408
  %v419 = vadd.f32 %v287, %v408
  %v420 = vadd.f32 %v288, %v408
  %v421 = vadd.f32 %v289, %v408
  %v422 = vadd.f32 %v290, %v408
  %v423 = vadd.f32 %v291, %v408
  %v424 = vadd.f32 %v292, %v408
  %v425 = vadd.f32 %v293, %v408
  %v426 = vadd.f32 %v294, %v408
  %v427 = vadd.f32 %v295, %v408
  %v428 = vadd.f32 %v296, %v408
  %v429 = vadd.f32 %v297, %v408
  %v430 = vadd.f32 %v298, %v408
  %v431 = vadd.f32 %v299, %v408
  %v432 = vadd.f32 %v300, %v408
  %v433 = vadd.f32 %v301, %v408
  %v434 = vadd.f32 %v302, %v408
  %v435 = vadd.f32 %v303, %v408
  %v436 = vadd.f32 %v304, %v408
  %v437 = vadd.f32 %v305, %v408
  %v438 = vadd.f32 %v306, %v408
  %v439 = vadd.f32 %v307, %v408
  %v440 = vadd.f32 %v308, %v408
  %v441 = vadd.f32 %v309, %v408
  %v442 = vadd.f32 %v310, %v408
  %v443 = vadd.f32 %v311, %v408
  %v444 = vadd.f32 %v312, %v408
  %v445 = vadd.f32 %v313, %v408
  %v446 = vadd.f32 %v314, %v408
  %v447 = vadd.f32 %v315, %v408
  %v448 = vadd.f32 %v316, %v408
  %v449 = vadd.f32 %v317, %v408
  %v450 = vadd.f32 %v318, %v408
  %v451 = vadd.f32 %v319, %v408
  %v452 = vadd.f32 %v320, %v408
  %v453 = vadd.f32 %v321, %v408
  %v454 = vadd.f32 %v322, %v408
  %v455 = vadd.f32 %v323, %v408
  %v456 = vadd.f32 %v324, %v408
  %v457 = vadd.f32 %v325, %v408
  %v458 = vadd.f32 %v326, %v408
  %v459 = vadd.f32 %v327, %v408
  %v460 = vadd.f32 %v328, %v408
  %v461 = vadd.f32 %v329, %v408
  %v462 = vadd.f32 %v330, %v408
  %v463 = vadd.f32 %v331, %v408
  %v464 = vadd.f32 %v332, %v408
  %v465 = vadd.f32 %v333, %v408
  %v466 = vadd.f32 %v334, %v408
  %v467 = vadd.f32 %v335, %v408
  %v468 = vadd.f32 %v336, %v408
  %v469 = vadd.f32 %v337, %v408
  %v470 = vadd.f32 %v338, %v408
  %v471 = vadd.f32 %v339, %v408
  %v472 = vadd.f32 %v340, %v408
  %v473 = vadd.f32 %v341, %v408
  %v474 = vadd.f32 %v342, %v408
  %v475 = vadd.f32 %v343, %v408
  %v476 = vadd.f32 %v344, %v408
  %v477 = vadd.f32 %v345, %v408
  %v478 = vadd.f32 %v346, %v408
  %v479 = vadd.f32 %v347, %v408
  %v480 = vadd.f32 %v348, %v408
  %v481 = vadd.f32 %v349, %v408
  %v482 = vadd.f32 %v350, %v408
  %v483 = vadd.f32 %v351, %v408
  %v484 = vadd.f32 %v352, %v408
  %v485 = vadd.f32 %v353, %v408
  %v486 = vadd.f32 %v354, %v408
  %v487 = vadd.f32 %v355, %v408
  %v488 = vadd.f32 %v356, %v408
  %v489 = vadd.f32 %v357, %v408
  %v490 = vadd.f32 %v358, %v408
  %v491 = vadd.f32 %v359, %v408
  %v492 = vadd.f32 %v360, %v408
  %v493 = vadd.f32 %v361, %v408
  %v494 = vadd.f32 %v362, %v408
  %v495 = vadd.f32 %v363, %v408
  %v496 = vadd.f32 %v364, %v408
  %v497 = vadd.f32 %v365, %v408
  %v498 = vadd.f32 %v366, %v408
  %v499 = vadd.f32 %v367, %v408
  %v500 = vadd.f32 %v368, %v408
  %v501 = vadd.f32 %v369, %v408
  %v502 = vadd.f32 %v370, %v408
  %v503 = vadd.f32 %v371, %v408
  %v504 = vadd.f32 %v372, %v408
  %v505 = vadd.f32 %v373, %v408
  %v506 = vadd.f32 %v374, %v408
  %v507 = vadd.f32 %v375, %v408
  %v508 = vadd.f32 %v376, %v408
  %v509 = vadd.f32 %v377, %v408
  %v510 = vadd.f32 %v378, %v408
  %v511 = vadd.f32 %v379, %v408
  %v512 = vadd.f32 %v380, %v408
  %v513 = vadd.f32 %v381, %v408
  %v514 = vadd.f32 %v382, %v408
  %v515 = vadd.f32 %v383, %v408
  %v516 = vadd.f32 %v384, %v408
  %v517 = vadd.f32 %v385, %v408
  %v518 = vadd.f32 %v386, %v408
  %v519 = vadd.f32 %v387, %v408
  %v520 = vadd.f32 %v388, %v408
  %v521 = vadd.f32 %v389, %v408
  %v522 = vadd.f32 %v390, %v408
  %v523 = vadd.f32 %v391, %v408
  %v524 = vadd.f32 %v392, %v408
  %v525 = vadd.f32 %v393, %v408
  %v526 = vadd.f32 %v394, %v408
  %v527 = vadd.f32 %v395, %v408
  %v528 = vadd.f32 %v396, %v408
  %v529 = vadd.f32 %v397, %v408
  %v530 = vadd.f32 %v398, %v408
  %v531 = vadd.f32 %v399, %v408
  %v532 = vadd.f32 %v400, %v408
  %v533 = vadd.f32 %v401, %v408
  %v534 = vadd.f32 %v402, %v408
  %v535 = vadd.f32 %v403, %v408
  %v536 = vadd.f32 %v404, %v408
  %v537 = vadd.f32 %v405, %v408
  %v538 = vmax.f32 %v410, 0.0
  %v539 = vmax.f32 %v411, 0.0
  %v540 = vmax.f32 %v412, 0.0
  %v541 = vmax.f32 %v413, 0.0
  %v542 = vmax.f32 %v414, 0.0
  %v543 = vmax.f32 %v415, 0.0
  %v544 = vmax.f32 %v416, 0.0
  %v545 = vmax.f32 %v417, 0.0
  %v546 = vmax.f32 %v418, 0.0
  %v547 = vmax.f32 %v419, 0.0
  %v548 = vmax.f32 %v420, 0.0
  %v549 = vmax.f32 %v421, 0.0
  %v550 = vmax.f32 %v422, 0.0
  %v551 = vmax.f32 %v423, 0.0
  %v552 = vmax.f32 %v424, 0.0
  %v553 = vmax.f32 %v425, 0.0
  %v554 = vmax.f32 %v426, 0.0
  %v555 = vmax.f32 %v427, 0.0
  %v556 = vmax.f32 %v428, 0.0
  %v557 = vmax.f32 %v429, 0.0
  %v558 = vmax.f32 %v430, 0.0
  %v559 = vmax.f32 %v431, 0.0
  %v560 = vmax.f32 %v432, 0.0
  %v561 = vmax.f32 %v433, 0.0
  %v562 = vmax.f32 %v434, 0.0
  %v563 = vmax.f32 %v435, 0.0
  %v564 = vmax.f32 %v436, 0.0
  %v565 = vmax.f32 %v437, 0.0
  %v566 = vmax.f32 %v438, 0.0
  %v567 = vmax.f32 %v439, 0.0
  %v568 = vmax.f32 %v440, 0.0
  %v569 = vmax.f32 %v441, 0.0
  %v570 = vmax.f32 %v442, 0.0
  %v571 = vmax.f32 %v443, 0.0
  %v572 = vmax.f32 %v444, 0.0
  %v573 = vmax.f32 %v445, 0.0
  %v574 = vmax.f32 %v446, 0.0
  %v575 = vmax.f32 %v447, 0.0
  %v576 = vmax.f32 %v448, 0.0
  %v577 = vmax.f32 %v449, 0.0
  %v578 = vmax.f32 %v450, 0.0
  %v579 = vmax.f32 %v451, 0.0
  %v580 = vmax.f32 %v452, 0.0
  %v581 = vmax.f32 %v453, 0.0
  %v582 = vmax.f32 %v454, 0.0
  %v583 = vmax.f32 %v455, 0.0
  %v584 = vmax.f32 %v456, 0.0
  %v585 = vmax.f32 %v457, 0.0
  %v586 = vmax.f32 %v458, 0.0
  %v587 = vmax.f32 %v459, 0.0
  %v588 = vmax.f32 %v460, 0.0
  %v589 = vmax.f32 %v461, 0.0
  %v590 = vmax.f32 %v462, 0.0
  %v591 = vmax.f32 %v463, 0.0
  %v592 = vmax.f32 %v464, 0.0
  %v593 = vmax.f32 %v465, 0.0
  %v594 = vmax.f32 %v466, 0.0
  %v595 = vmax.f32 %v467, 0.0
  %v596 = vmax.f32 %v468, 0.0
  %v597 = vmax.f32 %v469, 0.0
  %v598 = vmax.f32 %v470, 0.0
  %v599 = vmax.f32 %v471, 0.0
  %v600 = vmax.f32 %v472, 0.0
  %v601 = vmax.f32 %v473, 0.0
  %v602 = vmax.f32 %v474, 0.0
  %v603 = vmax.f32 %v475, 0.0
  %v604 = vmax.f32 %v476, 0.0
  %v605 = vmax.f32 %v477, 0.0
  %v606 = vmax.f32 %v478, 0.0
  %v607 = vmax.f32 %v479, 0.0
  %v608 = vmax.f32 %v480, 0.0
  %v609 = vmax.f32 %v481, 0.0
  %v610 = vmax.f32 %v482, 0.0
  %v611 = vmax.f32 %v483, 0.0
  %v612 = vmax.f32 %v484, 0.0
  %v613 = vmax.f32 %v485, 0.0
  %v614 = vmax.f32 %v486, 0.0
  %v615 = vmax.f32 %v487, 0.0
  %v616 = vmax.f32 %v488, 0.0
  %v617 = vmax.f32 %v489, 0.0
  %v618 = vmax.f32 %v490, 0.0
  %v619 = vmax.f32 %v491, 0.0
  %v620 = vmax.f32 %v492, 0.0
  %v621 = vmax.f32 %v493, 0.0
  %v622 = vmax.f32 %v494, 0.0
  %v623 = vmax.f32 %v495, 0.0
  %v624 = vmax.f32 %v496, 0.0
  %v625 = vmax.f32 %v497, 0.0
  %v626 = vmax.f32 %v498, 0.0
  %v627 = vmax.f32 %v499, 0.0
  %v628 = vmax.f32 %v500, 0.0
  %v629 = vmax.f32 %v501, 0.0
  %v630 = vmax.f32 %v502, 0.0
  %v631 = vmax.f32 %v503, 0.0
  %v632 = vmax.f32 %v504, 0.0
  %v633 = vmax.f32 %v505, 0.0
  %v634 = vmax.f32 %v506, 0.0
  %v635 = vmax.f32 %v507, 0.0
  %v636 = vmax.f32 %v508, 0.0
  %v637 = vmax.f32 %v509, 0.0
  %v638 = vmax.f32 %v510, 0.0
  %v639 = vmax.f32 %v511, 0.0
  %v640 = vmax.f32 %v512, 0.0
  %v641 = vmax.f32 %v513, 0.0
  %v642 = vmax.f32 %v514, 0.0
  %v643 = vmax.f32 %v515, 0.0
  %v644 = vmax.f32 %v516, 0.0
  %v645 = vmax.f32 %v517, 0.0
  %v646 = vmax.f32 %v518, 0.0
  %v647 = vmax.f32 %v519, 0.0
  %v648 = vmax.f32 %v520, 0.0
  %v649 = vmax.f32 %v521, 0.0
  %v650 = vmax.f32 %v522, 0.0
  %v651 = vmax.f32 %v523, 0.0
  %v652 = vmax.f32 %v524, 0.0
  %v653 = vmax.f32 %v525, 0.0
  %v654 = vmax.f32 %v526, 0.0
  %v655 = vmax.f32 %v527, 0.0
  %v656 = vmax.f32 %v528, 0.0
  %v657 = vmax.f32 %v529, 0.0
  %v658 = vmax.f32 %v530, 0.0
  %v659 = vmax.f32 %v531, 0.0
  %v660 = vmax.f32 %v532, 0.0
  %v661 = vmax.f32 %v533, 0.0
  %v662 = vmax.f32 %v534, 0.0
  %v663 = vmax.f32 %v535, 0.0
  %v664 = vmax.f32 %v536, 0.0
  %v665 = vmax.f32 %v537, 0.0
  %vm666 = vcmask 7168
  %667 = vst.msk [vmem:[%s3] sm:$0xff] %vm666, %v538
  %668 = vst.msk [vmem:[%s3 + $0x8] sm:$0xff] %vm666, %v539
  %669 = vst.msk [vmem:[%s3 + $0x10] sm:$0xff] %vm666, %v540
  %670 = vst.msk [vmem:[%s3 + $0x18] sm:$0xff] %vm666, %v541
  %671 = vst.msk [vmem:[%s3 + $0x20] sm:$0xff] %vm666, %v542
  %672 = vst.msk [vmem:[%s3 + $0x28] sm:$0xff] %vm666, %v543
  %673 = vst.msk [vmem:[%s3 + $0x30] sm:$0xff] %vm666, %v544
  %674 = vst.msk [vmem:[%s3 + $0x38] sm:$0xff] %vm666, %v545
  %675 = vst.msk [vmem:[%s3 + $0x40] sm:$0xff] %vm666, %v546
  %676 = vst.msk [vmem:[%s3 + $0x48] sm:$0xff] %vm666, %v547
  %677 = vst.msk [vmem:[%s3 + $0x50] sm:$0xff] %vm666, %v548
  %678 = vst.msk [vmem:[%s3 + $0x58] sm:$0xff] %vm666, %v549
  %679 = vst.msk [vmem:[%s3 + $0x60] sm:$0xff] %vm666, %v550
  %680 = vst.msk [vmem:[%s3 + $0x68] sm:$0xff] %vm666, %v551
  %681 = vst.msk [vmem:[%s3 + $0x70] sm:$0xff] %vm666, %v552
  %682 = vst.msk [vmem:[%s3 + $0x78] sm:$0xff] %vm666, %v553
  %683 = vst.msk [vmem:[%s3 + $0x80] sm:$0xff] %vm666, %v554
  %684 = vst.msk [vmem:[%s3 + $0x88] sm:$0xff] %vm666, %v555
  %685 = vst.msk [vmem:[%s3 + $0x90] sm:$0xff] %vm666, %v556
  %686 = vst.msk [vmem:[%s3 + $0x98] sm:$0xff] %vm666, %v557
  %687 = vst.msk [vmem:[%s3 + $0xa0] sm:$0xff] %vm666, %v558
  %688 = vst.msk [vmem:[%s3 + $0xa8] sm:$0xff] %vm666, %v559
  %689 = vst.msk [vmem:[%s3 + $0xb0] sm:$0xff] %vm666, %v560
  %690 = vst.msk [vmem:[%s3 + $0xb8] sm:$0xff] %vm666, %v561
  %691 = vst.msk [vmem:[%s3 + $0xc0] sm:$0xff] %vm666, %v562
  %692 = vst.msk [vmem:[%s3 + $0xc8] sm:$0xff] %vm666, %v563
  %693 = vst.msk [vmem:[%s3 + $0xd0] sm:$0xff] %vm666, %v564
  %694 = vst.msk [vmem:[%s3 + $0xd8] sm:$0xff] %vm666, %v565
  %695 = vst.msk [vmem:[%s3 + $0xe0] sm:$0xff] %vm666, %v566
  %696 = vst.msk [vmem:[%s3 + $0xe8] sm:$0xff] %vm666, %v567
  %697 = vst.msk [vmem:[%s3 + $0xf0] sm:$0xff] %vm666, %v568
  %698 = vst.msk [vmem:[%s3 + $0xf8] sm:$0xff] %vm666, %v569
  %699 = vst.msk [vmem:[%s3 + $0x100] sm:$0xff] %vm666, %v570
  %700 = vst.msk [vmem:[%s3 + $0x108] sm:$0xff] %vm666, %v571
  %701 = vst.msk [vmem:[%s3 + $0x110] sm:$0xff] %vm666, %v572
  %702 = vst.msk [vmem:[%s3 + $0x118] sm:$0xff] %vm666, %v573
  %703 = vst.msk [vmem:[%s3 + $0x120] sm:$0xff] %vm666, %v574
  %704 = vst.msk [vmem:[%s3 + $0x128] sm:$0xff] %vm666, %v575
  %705 = vst.msk [vmem:[%s3 + $0x130] sm:$0xff] %vm666, %v576
  %706 = vst.msk [vmem:[%s3 + $0x138] sm:$0xff] %vm666, %v577
  %707 = vst.msk [vmem:[%s3 + $0x140] sm:$0xff] %vm666, %v578
  %708 = vst.msk [vmem:[%s3 + $0x148] sm:$0xff] %vm666, %v579
  %709 = vst.msk [vmem:[%s3 + $0x150] sm:$0xff] %vm666, %v580
  %710 = vst.msk [vmem:[%s3 + $0x158] sm:$0xff] %vm666, %v581
  %711 = vst.msk [vmem:[%s3 + $0x160] sm:$0xff] %vm666, %v582
  %712 = vst.msk [vmem:[%s3 + $0x168] sm:$0xff] %vm666, %v583
  %713 = vst.msk [vmem:[%s3 + $0x170] sm:$0xff] %vm666, %v584
  %714 = vst.msk [vmem:[%s3 + $0x178] sm:$0xff] %vm666, %v585
  %715 = vst.msk [vmem:[%s3 + $0x180] sm:$0xff] %vm666, %v586
  %716 = vst.msk [vmem:[%s3 + $0x188] sm:$0xff] %vm666, %v587
  %717 = vst.msk [vmem:[%s3 + $0x190] sm:$0xff] %vm666, %v588
  %718 = vst.msk [vmem:[%s3 + $0x198] sm:$0xff] %vm666, %v589
  %719 = vst.msk [vmem:[%s3 + $0x1a0] sm:$0xff] %vm666, %v590
  %720 = vst.msk [vmem:[%s3 + $0x1a8] sm:$0xff] %vm666, %v591
  %721 = vst.msk [vmem:[%s3 + $0x1b0] sm:$0xff] %vm666, %v592
  %722 = vst.msk [vmem:[%s3 + $0x1b8] sm:$0xff] %vm666, %v593
  %723 = vst.msk [vmem:[%s3 + $0x1c0] sm:$0xff] %vm666, %v594
  %724 = vst.msk [vmem:[%s3 + $0x1c8] sm:$0xff] %vm666, %v595
  %725 = vst.msk [vmem:[%s3 + $0x1d0] sm:$0xff] %vm666, %v596
  %726 = vst.msk [vmem:[%s3 + $0x1d8] sm:$0xff] %vm666, %v597
  %727 = vst.msk [vmem:[%s3 + $0x1e0] sm:$0xff] %vm666, %v598
  %728 = vst.msk [vmem:[%s3 + $0x1e8] sm:$0xff] %vm666, %v599
  %729 = vst.msk [vmem:[%s3 + $0x1f0] sm:$0xff] %vm666, %v600
  %730 = vst.msk [vmem:[%s3 + $0x1f8] sm:$0xff] %vm666, %v601
  %731 = vst.msk [vmem:[%s3 + $0x200] sm:$0xff] %vm666, %v602
  %732 = vst.msk [vmem:[%s3 + $0x208] sm:$0xff] %vm666, %v603
  %733 = vst.msk [vmem:[%s3 + $0x210] sm:$0xff] %vm666, %v604
  %734 = vst.msk [vmem:[%s3 + $0x218] sm:$0xff] %vm666, %v605
  %735 = vst.msk [vmem:[%s3 + $0x220] sm:$0xff] %vm666, %v606
  %736 = vst.msk [vmem:[%s3 + $0x228] sm:$0xff] %vm666, %v607
  %737 = vst.msk [vmem:[%s3 + $0x230] sm:$0xff] %vm666, %v608
  %738 = vst.msk [vmem:[%s3 + $0x238] sm:$0xff] %vm666, %v609
  %739 = vst.msk [vmem:[%s3 + $0x240] sm:$0xff] %vm666, %v610
  %740 = vst.msk [vmem:[%s3 + $0x248] sm:$0xff] %vm666, %v611
  %741 = vst.msk [vmem:[%s3 + $0x250] sm:$0xff] %vm666, %v612
  %742 = vst.msk [vmem:[%s3 + $0x258] sm:$0xff] %vm666, %v613
  %743 = vst.msk [vmem:[%s3 + $0x260] sm:$0xff] %vm666, %v614
  %744 = vst.msk [vmem:[%s3 + $0x268] sm:$0xff] %vm666, %v615
  %745 = vst.msk [vmem:[%s3 + $0x270] sm:$0xff] %vm666, %v616
  %746 = vst.msk [vmem:[%s3 + $0x278] sm:$0xff] %vm666, %v617
  %747 = vst.msk [vmem:[%s3 + $0x280] sm:$0xff] %vm666, %v618
  %748 = vst.msk [vmem:[%s3 + $0x288] sm:$0xff] %vm666, %v619
  %749 = vst.msk [vmem:[%s3 + $0x290] sm:$0xff] %vm666, %v620
  %750 = vst.msk [vmem:[%s3 + $0x298] sm:$0xff] %vm666, %v621
  %751 = vst.msk [vmem:[%s3 + $0x2a0] sm:$0xff] %vm666, %v622
  %752 = vst.msk [vmem:[%s3 + $0x2a8] sm:$0xff] %vm666, %v623
  %753 = vst.msk [vmem:[%s3 + $0x2b0] sm:$0xff] %vm666, %v624
  %754 = vst.msk [vmem:[%s3 + $0x2b8] sm:$0xff] %vm666, %v625
  %755 = vst.msk [vmem:[%s3 + $0x2c0] sm:$0xff] %vm666, %v626
  %756 = vst.msk [vmem:[%s3 + $0x2c8] sm:$0xff] %vm666, %v627
  %757 = vst.msk [vmem:[%s3 + $0x2d0] sm:$0xff] %vm666, %v628
  %758 = vst.msk [vmem:[%s3 + $0x2d8] sm:$0xff] %vm666, %v629
  %759 = vst.msk [vmem:[%s3 + $0x2e0] sm:$0xff] %vm666, %v630
  %760 = vst.msk [vmem:[%s3 + $0x2e8] sm:$0xff] %vm666, %v631
  %761 = vst.msk [vmem:[%s3 + $0x2f0] sm:$0xff] %vm666, %v632
  %762 = vst.msk [vmem:[%s3 + $0x2f8] sm:$0xff] %vm666, %v633
  %763 = vst.msk [vmem:[%s3 + $0x300] sm:$0xff] %vm666, %v634
  %764 = vst.msk [vmem:[%s3 + $0x308] sm:$0xff] %vm666, %v635
  %765 = vst.msk [vmem:[%s3 + $0x310] sm:$0xff] %vm666, %v636
  %766 = vst.msk [vmem:[%s3 + $0x318] sm:$0xff] %vm666, %v637
  %767 = vst.msk [vmem:[%s3 + $0x320] sm:$0xff] %vm666, %v638
  %768 = vst.msk [vmem:[%s3 + $0x328] sm:$0xff] %vm666, %v639
  %769 = vst.msk [vmem:[%s3 + $0x330] sm:$0xff] %vm666, %v640
  %770 = vst.msk [vmem:[%s3 + $0x338] sm:$0xff] %vm666, %v641
  %771 = vst.msk [vmem:[%s3 + $0x340] sm:$0xff] %vm666, %v642
  %772 = vst.msk [vmem:[%s3 + $0x348] sm:$0xff] %vm666, %v643
  %773 = vst.msk [vmem:[%s3 + $0x350] sm:$0xff] %vm666, %v644
  %774 = vst.msk [vmem:[%s3 + $0x358] sm:$0xff] %vm666, %v645
  %775 = vst.msk [vmem:[%s3 + $0x360] sm:$0xff] %vm666, %v646
  %776 = vst.msk [vmem:[%s3 + $0x368] sm:$0xff] %vm666, %v647
  %777 = vst.msk [vmem:[%s3 + $0x370] sm:$0xff] %vm666, %v648
  %778 = vst.msk [vmem:[%s3 + $0x378] sm:$0xff] %vm666, %v649
  %779 = vst.msk [vmem:[%s3 + $0x380] sm:$0xff] %vm666, %v650
  %780 = vst.msk [vmem:[%s3 + $0x388] sm:$0xff] %vm666, %v651
  %781 = vst.msk [vmem:[%s3 + $0x390] sm:$0xff] %vm666, %v652
  %782 = vst.msk [vmem:[%s3 + $0x398] sm:$0xff] %vm666, %v653
  %783 = vst.msk [vmem:[%s3 + $0x3a0] sm:$0xff] %vm666, %v654
  %784 = vst.msk [vmem:[%s3 + $0x3a8] sm:$0xff] %vm666, %v655
  %785 = vst.msk [vmem:[%s3 + $0x3b0] sm:$0xff] %vm666, %v656
  %786 = vst.msk [vmem:[%s3 + $0x3b8] sm:$0xff] %vm666, %v657
  %787 = vst.msk [vmem:[%s3 + $0x3c0] sm:$0xff] %vm666, %v658
  %788 = vst.msk [vmem:[%s3 + $0x3c8] sm:$0xff] %vm666, %v659
  %789 = vst.msk [vmem:[%s3 + $0x3d0] sm:$0xff] %vm666, %v660
  %790 = vst.msk [vmem:[%s3 + $0x3d8] sm:$0xff] %vm666, %v661
  %791 = vst.msk [vmem:[%s3 + $0x3e0] sm:$0xff] %vm666, %v662
  %792 = vst.msk [vmem:[%s3 + $0x3e8] sm:$0xff] %vm666, %v663
  %793 = vst.msk [vmem:[%s3 + $0x3f0] sm:$0xff] %vm666, %v664
  %794 = vst.msk [vmem:[%s3 + $0x3f8] sm:$0xff] %vm666, %v665
  // Predicated region
  $region14: #{refine_net_unet_forward.35} parent=0 // pred_check
    _
  $region15: #{refine_net_unet_forward.35} parent=0 // pred_check_branch
    %796 = sbr.rel (0) target = $region17
  $region16: #{refine_net_unet_forward.35} parent=0 // pred_region
    _
  $region17: #{refine_net_unet_forward.35} parent=0 // pred_fallthru
    _
  // Predicated region
  $region18: #{refine_net_unet_forward.35} parent=0 // pred_check
    _
  $region19: #{refine_net_unet_forward.35} parent=0 // pred_check_branch
    %798 = sbr.rel (0) target = $region21
  $region20: #{refine_net_unet_forward.35} parent=0 // pred_region
    _
  $region21: #{refine_net_unet_forward.35} parent=0 // pred_fallthru
    _

</llo_original>
